<compile_context>
chip_gen: v5e
topology: v5e:2x2
jax: 0.10.0
libtpu: 0.0.40
codegen_flags: <defaults>
</compile_context>

<pallas_src>
from functools import partial

import jax
import jax.numpy as jnp
from jax import lax
from jax.experimental import pallas as pl
from jax.experimental.pallas import tpu as pltpu

# ---- config mirroring the module's __init__ (synthetic, deterministic) ------
Z_SIZE = 128        # config['z_size']                   -- unused in forward
USE_BIAS = True     # config['model']['D']['use_bias']
RELU_SLOPE = 0.2    # config['model']['D']['relu_slope'] -- unused: forward uses nn.ReLU
DROPOUT = 0.5       # config['model']['D']['dropout']    -- unused in forward
# TODO(synk): relu_slope / dropout are stored by __init__ but never used in forward.

CONV_DIMS = [3, 64, 128, 256, 256, 512]               # Conv1d(k=1) channel sizes
MLP_DIMS = [512, 256, 2048, 512, 512, 128, 64, 1]     # Linear sizes
# ReLU placement exactly as in the nn.Sequential definitions:
CONV_RELU = [True, True, True, True, False]
MLP_RELU = [True, False, True, True, True, True, False]

N_CONV = len(CONV_DIMS) - 1
N_MLP = len(MLP_DIMS) - 1
FEAT = CONV_DIMS[-1]                                  # 512


def _round_up(x, m):
    return ((x + m - 1) // m) * m


def _device_kind():
    try:
        return jax.devices()[0].device_kind.lower()
    except Exception:
        return ""


def _default_epilogue_dtype():
    # v5e/v5p VPU has no bf16 ALUs and the kernel is MXU-bound there -> keep f32.
    return jnp.float32 if "v5" in _device_kind() else jnp.bfloat16


# ------------------------------- Pallas kernel -------------------------------
def disc_kernel(x_ref, *refs, n_true, n_pad, ep_dtype):
    # refs: conv_w[5], conv_b_pack, mlp_w[7], mlp_b_pack, out, acc(scratch)
    cw = refs[:N_CONV]
    cb_ref = refs[N_CONV]
    mw = refs[N_CONV + 1: N_CONV + 1 + N_MLP]
    mb_ref = refs[N_CONV + 1 + N_MLP]
    out_ref = refs[N_CONV + 2 + N_MLP]
    acc_ref = refs[N_CONV + 3 + N_MLP]

    b_blk, n_blk, c_in = x_ref.shape
    n_step = pl.program_id(1)
    last_step = pl.num_programs(1) - 1

    # reset the running max at the first point tile of each batch tile
    @pl.when(n_step == 0)
    def _():
        acc_ref[...] = jnp.full((b_blk, FEAT), -jnp.inf, jnp.float32)

    # ---- pointwise "conv" stack; batch folded into the matmul M dimension ----
    xv = x_ref[...].astype(jnp.float32).reshape(b_blk * n_blk, c_in)   # (M, 3)

    # layer 0 (K=3) on the VPU: three broadcast FMAs (kept f32 for precision).
    # TODO(synk): on v6e/v7x (VALU-bound) this could move to the idle MXU by
    # padding K 3->8; kept on the VPU for robustness of lowering.
    w0 = cw[0][...]                                   # (3, 64) f32
    h = cb_ref[0, :CONV_DIMS[1]]                      # (64,)
    for c in range(c_in):
        h = h + xv[:, c:c + 1] * w0[c:c + 1, :]       # (M, 64)
    if CONV_RELU[0]:
        h = jnp.maximum(h, 0.0)

    # layers 1..4 on the MXU: bf16 operands, f32 accumulation, ep_dtype epilogue
    for i in range(1, N_CONV):
        h = jnp.dot(h.astype(jnp.bfloat16), cw[i][...],
                    preferred_element_type=jnp.float32)
        h = h.astype(ep_dtype) + cb_ref[i, :CONV_DIMS[i + 1]].astype(ep_dtype)
        if CONV_RELU[i]:
            h = jnp.maximum(h, 0.0)

    # ---- global max over points (running accumulator) ----
    h3 = h.reshape(b_blk, n_blk, FEAT)

    def acc_update(vals):
        acc_ref[...] = jnp.maximum(acc_ref[...],
                                   jnp.max(vals, axis=1).astype(jnp.float32))

    if n_pad > n_true:  # static: padding exists, but ONLY in the final point tile
        @pl.when(n_step != last_step)
        def _():
            acc_update(h3)                            # no mask on non-final tiles

        @pl.when(n_step == last_step)
        def _():
            idx = n_step * n_blk + lax.broadcasted_iota(jnp.int32, (1, n_blk, 1), 1)
            acc_update(jnp.where(idx < n_true, h3, -jnp.inf))
    else:
        acc_update(h3)

    # ---- MLP head once per batch tile, after the last point tile ----
    @pl.when(n_step == last_step)
    def _():
        z = acc_ref[...]                              # (b_blk, 512) f32
        for i in range(N_MLP):
            z = jnp.dot(z.astype(jnp.bfloat16), mw[i][...],
                        preferred_element_type=jnp.float32)
            z = z + mb_ref[i, :MLP_DIMS[i + 1]]
            if MLP_RELU[i]:
                z = jnp.maximum(z, 0.0)
        # TODO(synk): for very large B a lane-dense (B,128) staging output would
        # avoid masked vst; negligible at small batch so we keep (B, 1).
        out_ref[...] = z.astype(out_ref.dtype)        # (b_blk, 1)


# ------------------------------- JAX wrapper ----------------------------------
@partial(jax.jit, static_argnames=("n_blk", "epilogue_dtype"))
def discriminator_forward(x_ncl, conv_w, conv_b, mlp_w, mlp_b, *,
                          n_blk=None, epilogue_dtype=None):
    """x_ncl: (B, 3, N) float32 (PyTorch NCL layout). Returns (B, 1) logits."""
    B, c_in, N = x_ncl.shape
    assert c_in == CONV_DIMS[0]

    kind = _device_kind()
    if epilogue_dtype is None:
        epilogue_dtype = _default_epilogue_dtype()
    big_vmem = ("v5" in kind) or ("v6" in kind)       # 128 MiB physical VMEM
    m_target = 8192 if big_vmem else 4096             # keep v7x (64 MiB) tiles smaller
    vmem_limit = (96 if big_vmem else 48) * 1024 * 1024

    # batch tile: large enough that the MLP head sees a useful M, but keep >=2
    # batch tiles when possible so the "parallel" axis can be megacore-split.
    if B % 8 == 0:
        b_blk = 8
        while b_blk * 2 <= 64 and B % (b_blk * 2) == 0 and B // (b_blk * 2) >= 2:
            b_blk *= 2
    else:
        b_blk = B
        # TODO(synk): for tiny/odd B on v7x a parallel point-split with a
        # partial-max combine stage would keep the second TensorCore busy.
    b_tiles = B // b_blk

    # point tile: M = b_blk * n_blk ~= m_target, multiple of 8
    if n_blk is None:
        n_blk = max(64, m_target // b_blk)
    n_blk = min(_round_up(n_blk, 8), _round_up(N, 8))
    n_pad = _round_up(N, n_blk)
    n_tiles = n_pad // n_blk

    x_bnc = jnp.transpose(x_ncl, (0, 2, 1))           # (B, N, 3) channels-last
    if n_pad != N:
        x_bnc = jnp.pad(x_bnc, ((0, 0), (0, n_pad - N), (0, 0)))
    # TODO(synk): the (b_blk, n_blk, 3) tile is lane-padded 3->128 in VMEM; a
    # lane-dense (b_blk, 3, n_blk) NCL tile would need an in-kernel relayout for
    # the channels-last matmuls, so we keep the proven layout (input DMA is tiny
    # and fully hidden behind compute).

    # weight dtypes: tiny first conv stays f32 (VPU path); everything else bf16
    cw = [conv_w[0].astype(jnp.float32)] + [w.astype(jnp.bfloat16) for w in conv_w[1:]]
    mw = [w.astype(jnp.bfloat16) for w in mlp_w]

    # pack the 12 tiny biases into two refs (f32, zero-padded rows)
    cb_pack = jnp.zeros((N_CONV, max(CONV_DIMS[1:])), jnp.float32)
    for i, b in enumerate(conv_b):
        cb_pack = cb_pack.at[i, :b.shape[-1]].set(b.reshape(-1))
    mb_pack = jnp.zeros((N_MLP, max(MLP_DIMS[1:])), jnp.float32)
    for i, b in enumerate(mlp_b):
        mb_pack = mb_pack.at[i, :b.shape[-1]].set(b.reshape(-1))

    def const_spec(shape):
        # TODO(synk): pipeline_mode=pl.Buffered(1) would halve resident-weight
        # VMEM (constant block index -> the second pipeline buffer is dead);
        # skipped here to keep lowering maximally portable.
        return pl.BlockSpec(shape, lambda b, n: (0,) * len(shape))

    in_specs = (
        [pl.BlockSpec((b_blk, n_blk, c_in), lambda b, n: (b, n, 0))]
        + [const_spec(w.shape) for w in cw]
        + [const_spec(cb_pack.shape)]
        + [const_spec(w.shape) for w in mw]
        + [const_spec(mb_pack.shape)]
    )

    kernel = partial(disc_kernel, n_true=N, n_pad=n_pad,
                     ep_dtype=jnp.dtype(epilogue_dtype))
    return pl.pallas_call(
        kernel,
        out_shape=jax.ShapeDtypeStruct((B, 1), jnp.float32),
        grid=(b_tiles, n_tiles),
        in_specs=in_specs,
        out_specs=pl.BlockSpec((b_blk, 1), lambda b, n: (b, 0)),
        scratch_shapes=[pltpu.VMEM((b_blk, FEAT), jnp.float32)],
        compiler_params=pltpu.CompilerParams(
            dimension_semantics=("parallel", "arbitrary"),
            vmem_limit_bytes=vmem_limit),
    )(x_bnc, *cw, cb_pack, *mw, mb_pack)


# ------------------------- deterministic param init ---------------------------
def init_params(key):
    """PyTorch-default-style init: U(-1/sqrt(fan_in), 1/sqrt(fan_in))."""
    keys = iter(jax.random.split(key, 2 * (N_CONV + N_MLP)))

    conv_w, conv_b = [], []
    for i in range(N_CONV):
        fan_in = CONV_DIMS[i]
        bound = 1.0 / float(fan_in) ** 0.5
        w = jax.random.uniform(next(keys), (CONV_DIMS[i], CONV_DIMS[i + 1]),
                               jnp.float32, -bound, bound)
        bk = next(keys)
        if USE_BIAS:
            b = jax.random.uniform(bk, (CONV_DIMS[i + 1],), jnp.float32, -bound, bound)
        else:
            b = jnp.zeros((CONV_DIMS[i + 1],), jnp.float32)
        conv_w.append(w)
        conv_b.append(b)

    mlp_w, mlp_b = [], []
    for i in range(N_MLP):
        fan_in = MLP_DIMS[i]
        bound = 1.0 / float(fan_in) ** 0.5
        w = jax.random.uniform(next(keys), (MLP_DIMS[i], MLP_DIMS[i + 1]),
                               jnp.float32, -bound, bound)
        b = jax.random.uniform(next(keys), (MLP_DIMS[i + 1],),
                               jnp.float32, -bound, bound)
        mlp_w.append(w)
        mlp_b.append(b)

    return conv_w, conv_b, mlp_w, mlp_b


# --------------- pure-JAX reference (mirrors kernel mixed precision) ----------
def reference_forward(x_ncl, conv_w, conv_b, mlp_w, mlp_b, epilogue_dtype=None):
    if epilogue_dtype is None:
        epilogue_dtype = _default_epilogue_dtype()
    ep = jnp.dtype(epilogue_dtype)

    x = jnp.transpose(x_ncl, (0, 2, 1)).astype(jnp.float32)    # (B, N, 3)
    # layer 0 in f32 with the same FMA ordering as the in-kernel VPU path
    h = conv_b[0]
    for c in range(CONV_DIMS[0]):
        h = h + x[..., c:c + 1] * conv_w[0][c:c + 1, :]
    h = jnp.maximum(h, 0.0)
    for i in range(1, N_CONV):
        h = jnp.einsum("bnc,cd->bnd",
                       h.astype(jnp.bfloat16), conv_w[i].astype(jnp.bfloat16),
                       preferred_element_type=jnp.float32)
        h = h.astype(ep) + conv_b[i].astype(ep)
        if CONV_RELU[i]:
            h = jnp.maximum(h, 0.0)
    z = jnp.max(h, axis=1).astype(jnp.float32)                 # (B, 512)
    for i in range(N_MLP):
        z = jnp.dot(z.astype(jnp.bfloat16), mlp_w[i].astype(jnp.bfloat16),
                    preferred_element_type=jnp.float32) + mlp_b[i]
        if MLP_RELU[i]:
            z = jnp.maximum(z, 0.0)
    return z


if __name__ == "__main__":
    key = jax.random.PRNGKey(0)
    k_x, k_p = jax.random.split(key)

    # small demo shapes; N is NOT a multiple of the point tile so the padding
    # mask (gated to the last tile) and the multi-tile running-max accumulator
    # are both exercised.
    B, C_IN, N_POINTS = 2, 3, 200
    x = jax.random.normal(k_x, (B, C_IN, N_POINTS), jnp.float32)

    conv_w, conv_b, mlp_w, mlp_b = init_params(k_p)

    logits = discriminator_forward(x, conv_w, conv_b, mlp_w, mlp_b, n_blk=64)
    logits = jax.block_until_ready(logits)

    ref = reference_forward(x, conv_w, conv_b, mlp_w, mlp_b)
    assert logits.shape == (B, 1)
    assert jnp.allclose(logits, ref, atol=1e-2, rtol=1e-2), (logits, ref)

    print("KERNEL_OK")
</pallas_src>

<mosaic_0001>
module attributes {stable_mosaic.version = 11 : i64} {
  func.func @disc_kernel(%arg0: i32, %arg1: i32, %arg2: memref<2x64x3xf32, #tpu.memory_space<vmem>>, %arg3: memref<3x64xf32, #tpu.memory_space<vmem>>, %arg4: memref<64x128xbf16, #tpu.memory_space<vmem>>, %arg5: memref<128x256xbf16, #tpu.memory_space<vmem>>, %arg6: memref<256x256xbf16, #tpu.memory_space<vmem>>, %arg7: memref<256x512xbf16, #tpu.memory_space<vmem>>, %arg8: memref<5x512xf32, #tpu.memory_space<vmem>>, %arg9: memref<512x256xbf16, #tpu.memory_space<vmem>>, %arg10: memref<256x2048xbf16, #tpu.memory_space<vmem>>, %arg11: memref<2048x512xbf16, #tpu.memory_space<vmem>>, %arg12: memref<512x512xbf16, #tpu.memory_space<vmem>>, %arg13: memref<512x128xbf16, #tpu.memory_space<vmem>>, %arg14: memref<128x64xbf16, #tpu.memory_space<vmem>>, %arg15: memref<64x1xbf16, #tpu.memory_space<vmem>>, %arg16: memref<7x2048xf32, #tpu.memory_space<vmem>>, %arg17: memref<2x1xf32, #tpu.memory_space<vmem>>, %arg18: memref<2x512xf32, #tpu.memory_space<vmem>>) attributes {dimension_semantics = [#tpu.dimension_semantics<parallel>, #tpu.dimension_semantics<arbitrary>], iteration_bounds = array<i64: 1, 4>, scalar_prefetch = 0 : i64, scratch_operands = 1 : i64, tpu.core_type = #tpu.core_type<tc>, window_params = [{transform_indices = @transform_0, window_bounds = array<i64: 2, 64, 3>}, {pipeline_mode = #tpu.pipeline_mode<synchronous>, transform_indices = @transform_1, window_bounds = array<i64: 3, 64>}, {pipeline_mode = #tpu.pipeline_mode<synchronous>, transform_indices = @transform_2, window_bounds = array<i64: 64, 128>}, {pipeline_mode = #tpu.pipeline_mode<synchronous>, transform_indices = @transform_3, window_bounds = array<i64: 128, 256>}, {pipeline_mode = #tpu.pipeline_mode<synchronous>, transform_indices = @transform_4, window_bounds = array<i64: 256, 256>}, {pipeline_mode = #tpu.pipeline_mode<synchronous>, transform_indices = @transform_5, window_bounds = array<i64: 256, 512>}, {pipeline_mode = #tpu.pipeline_mode<synchronous>, transform_indices = @transform_6, window_bounds = array<i64: 5, 512>}, {pipeline_mode = #tpu.pipeline_mode<synchronous>, transform_indices = @transform_7, window_bounds = array<i64: 512, 256>}, {pipeline_mode = #tpu.pipeline_mode<synchronous>, transform_indices = @transform_8, window_bounds = array<i64: 256, 2048>}, {pipeline_mode = #tpu.pipeline_mode<synchronous>, transform_indices = @transform_9, window_bounds = array<i64: 2048, 512>}, {pipeline_mode = #tpu.pipeline_mode<synchronous>, transform_indices = @transform_10, window_bounds = array<i64: 512, 512>}, {pipeline_mode = #tpu.pipeline_mode<synchronous>, transform_indices = @transform_11, window_bounds = array<i64: 512, 128>}, {pipeline_mode = #tpu.pipeline_mode<synchronous>, transform_indices = @transform_12, window_bounds = array<i64: 128, 64>}, {pipeline_mode = #tpu.pipeline_mode<synchronous>, transform_indices = @transform_13, window_bounds = array<i64: 64, 1>}, {pipeline_mode = #tpu.pipeline_mode<synchronous>, transform_indices = @transform_14, window_bounds = array<i64: 7, 2048>}, {transform_indices = @transform_15, window_bounds = array<i64: 2, 1>}]} {
    %c0_i32 = arith.constant 0 : i32
    %0 = arith.cmpi eq, %arg1, %c0_i32 : i32
    %1 = arith.extui %0 : i1 to i32
    %c0_i32_0 = arith.constant 0 : i32
    %2 = arith.cmpi ne, %1, %c0_i32_0 : i32
    scf.if %2 {
      %cst_31 = arith.constant 0xFF800000 : f32
      %83 = vector.broadcast %cst_31 : f32 to vector<2x512xf32>
      %c0_32 = arith.constant 0 : index
      %c0_33 = arith.constant 0 : index
      %84 = vector.load %arg18[%c0_32, %c0_33] : memref<2x512xf32, #tpu.memory_space<vmem>>, vector<2x512xf32>
      tpu.vector_store %arg18[%c0_32, %c0_33], %83 {strides = array<i32>} : memref<2x512xf32, #tpu.memory_space<vmem>>, vector<2x512xf32>,
    } else {
    }
    %c0 = arith.constant 0 : index
    %c0_1 = arith.constant 0 : index
    %c0_2 = arith.constant 0 : index
    %3 = vector.load %arg2[%c0, %c0_1, %c0_2] : memref<2x64x3xf32, #tpu.memory_space<vmem>>, vector<2x64x3xf32>
    %4 = vector.shape_cast %3 : vector<2x64x3xf32> to vector<128x3xf32>
    %c0_3 = arith.constant 0 : index
    %c0_4 = arith.constant 0 : index
    %5 = vector.load %arg3[%c0_3, %c0_4] : memref<3x64xf32, #tpu.memory_space<vmem>>, vector<3x64xf32>
    %c0_5 = arith.constant 0 : index
    %c0_6 = arith.constant 0 : index
    %6 = vector.load %arg8[%c0_5, %c0_6] : memref<5x512xf32, #tpu.memory_space<vmem>>, vector<1x64xf32>
    %7 = vector.shape_cast %6 : vector<1x64xf32> to vector<64xf32>
    %8 = vector.extract_strided_slice %4 {offsets = [0, 0], sizes = [128, 1], strides = [1, 1]} : vector<128x3xf32> to vector<128x1xf32>
    %9 = vector.extract_strided_slice %5 {offsets = [0, 0], sizes = [1, 64], strides = [1, 1]} : vector<3x64xf32> to vector<1x64xf32>
    %10 = vector.broadcast %8 : vector<128x1xf32> to vector<128x64xf32>
    %11 = vector.broadcast %9 : vector<1x64xf32> to vector<128x64xf32>
    %12 = arith.mulf %10, %11 : vector<128x64xf32>
    %13 = vector.shape_cast %7 : vector<64xf32> to vector<1x64xf32>
    %14 = vector.broadcast %13 : vector<1x64xf32> to vector<128x64xf32>
    %15 = arith.addf %14, %12 : vector<128x64xf32>
    %16 = vector.extract_strided_slice %4 {offsets = [0, 1], sizes = [128, 1], strides = [1, 1]} : vector<128x3xf32> to vector<128x1xf32>
    %17 = vector.extract_strided_slice %5 {offsets = [1, 0], sizes = [1, 64], strides = [1, 1]} : vector<3x64xf32> to vector<1x64xf32>
    %18 = vector.broadcast %16 : vector<128x1xf32> to vector<128x64xf32>
    %19 = vector.broadcast %17 : vector<1x64xf32> to vector<128x64xf32>
    %20 = arith.mulf %18, %19 : vector<128x64xf32>
    %21 = arith.addf %15, %20 : vector<128x64xf32>
    %22 = vector.extract_strided_slice %4 {offsets = [0, 2], sizes = [128, 1], strides = [1, 1]} : vector<128x3xf32> to vector<128x1xf32>
    %23 = vector.extract_strided_slice %5 {offsets = [2, 0], sizes = [1, 64], strides = [1, 1]} : vector<3x64xf32> to vector<1x64xf32>
    %24 = vector.broadcast %22 : vector<128x1xf32> to vector<128x64xf32>
    %25 = vector.broadcast %23 : vector<1x64xf32> to vector<128x64xf32>
    %26 = arith.mulf %24, %25 : vector<128x64xf32>
    %27 = arith.addf %21, %26 : vector<128x64xf32>
    %cst = arith.constant 0.000000e+00 : f32
    %28 = vector.broadcast %cst : f32 to vector<128x64xf32>
    %29 = arith.maximumf %27, %28 : vector<128x64xf32>
    %30 = arith.truncf %29 : vector<128x64xf32> to vector<128x64xbf16>
    %c0_7 = arith.constant 0 : index
    %c0_8 = arith.constant 0 : index
    %31 = vector.load %arg4[%c0_7, %c0_8] : memref<64x128xbf16, #tpu.memory_space<vmem>>, vector<64x128xbf16>
    %cst_9 = arith.constant dense<0.000000e+00> : vector<128x128xf32>
    %32 = tpu.matmul %30, %31, %cst_9 {dimension_numbers = #tpu.dot_dimension_numbers<[1], [0], [0], [1], [0, 0, 1, 1], [], []>} : vector<128x64xbf16>, vector<64x128xbf16>, vector<128x128xf32> -> vector<128x128xf32>
    %33 = arith.truncf %32 : vector<128x128xf32> to vector<128x128xbf16>
    %c1 = arith.constant 1 : index
    %c0_10 = arith.constant 0 : index
    %34 = vector.load %arg8[%c1, %c0_10] : memref<5x512xf32, #tpu.memory_space<vmem>>, vector<1x128xf32>
    %35 = vector.shape_cast %34 : vector<1x128xf32> to vector<128xf32>
    %36 = arith.truncf %35 : vector<128xf32> to vector<128xbf16>
    %37 = vector.shape_cast %36 : vector<128xbf16> to vector<1x128xbf16>
    %38 = vector.broadcast %37 : vector<1x128xbf16> to vector<128x128xbf16>
    %39 = arith.addf %33, %38 : vector<128x128xbf16>
    %cst_11 = arith.constant 0.000000e+00 : bf16
    %40 = vector.broadcast %cst_11 : bf16 to vector<128x128xbf16>
    %41 = arith.maximumf %39, %40 : vector<128x128xbf16>
    %c0_12 = arith.constant 0 : index
    %c0_13 = arith.constant 0 : index
    %42 = vector.load %arg5[%c0_12, %c0_13] : memref<128x256xbf16, #tpu.memory_space<vmem>>, vector<128x256xbf16>
    %cst_14 = arith.constant dense<0.000000e+00> : vector<128x256xf32>
    %43 = tpu.matmul %41, %42, %cst_14 {dimension_numbers = #tpu.dot_dimension_numbers<[1], [0], [0], [1], [0, 0, 1, 1], [], []>} : vector<128x128xbf16>, vector<128x256xbf16>, vector<128x256xf32> -> vector<128x256xf32>
    %44 = arith.truncf %43 : vector<128x256xf32> to vector<128x256xbf16>
    %c2 = arith.constant 2 : index
    %c0_15 = arith.constant 0 : index
    %45 = vector.load %arg8[%c2, %c0_15] : memref<5x512xf32, #tpu.memory_space<vmem>>, vector<1x256xf32>
    %46 = vector.shape_cast %45 : vector<1x256xf32> to vector<256xf32>
    %47 = arith.truncf %46 : vector<256xf32> to vector<256xbf16>
    %48 = vector.shape_cast %47 : vector<256xbf16> to vector<1x256xbf16>
    %49 = vector.broadcast %48 : vector<1x256xbf16> to vector<128x256xbf16>
    %50 = arith.addf %44, %49 : vector<128x256xbf16>
    %cst_16 = arith.constant 0.000000e+00 : bf16
    %51 = vector.broadcast %cst_16 : bf16 to vector<128x256xbf16>
    %52 = arith.maximumf %50, %51 : vector<128x256xbf16>
    %c0_17 = arith.constant 0 : index
    %c0_18 = arith.constant 0 : index
    %53 = vector.load %arg6[%c0_17, %c0_18] : memref<256x256xbf16, #tpu.memory_space<vmem>>, vector<256x256xbf16>
    %cst_19 = arith.constant dense<0.000000e+00> : vector<128x256xf32>
    %54 = tpu.matmul %52, %53, %cst_19 {dimension_numbers = #tpu.dot_dimension_numbers<[1], [0], [0], [1], [0, 0, 1, 1], [], []>} : vector<128x256xbf16>, vector<256x256xbf16>, vector<128x256xf32> -> vector<128x256xf32>
    %55 = arith.truncf %54 : vector<128x256xf32> to vector<128x256xbf16>
    %c3 = arith.constant 3 : index
    %c0_20 = arith.constant 0 : index
    %56 = vector.load %arg8[%c3, %c0_20] : memref<5x512xf32, #tpu.memory_space<vmem>>, vector<1x256xf32>
    %57 = vector.shape_cast %56 : vector<1x256xf32> to vector<256xf32>
    %58 = arith.truncf %57 : vector<256xf32> to vector<256xbf16>
    %59 = vector.shape_cast %58 : vector<256xbf16> to vector<1x256xbf16>
    %60 = vector.broadcast %59 : vector<1x256xbf16> to vector<128x256xbf16>
    %61 = arith.addf %55, %60 : vector<128x256xbf16>
    %cst_21 = arith.constant 0.000000e+00 : bf16
    %62 = vector.broadcast %cst_21 : bf16 to vector<128x256xbf16>
    %63 = arith.maximumf %61, %62 : vector<128x256xbf16>
    %c0_22 = arith.constant 0 : index
    %c0_23 = arith.constant 0 : index
    %64 = vector.load %arg7[%c0_22, %c0_23] : memref<256x512xbf16, #tpu.memory_space<vmem>>, vector<256x512xbf16>
    %cst_24 = arith.constant dense<0.000000e+00> : vector<128x512xf32>
    %65 = tpu.matmul %63, %64, %cst_24 {dimension_numbers = #tpu.dot_dimension_numbers<[1], [0], [0], [1], [0, 0, 1, 1], [], []>} : vector<128x256xbf16>, vector<256x512xbf16>, vector<128x512xf32> -> vector<128x512xf32>
    %66 = arith.truncf %65 : vector<128x512xf32> to vector<128x512xbf16>
    %c4 = arith.constant 4 : index
    %c0_25 = arith.constant 0 : index
    %67 = vector.load %arg8[%c4, %c0_25] : memref<5x512xf32, #tpu.memory_space<vmem>>, vector<1x512xf32>
    %68 = vector.shape_cast %67 : vector<1x512xf32> to vector<512xf32>
    %69 = arith.truncf %68 : vector<512xf32> to vector<512xbf16>
    %70 = vector.shape_cast %69 : vector<512xbf16> to vector<1x512xbf16>
    %71 = vector.broadcast %70 : vector<1x512xbf16> to vector<128x512xbf16>
    %72 = arith.addf %66, %71 : vector<128x512xbf16>
    %73 = vector.shape_cast %72 : vector<128x512xbf16> to vector<2x64x512xbf16>
    %c3_i32 = arith.constant 3 : i32
    %74 = arith.cmpi ne, %arg1, %c3_i32 : i32
    %75 = arith.extui %74 : i1 to i32
    %c0_i32_26 = arith.constant 0 : i32
    %76 = arith.cmpi ne, %75, %c0_i32_26 : i32
    scf.if %76 {
      %c0_31 = arith.constant 0 : index
      %c0_32 = arith.constant 0 : index
      %83 = vector.load %arg18[%c0_31, %c0_32] : memref<2x512xf32, #tpu.memory_space<vmem>>, vector<2x512xf32>
      %cst_33 = arith.constant dense<0xFF80> : vector<2x512xbf16>
      %84 = vector.multi_reduction <maximumf>, %73, %cst_33 [1] : vector<2x64x512xbf16> to vector<2x512xbf16>
      %85 = arith.extf %84 : vector<2x512xbf16> to vector<2x512xf32>
      %86 = arith.maximumf %83, %85 : vector<2x512xf32>
      %c0_34 = arith.constant 0 : index
      %c0_35 = arith.constant 0 : index
      %87 = vector.load %arg18[%c0_34, %c0_35] : memref<2x512xf32, #tpu.memory_space<vmem>>, vector<2x512xf32>
      tpu.vector_store %arg18[%c0_34, %c0_35], %86 {strides = array<i32>} : memref<2x512xf32, #tpu.memory_space<vmem>>, vector<2x512xf32>,
    } else {
    }
    %c3_i32_27 = arith.constant 3 : i32
    %77 = arith.cmpi eq, %arg1, %c3_i32_27 : i32
    %78 = arith.extui %77 : i1 to i32
    %c0_i32_28 = arith.constant 0 : i32
    %79 = arith.cmpi ne, %78, %c0_i32_28 : i32
    scf.if %79 {
      %c64_i32 = arith.constant 64 : i32
      %83 = arith.muli %arg1, %c64_i32 : i32
      %84 = tpu.iota {dimensions = array<i32: 1>} : vector<1x64x1xi32>
      %85 = vector.broadcast %83 : i32 to vector<1x64x1xi32>
      %86 = arith.addi %85, %84 : vector<1x64x1xi32>
      %c200_i32 = arith.constant 200 : i32
      %87 = vector.broadcast %c200_i32 : i32 to vector<1x64x1xi32>
      %88 = arith.cmpi slt, %86, %87 : vector<1x64x1xi32>
      %cst_31 = arith.constant 0xFF800000 : f32
      %89 = arith.truncf %cst_31 : f32 to bf16
      %90 = vector.shape_cast %88 : vector<1x64x1xi1> to vector<1x64x1xi1>
      %91 = vector.broadcast %90 : vector<1x64x1xi1> to vector<2x64x512xi1>
      %92 = vector.broadcast %89 : bf16 to vector<2x64x512xbf16>
      %93 = arith.select %91, %73, %92 : vector<2x64x512xi1>, vector<2x64x512xbf16>
      %c0_32 = arith.constant 0 : index
      %c0_33 = arith.constant 0 : index
      %94 = vector.load %arg18[%c0_32, %c0_33] : memref<2x512xf32, #tpu.memory_space<vmem>>, vector<2x512xf32>
      %cst_34 = arith.constant dense<0xFF80> : vector<2x512xbf16>
      %95 = vector.multi_reduction <maximumf>, %93, %cst_34 [1] : vector<2x64x512xbf16> to vector<2x512xbf16>
      %96 = arith.extf %95 : vector<2x512xbf16> to vector<2x512xf32>
      %97 = arith.maximumf %94, %96 : vector<2x512xf32>
      %c0_35 = arith.constant 0 : index
      %c0_36 = arith.constant 0 : index
      %98 = vector.load %arg18[%c0_35, %c0_36] : memref<2x512xf32, #tpu.memory_space<vmem>>, vector<2x512xf32>
      tpu.vector_store %arg18[%c0_35, %c0_36], %97 {strides = array<i32>} : memref<2x512xf32, #tpu.memory_space<vmem>>, vector<2x512xf32>,
    } else {
    }
    %c3_i32_29 = arith.constant 3 : i32
    %80 = arith.cmpi eq, %arg1, %c3_i32_29 : i32
    %81 = arith.extui %80 : i1 to i32
    %c0_i32_30 = arith.constant 0 : i32
    %82 = arith.cmpi ne, %81, %c0_i32_30 : i32
    scf.if %82 {
      %c0_31 = arith.constant 0 : index
      %c0_32 = arith.constant 0 : index
      %83 = vector.load %arg18[%c0_31, %c0_32] : memref<2x512xf32, #tpu.memory_space<vmem>>, vector<2x512xf32>
      %84 = arith.truncf %83 : vector<2x512xf32> to vector<2x512xbf16>
      %c0_33 = arith.constant 0 : index
      %c0_34 = arith.constant 0 : index
      %85 = vector.load %arg9[%c0_33, %c0_34] : memref<512x256xbf16, #tpu.memory_space<vmem>>, vector<512x256xbf16>
      %cst_35 = arith.constant dense<0.000000e+00> : vector<2x256xf32>
      %86 = tpu.matmul %84, %85, %cst_35 {dimension_numbers = #tpu.dot_dimension_numbers<[1], [0], [0], [1], [0, 0, 1, 1], [], []>} : vector<2x512xbf16>, vector<512x256xbf16>, vector<2x256xf32> -> vector<2x256xf32>
      %c0_36 = arith.constant 0 : index
      %c0_37 = arith.constant 0 : index
      %87 = vector.load %arg16[%c0_36, %c0_37] : memref<7x2048xf32, #tpu.memory_space<vmem>>, vector<1x256xf32>
      %88 = vector.shape_cast %87 : vector<1x256xf32> to vector<256xf32>
      %89 = vector.shape_cast %88 : vector<256xf32> to vector<1x256xf32>
      %90 = vector.broadcast %89 : vector<1x256xf32> to vector<2x256xf32>
      %91 = arith.addf %86, %90 : vector<2x256xf32>
      %cst_38 = arith.constant 0.000000e+00 : f32
      %92 = vector.broadcast %cst_38 : f32 to vector<2x256xf32>
      %93 = arith.maximumf %91, %92 : vector<2x256xf32>
      %94 = arith.truncf %93 : vector<2x256xf32> to vector<2x256xbf16>
      %c0_39 = arith.constant 0 : index
      %c0_40 = arith.constant 0 : index
      %95 = vector.load %arg10[%c0_39, %c0_40] : memref<256x2048xbf16, #tpu.memory_space<vmem>>, vector<256x2048xbf16>
      %cst_41 = arith.constant dense<0.000000e+00> : vector<2x2048xf32>
      %96 = tpu.matmul %94, %95, %cst_41 {dimension_numbers = #tpu.dot_dimension_numbers<[1], [0], [0], [1], [0, 0, 1, 1], [], []>} : vector<2x256xbf16>, vector<256x2048xbf16>, vector<2x2048xf32> -> vector<2x2048xf32>
      %c1_42 = arith.constant 1 : index
      %c0_43 = arith.constant 0 : index
      %97 = vector.load %arg16[%c1_42, %c0_43] : memref<7x2048xf32, #tpu.memory_space<vmem>>, vector<1x2048xf32>
      %98 = vector.shape_cast %97 : vector<1x2048xf32> to vector<2048xf32>
      %99 = vector.shape_cast %98 : vector<2048xf32> to vector<1x2048xf32>
      %100 = vector.broadcast %99 : vector<1x2048xf32> to vector<2x2048xf32>
      %101 = arith.addf %96, %100 : vector<2x2048xf32>
      %102 = arith.truncf %101 : vector<2x2048xf32> to vector<2x2048xbf16>
      %c0_44 = arith.constant 0 : index
      %c0_45 = arith.constant 0 : index
      %103 = vector.load %arg11[%c0_44, %c0_45] : memref<2048x512xbf16, #tpu.memory_space<vmem>>, vector<2048x512xbf16>
      %cst_46 = arith.constant dense<0.000000e+00> : vector<2x512xf32>
      %104 = tpu.matmul %102, %103, %cst_46 {dimension_numbers = #tpu.dot_dimension_numbers<[1], [0], [0], [1], [0, 0, 1, 1], [], []>} : vector<2x2048xbf16>, vector<2048x512xbf16>, vector<2x512xf32> -> vector<2x512xf32>
      %c2_47 = arith.constant 2 : index
      %c0_48 = arith.constant 0 : index
      %105 = vector.load %arg16[%c2_47, %c0_48] : memref<7x2048xf32, #tpu.memory_space<vmem>>, vector<1x512xf32>
      %106 = vector.shape_cast %105 : vector<1x512xf32> to vector<512xf32>
      %107 = vector.shape_cast %106 : vector<512xf32> to vector<1x512xf32>
      %108 = vector.broadcast %107 : vector<1x512xf32> to vector<2x512xf32>
      %109 = arith.addf %104, %108 : vector<2x512xf32>
      %cst_49 = arith.constant 0.000000e+00 : f32
      %110 = vector.broadcast %cst_49 : f32 to vector<2x512xf32>
      %111 = arith.maximumf %109, %110 : vector<2x512xf32>
      %112 = arith.truncf %111 : vector<2x512xf32> to vector<2x512xbf16>
      %c0_50 = arith.constant 0 : index
      %c0_51 = arith.constant 0 : index
      %113 = vector.load %arg12[%c0_50, %c0_51] : memref<512x512xbf16, #tpu.memory_space<vmem>>, vector<512x512xbf16>
      %cst_52 = arith.constant dense<0.000000e+00> : vector<2x512xf32>
      %114 = tpu.matmul %112, %113, %cst_52 {dimension_numbers = #tpu.dot_dimension_numbers<[1], [0], [0], [1], [0, 0, 1, 1], [], []>} : vector<2x512xbf16>, vector<512x512xbf16>, vector<2x512xf32> -> vector<2x512xf32>
      %c3_53 = arith.constant 3 : index
      %c0_54 = arith.constant 0 : index
      %115 = vector.load %arg16[%c3_53, %c0_54] : memref<7x2048xf32, #tpu.memory_space<vmem>>, vector<1x512xf32>
      %116 = vector.shape_cast %115 : vector<1x512xf32> to vector<512xf32>
      %117 = vector.shape_cast %116 : vector<512xf32> to vector<1x512xf32>
      %118 = vector.broadcast %117 : vector<1x512xf32> to vector<2x512xf32>
      %119 = arith.addf %114, %118 : vector<2x512xf32>
      %cst_55 = arith.constant 0.000000e+00 : f32
      %120 = vector.broadcast %cst_55 : f32 to vector<2x512xf32>
      %121 = arith.maximumf %119, %120 : vector<2x512xf32>
      %122 = arith.truncf %121 : vector<2x512xf32> to vector<2x512xbf16>
      %c0_56 = arith.constant 0 : index
      %c0_57 = arith.constant 0 : index
      %123 = vector.load %arg13[%c0_56, %c0_57] : memref<512x128xbf16, #tpu.memory_space<vmem>>, vector<512x128xbf16>
      %cst_58 = arith.constant dense<0.000000e+00> : vector<2x128xf32>
      %124 = tpu.matmul %122, %123, %cst_58 {dimension_numbers = #tpu.dot_dimension_numbers<[1], [0], [0], [1], [0, 0, 1, 1], [], []>} : vector<2x512xbf16>, vector<512x128xbf16>, vector<2x128xf32> -> vector<2x128xf32>
      %c4_59 = arith.constant 4 : index
      %c0_60 = arith.constant 0 : index
      %125 = vector.load %arg16[%c4_59, %c0_60] : memref<7x2048xf32, #tpu.memory_space<vmem>>, vector<1x128xf32>
      %126 = vector.shape_cast %125 : vector<1x128xf32> to vector<128xf32>
      %127 = vector.shape_cast %126 : vector<128xf32> to vector<1x128xf32>
      %128 = vector.broadcast %127 : vector<1x128xf32> to vector<2x128xf32>
      %129 = arith.addf %124, %128 : vector<2x128xf32>
      %cst_61 = arith.constant 0.000000e+00 : f32
      %130 = vector.broadcast %cst_61 : f32 to vector<2x128xf32>
      %131 = arith.maximumf %129, %130 : vector<2x128xf32>
      %132 = arith.truncf %131 : vector<2x128xf32> to vector<2x128xbf16>
      %c0_62 = arith.constant 0 : index
      %c0_63 = arith.constant 0 : index
      %133 = vector.load %arg14[%c0_62, %c0_63] : memref<128x64xbf16, #tpu.memory_space<vmem>>, vector<128x64xbf16>
      %cst_64 = arith.constant dense<0.000000e+00> : vector<2x64xf32>
      %134 = tpu.matmul %132, %133, %cst_64 {dimension_numbers = #tpu.dot_dimension_numbers<[1], [0], [0], [1], [0, 0, 1, 1], [], []>} : vector<2x128xbf16>, vector<128x64xbf16>, vector<2x64xf32> -> vector<2x64xf32>
      %c5 = arith.constant 5 : index
      %c0_65 = arith.constant 0 : index
      %135 = vector.load %arg16[%c5, %c0_65] : memref<7x2048xf32, #tpu.memory_space<vmem>>, vector<1x64xf32>
      %136 = vector.shape_cast %135 : vector<1x64xf32> to vector<64xf32>
      %137 = vector.shape_cast %136 : vector<64xf32> to vector<1x64xf32>
      %138 = vector.broadcast %137 : vector<1x64xf32> to vector<2x64xf32>
      %139 = arith.addf %134, %138 : vector<2x64xf32>
      %cst_66 = arith.constant 0.000000e+00 : f32
      %140 = vector.broadcast %cst_66 : f32 to vector<2x64xf32>
      %141 = arith.maximumf %139, %140 : vector<2x64xf32>
      %142 = arith.truncf %141 : vector<2x64xf32> to vector<2x64xbf16>
      %c0_67 = arith.constant 0 : index
      %c0_68 = arith.constant 0 : index
      %143 = vector.load %arg15[%c0_67, %c0_68] : memref<64x1xbf16, #tpu.memory_space<vmem>>, vector<64x1xbf16>
      %cst_69 = arith.constant dense<0.000000e+00> : vector<2x1xf32>
      %144 = tpu.matmul %142, %143, %cst_69 {dimension_numbers = #tpu.dot_dimension_numbers<[1], [0], [0], [1], [0, 0, 1, 1], [], []>} : vector<2x64xbf16>, vector<64x1xbf16>, vector<2x1xf32> -> vector<2x1xf32>
      %c6 = arith.constant 6 : index
      %c0_70 = arith.constant 0 : index
      %145 = vector.load %arg16[%c6, %c0_70] : memref<7x2048xf32, #tpu.memory_space<vmem>>, vector<1x1xf32>
      %146 = vector.shape_cast %145 : vector<1x1xf32> to vector<1xf32>
      %147 = vector.shape_cast %146 : vector<1xf32> to vector<1x1xf32>
      %148 = vector.broadcast %147 : vector<1x1xf32> to vector<2x1xf32>
      %149 = arith.addf %144, %148 : vector<2x1xf32>
      %c0_71 = arith.constant 0 : index
      %c0_72 = arith.constant 0 : index
      %150 = vector.load %arg17[%c0_71, %c0_72] : memref<2x1xf32, #tpu.memory_space<vmem>>, vector<2x1xf32>
      tpu.vector_store %arg17[%c0_71, %c0_72], %149 {strides = array<i32>} : memref<2x1xf32, #tpu.memory_space<vmem>>, vector<2x1xf32>,
    } else {
    }
    return
  }
  func.func @transform_0(%arg0: i32, %arg1: i32) -> (i32, i32, i32) {
    %c0_i32 = arith.constant 0 : i32
    %c0_i32_0 = arith.constant 0 : i32
    return %arg0, %arg1, %c0_i32 : i32, i32, i32
  }
  func.func @transform_1(%arg0: i32, %arg1: i32) -> (i32, i32) {
    %c0_i32 = arith.constant 0 : i32
    %c0_i32_0 = arith.constant 0 : i32
    %c0_i32_1 = arith.constant 0 : i32
    return %c0_i32, %c0_i32_0 : i32, i32
  }
  func.func @transform_2(%arg0: i32, %arg1: i32) -> (i32, i32) {
    %c0_i32 = arith.constant 0 : i32
    %c0_i32_0 = arith.constant 0 : i32
    %c0_i32_1 = arith.constant 0 : i32
    return %c0_i32, %c0_i32_0 : i32, i32
  }
  func.func @transform_3(%arg0: i32, %arg1: i32) -> (i32, i32) {
    %c0_i32 = arith.constant 0 : i32
    %c0_i32_0 = arith.constant 0 : i32
    %c0_i32_1 = arith.constant 0 : i32
    return %c0_i32, %c0_i32_0 : i32, i32
  }
  func.func @transform_4(%arg0: i32, %arg1: i32) -> (i32, i32) {
    %c0_i32 = arith.constant 0 : i32
    %c0_i32_0 = arith.constant 0 : i32
    %c0_i32_1 = arith.constant 0 : i32
    return %c0_i32, %c0_i32_0 : i32, i32
  }
  func.func @transform_5(%arg0: i32, %arg1: i32) -> (i32, i32) {
    %c0_i32 = arith.constant 0 : i32
    %c0_i32_0 = arith.constant 0 : i32
    %c0_i32_1 = arith.constant 0 : i32
    return %c0_i32, %c0_i32_0 : i32, i32
  }
  func.func @transform_6(%arg0: i32, %arg1: i32) -> (i32, i32) {
    %c0_i32 = arith.constant 0 : i32
    %c0_i32_0 = arith.constant 0 : i32
    %c0_i32_1 = arith.constant 0 : i32
    return %c0_i32, %c0_i32_0 : i32, i32
  }
  func.func @transform_7(%arg0: i32, %arg1: i32) -> (i32, i32) {
    %c0_i32 = arith.constant 0 : i32
    %c0_i32_0 = arith.constant 0 : i32
    %c0_i32_1 = arith.constant 0 : i32
    return %c0_i32, %c0_i32_0 : i32, i32
  }
  func.func @transform_8(%arg0: i32, %arg1: i32) -> (i32, i32) {
    %c0_i32 = arith.constant 0 : i32
    %c0_i32_0 = arith.constant 0 : i32
    %c0_i32_1 = arith.constant 0 : i32
    return %c0_i32, %c0_i32_0 : i32, i32
  }
  func.func @transform_9(%arg0: i32, %arg1: i32) -> (i32, i32) {
    %c0_i32 = arith.constant 0 : i32
    %c0_i32_0 = arith.constant 0 : i32
    %c0_i32_1 = arith.constant 0 : i32
    return %c0_i32, %c0_i32_0 : i32, i32
  }
  func.func @transform_10(%arg0: i32, %arg1: i32) -> (i32, i32) {
    %c0_i32 = arith.constant 0 : i32
    %c0_i32_0 = arith.constant 0 : i32
    %c0_i32_1 = arith.constant 0 : i32
    return %c0_i32, %c0_i32_0 : i32, i32
  }
  func.func @transform_11(%arg0: i32, %arg1: i32) -> (i32, i32) {
    %c0_i32 = arith.constant 0 : i32
    %c0_i32_0 = arith.constant 0 : i32
    %c0_i32_1 = arith.constant 0 : i32
    return %c0_i32, %c0_i32_0 : i32, i32
  }
  func.func @transform_12(%arg0: i32, %arg1: i32) -> (i32, i32) {
    %c0_i32 = arith.constant 0 : i32
    %c0_i32_0 = arith.constant 0 : i32
    %c0_i32_1 = arith.constant 0 : i32
    return %c0_i32, %c0_i32_0 : i32, i32
  }
  func.func @transform_13(%arg0: i32, %arg1: i32) -> (i32, i32) {
    %c0_i32 = arith.constant 0 : i32
    %c0_i32_0 = arith.constant 0 : i32
    %c0_i32_1 = arith.constant 0 : i32
    return %c0_i32, %c0_i32_0 : i32, i32
  }
  func.func @transform_14(%arg0: i32, %arg1: i32) -> (i32, i32) {
    %c0_i32 = arith.constant 0 : i32
    %c0_i32_0 = arith.constant 0 : i32
    %c0_i32_1 = arith.constant 0 : i32
    return %c0_i32, %c0_i32_0 : i32, i32
  }
  func.func @transform_15(%arg0: i32, %arg1: i32) -> (i32, i32) {
    %c0_i32 = arith.constant 0 : i32
    %c0_i32_0 = arith.constant 0 : i32
    return %arg0, %c0_i32 : i32, i32
  }
}

</mosaic_0001>

<llo_original>
// kernel: discriminator_forward.1
$region0: #{discriminator_forward.1}
  #allocation0 [shape = 'u32[]', space=smem, size = 0x4, offset = 0x4, fixed_abs, tag = 'smem constant byte address 0x4 - core index']
  #allocation1 [shape = 'u32[72,128]{1,0:T(1,128)}', space=vmem, size = 0x9000, scoped, tag = 'internal scratch']
  #allocation2 [shape = 'f32[2,512]{1,0:T(2,128)}', space=vmem, size = 0x1000, scoped, tag = 'scratch operand']
  %s0 = inlined_call_operand.vmem [shape: f32[2,256,3], index: 0, kind: input, shape index: {}]
  %s1 = inlined_call_operand.vmem [shape: f32[3,64], index: 1, kind: input, shape index: {}]
  %s2 = inlined_call_operand.vmem [shape: bf16[64,128], index: 2, kind: input, shape index: {}]
  %s3 = inlined_call_operand.vmem [shape: bf16[128,256], index: 3, kind: input, shape index: {}]
  %s4 = inlined_call_operand.vmem [shape: bf16[256,256], index: 4, kind: input, shape index: {}]
  %s5 = inlined_call_operand.vmem [shape: bf16[256,512], index: 5, kind: input, shape index: {}]
  %s6 = inlined_call_operand.vmem [shape: f32[5,512], index: 6, kind: input, shape index: {}]
  %s7 = inlined_call_operand.vmem [shape: bf16[512,256], index: 7, kind: input, shape index: {}]
  %s8 = inlined_call_operand.vmem [shape: bf16[256,2048], index: 8, kind: input, shape index: {}]
  %s9 = inlined_call_operand.vmem [shape: bf16[2048,512], index: 9, kind: input, shape index: {}]
  %s10 = inlined_call_operand.vmem [shape: bf16[512,512], index: 10, kind: input, shape index: {}]
  %s11 = inlined_call_operand.vmem [shape: bf16[512,128], index: 11, kind: input, shape index: {}]
  %s12 = inlined_call_operand.vmem [shape: bf16[128,64], index: 12, kind: input, shape index: {}]
  %s13 = inlined_call_operand.vmem [shape: bf16[64,1], index: 13, kind: input, shape index: {}]
  %s14 = inlined_call_operand.vmem [shape: f32[7,2048], index: 14, kind: input, shape index: {}]
  %s15 = inlined_call_operand.vmem [shape: f32[2,1], index: 15, kind: output, shape index: {}]
  %s16 = sld [smem:[#allocation0]]
  $region143: #{discriminator_forward.1} parent=0
    _
  %s18 = ssub.s32 1, %s16
  %s19 = scalar_select 0, %s18, %s16
  $region1: #{discriminator_forward.1} parent=0
    #allocation3 [shape = 'u8[131072]{0}', space=vmem, size = 0x20000, scoped, tag = 'input window, operand 0']
    loop: start=0, step=1, limit=6
    $region2: #{discriminator_forward.1} parent=1 // loop_pre_header
      _
    $region3: #{discriminator_forward.1} parent=1 // loop_header
      %s21 = sphi 0, %s25
      %p22 = scmp.ge.s32.totalorder %s21, 6
      %s28 = sphi 0, %s40
      %s29 = sphi 0, %s36
      %s30 = sphi 0, %s28
      %s31 = sphi 0, %s29
      %s32 = sphi 0, %s30
      %s33 = sphi 0, %s31
      %s45 = sphi 0, %s47
      %s48 = sphi 0, %s45
      %s49 = sphi 0, %s48
      %s65 = sphi 0, %s49
      %s69 = sphi 0, %s69
      %s71 = sphi 0, %s69
      %s72 = sphi 0, %s71
      %s86 = sphi 0, %s72
      %s90 = sphi 0, %s90
      %s92 = sphi 0, %s90
      %s93 = sphi 0, %s92
      %s107 = sphi 0, %s93
      %s111 = sphi 0, %s111
      %s113 = sphi 0, %s111
      %s114 = sphi 0, %s113
      %s128 = sphi 0, %s114
      %s132 = sphi 0, %s132
      %s134 = sphi 0, %s132
      %s135 = sphi 0, %s134
      %s149 = sphi 0, %s135
      %s153 = sphi 0, %s153
      %s155 = sphi 0, %s153
      %s156 = sphi 0, %s155
      %s170 = sphi 0, %s156
      %s174 = sphi 0, %s174
      %s176 = sphi 0, %s174
      %s177 = sphi 0, %s176
      %s191 = sphi 0, %s177
      %s195 = sphi 0, %s195
      %s197 = sphi 0, %s195
      %s198 = sphi 0, %s197
      %s212 = sphi 0, %s198
      %s216 = sphi 0, %s216
      %s218 = sphi 0, %s216
      %s219 = sphi 0, %s218
      %s233 = sphi 0, %s219
      %s237 = sphi 0, %s237
      %s239 = sphi 0, %s237
      %s240 = sphi 0, %s239
      %s254 = sphi 0, %s240
      %s258 = sphi 0, %s258
      %s260 = sphi 0, %s258
      %s261 = sphi 0, %s260
      %s275 = sphi 0, %s261
      %s279 = sphi 0, %s279
      %s281 = sphi 0, %s279
      %s282 = sphi 0, %s281
      %s296 = sphi 0, %s282
      %s300 = sphi 0, %s300
      %s302 = sphi 0, %s300
      %s303 = sphi 0, %s302
      %s317 = sphi 0, %s303
      %s321 = sphi 0, %s321
      %s323 = sphi 0, %s321
      %s324 = sphi 0, %s323
      %s338 = sphi 0, %s324
      %s342 = sphi 0, %s342
      %s344 = sphi 0, %s342
      %s345 = sphi 0, %s344
      %s359 = sphi 0, %s345
      %s365 = sphi 0, %s367
      %s368 = sphi 0, %s365
      %s369 = sphi 0, %s368
      %s385 = sphi 0, %s369
    $region4: #{discriminator_forward.1} parent=1 // loop_header_branch
      %24 = sbr.rel (%p22) target = $region8
    $region5: #{discriminator_forward.1} parent=1 // loop_body
      %s26 = ssub.s32 %s21, 1
      %s27 = ssub.s32 %s21, 2
      %s34 = sadd.s32 1, %s29
      %p35 = scmp.ge.s32.totalorder %s34, 4
      %s36 = scalar_select %p35, 0, %s34
      %s37 = sadd.s32 1, %s28
      %s38 = scalar_select %p35, %s37, %s28
      %p39 = scmp.ge.s32.totalorder %s38, 1
      %s40 = scalar_select %p39, 0, %s38
      %s41 = ssub.s32 %s28, %s40
      %s42 = ssub.s32 %s29, %s36
      %s43 = sor.u32 %s41, %s42
      %p44 = scmp.eq.s32.totalorder %s43, 0
      %s46 = sadd.s32 %s45, 1
      %s47 = scalar_select %p44, %s45, %s46
      %p50 = pneg %p44
      %p51 = scmp.eq.s32.totalorder %s21, 3
      %p52 = por %p50, %p51
      %p53 = scmp.ne.s32.totalorder %s45, %s48
      %p54 = scmp.eq.s32.totalorder %s21, 0
      %p55 = por %p53, %p54
      %p56 = scmp.ne.s32.totalorder %s45, %s48
      %p57 = scmp.eq.s32.totalorder %s26, 3
      %p58 = por %p56, %p57
      %p59 = scmp.ne.s32.totalorder %s48, %s49
      %p60 = scmp.eq.s32.totalorder %s26, 0
      %p61 = por %p59, %p60
      %p62 = scmp.ne.s32.totalorder %s48, %s49
      %p63 = scmp.eq.s32.totalorder %s27, 3
      %p64 = por %p62, %p63
      %p66 = scmp.ne.s32.totalorder %s49, %s65
      %p67 = scmp.eq.s32.totalorder %s27, 0
      %p68 = por %p66, %p67
      %s70 = sadd.s32 %s69, 1
      %p73 = scmp.eq.s32.totalorder %s21, 3
      %p74 = scmp.ne.s32.totalorder %s69, %s71
      %p75 = scmp.eq.s32.totalorder %s21, 0
      %p76 = por %p74, %p75
      %p77 = scmp.ne.s32.totalorder %s69, %s71
      %p78 = scmp.eq.s32.totalorder %s26, 3
      %p79 = por %p77, %p78
      %p80 = scmp.ne.s32.totalorder %s71, %s72
      %p81 = scmp.eq.s32.totalorder %s26, 0
      %p82 = por %p80, %p81
      %p83 = scmp.ne.s32.totalorder %s71, %s72
      %p84 = scmp.eq.s32.totalorder %s27, 3
      %p85 = por %p83, %p84
      %p87 = scmp.ne.s32.totalorder %s72, %s86
      %p88 = scmp.eq.s32.totalorder %s27, 0
      %p89 = por %p87, %p88
      %s91 = sadd.s32 %s90, 1
      %p94 = scmp.eq.s32.totalorder %s21, 3
      %p95 = scmp.ne.s32.totalorder %s90, %s92
      %p96 = scmp.eq.s32.totalorder %s21, 0
      %p97 = por %p95, %p96
      %p98 = scmp.ne.s32.totalorder %s90, %s92
      %p99 = scmp.eq.s32.totalorder %s26, 3
      %p100 = por %p98, %p99
      %p101 = scmp.ne.s32.totalorder %s92, %s93
      %p102 = scmp.eq.s32.totalorder %s26, 0
      %p103 = por %p101, %p102
      %p104 = scmp.ne.s32.totalorder %s92, %s93
      %p105 = scmp.eq.s32.totalorder %s27, 3
      %p106 = por %p104, %p105
      %p108 = scmp.ne.s32.totalorder %s93, %s107
      %p109 = scmp.eq.s32.totalorder %s27, 0
      %p110 = por %p108, %p109
      %s112 = sadd.s32 %s111, 1
      %p115 = scmp.eq.s32.totalorder %s21, 3
      %p116 = scmp.ne.s32.totalorder %s111, %s113
      %p117 = scmp.eq.s32.totalorder %s21, 0
      %p118 = por %p116, %p117
      %p119 = scmp.ne.s32.totalorder %s111, %s113
      %p120 = scmp.eq.s32.totalorder %s26, 3
      %p121 = por %p119, %p120
      %p122 = scmp.ne.s32.totalorder %s113, %s114
      %p123 = scmp.eq.s32.totalorder %s26, 0
      %p124 = por %p122, %p123
      %p125 = scmp.ne.s32.totalorder %s113, %s114
      %p126 = scmp.eq.s32.totalorder %s27, 3
      %p127 = por %p125, %p126
      %p129 = scmp.ne.s32.totalorder %s114, %s128
      %p130 = scmp.eq.s32.totalorder %s27, 0
      %p131 = por %p129, %p130
      %s133 = sadd.s32 %s132, 1
      %p136 = scmp.eq.s32.totalorder %s21, 3
      %p137 = scmp.ne.s32.totalorder %s132, %s134
      %p138 = scmp.eq.s32.totalorder %s21, 0
      %p139 = por %p137, %p138
      %p140 = scmp.ne.s32.totalorder %s132, %s134
      %p141 = scmp.eq.s32.totalorder %s26, 3
      %p142 = por %p140, %p141
      %p143 = scmp.ne.s32.totalorder %s134, %s135
      %p144 = scmp.eq.s32.totalorder %s26, 0
      %p145 = por %p143, %p144
      %p146 = scmp.ne.s32.totalorder %s134, %s135
      %p147 = scmp.eq.s32.totalorder %s27, 3
      %p148 = por %p146, %p147
      %p150 = scmp.ne.s32.totalorder %s135, %s149
      %p151 = scmp.eq.s32.totalorder %s27, 0
      %p152 = por %p150, %p151
      %s154 = sadd.s32 %s153, 1
      %p157 = scmp.eq.s32.totalorder %s21, 3
      %p158 = scmp.ne.s32.totalorder %s153, %s155
      %p159 = scmp.eq.s32.totalorder %s21, 0
      %p160 = por %p158, %p159
      %p161 = scmp.ne.s32.totalorder %s153, %s155
      %p162 = scmp.eq.s32.totalorder %s26, 3
      %p163 = por %p161, %p162
      %p164 = scmp.ne.s32.totalorder %s155, %s156
      %p165 = scmp.eq.s32.totalorder %s26, 0
      %p166 = por %p164, %p165
      %p167 = scmp.ne.s32.totalorder %s155, %s156
      %p168 = scmp.eq.s32.totalorder %s27, 3
      %p169 = por %p167, %p168
      %p171 = scmp.ne.s32.totalorder %s156, %s170
      %p172 = scmp.eq.s32.totalorder %s27, 0
      %p173 = por %p171, %p172
      %s175 = sadd.s32 %s174, 1
      %p178 = scmp.eq.s32.totalorder %s21, 3
      %p179 = scmp.ne.s32.totalorder %s174, %s176
      %p180 = scmp.eq.s32.totalorder %s21, 0
      %p181 = por %p179, %p180
      %p182 = scmp.ne.s32.totalorder %s174, %s176
      %p183 = scmp.eq.s32.totalorder %s26, 3
      %p184 = por %p182, %p183
      %p185 = scmp.ne.s32.totalorder %s176, %s177
      %p186 = scmp.eq.s32.totalorder %s26, 0
      %p187 = por %p185, %p186
      %p188 = scmp.ne.s32.totalorder %s176, %s177
      %p189 = scmp.eq.s32.totalorder %s27, 3
      %p190 = por %p188, %p189
      %p192 = scmp.ne.s32.totalorder %s177, %s191
      %p193 = scmp.eq.s32.totalorder %s27, 0
      %p194 = por %p192, %p193
      %s196 = sadd.s32 %s195, 1
      %p199 = scmp.eq.s32.totalorder %s21, 3
      %p200 = scmp.ne.s32.totalorder %s195, %s197
      %p201 = scmp.eq.s32.totalorder %s21, 0
      %p202 = por %p200, %p201
      %p203 = scmp.ne.s32.totalorder %s195, %s197
      %p204 = scmp.eq.s32.totalorder %s26, 3
      %p205 = por %p203, %p204
      %p206 = scmp.ne.s32.totalorder %s197, %s198
      %p207 = scmp.eq.s32.totalorder %s26, 0
      %p208 = por %p206, %p207
      %p209 = scmp.ne.s32.totalorder %s197, %s198
      %p210 = scmp.eq.s32.totalorder %s27, 3
      %p211 = por %p209, %p210
      %p213 = scmp.ne.s32.totalorder %s198, %s212
      %p214 = scmp.eq.s32.totalorder %s27, 0
      %p215 = por %p213, %p214
      %s217 = sadd.s32 %s216, 1
      %p220 = scmp.eq.s32.totalorder %s21, 3
      %p221 = scmp.ne.s32.totalorder %s216, %s218
      %p222 = scmp.eq.s32.totalorder %s21, 0
      %p223 = por %p221, %p222
      %p224 = scmp.ne.s32.totalorder %s216, %s218
      %p225 = scmp.eq.s32.totalorder %s26, 3
      %p226 = por %p224, %p225
      %p227 = scmp.ne.s32.totalorder %s218, %s219
      %p228 = scmp.eq.s32.totalorder %s26, 0
      %p229 = por %p227, %p228
      %p230 = scmp.ne.s32.totalorder %s218, %s219
      %p231 = scmp.eq.s32.totalorder %s27, 3
      %p232 = por %p230, %p231
      %p234 = scmp.ne.s32.totalorder %s219, %s233
      %p235 = scmp.eq.s32.totalorder %s27, 0
      %p236 = por %p234, %p235
      %s238 = sadd.s32 %s237, 1
      %p241 = scmp.eq.s32.totalorder %s21, 3
      %p242 = scmp.ne.s32.totalorder %s237, %s239
      %p243 = scmp.eq.s32.totalorder %s21, 0
      %p244 = por %p242, %p243
      %p245 = scmp.ne.s32.totalorder %s237, %s239
      %p246 = scmp.eq.s32.totalorder %s26, 3
      %p247 = por %p245, %p246
      %p248 = scmp.ne.s32.totalorder %s239, %s240
      %p249 = scmp.eq.s32.totalorder %s26, 0
      %p250 = por %p248, %p249
      %p251 = scmp.ne.s32.totalorder %s239, %s240
      %p252 = scmp.eq.s32.totalorder %s27, 3
      %p253 = por %p251, %p252
      %p255 = scmp.ne.s32.totalorder %s240, %s254
      %p256 = scmp.eq.s32.totalorder %s27, 0
      %p257 = por %p255, %p256
      %s259 = sadd.s32 %s258, 1
      %p262 = scmp.eq.s32.totalorder %s21, 3
      %p263 = scmp.ne.s32.totalorder %s258, %s260
      %p264 = scmp.eq.s32.totalorder %s21, 0
      %p265 = por %p263, %p264
      %p266 = scmp.ne.s32.totalorder %s258, %s260
      %p267 = scmp.eq.s32.totalorder %s26, 3
      %p268 = por %p266, %p267
      %p269 = scmp.ne.s32.totalorder %s260, %s261
      %p270 = scmp.eq.s32.totalorder %s26, 0
      %p271 = por %p269, %p270
      %p272 = scmp.ne.s32.totalorder %s260, %s261
      %p273 = scmp.eq.s32.totalorder %s27, 3
      %p274 = por %p272, %p273
      %p276 = scmp.ne.s32.totalorder %s261, %s275
      %p277 = scmp.eq.s32.totalorder %s27, 0
      %p278 = por %p276, %p277
      %s280 = sadd.s32 %s279, 1
      %p283 = scmp.eq.s32.totalorder %s21, 3
      %p284 = scmp.ne.s32.totalorder %s279, %s281
      %p285 = scmp.eq.s32.totalorder %s21, 0
      %p286 = por %p284, %p285
      %p287 = scmp.ne.s32.totalorder %s279, %s281
      %p288 = scmp.eq.s32.totalorder %s26, 3
      %p289 = por %p287, %p288
      %p290 = scmp.ne.s32.totalorder %s281, %s282
      %p291 = scmp.eq.s32.totalorder %s26, 0
      %p292 = por %p290, %p291
      %p293 = scmp.ne.s32.totalorder %s281, %s282
      %p294 = scmp.eq.s32.totalorder %s27, 3
      %p295 = por %p293, %p294
      %p297 = scmp.ne.s32.totalorder %s282, %s296
      %p298 = scmp.eq.s32.totalorder %s27, 0
      %p299 = por %p297, %p298
      %s301 = sadd.s32 %s300, 1
      %p304 = scmp.eq.s32.totalorder %s21, 3
      %p305 = scmp.ne.s32.totalorder %s300, %s302
      %p306 = scmp.eq.s32.totalorder %s21, 0
      %p307 = por %p305, %p306
      %p308 = scmp.ne.s32.totalorder %s300, %s302
      %p309 = scmp.eq.s32.totalorder %s26, 3
      %p310 = por %p308, %p309
      %p311 = scmp.ne.s32.totalorder %s302, %s303
      %p312 = scmp.eq.s32.totalorder %s26, 0
      %p313 = por %p311, %p312
      %p314 = scmp.ne.s32.totalorder %s302, %s303
      %p315 = scmp.eq.s32.totalorder %s27, 3
      %p316 = por %p314, %p315
      %p318 = scmp.ne.s32.totalorder %s303, %s317
      %p319 = scmp.eq.s32.totalorder %s27, 0
      %p320 = por %p318, %p319
      %s322 = sadd.s32 %s321, 1
      %p325 = scmp.eq.s32.totalorder %s21, 3
      %p326 = scmp.ne.s32.totalorder %s321, %s323
      %p327 = scmp.eq.s32.totalorder %s21, 0
      %p328 = por %p326, %p327
      %p329 = scmp.ne.s32.totalorder %s321, %s323
      %p330 = scmp.eq.s32.totalorder %s26, 3
      %p331 = por %p329, %p330
      %p332 = scmp.ne.s32.totalorder %s323, %s324
      %p333 = scmp.eq.s32.totalorder %s26, 0
      %p334 = por %p332, %p333
      %p335 = scmp.ne.s32.totalorder %s323, %s324
      %p336 = scmp.eq.s32.totalorder %s27, 3
      %p337 = por %p335, %p336
      %p339 = scmp.ne.s32.totalorder %s324, %s338
      %p340 = scmp.eq.s32.totalorder %s27, 0
      %p341 = por %p339, %p340
      %s343 = sadd.s32 %s342, 1
      %p346 = scmp.eq.s32.totalorder %s21, 3
      %p347 = scmp.ne.s32.totalorder %s342, %s344
      %p348 = scmp.eq.s32.totalorder %s21, 0
      %p349 = por %p347, %p348
      %p350 = scmp.ne.s32.totalorder %s342, %s344
      %p351 = scmp.eq.s32.totalorder %s26, 3
      %p352 = por %p350, %p351
      %p353 = scmp.ne.s32.totalorder %s344, %s345
      %p354 = scmp.eq.s32.totalorder %s26, 0
      %p355 = por %p353, %p354
      %p356 = scmp.ne.s32.totalorder %s344, %s345
      %p357 = scmp.eq.s32.totalorder %s27, 3
      %p358 = por %p356, %p357
      %p360 = scmp.ne.s32.totalorder %s345, %s359
      %p361 = scmp.eq.s32.totalorder %s27, 0
      %p362 = por %p360, %p361
      %s363 = ssub.s32 %s28, %s40
      %p364 = scmp.eq.s32.totalorder %s363, 0
      %s366 = sadd.s32 %s365, 1
      %s367 = scalar_select %p364, %s365, %s366
      %p370 = pneg %p364
      %p371 = scmp.eq.s32.totalorder %s21, 3
      %p372 = por %p370, %p371
      %p373 = scmp.ne.s32.totalorder %s365, %s368
      %p374 = scmp.eq.s32.totalorder %s21, 0
      %p375 = por %p373, %p374
      %p376 = scmp.ne.s32.totalorder %s365, %s368
      %p377 = scmp.eq.s32.totalorder %s26, 3
      %p378 = por %p376, %p377
      %p379 = scmp.ne.s32.totalorder %s368, %s369
      %p380 = scmp.eq.s32.totalorder %s26, 0
      %p381 = por %p379, %p380
      %p382 = scmp.ne.s32.totalorder %s368, %s369
      %p383 = scmp.eq.s32.totalorder %s27, 3
      %p384 = por %p382, %p383
      %p386 = scmp.ne.s32.totalorder %s369, %s385
      %p387 = scmp.eq.s32.totalorder %s27, 0
      %p388 = por %p386, %p387
      %p389 = scmp.le.s32.totalorder 1, %s21
      %p390 = scmp.lt.s32.totalorder %s21, 5
      %p391 = pnand %p389, %p390
      %p392 = pneg %p391
      // Predicated region
      $region9: #{discriminator_forward.1} parent=5 // pred_check
        _
      $region10: #{discriminator_forward.1} parent=5 // pred_check_branch
        %394 = sbr.rel (%p391) target = $region12
      $region11: #{discriminator_forward.1} parent=5 // pred_region
        %s395 = ssub.s32 %s21, 1
        // Predicated region
        $region13: #{discriminator_forward.1} parent=11 // pred_check
          %p396 = pneg %p82
        $region14: #{discriminator_forward.1} parent=11 // pred_check_branch
          %398 = sbr.rel (%p396) target = $region16
        $region15: #{discriminator_forward.1} parent=11 // pred_region
          _
        $region16: #{discriminator_forward.1} parent=11 // pred_fallthru
          _
        // Predicated region
        $region17: #{discriminator_forward.1} parent=11 // pred_check
          %p399 = pneg %p103
        $region18: #{discriminator_forward.1} parent=11 // pred_check_branch
          %401 = sbr.rel (%p399) target = $region20
        $region19: #{discriminator_forward.1} parent=11 // pred_region
          _
        $region20: #{discriminator_forward.1} parent=11 // pred_fallthru
          _
        // Predicated region
        $region21: #{discriminator_forward.1} parent=11 // pred_check
          %p402 = pneg %p124
        $region22: #{discriminator_forward.1} parent=11 // pred_check_branch
          %404 = sbr.rel (%p402) target = $region24
        $region23: #{discriminator_forward.1} parent=11 // pred_region
          _
        $region24: #{discriminator_forward.1} parent=11 // pred_fallthru
          _
        // Predicated region
        $region25: #{discriminator_forward.1} parent=11 // pred_check
          %p405 = pneg %p145
        $region26: #{discriminator_forward.1} parent=11 // pred_check_branch
          %407 = sbr.rel (%p405) target = $region28
        $region27: #{discriminator_forward.1} parent=11 // pred_region
          _
        $region28: #{discriminator_forward.1} parent=11 // pred_fallthru
          _
        // Predicated region
        $region29: #{discriminator_forward.1} parent=11 // pred_check
          %p408 = pneg %p166
        $region30: #{discriminator_forward.1} parent=11 // pred_check_branch
          %410 = sbr.rel (%p408) target = $region32
        $region31: #{discriminator_forward.1} parent=11 // pred_region
          _
        $region32: #{discriminator_forward.1} parent=11 // pred_fallthru
          _
        // Predicated region
        $region33: #{discriminator_forward.1} parent=11 // pred_check
          %p411 = pneg %p187
        $region34: #{discriminator_forward.1} parent=11 // pred_check_branch
          %413 = sbr.rel (%p411) target = $region36
        $region35: #{discriminator_forward.1} parent=11 // pred_region
          _
        $region36: #{discriminator_forward.1} parent=11 // pred_fallthru
          _
        // Predicated region
        $region37: #{discriminator_forward.1} parent=11 // pred_check
          %p414 = pneg %p208
        $region38: #{discriminator_forward.1} parent=11 // pred_check_branch
          %416 = sbr.rel (%p414) target = $region40
        $region39: #{discriminator_forward.1} parent=11 // pred_region
          _
        $region40: #{discriminator_forward.1} parent=11 // pred_fallthru
          _
        // Predicated region
        $region41: #{discriminator_forward.1} parent=11 // pred_check
          %p417 = pneg %p229
        $region42: #{discriminator_forward.1} parent=11 // pred_check_branch
          %419 = sbr.rel (%p417) target = $region44
        $region43: #{discriminator_forward.1} parent=11 // pred_region
          _
        $region44: #{discriminator_forward.1} parent=11 // pred_fallthru
          _
        // Predicated region
        $region45: #{discriminator_forward.1} parent=11 // pred_check
          %p420 = pneg %p250
        $region46: #{discriminator_forward.1} parent=11 // pred_check_branch
          %422 = sbr.rel (%p420) target = $region48
        $region47: #{discriminator_forward.1} parent=11 // pred_region
          _
        $region48: #{discriminator_forward.1} parent=11 // pred_fallthru
          _
        // Predicated region
        $region49: #{discriminator_forward.1} parent=11 // pred_check
          %p423 = pneg %p271
        $region50: #{discriminator_forward.1} parent=11 // pred_check_branch
          %425 = sbr.rel (%p423) target = $region52
        $region51: #{discriminator_forward.1} parent=11 // pred_region
          _
        $region52: #{discriminator_forward.1} parent=11 // pred_fallthru
          _
        // Predicated region
        $region53: #{discriminator_forward.1} parent=11 // pred_check
          %p426 = pneg %p292
        $region54: #{discriminator_forward.1} parent=11 // pred_check_branch
          %428 = sbr.rel (%p426) target = $region56
        $region55: #{discriminator_forward.1} parent=11 // pred_region
          _
        $region56: #{discriminator_forward.1} parent=11 // pred_fallthru
          _
        // Predicated region
        $region57: #{discriminator_forward.1} parent=11 // pred_check
          %p429 = pneg %p313
        $region58: #{discriminator_forward.1} parent=11 // pred_check_branch
          %431 = sbr.rel (%p429) target = $region60
        $region59: #{discriminator_forward.1} parent=11 // pred_region
          _
        $region60: #{discriminator_forward.1} parent=11 // pred_fallthru
          _
        // Predicated region
        $region61: #{discriminator_forward.1} parent=11 // pred_check
          %p432 = pneg %p334
        $region62: #{discriminator_forward.1} parent=11 // pred_check_branch
          %434 = sbr.rel (%p432) target = $region64
        $region63: #{discriminator_forward.1} parent=11 // pred_region
          _
        $region64: #{discriminator_forward.1} parent=11 // pred_fallthru
          _
        // Predicated region
        $region65: #{discriminator_forward.1} parent=11 // pred_check
          %p435 = pneg %p355
        $region66: #{discriminator_forward.1} parent=11 // pred_check_branch
          %437 = sbr.rel (%p435) target = $region68
        $region67: #{discriminator_forward.1} parent=11 // pred_region
          _
        $region68: #{discriminator_forward.1} parent=11 // pred_fallthru
          _
      $region12: #{discriminator_forward.1} parent=5 // pred_fallthru
        _
      %p438 = scmp.lt.s32.totalorder %s21, 4
      // Predicated region
      $region69: #{discriminator_forward.1} parent=5 // pred_check
        %p439 = pneg %p438
      $region70: #{discriminator_forward.1} parent=5 // pred_check_branch
        %441 = sbr.rel (%p439) target = $region72
      $region71: #{discriminator_forward.1} parent=5 // pred_region
        // Predicated region
        $region73: #{discriminator_forward.1} parent=71 // pred_check
          %p442 = pneg %p55
        $region74: #{discriminator_forward.1} parent=71 // pred_check_branch
          %444 = sbr.rel (%p442) target = $region76
        $region75: #{discriminator_forward.1} parent=71 // pred_region
          %s445 = sand.u32 %s45, 1
          %s446 = sand.u32 %s45, 1
          %s447 = smul.addr %s446, 128
          %s448 = scalar_lea.vmem [#allocation3], %s447
          %s449 = smul.u32 2, %s28
          %s450 = smul.u32 8, %s29
          %s451 = smul.addr %s449, 32
          %s452 = sadd.s32 %s450, %s451
          %s453 = smul.addr %s452, 8
          %s454 = scalar_lea.vmem %s0, %s453
          // Predicated region
          $region77: #{discriminator_forward.1} parent=75 // pred_check
            _
          $region78: #{discriminator_forward.1} parent=75 // pred_check_branch
            %456 = sbr.rel (0) target = $region80
          $region79: #{discriminator_forward.1} parent=75 // pred_region
            // Predicated region
            $region81: #{discriminator_forward.1} parent=79 // pred_check
              _
            $region82: #{discriminator_forward.1} parent=79 // pred_check_branch
              %458 = sbr.rel (0) target = $region84
            $region83: #{discriminator_forward.1} parent=79 // pred_region
              // Predicated region
              $region96: #{discriminator_forward.1} parent=83 // pred_check
                _
              $region97: #{discriminator_forward.1} parent=83 // pred_check_branch
                %504 = sbr.rel (0) target = $region99
              $region98: #{discriminator_forward.1} parent=83 // pred_region
                loop: start=0, step=1, limit=1
                $region100: #{discriminator_forward.1} parent=98 // loop_pre_header
                  _
                $region101: #{discriminator_forward.1} parent=98 // loop_header
                  %s506 = sphi 0, %s510
                  %p507 = scmp.ge.s32.totalorder %s506, 1
                  %s511 = sphi %s454, %s454
                  %s512 = sphi %s448, %s448
                $region102: #{discriminator_forward.1} parent=98 // loop_header_branch
                  %509 = sbr.rel (%p507) target = $region106
                $region103: #{discriminator_forward.1} parent=98 // loop_body
                  %v513 = vld [vmem:[%s511] sm:$0xff]
                  %514 = vst [vmem:[%s512] sm:$0xff] %v513
                  %v515 = vld [vmem:[%s511 + $0x8] sm:$0xff]
                  %516 = vst [vmem:[%s512 + $0x8] sm:$0xff] %v515
                  %v517 = vld [vmem:[%s511 + $0x10] sm:$0xff]
                  %518 = vst [vmem:[%s512 + $0x10] sm:$0xff] %v517
                  %v519 = vld [vmem:[%s511 + $0x18] sm:$0xff]
                  %520 = vst [vmem:[%s512 + $0x18] sm:$0xff] %v519
                  %v521 = vld [vmem:[%s511 + $0x20] sm:$0xff]
                  %522 = vst [vmem:[%s512 + $0x20] sm:$0xff] %v521
                  %v523 = vld [vmem:[%s511 + $0x28] sm:$0xff]
                  %524 = vst [vmem:[%s512 + $0x28] sm:$0xff] %v523
                  %v525 = vld [vmem:[%s511 + $0x30] sm:$0xff]
                  %526 = vst [vmem:[%s512 + $0x30] sm:$0xff] %v525
                  %v527 = vld [vmem:[%s511 + $0x38] sm:$0xff]
                  %528 = vst [vmem:[%s512 + $0x38] sm:$0xff] %v527
                  %v529 = vld [vmem:[%s511 + $0x100] sm:$0xff]
                  %530 = vst [vmem:[%s512 + $0x40] sm:$0xff] %v529
                  %v531 = vld [vmem:[%s511 + $0x108] sm:$0xff]
                  %532 = vst [vmem:[%s512 + $0x48] sm:$0xff] %v531
                  %v533 = vld [vmem:[%s511 + $0x110] sm:$0xff]
                  %534 = vst [vmem:[%s512 + $0x50] sm:$0xff] %v533
                  %v535 = vld [vmem:[%s511 + $0x118] sm:$0xff]
                  %536 = vst [vmem:[%s512 + $0x58] sm:$0xff] %v535
                  %v537 = vld [vmem:[%s511 + $0x120] sm:$0xff]
                  %538 = vst [vmem:[%s512 + $0x60] sm:$0xff] %v537
                  %v539 = vld [vmem:[%s511 + $0x128] sm:$0xff]
                  %540 = vst [vmem:[%s512 + $0x68] sm:$0xff] %v539
                  %v541 = vld [vmem:[%s511 + $0x130] sm:$0xff]
                  %542 = vst [vmem:[%s512 + $0x70] sm:$0xff] %v541
                  %v543 = vld [vmem:[%s511 + $0x138] sm:$0xff]
                  %544 = vst [vmem:[%s512 + $0x78] sm:$0xff] %v543
                $region104: #{discriminator_forward.1} parent=98 // loop_footer
                  %s510 = sadd.s32 1, %s506
                $region105: #{discriminator_forward.1} parent=98 // loop_footer_branch
                  %505 = sbr.rel target = $region101
                $region106: #{discriminator_forward.1} parent=98 // loop_exit
                  _
              $region99: #{discriminator_forward.1} parent=83 // pred_fallthru
                _
              // Predicated region
              $region107: #{discriminator_forward.1} parent=83 // pred_check
                _
              $region108: #{discriminator_forward.1} parent=83 // pred_check_branch
                %546 = sbr.rel target = $region110
              $region109: #{discriminator_forward.1} parent=83 // pred_region
                _
              $region110: #{discriminator_forward.1} parent=83 // pred_fallthru
                _
            $region84: #{discriminator_forward.1} parent=79 // pred_fallthru
              _
            // Predicated region
            $region85: #{discriminator_forward.1} parent=79 // pred_check
              _
            $region86: #{discriminator_forward.1} parent=79 // pred_check_branch
              %460 = sbr.rel target = $region88
            $region87: #{discriminator_forward.1} parent=79 // pred_region
              %s462 = ssub.s32 256, 1
              loop: start=0, step=1, limit=1
              $region89: #{discriminator_forward.1} parent=87 // loop_pre_header
                _
              $region90: #{discriminator_forward.1} parent=87 // loop_header
                %s464 = sphi 0, %s468
                %p465 = scmp.ge.s32.totalorder %s464, 1
                %s469 = sphi %s454, %s454
                %s470 = sphi %s448, %s448
              $region91: #{discriminator_forward.1} parent=87 // loop_header_branch
                %467 = sbr.rel (%p465) target = $region95
              $region92: #{discriminator_forward.1} parent=87 // loop_body
                %v471 = vld [vmem:[%s469] sm:%s462]
                %472 = vst [vmem:[%s470] sm:%s462] %v471
                %v473 = vld [vmem:[%s469 + $0x8] sm:%s462]
                %474 = vst [vmem:[%s470 + $0x8] sm:%s462] %v473
                %v475 = vld [vmem:[%s469 + $0x10] sm:%s462]
                %476 = vst [vmem:[%s470 + $0x10] sm:%s462] %v475
                %v477 = vld [vmem:[%s469 + $0x18] sm:%s462]
                %478 = vst [vmem:[%s470 + $0x18] sm:%s462] %v477
                %v479 = vld [vmem:[%s469 + $0x20] sm:%s462]
                %480 = vst [vmem:[%s470 + $0x20] sm:%s462] %v479
                %v481 = vld [vmem:[%s469 + $0x28] sm:%s462]
                %482 = vst [vmem:[%s470 + $0x28] sm:%s462] %v481
                %v483 = vld [vmem:[%s469 + $0x30] sm:%s462]
                %484 = vst [vmem:[%s470 + $0x30] sm:%s462] %v483
                %v485 = vld [vmem:[%s469 + $0x38] sm:%s462]
                %486 = vst [vmem:[%s470 + $0x38] sm:%s462] %v485
                %v487 = vld [vmem:[%s469 + $0x100] sm:%s462]
                %488 = vst [vmem:[%s470 + $0x40] sm:%s462] %v487
                %v489 = vld [vmem:[%s469 + $0x108] sm:%s462]
                %490 = vst [vmem:[%s470 + $0x48] sm:%s462] %v489
                %v491 = vld [vmem:[%s469 + $0x110] sm:%s462]
                %492 = vst [vmem:[%s470 + $0x50] sm:%s462] %v491
                %v493 = vld [vmem:[%s469 + $0x118] sm:%s462]
                %494 = vst [vmem:[%s470 + $0x58] sm:%s462] %v493
                %v495 = vld [vmem:[%s469 + $0x120] sm:%s462]
                %496 = vst [vmem:[%s470 + $0x60] sm:%s462] %v495
                %v497 = vld [vmem:[%s469 + $0x128] sm:%s462]
                %498 = vst [vmem:[%s470 + $0x68] sm:%s462] %v497
                %v499 = vld [vmem:[%s469 + $0x130] sm:%s462]
                %500 = vst [vmem:[%s470 + $0x70] sm:%s462] %v499
                %v501 = vld [vmem:[%s469 + $0x138] sm:%s462]
                %502 = vst [vmem:[%s470 + $0x78] sm:%s462] %v501
              $region93: #{discriminator_forward.1} parent=87 // loop_footer
                %s468 = sadd.s32 1, %s464
              $region94: #{discriminator_forward.1} parent=87 // loop_footer_branch
                %463 = sbr.rel target = $region90
              $region95: #{discriminator_forward.1} parent=87 // loop_exit
                _
            $region88: #{discriminator_forward.1} parent=79 // pred_fallthru
              _
          $region80: #{discriminator_forward.1} parent=75 // pred_fallthru
            _
          %547 = vnop
        $region76: #{discriminator_forward.1} parent=71 // pred_fallthru
          _
      $region72: #{discriminator_forward.1} parent=5 // pred_fallthru
        _
      %p548 = scmp.le.s32.totalorder 1, %s21
      %p549 = scmp.lt.s32.totalorder %s21, 5
      %p550 = pnand %p548, %p549
      %p551 = pneg %p550
      // Predicated region
      $region111: #{discriminator_forward.1} parent=5 // pred_check
        _
      $region112: #{discriminator_forward.1} parent=5 // pred_check_branch
        %553 = sbr.rel (%p550) target = $region114
      $region113: #{discriminator_forward.1} parent=5 // pred_region
        %s554 = ssub.s32 %s21, 1
        %s555 = sand.u32 %s48, 1
        %s556 = sand.u32 %s48, 1
        %s557 = smul.addr %s556, 128
        %s558 = scalar_lea.vmem [#allocation3], %s557
        // Predicated region
        $region115: #{discriminator_forward.1} parent=113 // pred_check
          %p559 = pneg %p61
        $region116: #{discriminator_forward.1} parent=113 // pred_check_branch
          %561 = sbr.rel (%p559) target = $region118
        $region117: #{discriminator_forward.1} parent=113 // pred_region
          _
        $region118: #{discriminator_forward.1} parent=113 // pred_fallthru
          _
        %s562 = sand.u32 %s48, 1
        %s563 = sand.u32 %s48, 1
        %s564 = smul.addr %s563, 128
        %s565 = scalar_lea.vmem [#allocation3], %s564
        %p566 = pneg %p61
        %p567 = pneg %p58
        %p568 = pneg %p82
        %p569 = pneg %p79
        %p570 = pneg %p103
        %p571 = pneg %p100
        %p572 = pneg %p124
        %p573 = pneg %p121
        %p574 = pneg %p145
        %p575 = pneg %p142
        %p576 = pneg %p166
        %p577 = pneg %p163
        %p578 = pneg %p187
        %p579 = pneg %p184
        %p580 = pneg %p208
        %p581 = pneg %p205
        %p582 = pneg %p229
        %p583 = pneg %p226
        %p584 = pneg %p250
        %p585 = pneg %p247
        %p586 = pneg %p271
        %p587 = pneg %p268
        %p588 = pneg %p292
        %p589 = pneg %p289
        %p590 = pneg %p313
        %p591 = pneg %p310
        %p592 = pneg %p334
        %p593 = pneg %p331
        %p594 = pneg %p355
        %p595 = pneg %p352
        %p596 = pneg %p381
        %p597 = pneg %p378
        %p598 = scmp.lt.s32.totalorder %s30, 0
        %s599 = scalar_select %p598, %s30, 0
        %s600 = smul.addr %s599, 2
        %s601 = scalar_lea.vmem %s15, %s600
        %s602 = smul.u32 2, %s30
        %s603 = smul.u32 8, %s31
        %p604 = scmp.lt.s32.totalorder %s30, 0
        %s605 = scalar_select %p604, %s30, 0
        %s606 = smul.addr %s605, 2
        %s607 = scalar_lea.vmem %s15, %s606
        %p610 = scmp.eq.s32.totalorder %s31, 0
        // Predicated region
        $region119: #{discriminator_forward.1} parent=113 // pred_check
          %p611 = pneg %p610
        $region120: #{discriminator_forward.1} parent=113 // pred_check_branch
          %613 = sbr.rel (%p611) target = $region122
        $region121: #{discriminator_forward.1} parent=113 // pred_region
          %614 = vst [vmem:[#allocation2] sm:$0xff] -inf
        $region122: #{discriminator_forward.1} parent=113 // pred_fallthru
          _
        %v615 = vld [vmem:[%s558] sm:$0xff]
        %v616 = vld [vmem:[%s558 + $0x8] sm:$0xff]
        %v617 = vld [vmem:[%s558 + $0x10] sm:$0xff]
        %v618 = vld [vmem:[%s558 + $0x18] sm:$0xff]
        %v619 = vld [vmem:[%s558 + $0x20] sm:$0xff]
        %v620 = vld [vmem:[%s558 + $0x28] sm:$0xff]
        %v621 = vld [vmem:[%s558 + $0x30] sm:$0xff]
        %v622 = vld [vmem:[%s558 + $0x38] sm:$0xff]
        %v623 = vld [vmem:[%s558 + $0x40] sm:$0xff]
        %v624 = vld [vmem:[%s558 + $0x48] sm:$0xff]
        %v625 = vld [vmem:[%s558 + $0x50] sm:$0xff]
        %v626 = vld [vmem:[%s558 + $0x58] sm:$0xff]
        %v627 = vld [vmem:[%s558 + $0x60] sm:$0xff]
        %v628 = vld [vmem:[%s558 + $0x68] sm:$0xff]
        %v629 = vld [vmem:[%s558 + $0x70] sm:$0xff]
        %v630 = vld [vmem:[%s558 + $0x78] sm:$0xff]
        %v631 = vld [vmem:[%s1] sm:$0x7]
        %v632 = vld [vmem:[%s6] ss:$0 sm:$0xff]
        %634 = vset.pattern.permute.xlu0 0
        %635 = vperm.xlu0 %634, %v615
        %v636 = vpop.permute.xlu0 %635
        %639 = vset.pattern.permute.xlu0 0
        %640 = vperm.xlu0 %639, %v616
        %v641 = vpop.permute.xlu0 %640
        %644 = vset.pattern.permute.xlu0 0
        %645 = vperm.xlu0 %644, %v617
        %v646 = vpop.permute.xlu0 %645
        %649 = vset.pattern.permute.xlu0 0
        %650 = vperm.xlu0 %649, %v618
        %v651 = vpop.permute.xlu0 %650
        %654 = vset.pattern.permute.xlu0 0
        %655 = vperm.xlu0 %654, %v619
        %v656 = vpop.permute.xlu0 %655
        %659 = vset.pattern.permute.xlu0 0
        %660 = vperm.xlu0 %659, %v620
        %v661 = vpop.permute.xlu0 %660
        %664 = vset.pattern.permute.xlu0 0
        %665 = vperm.xlu0 %664, %v621
        %v666 = vpop.permute.xlu0 %665
        %669 = vset.pattern.permute.xlu0 0
        %670 = vperm.xlu0 %669, %v622
        %v671 = vpop.permute.xlu0 %670
        %674 = vset.pattern.permute.xlu0 0
        %675 = vperm.xlu0 %674, %v623
        %v676 = vpop.permute.xlu0 %675
        %679 = vset.pattern.permute.xlu0 0
        %680 = vperm.xlu0 %679, %v624
        %v681 = vpop.permute.xlu0 %680
        %684 = vset.pattern.permute.xlu0 0
        %685 = vperm.xlu0 %684, %v625
        %v686 = vpop.permute.xlu0 %685
        %689 = vset.pattern.permute.xlu0 0
        %690 = vperm.xlu0 %689, %v626
        %v691 = vpop.permute.xlu0 %690
        %694 = vset.pattern.permute.xlu0 0
        %695 = vperm.xlu0 %694, %v627
        %v696 = vpop.permute.xlu0 %695
        %699 = vset.pattern.permute.xlu0 0
        %700 = vperm.xlu0 %699, %v628
        %v701 = vpop.permute.xlu0 %700
        %704 = vset.pattern.permute.xlu0 0
        %705 = vperm.xlu0 %704, %v629
        %v706 = vpop.permute.xlu0 %705
        %709 = vset.pattern.permute.xlu0 0
        %710 = vperm.xlu0 %709, %v630
        %v711 = vpop.permute.xlu0 %710
        %v713 = vperm.slane %v631, 0
        %v714 = vmul.f32 %v636, %v713
        %v715 = vmul.f32 %v641, %v713
        %v716 = vmul.f32 %v646, %v713
        %v717 = vmul.f32 %v651, %v713
        %v718 = vmul.f32 %v656, %v713
        %v719 = vmul.f32 %v661, %v713
        %v720 = vmul.f32 %v666, %v713
        %v721 = vmul.f32 %v671, %v713
        %v722 = vmul.f32 %v676, %v713
        %v723 = vmul.f32 %v681, %v713
        %v724 = vmul.f32 %v686, %v713
        %v725 = vmul.f32 %v691, %v713
        %v726 = vmul.f32 %v696, %v713
        %v727 = vmul.f32 %v701, %v713
        %v728 = vmul.f32 %v706, %v713
        %v729 = vmul.f32 %v711, %v713
        %v730 = vadd.f32 %v632, %v714
        %v731 = vadd.f32 %v632, %v715
        %v732 = vadd.f32 %v632, %v716
        %v733 = vadd.f32 %v632, %v717
        %v734 = vadd.f32 %v632, %v718
        %v735 = vadd.f32 %v632, %v719
        %v736 = vadd.f32 %v632, %v720
        %v737 = vadd.f32 %v632, %v721
        %v738 = vadd.f32 %v632, %v722
        %v739 = vadd.f32 %v632, %v723
        %v740 = vadd.f32 %v632, %v724
        %v741 = vadd.f32 %v632, %v725
        %v742 = vadd.f32 %v632, %v726
        %v743 = vadd.f32 %v632, %v727
        %v744 = vadd.f32 %v632, %v728
        %v745 = vadd.f32 %v632, %v729
        %746 = vset.pattern.permute.xlu0 1
        %747 = vperm.xlu0 %746, %v615
        %v748 = vpop.permute.xlu0 %747
        %750 = vset.pattern.permute.xlu0 1
        %751 = vperm.xlu0 %750, %v616
        %v752 = vpop.permute.xlu0 %751
        %754 = vset.pattern.permute.xlu0 1
        %755 = vperm.xlu0 %754, %v617
        %v756 = vpop.permute.xlu0 %755
        %758 = vset.pattern.permute.xlu0 1
        %759 = vperm.xlu0 %758, %v618
        %v760 = vpop.permute.xlu0 %759
        %762 = vset.pattern.permute.xlu0 1
        %763 = vperm.xlu0 %762, %v619
        %v764 = vpop.permute.xlu0 %763
        %766 = vset.pattern.permute.xlu0 1
        %767 = vperm.xlu0 %766, %v620
        %v768 = vpop.permute.xlu0 %767
        %770 = vset.pattern.permute.xlu0 1
        %771 = vperm.xlu0 %770, %v621
        %v772 = vpop.permute.xlu0 %771
        %774 = vset.pattern.permute.xlu0 1
        %775 = vperm.xlu0 %774, %v622
        %v776 = vpop.permute.xlu0 %775
        %778 = vset.pattern.permute.xlu0 1
        %779 = vperm.xlu0 %778, %v623
        %v780 = vpop.permute.xlu0 %779
        %782 = vset.pattern.permute.xlu0 1
        %783 = vperm.xlu0 %782, %v624
        %v784 = vpop.permute.xlu0 %783
        %786 = vset.pattern.permute.xlu0 1
        %787 = vperm.xlu0 %786, %v625
        %v788 = vpop.permute.xlu0 %787
        %790 = vset.pattern.permute.xlu0 1
        %791 = vperm.xlu0 %790, %v626
        %v792 = vpop.permute.xlu0 %791
        %794 = vset.pattern.permute.xlu0 1
        %795 = vperm.xlu0 %794, %v627
        %v796 = vpop.permute.xlu0 %795
        %798 = vset.pattern.permute.xlu0 1
        %799 = vperm.xlu0 %798, %v628
        %v800 = vpop.permute.xlu0 %799
        %802 = vset.pattern.permute.xlu0 1
        %803 = vperm.xlu0 %802, %v629
        %v804 = vpop.permute.xlu0 %803
        %806 = vset.pattern.permute.xlu0 1
        %807 = vperm.xlu0 %806, %v630
        %v808 = vpop.permute.xlu0 %807
        %v810 = vperm.slane %v631, 1
        %v811 = vmul.f32 %v748, %v810
        %v812 = vmul.f32 %v752, %v810
        %v813 = vmul.f32 %v756, %v810
        %v814 = vmul.f32 %v760, %v810
        %v815 = vmul.f32 %v764, %v810
        %v816 = vmul.f32 %v768, %v810
        %v817 = vmul.f32 %v772, %v810
        %v818 = vmul.f32 %v776, %v810
        %v819 = vmul.f32 %v780, %v810
        %v820 = vmul.f32 %v784, %v810
        %v821 = vmul.f32 %v788, %v810
        %v822 = vmul.f32 %v792, %v810
        %v823 = vmul.f32 %v796, %v810
        %v824 = vmul.f32 %v800, %v810
        %v825 = vmul.f32 %v804, %v810
        %v826 = vmul.f32 %v808, %v810
        %v827 = vadd.f32 %v730, %v811
        %v828 = vadd.f32 %v731, %v812
        %v829 = vadd.f32 %v732, %v813
        %v830 = vadd.f32 %v733, %v814
        %v831 = vadd.f32 %v734, %v815
        %v832 = vadd.f32 %v735, %v816
        %v833 = vadd.f32 %v736, %v817
        %v834 = vadd.f32 %v737, %v818
        %v835 = vadd.f32 %v738, %v819
        %v836 = vadd.f32 %v739, %v820
        %v837 = vadd.f32 %v740, %v821
        %v838 = vadd.f32 %v741, %v822
        %v839 = vadd.f32 %v742, %v823
        %v840 = vadd.f32 %v743, %v824
        %v841 = vadd.f32 %v744, %v825
        %v842 = vadd.f32 %v745, %v826
        %843 = vset.pattern.permute.xlu0 2
        %844 = vperm.xlu0 %843, %v615
        %v845 = vpop.permute.xlu0 %844
        %847 = vset.pattern.permute.xlu0 2
        %848 = vperm.xlu0 %847, %v616
        %v849 = vpop.permute.xlu0 %848
        %851 = vset.pattern.permute.xlu0 2
        %852 = vperm.xlu0 %851, %v617
        %v853 = vpop.permute.xlu0 %852
        %855 = vset.pattern.permute.xlu0 2
        %856 = vperm.xlu0 %855, %v618
        %v857 = vpop.permute.xlu0 %856
        %859 = vset.pattern.permute.xlu0 2
        %860 = vperm.xlu0 %859, %v619
        %v861 = vpop.permute.xlu0 %860
        %863 = vset.pattern.permute.xlu0 2
        %864 = vperm.xlu0 %863, %v620
        %v865 = vpop.permute.xlu0 %864
        %867 = vset.pattern.permute.xlu0 2
        %868 = vperm.xlu0 %867, %v621
        %v869 = vpop.permute.xlu0 %868
        %871 = vset.pattern.permute.xlu0 2
        %872 = vperm.xlu0 %871, %v622
        %v873 = vpop.permute.xlu0 %872
        %875 = vset.pattern.permute.xlu0 2
        %876 = vperm.xlu0 %875, %v623
        %v877 = vpop.permute.xlu0 %876
        %879 = vset.pattern.permute.xlu0 2
        %880 = vperm.xlu0 %879, %v624
        %v881 = vpop.permute.xlu0 %880
        %883 = vset.pattern.permute.xlu0 2
        %884 = vperm.xlu0 %883, %v625
        %v885 = vpop.permute.xlu0 %884
        %887 = vset.pattern.permute.xlu0 2
        %888 = vperm.xlu0 %887, %v626
        %v889 = vpop.permute.xlu0 %888
        %891 = vset.pattern.permute.xlu0 2
        %892 = vperm.xlu0 %891, %v627
        %v893 = vpop.permute.xlu0 %892
        %895 = vset.pattern.permute.xlu0 2
        %896 = vperm.xlu0 %895, %v628
        %v897 = vpop.permute.xlu0 %896
        %899 = vset.pattern.permute.xlu0 2
        %900 = vperm.xlu0 %899, %v629
        %v901 = vpop.permute.xlu0 %900
        %903 = vset.pattern.permute.xlu0 2
        %904 = vperm.xlu0 %903, %v630
        %v905 = vpop.permute.xlu0 %904
        %v907 = vperm.slane %v631, 2
        %v908 = vmul.f32 %v845, %v907
        %v909 = vmul.f32 %v849, %v907
        %v910 = vmul.f32 %v853, %v907
        %v911 = vmul.f32 %v857, %v907
        %v912 = vmul.f32 %v861, %v907
        %v913 = vmul.f32 %v865, %v907
        %v914 = vmul.f32 %v869, %v907
        %v915 = vmul.f32 %v873, %v907
        %v916 = vmul.f32 %v877, %v907
        %v917 = vmul.f32 %v881, %v907
        %v918 = vmul.f32 %v885, %v907
        %v919 = vmul.f32 %v889, %v907
        %v920 = vmul.f32 %v893, %v907
        %v921 = vmul.f32 %v897, %v907
        %v922 = vmul.f32 %v901, %v907
        %v923 = vmul.f32 %v905, %v907
        %v924 = vadd.f32 %v827, %v908
        %v925 = vadd.f32 %v828, %v909
        %v926 = vadd.f32 %v829, %v910
        %v927 = vadd.f32 %v830, %v911
        %v928 = vadd.f32 %v831, %v912
        %v929 = vadd.f32 %v832, %v913
        %v930 = vadd.f32 %v833, %v914
        %v931 = vadd.f32 %v834, %v915
        %v932 = vadd.f32 %v835, %v916
        %v933 = vadd.f32 %v836, %v917
        %v934 = vadd.f32 %v837, %v918
        %v935 = vadd.f32 %v838, %v919
        %v936 = vadd.f32 %v839, %v920
        %v937 = vadd.f32 %v840, %v921
        %v938 = vadd.f32 %v841, %v922
        %v939 = vadd.f32 %v842, %v923
        %v940 = vmax.f32 %v924, 0.0
        %v941 = vmax.f32 %v925, 0.0
        %v942 = vmax.f32 %v926, 0.0
        %v943 = vmax.f32 %v927, 0.0
        %v944 = vmax.f32 %v928, 0.0
        %v945 = vmax.f32 %v929, 0.0
        %v946 = vmax.f32 %v930, 0.0
        %v947 = vmax.f32 %v931, 0.0
        %v948 = vmax.f32 %v932, 0.0
        %v949 = vmax.f32 %v933, 0.0
        %v950 = vmax.f32 %v934, 0.0
        %v951 = vmax.f32 %v935, 0.0
        %v952 = vmax.f32 %v936, 0.0
        %v953 = vmax.f32 %v937, 0.0
        %v954 = vmax.f32 %v938, 0.0
        %v955 = vmax.f32 %v939, 0.0
        %v956 = vpack.c.bf16 %v941, %v940
        %v957 = vpack.c.bf16 %v943, %v942
        %v958 = vpack.c.bf16 %v945, %v944
        %v959 = vpack.c.bf16 %v947, %v946
        %v960 = vpack.c.bf16 %v949, %v948
        %v961 = vpack.c.bf16 %v951, %v950
        %v962 = vpack.c.bf16 %v953, %v952
        %v963 = vpack.c.bf16 %v955, %v954
        %v964 = vld [vmem:[%s2] sm:$0xf]
        %v965 = vld [vmem:[%s2 + $0x4] sm:$0xf]
        %v966 = vld [vmem:[%s2 + $0x8] sm:$0xf]
        %v967 = vld [vmem:[%s2 + $0xc] sm:$0xf]
        %v968 = vld [vmem:[%s2 + $0x10] sm:$0xf]
        %v969 = vld [vmem:[%s2 + $0x14] sm:$0xf]
        %v970 = vld [vmem:[%s2 + $0x18] sm:$0xf]
        %v971 = vld [vmem:[%s2 + $0x1c] sm:$0xf]
        %v980 = vunpack.c.l.b16 %v964
        %v981 = vunpack.c.l.b16 %v965
        %v982 = vunpack.c.l.b16 %v966
        %v983 = vunpack.c.l.b16 %v967
        %v984 = vunpack.c.l.b16 %v968
        %v985 = vunpack.c.l.b16 %v969
        %v986 = vunpack.c.l.b16 %v970
        %v987 = vunpack.c.l.b16 %v971
        %v988 = vpack.c.b16 %v981, %v980
        %v989 = vpack.c.b16 %v983, %v982
        %v990 = vpack.c.b16 %v985, %v984
        %v991 = vpack.c.b16 %v987, %v986
        %vm996 = vcmask 523264
        %v998 = vsel %vm996, %v956, 0
        %v1001 = vsel %vm996, %v957, 0
        %v1004 = vsel %vm996, %v958, 0
        %v1007 = vsel %vm996, %v959, 0
        %v1010 = vsel %vm996, %v960, 0
        %v1013 = vsel %vm996, %v961, 0
        %v1016 = vsel %vm996, %v962, 0
        %v1019 = vsel %vm996, %v963, 0
        %1021 = vmatpush.bf16.msra.mxu0 0
        %1022 = vmatpush.bf16.msra.mxu0 0
        %1023 = vmatpush.bf16.msra.mxu0 0
        %1024 = vmatpush.bf16.msra.mxu0 0
        %1025 = vmatpush.bf16.msra.mxu0 %v991
        %1026 = vmatpush.bf16.msra.mxu0 %v990
        %1027 = vmatpush.bf16.msra.mxu0 %v989
        %1028 = vmatpush.bf16.msra.mxu0 %v988
        %1029 = vmatmul.bf16.gmra.mxu0 %v998
        %v1030 = vpop.f32.mrf.mxu0
        %v1031 = vadd.f32 0.0, %v1030
        %v1032 = vpop.f32.mrf.mxu0
        %v1033 = vadd.f32 0.0, %v1032
        %1034 = vmatmul.bf16.gmra.mxu0 %v1001
        %v1035 = vpop.f32.mrf.mxu0
        %v1036 = vadd.f32 0.0, %v1035
        %v1037 = vpop.f32.mrf.mxu0
        %v1038 = vadd.f32 0.0, %v1037
        %1039 = vmatmul.bf16.gmra.mxu0 %v1004
        %v1040 = vpop.f32.mrf.mxu0
        %v1041 = vadd.f32 0.0, %v1040
        %v1042 = vpop.f32.mrf.mxu0
        %v1043 = vadd.f32 0.0, %v1042
        %1044 = vmatmul.bf16.gmra.mxu0 %v1007
        %v1045 = vpop.f32.mrf.mxu0
        %v1046 = vadd.f32 0.0, %v1045
        %v1047 = vpop.f32.mrf.mxu0
        %v1048 = vadd.f32 0.0, %v1047
        %1049 = vmatmul.bf16.gmra.mxu0 %v1010
        %v1050 = vpop.f32.mrf.mxu0
        %v1051 = vadd.f32 0.0, %v1050
        %v1052 = vpop.f32.mrf.mxu0
        %v1053 = vadd.f32 0.0, %v1052
        %1054 = vmatmul.bf16.gmra.mxu0 %v1013
        %v1055 = vpop.f32.mrf.mxu0
        %v1056 = vadd.f32 0.0, %v1055
        %v1057 = vpop.f32.mrf.mxu0
        %v1058 = vadd.f32 0.0, %v1057
        %1059 = vmatmul.bf16.gmra.mxu0 %v1016
        %v1060 = vpop.f32.mrf.mxu0
        %v1061 = vadd.f32 0.0, %v1060
        %v1062 = vpop.f32.mrf.mxu0
        %v1063 = vadd.f32 0.0, %v1062
        %1064 = vmatmul.bf16.gmra.mxu0 %v1019
        %v1065 = vpop.f32.mrf.mxu0
        %v1066 = vadd.f32 0.0, %v1065
        %v1067 = vpop.f32.mrf.mxu0
        %v1068 = vadd.f32 0.0, %v1067
        %1069 = vdwg.mxu0
        %v1070 = vpack.c.bf16 %v1031, %v1031
        %v1071 = vpack.c.bf16 %v1033, %v1033
        %v1072 = vpack.c.bf16 %v1036, %v1036
        %v1073 = vpack.c.bf16 %v1038, %v1038
        %v1074 = vpack.c.bf16 %v1041, %v1041
        %v1075 = vpack.c.bf16 %v1043, %v1043
        %v1076 = vpack.c.bf16 %v1046, %v1046
        %v1077 = vpack.c.bf16 %v1048, %v1048
        %v1078 = vpack.c.bf16 %v1051, %v1051
        %v1079 = vpack.c.bf16 %v1053, %v1053
        %v1080 = vpack.c.bf16 %v1056, %v1056
        %v1081 = vpack.c.bf16 %v1058, %v1058
        %v1082 = vpack.c.bf16 %v1061, %v1061
        %v1083 = vpack.c.bf16 %v1063, %v1063
        %v1084 = vpack.c.bf16 %v1066, %v1066
        %v1085 = vpack.c.bf16 %v1068, %v1068
        %v1086 = vld [vmem:[%s6 + $0x1] ss:$0 sm:$0xff]
        %v1087 = vpack.c.bf16 %v1086, %v1086
        %v1088 = vunpack.c.l.bf16 %v1070
        %v1089 = vunpack.c.l.bf16 %v1071
        %v1090 = vunpack.c.l.bf16 %v1072
        %v1091 = vunpack.c.l.bf16 %v1073
        %v1092 = vunpack.c.l.bf16 %v1074
        %v1093 = vunpack.c.l.bf16 %v1075
        %v1094 = vunpack.c.l.bf16 %v1076
        %v1095 = vunpack.c.l.bf16 %v1077
        %v1096 = vunpack.c.l.bf16 %v1078
        %v1097 = vunpack.c.l.bf16 %v1079
        %v1098 = vunpack.c.l.bf16 %v1080
        %v1099 = vunpack.c.l.bf16 %v1081
        %v1100 = vunpack.c.l.bf16 %v1082
        %v1101 = vunpack.c.l.bf16 %v1083
        %v1102 = vunpack.c.l.bf16 %v1084
        %v1103 = vunpack.c.l.bf16 %v1085
        %v1104 = vunpack.c.l.bf16 %v1087
        %v1105 = vadd.f32 %v1088, %v1104
        %v1106 = vadd.f32 %v1089, %v1104
        %v1107 = vadd.f32 %v1090, %v1104
        %v1108 = vadd.f32 %v1091, %v1104
        %v1109 = vadd.f32 %v1092, %v1104
        %v1110 = vadd.f32 %v1093, %v1104
        %v1111 = vadd.f32 %v1094, %v1104
        %v1112 = vadd.f32 %v1095, %v1104
        %v1113 = vadd.f32 %v1096, %v1104
        %v1114 = vadd.f32 %v1097, %v1104
        %v1115 = vadd.f32 %v1098, %v1104
        %v1116 = vadd.f32 %v1099, %v1104
        %v1117 = vadd.f32 %v1100, %v1104
        %v1118 = vadd.f32 %v1101, %v1104
        %v1119 = vadd.f32 %v1102, %v1104
        %v1120 = vadd.f32 %v1103, %v1104
        %v1121 = vpack.c.bf16 %v1105, %v1105
        %v1122 = vpack.c.bf16 %v1106, %v1106
        %v1123 = vpack.c.bf16 %v1107, %v1107
        %v1124 = vpack.c.bf16 %v1108, %v1108
        %v1125 = vpack.c.bf16 %v1109, %v1109
        %v1126 = vpack.c.bf16 %v1110, %v1110
        %v1127 = vpack.c.bf16 %v1111, %v1111
        %v1128 = vpack.c.bf16 %v1112, %v1112
        %v1129 = vpack.c.bf16 %v1113, %v1113
        %v1130 = vpack.c.bf16 %v1114, %v1114
        %v1131 = vpack.c.bf16 %v1115, %v1115
        %v1132 = vpack.c.bf16 %v1116, %v1116
        %v1133 = vpack.c.bf16 %v1117, %v1117
        %v1134 = vpack.c.bf16 %v1118, %v1118
        %v1135 = vpack.c.bf16 %v1119, %v1119
        %v1136 = vpack.c.bf16 %v1120, %v1120
        %v1137 = vunpack.c.l.bf16 %v1121
        %v1138 = vunpack.c.l.bf16 %v1122
        %v1139 = vunpack.c.l.bf16 %v1123
        %v1140 = vunpack.c.l.bf16 %v1124
        %v1141 = vunpack.c.l.bf16 %v1125
        %v1142 = vunpack.c.l.bf16 %v1126
        %v1143 = vunpack.c.l.bf16 %v1127
        %v1144 = vunpack.c.l.bf16 %v1128
        %v1145 = vunpack.c.l.bf16 %v1129
        %v1146 = vunpack.c.l.bf16 %v1130
        %v1147 = vunpack.c.l.bf16 %v1131
        %v1148 = vunpack.c.l.bf16 %v1132
        %v1149 = vunpack.c.l.bf16 %v1133
        %v1150 = vunpack.c.l.bf16 %v1134
        %v1151 = vunpack.c.l.bf16 %v1135
        %v1152 = vunpack.c.l.bf16 %v1136
        %v1153 = vmax.f32 %v1137, 0.0
        %v1154 = vmax.f32 %v1138, 0.0
        %v1155 = vmax.f32 %v1139, 0.0
        %v1156 = vmax.f32 %v1140, 0.0
        %v1157 = vmax.f32 %v1141, 0.0
        %v1158 = vmax.f32 %v1142, 0.0
        %v1159 = vmax.f32 %v1143, 0.0
        %v1160 = vmax.f32 %v1144, 0.0
        %v1161 = vmax.f32 %v1145, 0.0
        %v1162 = vmax.f32 %v1146, 0.0
        %v1163 = vmax.f32 %v1147, 0.0
        %v1164 = vmax.f32 %v1148, 0.0
        %v1165 = vmax.f32 %v1149, 0.0
        %v1166 = vmax.f32 %v1150, 0.0
        %v1167 = vmax.f32 %v1151, 0.0
        %v1168 = vmax.f32 %v1152, 0.0
        %v1169 = vpack.c.bf16 %v1154, %v1153
        %v1170 = vpack.c.bf16 %v1156, %v1155
        %v1171 = vpack.c.bf16 %v1158, %v1157
        %v1172 = vpack.c.bf16 %v1160, %v1159
        %v1173 = vpack.c.bf16 %v1162, %v1161
        %v1174 = vpack.c.bf16 %v1164, %v1163
        %v1175 = vpack.c.bf16 %v1166, %v1165
        %v1176 = vpack.c.bf16 %v1168, %v1167
        %v1177 = vld [vmem:[%s3] sm:$0xff]
        %v1178 = vld [vmem:[%s3 + $0x8] sm:$0xff]
        %v1179 = vld [vmem:[%s3 + $0x10] sm:$0xff]
        %v1180 = vld [vmem:[%s3 + $0x18] sm:$0xff]
        %v1181 = vld [vmem:[%s3 + $0x20] sm:$0xff]
        %v1182 = vld [vmem:[%s3 + $0x28] sm:$0xff]
        %v1183 = vld [vmem:[%s3 + $0x30] sm:$0xff]
        %v1184 = vld [vmem:[%s3 + $0x38] sm:$0xff]
        %v1185 = vld [vmem:[%s3 + $0x40] sm:$0xff]
        %v1186 = vld [vmem:[%s3 + $0x48] sm:$0xff]
        %v1187 = vld [vmem:[%s3 + $0x50] sm:$0xff]
        %v1188 = vld [vmem:[%s3 + $0x58] sm:$0xff]
        %v1189 = vld [vmem:[%s3 + $0x60] sm:$0xff]
        %v1190 = vld [vmem:[%s3 + $0x68] sm:$0xff]
        %v1191 = vld [vmem:[%s3 + $0x70] sm:$0xff]
        %v1192 = vld [vmem:[%s3 + $0x78] sm:$0xff]
        %v1209 = vunpack.c.l.b16 %v1177
        %v1210 = vunpack.c.h.b16 %v1177
        %v1211 = vunpack.c.l.b16 %v1178
        %v1212 = vunpack.c.h.b16 %v1178
        %v1213 = vunpack.c.l.b16 %v1179
        %v1214 = vunpack.c.h.b16 %v1179
        %v1215 = vunpack.c.l.b16 %v1180
        %v1216 = vunpack.c.h.b16 %v1180
        %v1217 = vunpack.c.l.b16 %v1181
        %v1218 = vunpack.c.h.b16 %v1181
        %v1219 = vunpack.c.l.b16 %v1182
        %v1220 = vunpack.c.h.b16 %v1182
        %v1221 = vunpack.c.l.b16 %v1183
        %v1222 = vunpack.c.h.b16 %v1183
        %v1223 = vunpack.c.l.b16 %v1184
        %v1224 = vunpack.c.h.b16 %v1184
        %v1225 = vunpack.c.l.b16 %v1185
        %v1226 = vunpack.c.h.b16 %v1185
        %v1227 = vunpack.c.l.b16 %v1186
        %v1228 = vunpack.c.h.b16 %v1186
        %v1229 = vunpack.c.l.b16 %v1187
        %v1230 = vunpack.c.h.b16 %v1187
        %v1231 = vunpack.c.l.b16 %v1188
        %v1232 = vunpack.c.h.b16 %v1188
        %v1233 = vunpack.c.l.b16 %v1189
        %v1234 = vunpack.c.h.b16 %v1189
        %v1235 = vunpack.c.l.b16 %v1190
        %v1236 = vunpack.c.h.b16 %v1190
        %v1237 = vunpack.c.l.b16 %v1191
        %v1238 = vunpack.c.h.b16 %v1191
        %v1239 = vunpack.c.l.b16 %v1192
        %v1240 = vunpack.c.h.b16 %v1192
        %v1241 = vpack.c.b16 %v1211, %v1209
        %v1242 = vpack.c.b16 %v1212, %v1210
        %v1243 = vpack.c.b16 %v1215, %v1213
        %v1244 = vpack.c.b16 %v1216, %v1214
        %v1245 = vpack.c.b16 %v1219, %v1217
        %v1246 = vpack.c.b16 %v1220, %v1218
        %v1247 = vpack.c.b16 %v1223, %v1221
        %v1248 = vpack.c.b16 %v1224, %v1222
        %v1249 = vpack.c.b16 %v1227, %v1225
        %v1250 = vpack.c.b16 %v1228, %v1226
        %v1251 = vpack.c.b16 %v1231, %v1229
        %v1252 = vpack.c.b16 %v1232, %v1230
        %v1253 = vpack.c.b16 %v1235, %v1233
        %v1254 = vpack.c.b16 %v1236, %v1234
        %v1255 = vpack.c.b16 %v1239, %v1237
        %v1256 = vpack.c.b16 %v1240, %v1238
        %1273 = vmatpush.bf16.msra.mxu0 %v1255
        %1274 = vmatpush.bf16.msra.mxu0 %v1253
        %1275 = vmatpush.bf16.msra.mxu0 %v1251
        %1276 = vmatpush.bf16.msra.mxu0 %v1249
        %1277 = vmatpush.bf16.msra.mxu0 %v1247
        %1278 = vmatpush.bf16.msra.mxu0 %v1245
        %1279 = vmatpush.bf16.msra.mxu0 %v1243
        %1280 = vmatpush.bf16.msra.mxu0 %v1241
        %1281 = vmatmul.bf16.gmra.mxu0 %v1169
        %v1282 = vpop.f32.mrf.mxu0
        %v1283 = vadd.f32 0.0, %v1282
        %v1284 = vpop.f32.mrf.mxu0
        %v1285 = vadd.f32 0.0, %v1284
        %1286 = vmatmul.bf16.gmra.mxu0 %v1170
        %v1287 = vpop.f32.mrf.mxu0
        %v1288 = vadd.f32 0.0, %v1287
        %v1289 = vpop.f32.mrf.mxu0
        %v1290 = vadd.f32 0.0, %v1289
        %1291 = vmatmul.bf16.gmra.mxu0 %v1171
        %v1292 = vpop.f32.mrf.mxu0
        %v1293 = vadd.f32 0.0, %v1292
        %v1294 = vpop.f32.mrf.mxu0
        %v1295 = vadd.f32 0.0, %v1294
        %1296 = vmatmul.bf16.gmra.mxu0 %v1172
        %v1297 = vpop.f32.mrf.mxu0
        %v1298 = vadd.f32 0.0, %v1297
        %v1299 = vpop.f32.mrf.mxu0
        %v1300 = vadd.f32 0.0, %v1299
        %1301 = vmatmul.bf16.gmra.mxu0 %v1173
        %v1302 = vpop.f32.mrf.mxu0
        %v1303 = vadd.f32 0.0, %v1302
        %v1304 = vpop.f32.mrf.mxu0
        %v1305 = vadd.f32 0.0, %v1304
        %1306 = vmatmul.bf16.gmra.mxu0 %v1174
        %v1307 = vpop.f32.mrf.mxu0
        %v1308 = vadd.f32 0.0, %v1307
        %v1309 = vpop.f32.mrf.mxu0
        %v1310 = vadd.f32 0.0, %v1309
        %1311 = vmatmul.bf16.gmra.mxu0 %v1175
        %v1312 = vpop.f32.mrf.mxu0
        %v1313 = vadd.f32 0.0, %v1312
        %v1314 = vpop.f32.mrf.mxu0
        %v1315 = vadd.f32 0.0, %v1314
        %1316 = vmatmul.bf16.gmra.mxu0 %v1176
        %v1317 = vpop.f32.mrf.mxu0
        %v1318 = vadd.f32 0.0, %v1317
        %v1319 = vpop.f32.mrf.mxu0
        %v1320 = vadd.f32 0.0, %v1319
        %1321 = vdwg.mxu0
        %1322 = vmatpush.bf16.msra.mxu0 %v1256
        %1323 = vmatpush.bf16.msra.mxu0 %v1254
        %1324 = vmatpush.bf16.msra.mxu0 %v1252
        %1325 = vmatpush.bf16.msra.mxu0 %v1250
        %1326 = vmatpush.bf16.msra.mxu0 %v1248
        %1327 = vmatpush.bf16.msra.mxu0 %v1246
        %1328 = vmatpush.bf16.msra.mxu0 %v1244
        %1329 = vmatpush.bf16.msra.mxu0 %v1242
        %1330 = vmatmul.bf16.gmra.mxu0 %v1169
        %v1331 = vpop.f32.mrf.mxu0
        %v1332 = vadd.f32 0.0, %v1331
        %v1333 = vpop.f32.mrf.mxu0
        %v1334 = vadd.f32 0.0, %v1333
        %1335 = vmatmul.bf16.gmra.mxu0 %v1170
        %v1336 = vpop.f32.mrf.mxu0
        %v1337 = vadd.f32 0.0, %v1336
        %v1338 = vpop.f32.mrf.mxu0
        %v1339 = vadd.f32 0.0, %v1338
        %1340 = vmatmul.bf16.gmra.mxu0 %v1171
        %v1341 = vpop.f32.mrf.mxu0
        %v1342 = vadd.f32 0.0, %v1341
        %v1343 = vpop.f32.mrf.mxu0
        %v1344 = vadd.f32 0.0, %v1343
        %1345 = vmatmul.bf16.gmra.mxu0 %v1172
        %v1346 = vpop.f32.mrf.mxu0
        %v1347 = vadd.f32 0.0, %v1346
        %v1348 = vpop.f32.mrf.mxu0
        %v1349 = vadd.f32 0.0, %v1348
        %1350 = vmatmul.bf16.gmra.mxu0 %v1173
        %v1351 = vpop.f32.mrf.mxu0
        %v1352 = vadd.f32 0.0, %v1351
        %v1353 = vpop.f32.mrf.mxu0
        %v1354 = vadd.f32 0.0, %v1353
        %1355 = vmatmul.bf16.gmra.mxu0 %v1174
        %v1356 = vpop.f32.mrf.mxu0
        %v1357 = vadd.f32 0.0, %v1356
        %v1358 = vpop.f32.mrf.mxu0
        %v1359 = vadd.f32 0.0, %v1358
        %1360 = vmatmul.bf16.gmra.mxu0 %v1175
        %v1361 = vpop.f32.mrf.mxu0
        %v1362 = vadd.f32 0.0, %v1361
        %v1363 = vpop.f32.mrf.mxu0
        %v1364 = vadd.f32 0.0, %v1363
        %1365 = vmatmul.bf16.gmra.mxu0 %v1176
        %v1366 = vpop.f32.mrf.mxu0
        %v1367 = vadd.f32 0.0, %v1366
        %v1368 = vpop.f32.mrf.mxu0
        %v1369 = vadd.f32 0.0, %v1368
        %1370 = vdwg.mxu0
        %v1371 = vpack.c.bf16 %v1332, %v1283
        %v1372 = vpack.c.bf16 %v1334, %v1285
        %v1373 = vpack.c.bf16 %v1337, %v1288
        %v1374 = vpack.c.bf16 %v1339, %v1290
        %v1375 = vpack.c.bf16 %v1342, %v1293
        %v1376 = vpack.c.bf16 %v1344, %v1295
        %v1377 = vpack.c.bf16 %v1347, %v1298
        %v1378 = vpack.c.bf16 %v1349, %v1300
        %v1379 = vpack.c.bf16 %v1352, %v1303
        %v1380 = vpack.c.bf16 %v1354, %v1305
        %v1381 = vpack.c.bf16 %v1357, %v1308
        %v1382 = vpack.c.bf16 %v1359, %v1310
        %v1383 = vpack.c.bf16 %v1362, %v1313
        %v1384 = vpack.c.bf16 %v1364, %v1315
        %v1385 = vpack.c.bf16 %v1367, %v1318
        %v1386 = vpack.c.bf16 %v1369, %v1320
        %s1387 = scalar_lea.vmem %s6, 2
        %v1388 = vld [vmem:[%s1387] ss:$8 sm:$0x3]
        %v1390 = vperm.slane %v1388, 0
        %v1391 = vperm.slane %v1388, 1
        %v1394 = vpack.c.bf16 %v1391, %v1390
        %v1396 = vunpack.c.l.b16 %v1394
        %v1397 = vunpack.c.h.b16 %v1394
        %v1398 = vpack.c.b16 %v1396, %v1396
        %v1399 = vpack.c.b16 %v1397, %v1397
        %v1401 = vpack.i.b16 %v1398, %v1398
        %v1403 = vperm.slane %v1401, 0
        %v1405 = vpack.i.b16 %v1399, %v1399
        %v1407 = vperm.slane %v1405, 0
        %v1408 = vunpack.c.l.bf16 %v1371
        %v1409 = vunpack.c.h.bf16 %v1371
        %v1410 = vunpack.c.l.bf16 %v1372
        %v1411 = vunpack.c.h.bf16 %v1372
        %v1412 = vunpack.c.l.bf16 %v1373
        %v1413 = vunpack.c.h.bf16 %v1373
        %v1414 = vunpack.c.l.bf16 %v1374
        %v1415 = vunpack.c.h.bf16 %v1374
        %v1416 = vunpack.c.l.bf16 %v1375
        %v1417 = vunpack.c.h.bf16 %v1375
        %v1418 = vunpack.c.l.bf16 %v1376
        %v1419 = vunpack.c.h.bf16 %v1376
        %v1420 = vunpack.c.l.bf16 %v1377
        %v1421 = vunpack.c.h.bf16 %v1377
        %v1422 = vunpack.c.l.bf16 %v1378
        %v1423 = vunpack.c.h.bf16 %v1378
        %v1424 = vunpack.c.l.bf16 %v1379
        %v1425 = vunpack.c.h.bf16 %v1379
        %v1426 = vunpack.c.l.bf16 %v1380
        %v1427 = vunpack.c.h.bf16 %v1380
        %v1428 = vunpack.c.l.bf16 %v1381
        %v1429 = vunpack.c.h.bf16 %v1381
        %v1430 = vunpack.c.l.bf16 %v1382
        %v1431 = vunpack.c.h.bf16 %v1382
        %v1432 = vunpack.c.l.bf16 %v1383
        %v1433 = vunpack.c.h.bf16 %v1383
        %v1434 = vunpack.c.l.bf16 %v1384
        %v1435 = vunpack.c.h.bf16 %v1384
        %v1436 = vunpack.c.l.bf16 %v1385
        %v1437 = vunpack.c.h.bf16 %v1385
        %v1438 = vunpack.c.l.bf16 %v1386
        %v1439 = vunpack.c.h.bf16 %v1386
        %v1440 = vunpack.c.l.bf16 %v1403
        %v1441 = vunpack.c.l.bf16 %v1407
        %v1442 = vadd.f32 %v1408, %v1440
        %v1443 = vadd.f32 %v1409, %v1441
        %v1444 = vadd.f32 %v1410, %v1440
        %v1445 = vadd.f32 %v1411, %v1441
        %v1446 = vadd.f32 %v1412, %v1440
        %v1447 = vadd.f32 %v1413, %v1441
        %v1448 = vadd.f32 %v1414, %v1440
        %v1449 = vadd.f32 %v1415, %v1441
        %v1450 = vadd.f32 %v1416, %v1440
        %v1451 = vadd.f32 %v1417, %v1441
        %v1452 = vadd.f32 %v1418, %v1440
        %v1453 = vadd.f32 %v1419, %v1441
        %v1454 = vadd.f32 %v1420, %v1440
        %v1455 = vadd.f32 %v1421, %v1441
        %v1456 = vadd.f32 %v1422, %v1440
        %v1457 = vadd.f32 %v1423, %v1441
        %v1458 = vadd.f32 %v1424, %v1440
        %v1459 = vadd.f32 %v1425, %v1441
        %v1460 = vadd.f32 %v1426, %v1440
        %v1461 = vadd.f32 %v1427, %v1441
        %v1462 = vadd.f32 %v1428, %v1440
        %v1463 = vadd.f32 %v1429, %v1441
        %v1464 = vadd.f32 %v1430, %v1440
        %v1465 = vadd.f32 %v1431, %v1441
        %v1466 = vadd.f32 %v1432, %v1440
        %v1467 = vadd.f32 %v1433, %v1441
        %v1468 = vadd.f32 %v1434, %v1440
        %v1469 = vadd.f32 %v1435, %v1441
        %v1470 = vadd.f32 %v1436, %v1440
        %v1471 = vadd.f32 %v1437, %v1441
        %v1472 = vadd.f32 %v1438, %v1440
        %v1473 = vadd.f32 %v1439, %v1441
        %v1474 = vpack.c.bf16 %v1443, %v1442
        %v1475 = vpack.c.bf16 %v1445, %v1444
        %v1476 = vpack.c.bf16 %v1447, %v1446
        %v1477 = vpack.c.bf16 %v1449, %v1448
        %v1478 = vpack.c.bf16 %v1451, %v1450
        %v1479 = vpack.c.bf16 %v1453, %v1452
        %v1480 = vpack.c.bf16 %v1455, %v1454
        %v1481 = vpack.c.bf16 %v1457, %v1456
        %v1482 = vpack.c.bf16 %v1459, %v1458
        %v1483 = vpack.c.bf16 %v1461, %v1460
        %v1484 = vpack.c.bf16 %v1463, %v1462
        %v1485 = vpack.c.bf16 %v1465, %v1464
        %v1486 = vpack.c.bf16 %v1467, %v1466
        %v1487 = vpack.c.bf16 %v1469, %v1468
        %v1488 = vpack.c.bf16 %v1471, %v1470
        %v1489 = vpack.c.bf16 %v1473, %v1472
        %v1490 = vunpack.c.l.bf16 %v1474
        %v1491 = vunpack.c.h.bf16 %v1474
        %v1492 = vunpack.c.l.bf16 %v1475
        %v1493 = vunpack.c.h.bf16 %v1475
        %v1494 = vunpack.c.l.bf16 %v1476
        %v1495 = vunpack.c.h.bf16 %v1476
        %v1496 = vunpack.c.l.bf16 %v1477
        %v1497 = vunpack.c.h.bf16 %v1477
        %v1498 = vunpack.c.l.bf16 %v1478
        %v1499 = vunpack.c.h.bf16 %v1478
        %v1500 = vunpack.c.l.bf16 %v1479
        %v1501 = vunpack.c.h.bf16 %v1479
        %v1502 = vunpack.c.l.bf16 %v1480
        %v1503 = vunpack.c.h.bf16 %v1480
        %v1504 = vunpack.c.l.bf16 %v1481
        %v1505 = vunpack.c.h.bf16 %v1481
        %v1506 = vunpack.c.l.bf16 %v1482
        %v1507 = vunpack.c.h.bf16 %v1482
        %v1508 = vunpack.c.l.bf16 %v1483
        %v1509 = vunpack.c.h.bf16 %v1483
        %v1510 = vunpack.c.l.bf16 %v1484
        %v1511 = vunpack.c.h.bf16 %v1484
        %v1512 = vunpack.c.l.bf16 %v1485
        %v1513 = vunpack.c.h.bf16 %v1485
        %v1514 = vunpack.c.l.bf16 %v1486
        %v1515 = vunpack.c.h.bf16 %v1486
        %v1516 = vunpack.c.l.bf16 %v1487
        %v1517 = vunpack.c.h.bf16 %v1487
        %v1518 = vunpack.c.l.bf16 %v1488
        %v1519 = vunpack.c.h.bf16 %v1488
        %v1520 = vunpack.c.l.bf16 %v1489
        %v1521 = vunpack.c.h.bf16 %v1489
        %v1522 = vmax.f32 %v1490, 0.0
        %v1523 = vmax.f32 %v1491, 0.0
        %v1524 = vmax.f32 %v1492, 0.0
        %v1525 = vmax.f32 %v1493, 0.0
        %v1526 = vmax.f32 %v1494, 0.0
        %v1527 = vmax.f32 %v1495, 0.0
        %v1528 = vmax.f32 %v1496, 0.0
        %v1529 = vmax.f32 %v1497, 0.0
        %v1530 = vmax.f32 %v1498, 0.0
        %v1531 = vmax.f32 %v1499, 0.0
        %v1532 = vmax.f32 %v1500, 0.0
        %v1533 = vmax.f32 %v1501, 0.0
        %v1534 = vmax.f32 %v1502, 0.0
        %v1535 = vmax.f32 %v1503, 0.0
        %v1536 = vmax.f32 %v1504, 0.0
        %v1537 = vmax.f32 %v1505, 0.0
        %v1538 = vmax.f32 %v1506, 0.0
        %v1539 = vmax.f32 %v1507, 0.0
        %v1540 = vmax.f32 %v1508, 0.0
        %v1541 = vmax.f32 %v1509, 0.0
        %v1542 = vmax.f32 %v1510, 0.0
        %v1543 = vmax.f32 %v1511, 0.0
        %v1544 = vmax.f32 %v1512, 0.0
        %v1545 = vmax.f32 %v1513, 0.0
        %v1546 = vmax.f32 %v1514, 0.0
        %v1547 = vmax.f32 %v1515, 0.0
        %v1548 = vmax.f32 %v1516, 0.0
        %v1549 = vmax.f32 %v1517, 0.0
        %v1550 = vmax.f32 %v1518, 0.0
        %v1551 = vmax.f32 %v1519, 0.0
        %v1552 = vmax.f32 %v1520, 0.0
        %v1553 = vmax.f32 %v1521, 0.0
        %v1554 = vpack.c.bf16 %v1524, %v1522
        %v1555 = vpack.c.bf16 %v1525, %v1523
        %v1556 = vpack.c.bf16 %v1528, %v1526
        %v1557 = vpack.c.bf16 %v1529, %v1527
        %v1558 = vpack.c.bf16 %v1532, %v1530
        %v1559 = vpack.c.bf16 %v1533, %v1531
        %v1560 = vpack.c.bf16 %v1536, %v1534
        %v1561 = vpack.c.bf16 %v1537, %v1535
        %v1562 = vpack.c.bf16 %v1540, %v1538
        %v1563 = vpack.c.bf16 %v1541, %v1539
        %v1564 = vpack.c.bf16 %v1544, %v1542
        %v1565 = vpack.c.bf16 %v1545, %v1543
        %v1566 = vpack.c.bf16 %v1548, %v1546
        %v1567 = vpack.c.bf16 %v1549, %v1547
        %v1568 = vpack.c.bf16 %v1552, %v1550
        %v1569 = vpack.c.bf16 %v1553, %v1551
        %v1570 = vld [vmem:[%s4] sm:$0xff]
        %v1571 = vld [vmem:[%s4 + $0x8] sm:$0xff]
        %v1572 = vld [vmem:[%s4 + $0x10] sm:$0xff]
        %v1573 = vld [vmem:[%s4 + $0x18] sm:$0xff]
        %v1574 = vld [vmem:[%s4 + $0x20] sm:$0xff]
        %v1575 = vld [vmem:[%s4 + $0x28] sm:$0xff]
        %v1576 = vld [vmem:[%s4 + $0x30] sm:$0xff]
        %v1577 = vld [vmem:[%s4 + $0x38] sm:$0xff]
        %v1578 = vld [vmem:[%s4 + $0x40] sm:$0xff]
        %v1579 = vld [vmem:[%s4 + $0x48] sm:$0xff]
        %v1580 = vld [vmem:[%s4 + $0x50] sm:$0xff]
        %v1581 = vld [vmem:[%s4 + $0x58] sm:$0xff]
        %v1582 = vld [vmem:[%s4 + $0x60] sm:$0xff]
        %v1583 = vld [vmem:[%s4 + $0x68] sm:$0xff]
        %v1584 = vld [vmem:[%s4 + $0x70] sm:$0xff]
        %v1585 = vld [vmem:[%s4 + $0x78] sm:$0xff]
        %v1586 = vld [vmem:[%s4 + $0x80] sm:$0xff]
        %v1587 = vld [vmem:[%s4 + $0x88] sm:$0xff]
        %v1588 = vld [vmem:[%s4 + $0x90] sm:$0xff]
        %v1589 = vld [vmem:[%s4 + $0x98] sm:$0xff]
        %v1590 = vld [vmem:[%s4 + $0xa0] sm:$0xff]
        %v1591 = vld [vmem:[%s4 + $0xa8] sm:$0xff]
        %v1592 = vld [vmem:[%s4 + $0xb0] sm:$0xff]
        %v1593 = vld [vmem:[%s4 + $0xb8] sm:$0xff]
        %v1594 = vld [vmem:[%s4 + $0xc0] sm:$0xff]
        %v1595 = vld [vmem:[%s4 + $0xc8] sm:$0xff]
        %v1596 = vld [vmem:[%s4 + $0xd0] sm:$0xff]
        %v1597 = vld [vmem:[%s4 + $0xd8] sm:$0xff]
        %v1598 = vld [vmem:[%s4 + $0xe0] sm:$0xff]
        %v1599 = vld [vmem:[%s4 + $0xe8] sm:$0xff]
        %v1600 = vld [vmem:[%s4 + $0xf0] sm:$0xff]
        %v1601 = vld [vmem:[%s4 + $0xf8] sm:$0xff]
        %v1634 = vunpack.c.l.b16 %v1570
        %v1635 = vunpack.c.h.b16 %v1570
        %v1636 = vunpack.c.l.b16 %v1571
        %v1637 = vunpack.c.h.b16 %v1571
        %v1638 = vunpack.c.l.b16 %v1572
        %v1639 = vunpack.c.h.b16 %v1572
        %v1640 = vunpack.c.l.b16 %v1573
        %v1641 = vunpack.c.h.b16 %v1573
        %v1642 = vunpack.c.l.b16 %v1574
        %v1643 = vunpack.c.h.b16 %v1574
        %v1644 = vunpack.c.l.b16 %v1575
        %v1645 = vunpack.c.h.b16 %v1575
        %v1646 = vunpack.c.l.b16 %v1576
        %v1647 = vunpack.c.h.b16 %v1576
        %v1648 = vunpack.c.l.b16 %v1577
        %v1649 = vunpack.c.h.b16 %v1577
        %v1650 = vunpack.c.l.b16 %v1578
        %v1651 = vunpack.c.h.b16 %v1578
        %v1652 = vunpack.c.l.b16 %v1579
        %v1653 = vunpack.c.h.b16 %v1579
        %v1654 = vunpack.c.l.b16 %v1580
        %v1655 = vunpack.c.h.b16 %v1580
        %v1656 = vunpack.c.l.b16 %v1581
        %v1657 = vunpack.c.h.b16 %v1581
        %v1658 = vunpack.c.l.b16 %v1582
        %v1659 = vunpack.c.h.b16 %v1582
        %v1660 = vunpack.c.l.b16 %v1583
        %v1661 = vunpack.c.h.b16 %v1583
        %v1662 = vunpack.c.l.b16 %v1584
        %v1663 = vunpack.c.h.b16 %v1584
        %v1664 = vunpack.c.l.b16 %v1585
        %v1665 = vunpack.c.h.b16 %v1585
        %v1666 = vunpack.c.l.b16 %v1586
        %v1667 = vunpack.c.h.b16 %v1586
        %v1668 = vunpack.c.l.b16 %v1587
        %v1669 = vunpack.c.h.b16 %v1587
        %v1670 = vunpack.c.l.b16 %v1588
        %v1671 = vunpack.c.h.b16 %v1588
        %v1672 = vunpack.c.l.b16 %v1589
        %v1673 = vunpack.c.h.b16 %v1589
        %v1674 = vunpack.c.l.b16 %v1590
        %v1675 = vunpack.c.h.b16 %v1590
        %v1676 = vunpack.c.l.b16 %v1591
        %v1677 = vunpack.c.h.b16 %v1591
        %v1678 = vunpack.c.l.b16 %v1592
        %v1679 = vunpack.c.h.b16 %v1592
        %v1680 = vunpack.c.l.b16 %v1593
        %v1681 = vunpack.c.h.b16 %v1593
        %v1682 = vunpack.c.l.b16 %v1594
        %v1683 = vunpack.c.h.b16 %v1594
        %v1684 = vunpack.c.l.b16 %v1595
        %v1685 = vunpack.c.h.b16 %v1595
        %v1686 = vunpack.c.l.b16 %v1596
        %v1687 = vunpack.c.h.b16 %v1596
        %v1688 = vunpack.c.l.b16 %v1597
        %v1689 = vunpack.c.h.b16 %v1597
        %v1690 = vunpack.c.l.b16 %v1598
        %v1691 = vunpack.c.h.b16 %v1598
        %v1692 = vunpack.c.l.b16 %v1599
        %v1693 = vunpack.c.h.b16 %v1599
        %v1694 = vunpack.c.l.b16 %v1600
        %v1695 = vunpack.c.h.b16 %v1600
        %v1696 = vunpack.c.l.b16 %v1601
        %v1697 = vunpack.c.h.b16 %v1601
        %v1698 = vpack.c.b16 %v1636, %v1634
        %v1699 = vpack.c.b16 %v1637, %v1635
        %v1700 = vpack.c.b16 %v1640, %v1638
        %v1701 = vpack.c.b16 %v1641, %v1639
        %v1702 = vpack.c.b16 %v1644, %v1642
        %v1703 = vpack.c.b16 %v1645, %v1643
        %v1704 = vpack.c.b16 %v1648, %v1646
        %v1705 = vpack.c.b16 %v1649, %v1647
        %v1706 = vpack.c.b16 %v1652, %v1650
        %v1707 = vpack.c.b16 %v1653, %v1651
        %v1708 = vpack.c.b16 %v1656, %v1654
        %v1709 = vpack.c.b16 %v1657, %v1655
        %v1710 = vpack.c.b16 %v1660, %v1658
        %v1711 = vpack.c.b16 %v1661, %v1659
        %v1712 = vpack.c.b16 %v1664, %v1662
        %v1713 = vpack.c.b16 %v1665, %v1663
        %v1714 = vpack.c.b16 %v1668, %v1666
        %v1715 = vpack.c.b16 %v1669, %v1667
        %v1716 = vpack.c.b16 %v1672, %v1670
        %v1717 = vpack.c.b16 %v1673, %v1671
        %v1718 = vpack.c.b16 %v1676, %v1674
        %v1719 = vpack.c.b16 %v1677, %v1675
        %v1720 = vpack.c.b16 %v1680, %v1678
        %v1721 = vpack.c.b16 %v1681, %v1679
        %v1722 = vpack.c.b16 %v1684, %v1682
        %v1723 = vpack.c.b16 %v1685, %v1683
        %v1724 = vpack.c.b16 %v1688, %v1686
        %v1725 = vpack.c.b16 %v1689, %v1687
        %v1726 = vpack.c.b16 %v1692, %v1690
        %v1727 = vpack.c.b16 %v1693, %v1691
        %v1728 = vpack.c.b16 %v1696, %v1694
        %v1729 = vpack.c.b16 %v1697, %v1695
        %1762 = vmatpush.bf16.msra.mxu0 %v1712
        %1763 = vmatpush.bf16.msra.mxu0 %v1710
        %1764 = vmatpush.bf16.msra.mxu0 %v1708
        %1765 = vmatpush.bf16.msra.mxu0 %v1706
        %1766 = vmatpush.bf16.msra.mxu0 %v1704
        %1767 = vmatpush.bf16.msra.mxu0 %v1702
        %1768 = vmatpush.bf16.msra.mxu0 %v1700
        %1769 = vmatpush.bf16.msra.mxu0 %v1698
        %1770 = vmatmul.bf16.gmra.mxu0 %v1554
        %v1771 = vpop.f32.mrf.mxu0
        %v1772 = vadd.f32 0.0, %v1771
        %v1773 = vpop.f32.mrf.mxu0
        %v1774 = vadd.f32 0.0, %v1773
        %1775 = vmatmul.bf16.gmra.mxu0 %v1556
        %v1776 = vpop.f32.mrf.mxu0
        %v1777 = vadd.f32 0.0, %v1776
        %v1778 = vpop.f32.mrf.mxu0
        %v1779 = vadd.f32 0.0, %v1778
        %1780 = vmatmul.bf16.gmra.mxu0 %v1558
        %v1781 = vpop.f32.mrf.mxu0
        %v1782 = vadd.f32 0.0, %v1781
        %v1783 = vpop.f32.mrf.mxu0
        %v1784 = vadd.f32 0.0, %v1783
        %1785 = vmatmul.bf16.gmra.mxu0 %v1560
        %v1786 = vpop.f32.mrf.mxu0
        %v1787 = vadd.f32 0.0, %v1786
        %v1788 = vpop.f32.mrf.mxu0
        %v1789 = vadd.f32 0.0, %v1788
        %1790 = vmatmul.bf16.gmra.mxu0 %v1562
        %v1791 = vpop.f32.mrf.mxu0
        %v1792 = vadd.f32 0.0, %v1791
        %v1793 = vpop.f32.mrf.mxu0
        %v1794 = vadd.f32 0.0, %v1793
        %1795 = vmatmul.bf16.gmra.mxu0 %v1564
        %v1796 = vpop.f32.mrf.mxu0
        %v1797 = vadd.f32 0.0, %v1796
        %v1798 = vpop.f32.mrf.mxu0
        %v1799 = vadd.f32 0.0, %v1798
        %1800 = vmatmul.bf16.gmra.mxu0 %v1566
        %v1801 = vpop.f32.mrf.mxu0
        %v1802 = vadd.f32 0.0, %v1801
        %v1803 = vpop.f32.mrf.mxu0
        %v1804 = vadd.f32 0.0, %v1803
        %1805 = vmatmul.bf16.gmra.mxu0 %v1568
        %v1806 = vpop.f32.mrf.mxu0
        %v1807 = vadd.f32 0.0, %v1806
        %v1808 = vpop.f32.mrf.mxu0
        %v1809 = vadd.f32 0.0, %v1808
        %1810 = vdwg.mxu0
        %1811 = vmatpush.bf16.msra.mxu0 %v1728
        %1812 = vmatpush.bf16.msra.mxu0 %v1726
        %1813 = vmatpush.bf16.msra.mxu0 %v1724
        %1814 = vmatpush.bf16.msra.mxu0 %v1722
        %1815 = vmatpush.bf16.msra.mxu0 %v1720
        %1816 = vmatpush.bf16.msra.mxu0 %v1718
        %1817 = vmatpush.bf16.msra.mxu0 %v1716
        %1818 = vmatpush.bf16.msra.mxu0 %v1714
        %1819 = vmatmul.bf16.gmra.mxu0 %v1555
        %v1820 = vpop.f32.mrf.mxu0
        %v1821 = vadd.f32 %v1772, %v1820
        %v1822 = vpop.f32.mrf.mxu0
        %v1823 = vadd.f32 %v1774, %v1822
        %1824 = vmatmul.bf16.gmra.mxu0 %v1557
        %v1825 = vpop.f32.mrf.mxu0
        %v1826 = vadd.f32 %v1777, %v1825
        %v1827 = vpop.f32.mrf.mxu0
        %v1828 = vadd.f32 %v1779, %v1827
        %1829 = vmatmul.bf16.gmra.mxu0 %v1559
        %v1830 = vpop.f32.mrf.mxu0
        %v1831 = vadd.f32 %v1782, %v1830
        %v1832 = vpop.f32.mrf.mxu0
        %v1833 = vadd.f32 %v1784, %v1832
        %1834 = vmatmul.bf16.gmra.mxu0 %v1561
        %v1835 = vpop.f32.mrf.mxu0
        %v1836 = vadd.f32 %v1787, %v1835
        %v1837 = vpop.f32.mrf.mxu0
        %v1838 = vadd.f32 %v1789, %v1837
        %1839 = vmatmul.bf16.gmra.mxu0 %v1563
        %v1840 = vpop.f32.mrf.mxu0
        %v1841 = vadd.f32 %v1792, %v1840
        %v1842 = vpop.f32.mrf.mxu0
        %v1843 = vadd.f32 %v1794, %v1842
        %1844 = vmatmul.bf16.gmra.mxu0 %v1565
        %v1845 = vpop.f32.mrf.mxu0
        %v1846 = vadd.f32 %v1797, %v1845
        %v1847 = vpop.f32.mrf.mxu0
        %v1848 = vadd.f32 %v1799, %v1847
        %1849 = vmatmul.bf16.gmra.mxu0 %v1567
        %v1850 = vpop.f32.mrf.mxu0
        %v1851 = vadd.f32 %v1802, %v1850
        %v1852 = vpop.f32.mrf.mxu0
        %v1853 = vadd.f32 %v1804, %v1852
        %1854 = vmatmul.bf16.gmra.mxu0 %v1569
        %v1855 = vpop.f32.mrf.mxu0
        %v1856 = vadd.f32 %v1807, %v1855
        %v1857 = vpop.f32.mrf.mxu0
        %v1858 = vadd.f32 %v1809, %v1857
        %1859 = vdwg.mxu0
        %1860 = vmatpush.bf16.msra.mxu0 %v1713
        %1861 = vmatpush.bf16.msra.mxu0 %v1711
        %1862 = vmatpush.bf16.msra.mxu0 %v1709
        %1863 = vmatpush.bf16.msra.mxu0 %v1707
        %1864 = vmatpush.bf16.msra.mxu0 %v1705
        %1865 = vmatpush.bf16.msra.mxu0 %v1703
        %1866 = vmatpush.bf16.msra.mxu0 %v1701
        %1867 = vmatpush.bf16.msra.mxu0 %v1699
        %1868 = vmatmul.bf16.gmra.mxu0 %v1554
        %v1869 = vpop.f32.mrf.mxu0
        %v1870 = vadd.f32 0.0, %v1869
        %v1871 = vpop.f32.mrf.mxu0
        %v1872 = vadd.f32 0.0, %v1871
        %1873 = vmatmul.bf16.gmra.mxu0 %v1556
        %v1874 = vpop.f32.mrf.mxu0
        %v1875 = vadd.f32 0.0, %v1874
        %v1876 = vpop.f32.mrf.mxu0
        %v1877 = vadd.f32 0.0, %v1876
        %1878 = vmatmul.bf16.gmra.mxu0 %v1558
        %v1879 = vpop.f32.mrf.mxu0
        %v1880 = vadd.f32 0.0, %v1879
        %v1881 = vpop.f32.mrf.mxu0
        %v1882 = vadd.f32 0.0, %v1881
        %1883 = vmatmul.bf16.gmra.mxu0 %v1560
        %v1884 = vpop.f32.mrf.mxu0
        %v1885 = vadd.f32 0.0, %v1884
        %v1886 = vpop.f32.mrf.mxu0
        %v1887 = vadd.f32 0.0, %v1886
        %1888 = vmatmul.bf16.gmra.mxu0 %v1562
        %v1889 = vpop.f32.mrf.mxu0
        %v1890 = vadd.f32 0.0, %v1889
        %v1891 = vpop.f32.mrf.mxu0
        %v1892 = vadd.f32 0.0, %v1891
        %1893 = vmatmul.bf16.gmra.mxu0 %v1564
        %v1894 = vpop.f32.mrf.mxu0
        %v1895 = vadd.f32 0.0, %v1894
        %v1896 = vpop.f32.mrf.mxu0
        %v1897 = vadd.f32 0.0, %v1896
        %1898 = vmatmul.bf16.gmra.mxu0 %v1566
        %v1899 = vpop.f32.mrf.mxu0
        %v1900 = vadd.f32 0.0, %v1899
        %v1901 = vpop.f32.mrf.mxu0
        %v1902 = vadd.f32 0.0, %v1901
        %1903 = vmatmul.bf16.gmra.mxu0 %v1568
        %v1904 = vpop.f32.mrf.mxu0
        %v1905 = vadd.f32 0.0, %v1904
        %v1906 = vpop.f32.mrf.mxu0
        %v1907 = vadd.f32 0.0, %v1906
        %1908 = vdwg.mxu0
        %1909 = vmatpush.bf16.msra.mxu0 %v1729
        %1910 = vmatpush.bf16.msra.mxu0 %v1727
        %1911 = vmatpush.bf16.msra.mxu0 %v1725
        %1912 = vmatpush.bf16.msra.mxu0 %v1723
        %1913 = vmatpush.bf16.msra.mxu0 %v1721
        %1914 = vmatpush.bf16.msra.mxu0 %v1719
        %1915 = vmatpush.bf16.msra.mxu0 %v1717
        %1916 = vmatpush.bf16.msra.mxu0 %v1715
        %1917 = vmatmul.bf16.gmra.mxu0 %v1555
        %v1918 = vpop.f32.mrf.mxu0
        %v1919 = vadd.f32 %v1870, %v1918
        %v1920 = vpop.f32.mrf.mxu0
        %v1921 = vadd.f32 %v1872, %v1920
        %1922 = vmatmul.bf16.gmra.mxu0 %v1557
        %v1923 = vpop.f32.mrf.mxu0
        %v1924 = vadd.f32 %v1875, %v1923
        %v1925 = vpop.f32.mrf.mxu0
        %v1926 = vadd.f32 %v1877, %v1925
        %1927 = vmatmul.bf16.gmra.mxu0 %v1559
        %v1928 = vpop.f32.mrf.mxu0
        %v1929 = vadd.f32 %v1880, %v1928
        %v1930 = vpop.f32.mrf.mxu0
        %v1931 = vadd.f32 %v1882, %v1930
        %1932 = vmatmul.bf16.gmra.mxu0 %v1561
        %v1933 = vpop.f32.mrf.mxu0
        %v1934 = vadd.f32 %v1885, %v1933
        %v1935 = vpop.f32.mrf.mxu0
        %v1936 = vadd.f32 %v1887, %v1935
        %1937 = vmatmul.bf16.gmra.mxu0 %v1563
        %v1938 = vpop.f32.mrf.mxu0
        %v1939 = vadd.f32 %v1890, %v1938
        %v1940 = vpop.f32.mrf.mxu0
        %v1941 = vadd.f32 %v1892, %v1940
        %1942 = vmatmul.bf16.gmra.mxu0 %v1565
        %v1943 = vpop.f32.mrf.mxu0
        %v1944 = vadd.f32 %v1895, %v1943
        %v1945 = vpop.f32.mrf.mxu0
        %v1946 = vadd.f32 %v1897, %v1945
        %1947 = vmatmul.bf16.gmra.mxu0 %v1567
        %v1948 = vpop.f32.mrf.mxu0
        %v1949 = vadd.f32 %v1900, %v1948
        %v1950 = vpop.f32.mrf.mxu0
        %v1951 = vadd.f32 %v1902, %v1950
        %1952 = vmatmul.bf16.gmra.mxu0 %v1569
        %v1953 = vpop.f32.mrf.mxu0
        %v1954 = vadd.f32 %v1905, %v1953
        %v1955 = vpop.f32.mrf.mxu0
        %v1956 = vadd.f32 %v1907, %v1955
        %1957 = vdwg.mxu0
        %v1958 = vpack.c.bf16 %v1919, %v1821
        %v1959 = vpack.c.bf16 %v1921, %v1823
        %v1960 = vpack.c.bf16 %v1924, %v1826
        %v1961 = vpack.c.bf16 %v1926, %v1828
        %v1962 = vpack.c.bf16 %v1929, %v1831
        %v1963 = vpack.c.bf16 %v1931, %v1833
        %v1964 = vpack.c.bf16 %v1934, %v1836
        %v1965 = vpack.c.bf16 %v1936, %v1838
        %v1966 = vpack.c.bf16 %v1939, %v1841
        %v1967 = vpack.c.bf16 %v1941, %v1843
        %v1968 = vpack.c.bf16 %v1944, %v1846
        %v1969 = vpack.c.bf16 %v1946, %v1848
        %v1970 = vpack.c.bf16 %v1949, %v1851
        %v1971 = vpack.c.bf16 %v1951, %v1853
        %v1972 = vpack.c.bf16 %v1954, %v1856
        %v1973 = vpack.c.bf16 %v1956, %v1858
        %s1974 = scalar_lea.vmem %s6, 3
        %v1975 = vld [vmem:[%s1974] ss:$8 sm:$0x3]
        %v1977 = vperm.slane %v1975, 0
        %v1978 = vperm.slane %v1975, 1
        %v1981 = vpack.c.bf16 %v1978, %v1977
        %v1983 = vunpack.c.l.b16 %v1981
        %v1984 = vunpack.c.h.b16 %v1981
        %v1985 = vpack.c.b16 %v1983, %v1983
        %v1986 = vpack.c.b16 %v1984, %v1984
        %v1988 = vpack.i.b16 %v1985, %v1985
        %v1990 = vperm.slane %v1988, 0
        %v1992 = vpack.i.b16 %v1986, %v1986
        %v1994 = vperm.slane %v1992, 0
        %v1995 = vunpack.c.l.bf16 %v1958
        %v1996 = vunpack.c.h.bf16 %v1958
        %v1997 = vunpack.c.l.bf16 %v1959
        %v1998 = vunpack.c.h.bf16 %v1959
        %v1999 = vunpack.c.l.bf16 %v1960
        %v2000 = vunpack.c.h.bf16 %v1960
        %v2001 = vunpack.c.l.bf16 %v1961
        %v2002 = vunpack.c.h.bf16 %v1961
        %v2003 = vunpack.c.l.bf16 %v1962
        %v2004 = vunpack.c.h.bf16 %v1962
        %v2005 = vunpack.c.l.bf16 %v1963
        %v2006 = vunpack.c.h.bf16 %v1963
        %v2007 = vunpack.c.l.bf16 %v1964
        %v2008 = vunpack.c.h.bf16 %v1964
        %v2009 = vunpack.c.l.bf16 %v1965
        %v2010 = vunpack.c.h.bf16 %v1965
        %v2011 = vunpack.c.l.bf16 %v1966
        %v2012 = vunpack.c.h.bf16 %v1966
        %v2013 = vunpack.c.l.bf16 %v1967
        %v2014 = vunpack.c.h.bf16 %v1967
        %v2015 = vunpack.c.l.bf16 %v1968
        %v2016 = vunpack.c.h.bf16 %v1968
        %v2017 = vunpack.c.l.bf16 %v1969
        %v2018 = vunpack.c.h.bf16 %v1969
        %v2019 = vunpack.c.l.bf16 %v1970
        %v2020 = vunpack.c.h.bf16 %v1970
        %v2021 = vunpack.c.l.bf16 %v1971
        %v2022 = vunpack.c.h.bf16 %v1971
        %v2023 = vunpack.c.l.bf16 %v1972
        %v2024 = vunpack.c.h.bf16 %v1972
        %v2025 = vunpack.c.l.bf16 %v1973
        %v2026 = vunpack.c.h.bf16 %v1973
        %v2027 = vunpack.c.l.bf16 %v1990
        %v2028 = vunpack.c.l.bf16 %v1994
        %v2029 = vadd.f32 %v1995, %v2027
        %v2030 = vadd.f32 %v1996, %v2028
        %v2031 = vadd.f32 %v1997, %v2027
        %v2032 = vadd.f32 %v1998, %v2028
        %v2033 = vadd.f32 %v1999, %v2027
        %v2034 = vadd.f32 %v2000, %v2028
        %v2035 = vadd.f32 %v2001, %v2027
        %v2036 = vadd.f32 %v2002, %v2028
        %v2037 = vadd.f32 %v2003, %v2027
        %v2038 = vadd.f32 %v2004, %v2028
        %v2039 = vadd.f32 %v2005, %v2027
        %v2040 = vadd.f32 %v2006, %v2028
        %v2041 = vadd.f32 %v2007, %v2027
        %v2042 = vadd.f32 %v2008, %v2028
        %v2043 = vadd.f32 %v2009, %v2027
        %v2044 = vadd.f32 %v2010, %v2028
        %v2045 = vadd.f32 %v2011, %v2027
        %v2046 = vadd.f32 %v2012, %v2028
        %v2047 = vadd.f32 %v2013, %v2027
        %v2048 = vadd.f32 %v2014, %v2028
        %v2049 = vadd.f32 %v2015, %v2027
        %v2050 = vadd.f32 %v2016, %v2028
        %v2051 = vadd.f32 %v2017, %v2027
        %v2052 = vadd.f32 %v2018, %v2028
        %v2053 = vadd.f32 %v2019, %v2027
        %v2054 = vadd.f32 %v2020, %v2028
        %v2055 = vadd.f32 %v2021, %v2027
        %v2056 = vadd.f32 %v2022, %v2028
        %v2057 = vadd.f32 %v2023, %v2027
        %v2058 = vadd.f32 %v2024, %v2028
        %v2059 = vadd.f32 %v2025, %v2027
        %v2060 = vadd.f32 %v2026, %v2028
        %v2061 = vpack.c.bf16 %v2030, %v2029
        %v2062 = vpack.c.bf16 %v2032, %v2031
        %v2063 = vpack.c.bf16 %v2034, %v2033
        %v2064 = vpack.c.bf16 %v2036, %v2035
        %v2065 = vpack.c.bf16 %v2038, %v2037
        %v2066 = vpack.c.bf16 %v2040, %v2039
        %v2067 = vpack.c.bf16 %v2042, %v2041
        %v2068 = vpack.c.bf16 %v2044, %v2043
        %v2069 = vpack.c.bf16 %v2046, %v2045
        %v2070 = vpack.c.bf16 %v2048, %v2047
        %v2071 = vpack.c.bf16 %v2050, %v2049
        %v2072 = vpack.c.bf16 %v2052, %v2051
        %v2073 = vpack.c.bf16 %v2054, %v2053
        %v2074 = vpack.c.bf16 %v2056, %v2055
        %v2075 = vpack.c.bf16 %v2058, %v2057
        %v2076 = vpack.c.bf16 %v2060, %v2059
        %v2077 = vunpack.c.l.bf16 %v2061
        %v2078 = vunpack.c.h.bf16 %v2061
        %v2079 = vunpack.c.l.bf16 %v2062
        %v2080 = vunpack.c.h.bf16 %v2062
        %v2081 = vunpack.c.l.bf16 %v2063
        %v2082 = vunpack.c.h.bf16 %v2063
        %v2083 = vunpack.c.l.bf16 %v2064
        %v2084 = vunpack.c.h.bf16 %v2064
        %v2085 = vunpack.c.l.bf16 %v2065
        %v2086 = vunpack.c.h.bf16 %v2065
        %v2087 = vunpack.c.l.bf16 %v2066
        %v2088 = vunpack.c.h.bf16 %v2066
        %v2089 = vunpack.c.l.bf16 %v2067
        %v2090 = vunpack.c.h.bf16 %v2067
        %v2091 = vunpack.c.l.bf16 %v2068
        %v2092 = vunpack.c.h.bf16 %v2068
        %v2093 = vunpack.c.l.bf16 %v2069
        %v2094 = vunpack.c.h.bf16 %v2069
        %v2095 = vunpack.c.l.bf16 %v2070
        %v2096 = vunpack.c.h.bf16 %v2070
        %v2097 = vunpack.c.l.bf16 %v2071
        %v2098 = vunpack.c.h.bf16 %v2071
        %v2099 = vunpack.c.l.bf16 %v2072
        %v2100 = vunpack.c.h.bf16 %v2072
        %v2101 = vunpack.c.l.bf16 %v2073
        %v2102 = vunpack.c.h.bf16 %v2073
        %v2103 = vunpack.c.l.bf16 %v2074
        %v2104 = vunpack.c.h.bf16 %v2074
        %v2105 = vunpack.c.l.bf16 %v2075
        %v2106 = vunpack.c.h.bf16 %v2075
        %v2107 = vunpack.c.l.bf16 %v2076
        %v2108 = vunpack.c.h.bf16 %v2076
        %v2109 = vmax.f32 %v2077, 0.0
        %v2110 = vmax.f32 %v2078, 0.0
        %v2111 = vmax.f32 %v2079, 0.0
        %v2112 = vmax.f32 %v2080, 0.0
        %v2113 = vmax.f32 %v2081, 0.0
        %v2114 = vmax.f32 %v2082, 0.0
        %v2115 = vmax.f32 %v2083, 0.0
        %v2116 = vmax.f32 %v2084, 0.0
        %v2117 = vmax.f32 %v2085, 0.0
        %v2118 = vmax.f32 %v2086, 0.0
        %v2119 = vmax.f32 %v2087, 0.0
        %v2120 = vmax.f32 %v2088, 0.0
        %v2121 = vmax.f32 %v2089, 0.0
        %v2122 = vmax.f32 %v2090, 0.0
        %v2123 = vmax.f32 %v2091, 0.0
        %v2124 = vmax.f32 %v2092, 0.0
        %v2125 = vmax.f32 %v2093, 0.0
        %v2126 = vmax.f32 %v2094, 0.0
        %v2127 = vmax.f32 %v2095, 0.0
        %v2128 = vmax.f32 %v2096, 0.0
        %v2129 = vmax.f32 %v2097, 0.0
        %v2130 = vmax.f32 %v2098, 0.0
        %v2131 = vmax.f32 %v2099, 0.0
        %v2132 = vmax.f32 %v2100, 0.0
        %v2133 = vmax.f32 %v2101, 0.0
        %v2134 = vmax.f32 %v2102, 0.0
        %v2135 = vmax.f32 %v2103, 0.0
        %v2136 = vmax.f32 %v2104, 0.0
        %v2137 = vmax.f32 %v2105, 0.0
        %v2138 = vmax.f32 %v2106, 0.0
        %v2139 = vmax.f32 %v2107, 0.0
        %v2140 = vmax.f32 %v2108, 0.0
        %v2141 = vpack.c.bf16 %v2111, %v2109
        %v2142 = vpack.c.bf16 %v2112, %v2110
        %v2143 = vpack.c.bf16 %v2115, %v2113
        %v2144 = vpack.c.bf16 %v2116, %v2114
        %v2145 = vpack.c.bf16 %v2119, %v2117
        %v2146 = vpack.c.bf16 %v2120, %v2118
        %v2147 = vpack.c.bf16 %v2123, %v2121
        %v2148 = vpack.c.bf16 %v2124, %v2122
        %v2149 = vpack.c.bf16 %v2127, %v2125
        %v2150 = vpack.c.bf16 %v2128, %v2126
        %v2151 = vpack.c.bf16 %v2131, %v2129
        %v2152 = vpack.c.bf16 %v2132, %v2130
        %v2153 = vpack.c.bf16 %v2135, %v2133
        %v2154 = vpack.c.bf16 %v2136, %v2134
        %v2155 = vpack.c.bf16 %v2139, %v2137
        %v2156 = vpack.c.bf16 %v2140, %v2138
        %v2157 = vld [vmem:[%s5] sm:$0xff]
        %v2158 = vld [vmem:[%s5 + $0x8] sm:$0xff]
        %v2159 = vld [vmem:[%s5 + $0x10] sm:$0xff]
        %v2160 = vld [vmem:[%s5 + $0x18] sm:$0xff]
        %v2161 = vld [vmem:[%s5 + $0x20] sm:$0xff]
        %v2162 = vld [vmem:[%s5 + $0x28] sm:$0xff]
        %v2163 = vld [vmem:[%s5 + $0x30] sm:$0xff]
        %v2164 = vld [vmem:[%s5 + $0x38] sm:$0xff]
        %v2165 = vld [vmem:[%s5 + $0x40] sm:$0xff]
        %v2166 = vld [vmem:[%s5 + $0x48] sm:$0xff]
        %v2167 = vld [vmem:[%s5 + $0x50] sm:$0xff]
        %v2168 = vld [vmem:[%s5 + $0x58] sm:$0xff]
        %v2169 = vld [vmem:[%s5 + $0x60] sm:$0xff]
        %v2170 = vld [vmem:[%s5 + $0x68] sm:$0xff]
        %v2171 = vld [vmem:[%s5 + $0x70] sm:$0xff]
        %v2172 = vld [vmem:[%s5 + $0x78] sm:$0xff]
        %v2173 = vld [vmem:[%s5 + $0x80] sm:$0xff]
        %v2174 = vld [vmem:[%s5 + $0x88] sm:$0xff]
        %v2175 = vld [vmem:[%s5 + $0x90] sm:$0xff]
        %v2176 = vld [vmem:[%s5 + $0x98] sm:$0xff]
        %v2177 = vld [vmem:[%s5 + $0xa0] sm:$0xff]
        %v2178 = vld [vmem:[%s5 + $0xa8] sm:$0xff]
        %v2179 = vld [vmem:[%s5 + $0xb0] sm:$0xff]
        %v2180 = vld [vmem:[%s5 + $0xb8] sm:$0xff]
        %v2181 = vld [vmem:[%s5 + $0xc0] sm:$0xff]
        %v2182 = vld [vmem:[%s5 + $0xc8] sm:$0xff]
        %v2183 = vld [vmem:[%s5 + $0xd0] sm:$0xff]
        %v2184 = vld [vmem:[%s5 + $0xd8] sm:$0xff]
        %v2185 = vld [vmem:[%s5 + $0xe0] sm:$0xff]
        %v2186 = vld [vmem:[%s5 + $0xe8] sm:$0xff]
        %v2187 = vld [vmem:[%s5 + $0xf0] sm:$0xff]
        %v2188 = vld [vmem:[%s5 + $0xf8] sm:$0xff]
        %v2189 = vld [vmem:[%s5 + $0x100] sm:$0xff]
        %v2190 = vld [vmem:[%s5 + $0x108] sm:$0xff]
        %v2191 = vld [vmem:[%s5 + $0x110] sm:$0xff]
        %v2192 = vld [vmem:[%s5 + $0x118] sm:$0xff]
        %v2193 = vld [vmem:[%s5 + $0x120] sm:$0xff]
        %v2194 = vld [vmem:[%s5 + $0x128] sm:$0xff]
        %v2195 = vld [vmem:[%s5 + $0x130] sm:$0xff]
        %v2196 = vld [vmem:[%s5 + $0x138] sm:$0xff]
        %v2197 = vld [vmem:[%s5 + $0x140] sm:$0xff]
        %v2198 = vld [vmem:[%s5 + $0x148] sm:$0xff]
        %v2199 = vld [vmem:[%s5 + $0x150] sm:$0xff]
        %v2200 = vld [vmem:[%s5 + $0x158] sm:$0xff]
        %v2201 = vld [vmem:[%s5 + $0x160] sm:$0xff]
        %v2202 = vld [vmem:[%s5 + $0x168] sm:$0xff]
        %v2203 = vld [vmem:[%s5 + $0x170] sm:$0xff]
        %v2204 = vld [vmem:[%s5 + $0x178] sm:$0xff]
        %v2205 = vld [vmem:[%s5 + $0x180] sm:$0xff]
        %v2206 = vld [vmem:[%s5 + $0x188] sm:$0xff]
        %v2207 = vld [vmem:[%s5 + $0x190] sm:$0xff]
        %v2208 = vld [vmem:[%s5 + $0x198] sm:$0xff]
        %v2209 = vld [vmem:[%s5 + $0x1a0] sm:$0xff]
        %v2210 = vld [vmem:[%s5 + $0x1a8] sm:$0xff]
        %v2211 = vld [vmem:[%s5 + $0x1b0] sm:$0xff]
        %v2212 = vld [vmem:[%s5 + $0x1b8] sm:$0xff]
        %v2213 = vld [vmem:[%s5 + $0x1c0] sm:$0xff]
        %v2214 = vld [vmem:[%s5 + $0x1c8] sm:$0xff]
        %v2215 = vld [vmem:[%s5 + $0x1d0] sm:$0xff]
        %v2216 = vld [vmem:[%s5 + $0x1d8] sm:$0xff]
        %v2217 = vld [vmem:[%s5 + $0x1e0] sm:$0xff]
        %v2218 = vld [vmem:[%s5 + $0x1e8] sm:$0xff]
        %v2219 = vld [vmem:[%s5 + $0x1f0] sm:$0xff]
        %v2220 = vld [vmem:[%s5 + $0x1f8] sm:$0xff]
        %v2285 = vunpack.c.l.b16 %v2157
        %v2286 = vunpack.c.h.b16 %v2157
        %v2287 = vunpack.c.l.b16 %v2158
        %v2288 = vunpack.c.h.b16 %v2158
        %v2289 = vunpack.c.l.b16 %v2159
        %v2290 = vunpack.c.h.b16 %v2159
        %v2291 = vunpack.c.l.b16 %v2160
        %v2292 = vunpack.c.h.b16 %v2160
        %v2293 = vunpack.c.l.b16 %v2161
        %v2294 = vunpack.c.h.b16 %v2161
        %v2295 = vunpack.c.l.b16 %v2162
        %v2296 = vunpack.c.h.b16 %v2162
        %v2297 = vunpack.c.l.b16 %v2163
        %v2298 = vunpack.c.h.b16 %v2163
        %v2299 = vunpack.c.l.b16 %v2164
        %v2300 = vunpack.c.h.b16 %v2164
        %v2301 = vunpack.c.l.b16 %v2165
        %v2302 = vunpack.c.h.b16 %v2165
        %v2303 = vunpack.c.l.b16 %v2166
        %v2304 = vunpack.c.h.b16 %v2166
        %v2305 = vunpack.c.l.b16 %v2167
        %v2306 = vunpack.c.h.b16 %v2167
        %v2307 = vunpack.c.l.b16 %v2168
        %v2308 = vunpack.c.h.b16 %v2168
        %v2309 = vunpack.c.l.b16 %v2169
        %v2310 = vunpack.c.h.b16 %v2169
        %v2311 = vunpack.c.l.b16 %v2170
        %v2312 = vunpack.c.h.b16 %v2170
        %v2313 = vunpack.c.l.b16 %v2171
        %v2314 = vunpack.c.h.b16 %v2171
        %v2315 = vunpack.c.l.b16 %v2172
        %v2316 = vunpack.c.h.b16 %v2172
        %v2317 = vunpack.c.l.b16 %v2173
        %v2318 = vunpack.c.h.b16 %v2173
        %v2319 = vunpack.c.l.b16 %v2174
        %v2320 = vunpack.c.h.b16 %v2174
        %v2321 = vunpack.c.l.b16 %v2175
        %v2322 = vunpack.c.h.b16 %v2175
        %v2323 = vunpack.c.l.b16 %v2176
        %v2324 = vunpack.c.h.b16 %v2176
        %v2325 = vunpack.c.l.b16 %v2177
        %v2326 = vunpack.c.h.b16 %v2177
        %v2327 = vunpack.c.l.b16 %v2178
        %v2328 = vunpack.c.h.b16 %v2178
        %v2329 = vunpack.c.l.b16 %v2179
        %v2330 = vunpack.c.h.b16 %v2179
        %v2331 = vunpack.c.l.b16 %v2180
        %v2332 = vunpack.c.h.b16 %v2180
        %v2333 = vunpack.c.l.b16 %v2181
        %v2334 = vunpack.c.h.b16 %v2181
        %v2335 = vunpack.c.l.b16 %v2182
        %v2336 = vunpack.c.h.b16 %v2182
        %v2337 = vunpack.c.l.b16 %v2183
        %v2338 = vunpack.c.h.b16 %v2183
        %v2339 = vunpack.c.l.b16 %v2184
        %v2340 = vunpack.c.h.b16 %v2184
        %v2341 = vunpack.c.l.b16 %v2185
        %v2342 = vunpack.c.h.b16 %v2185
        %v2343 = vunpack.c.l.b16 %v2186
        %v2344 = vunpack.c.h.b16 %v2186
        %v2345 = vunpack.c.l.b16 %v2187
        %v2346 = vunpack.c.h.b16 %v2187
        %v2347 = vunpack.c.l.b16 %v2188
        %v2348 = vunpack.c.h.b16 %v2188
        %v2349 = vunpack.c.l.b16 %v2189
        %v2350 = vunpack.c.h.b16 %v2189
        %v2351 = vunpack.c.l.b16 %v2190
        %v2352 = vunpack.c.h.b16 %v2190
        %v2353 = vunpack.c.l.b16 %v2191
        %v2354 = vunpack.c.h.b16 %v2191
        %v2355 = vunpack.c.l.b16 %v2192
        %v2356 = vunpack.c.h.b16 %v2192
        %v2357 = vunpack.c.l.b16 %v2193
        %v2358 = vunpack.c.h.b16 %v2193
        %v2359 = vunpack.c.l.b16 %v2194
        %v2360 = vunpack.c.h.b16 %v2194
        %v2361 = vunpack.c.l.b16 %v2195
        %v2362 = vunpack.c.h.b16 %v2195
        %v2363 = vunpack.c.l.b16 %v2196
        %v2364 = vunpack.c.h.b16 %v2196
        %v2365 = vunpack.c.l.b16 %v2197
        %v2366 = vunpack.c.h.b16 %v2197
        %v2367 = vunpack.c.l.b16 %v2198
        %v2368 = vunpack.c.h.b16 %v2198
        %v2369 = vunpack.c.l.b16 %v2199
        %v2370 = vunpack.c.h.b16 %v2199
        %v2371 = vunpack.c.l.b16 %v2200
        %v2372 = vunpack.c.h.b16 %v2200
        %v2373 = vunpack.c.l.b16 %v2201
        %v2374 = vunpack.c.h.b16 %v2201
        %v2375 = vunpack.c.l.b16 %v2202
        %v2376 = vunpack.c.h.b16 %v2202
        %v2377 = vunpack.c.l.b16 %v2203
        %v2378 = vunpack.c.h.b16 %v2203
        %v2379 = vunpack.c.l.b16 %v2204
        %v2380 = vunpack.c.h.b16 %v2204
        %v2381 = vunpack.c.l.b16 %v2205
        %v2382 = vunpack.c.h.b16 %v2205
        %v2383 = vunpack.c.l.b16 %v2206
        %v2384 = vunpack.c.h.b16 %v2206
        %v2385 = vunpack.c.l.b16 %v2207
        %v2386 = vunpack.c.h.b16 %v2207
        %v2387 = vunpack.c.l.b16 %v2208
        %v2388 = vunpack.c.h.b16 %v2208
        %v2389 = vunpack.c.l.b16 %v2209
        %v2390 = vunpack.c.h.b16 %v2209
        %v2391 = vunpack.c.l.b16 %v2210
        %v2392 = vunpack.c.h.b16 %v2210
        %v2393 = vunpack.c.l.b16 %v2211
        %v2394 = vunpack.c.h.b16 %v2211
        %v2395 = vunpack.c.l.b16 %v2212
        %v2396 = vunpack.c.h.b16 %v2212
        %v2397 = vunpack.c.l.b16 %v2213
        %v2398 = vunpack.c.h.b16 %v2213
        %v2399 = vunpack.c.l.b16 %v2214
        %v2400 = vunpack.c.h.b16 %v2214
        %v2401 = vunpack.c.l.b16 %v2215
        %v2402 = vunpack.c.h.b16 %v2215
        %v2403 = vunpack.c.l.b16 %v2216
        %v2404 = vunpack.c.h.b16 %v2216
        %v2405 = vunpack.c.l.b16 %v2217
        %v2406 = vunpack.c.h.b16 %v2217
        %v2407 = vunpack.c.l.b16 %v2218
        %v2408 = vunpack.c.h.b16 %v2218
        %v2409 = vunpack.c.l.b16 %v2219
        %v2410 = vunpack.c.h.b16 %v2219
        %v2411 = vunpack.c.l.b16 %v2220
        %v2412 = vunpack.c.h.b16 %v2220
        %v2413 = vpack.c.b16 %v2289, %v2285
        %v2414 = vpack.c.b16 %v2290, %v2286
        %v2415 = vpack.c.b16 %v2291, %v2287
        %v2416 = vpack.c.b16 %v2292, %v2288
        %v2417 = vpack.c.b16 %v2297, %v2293
        %v2418 = vpack.c.b16 %v2298, %v2294
        %v2419 = vpack.c.b16 %v2299, %v2295
        %v2420 = vpack.c.b16 %v2300, %v2296
        %v2421 = vpack.c.b16 %v2305, %v2301
        %v2422 = vpack.c.b16 %v2306, %v2302
        %v2423 = vpack.c.b16 %v2307, %v2303
        %v2424 = vpack.c.b16 %v2308, %v2304
        %v2425 = vpack.c.b16 %v2313, %v2309
        %v2426 = vpack.c.b16 %v2314, %v2310
        %v2427 = vpack.c.b16 %v2315, %v2311
        %v2428 = vpack.c.b16 %v2316, %v2312
        %v2429 = vpack.c.b16 %v2321, %v2317
        %v2430 = vpack.c.b16 %v2322, %v2318
        %v2431 = vpack.c.b16 %v2323, %v2319
        %v2432 = vpack.c.b16 %v2324, %v2320
        %v2433 = vpack.c.b16 %v2329, %v2325
        %v2434 = vpack.c.b16 %v2330, %v2326
        %v2435 = vpack.c.b16 %v2331, %v2327
        %v2436 = vpack.c.b16 %v2332, %v2328
        %v2437 = vpack.c.b16 %v2337, %v2333
        %v2438 = vpack.c.b16 %v2338, %v2334
        %v2439 = vpack.c.b16 %v2339, %v2335
        %v2440 = vpack.c.b16 %v2340, %v2336
        %v2441 = vpack.c.b16 %v2345, %v2341
        %v2442 = vpack.c.b16 %v2346, %v2342
        %v2443 = vpack.c.b16 %v2347, %v2343
        %v2444 = vpack.c.b16 %v2348, %v2344
        %v2445 = vpack.c.b16 %v2353, %v2349
        %v2446 = vpack.c.b16 %v2354, %v2350
        %v2447 = vpack.c.b16 %v2355, %v2351
        %v2448 = vpack.c.b16 %v2356, %v2352
        %v2449 = vpack.c.b16 %v2361, %v2357
        %v2450 = vpack.c.b16 %v2362, %v2358
        %v2451 = vpack.c.b16 %v2363, %v2359
        %v2452 = vpack.c.b16 %v2364, %v2360
        %v2453 = vpack.c.b16 %v2369, %v2365
        %v2454 = vpack.c.b16 %v2370, %v2366
        %v2455 = vpack.c.b16 %v2371, %v2367
        %v2456 = vpack.c.b16 %v2372, %v2368
        %v2457 = vpack.c.b16 %v2377, %v2373
        %v2458 = vpack.c.b16 %v2378, %v2374
        %v2459 = vpack.c.b16 %v2379, %v2375
        %v2460 = vpack.c.b16 %v2380, %v2376
        %v2461 = vpack.c.b16 %v2385, %v2381
        %v2462 = vpack.c.b16 %v2386, %v2382
        %v2463 = vpack.c.b16 %v2387, %v2383
        %v2464 = vpack.c.b16 %v2388, %v2384
        %v2465 = vpack.c.b16 %v2393, %v2389
        %v2466 = vpack.c.b16 %v2394, %v2390
        %v2467 = vpack.c.b16 %v2395, %v2391
        %v2468 = vpack.c.b16 %v2396, %v2392
        %v2469 = vpack.c.b16 %v2401, %v2397
        %v2470 = vpack.c.b16 %v2402, %v2398
        %v2471 = vpack.c.b16 %v2403, %v2399
        %v2472 = vpack.c.b16 %v2404, %v2400
        %v2473 = vpack.c.b16 %v2409, %v2405
        %v2474 = vpack.c.b16 %v2410, %v2406
        %v2475 = vpack.c.b16 %v2411, %v2407
        %v2476 = vpack.c.b16 %v2412, %v2408
        %2541 = vmatpush.bf16.msra.mxu0 %v2441
        %2542 = vmatpush.bf16.msra.mxu0 %v2437
        %2543 = vmatpush.bf16.msra.mxu0 %v2433
        %2544 = vmatpush.bf16.msra.mxu0 %v2429
        %2545 = vmatpush.bf16.msra.mxu0 %v2425
        %2546 = vmatpush.bf16.msra.mxu0 %v2421
        %2547 = vmatpush.bf16.msra.mxu0 %v2417
        %2548 = vmatpush.bf16.msra.mxu0 %v2413
        %2549 = vmatmul.bf16.gmra.mxu0 %v2141
        %v2550 = vpop.f32.mrf.mxu0
        %v2551 = vadd.f32 0.0, %v2550
        %v2552 = vpop.f32.mrf.mxu0
        %v2553 = vadd.f32 0.0, %v2552
        %2554 = vmatmul.bf16.gmra.mxu0 %v2143
        %v2555 = vpop.f32.mrf.mxu0
        %v2556 = vadd.f32 0.0, %v2555
        %v2557 = vpop.f32.mrf.mxu0
        %v2558 = vadd.f32 0.0, %v2557
        %2559 = vmatmul.bf16.gmra.mxu0 %v2145
        %v2560 = vpop.f32.mrf.mxu0
        %v2561 = vadd.f32 0.0, %v2560
        %v2562 = vpop.f32.mrf.mxu0
        %v2563 = vadd.f32 0.0, %v2562
        %2564 = vmatmul.bf16.gmra.mxu0 %v2147
        %v2565 = vpop.f32.mrf.mxu0
        %v2566 = vadd.f32 0.0, %v2565
        %v2567 = vpop.f32.mrf.mxu0
        %v2568 = vadd.f32 0.0, %v2567
        %2569 = vmatmul.bf16.gmra.mxu0 %v2149
        %v2570 = vpop.f32.mrf.mxu0
        %v2571 = vadd.f32 0.0, %v2570
        %v2572 = vpop.f32.mrf.mxu0
        %v2573 = vadd.f32 0.0, %v2572
        %2574 = vmatmul.bf16.gmra.mxu0 %v2151
        %v2575 = vpop.f32.mrf.mxu0
        %v2576 = vadd.f32 0.0, %v2575
        %v2577 = vpop.f32.mrf.mxu0
        %v2578 = vadd.f32 0.0, %v2577
        %2579 = vmatmul.bf16.gmra.mxu0 %v2153
        %v2580 = vpop.f32.mrf.mxu0
        %v2581 = vadd.f32 0.0, %v2580
        %v2582 = vpop.f32.mrf.mxu0
        %v2583 = vadd.f32 0.0, %v2582
        %2584 = vmatmul.bf16.gmra.mxu0 %v2155
        %v2585 = vpop.f32.mrf.mxu0
        %v2586 = vadd.f32 0.0, %v2585
        %v2587 = vpop.f32.mrf.mxu0
        %v2588 = vadd.f32 0.0, %v2587
        %2589 = vdwg.mxu0
        %2590 = vmatpush.bf16.msra.mxu0 %v2473
        %2591 = vmatpush.bf16.msra.mxu0 %v2469
        %2592 = vmatpush.bf16.msra.mxu0 %v2465
        %2593 = vmatpush.bf16.msra.mxu0 %v2461
        %2594 = vmatpush.bf16.msra.mxu0 %v2457
        %2595 = vmatpush.bf16.msra.mxu0 %v2453
        %2596 = vmatpush.bf16.msra.mxu0 %v2449
        %2597 = vmatpush.bf16.msra.mxu0 %v2445
        %2598 = vmatmul.bf16.gmra.mxu0 %v2142
        %v2599 = vpop.f32.mrf.mxu0
        %v2600 = vadd.f32 %v2551, %v2599
        %v2601 = vpop.f32.mrf.mxu0
        %v2602 = vadd.f32 %v2553, %v2601
        %2603 = vmatmul.bf16.gmra.mxu0 %v2144
        %v2604 = vpop.f32.mrf.mxu0
        %v2605 = vadd.f32 %v2556, %v2604
        %v2606 = vpop.f32.mrf.mxu0
        %v2607 = vadd.f32 %v2558, %v2606
        %2608 = vmatmul.bf16.gmra.mxu0 %v2146
        %v2609 = vpop.f32.mrf.mxu0
        %v2610 = vadd.f32 %v2561, %v2609
        %v2611 = vpop.f32.mrf.mxu0
        %v2612 = vadd.f32 %v2563, %v2611
        %2613 = vmatmul.bf16.gmra.mxu0 %v2148
        %v2614 = vpop.f32.mrf.mxu0
        %v2615 = vadd.f32 %v2566, %v2614
        %v2616 = vpop.f32.mrf.mxu0
        %v2617 = vadd.f32 %v2568, %v2616
        %2618 = vmatmul.bf16.gmra.mxu0 %v2150
        %v2619 = vpop.f32.mrf.mxu0
        %v2620 = vadd.f32 %v2571, %v2619
        %v2621 = vpop.f32.mrf.mxu0
        %v2622 = vadd.f32 %v2573, %v2621
        %2623 = vmatmul.bf16.gmra.mxu0 %v2152
        %v2624 = vpop.f32.mrf.mxu0
        %v2625 = vadd.f32 %v2576, %v2624
        %v2626 = vpop.f32.mrf.mxu0
        %v2627 = vadd.f32 %v2578, %v2626
        %2628 = vmatmul.bf16.gmra.mxu0 %v2154
        %v2629 = vpop.f32.mrf.mxu0
        %v2630 = vadd.f32 %v2581, %v2629
        %v2631 = vpop.f32.mrf.mxu0
        %v2632 = vadd.f32 %v2583, %v2631
        %2633 = vmatmul.bf16.gmra.mxu0 %v2156
        %v2634 = vpop.f32.mrf.mxu0
        %v2635 = vadd.f32 %v2586, %v2634
        %v2636 = vpop.f32.mrf.mxu0
        %v2637 = vadd.f32 %v2588, %v2636
        %2638 = vdwg.mxu0
        %2639 = vmatpush.bf16.msra.mxu0 %v2442
        %2640 = vmatpush.bf16.msra.mxu0 %v2438
        %2641 = vmatpush.bf16.msra.mxu0 %v2434
        %2642 = vmatpush.bf16.msra.mxu0 %v2430
        %2643 = vmatpush.bf16.msra.mxu0 %v2426
        %2644 = vmatpush.bf16.msra.mxu0 %v2422
        %2645 = vmatpush.bf16.msra.mxu0 %v2418
        %2646 = vmatpush.bf16.msra.mxu0 %v2414
        %2647 = vmatmul.bf16.gmra.mxu0 %v2141
        %v2648 = vpop.f32.mrf.mxu0
        %v2649 = vadd.f32 0.0, %v2648
        %v2650 = vpop.f32.mrf.mxu0
        %v2651 = vadd.f32 0.0, %v2650
        %2652 = vmatmul.bf16.gmra.mxu0 %v2143
        %v2653 = vpop.f32.mrf.mxu0
        %v2654 = vadd.f32 0.0, %v2653
        %v2655 = vpop.f32.mrf.mxu0
        %v2656 = vadd.f32 0.0, %v2655
        %2657 = vmatmul.bf16.gmra.mxu0 %v2145
        %v2658 = vpop.f32.mrf.mxu0
        %v2659 = vadd.f32 0.0, %v2658
        %v2660 = vpop.f32.mrf.mxu0
        %v2661 = vadd.f32 0.0, %v2660
        %2662 = vmatmul.bf16.gmra.mxu0 %v2147
        %v2663 = vpop.f32.mrf.mxu0
        %v2664 = vadd.f32 0.0, %v2663
        %v2665 = vpop.f32.mrf.mxu0
        %v2666 = vadd.f32 0.0, %v2665
        %2667 = vmatmul.bf16.gmra.mxu0 %v2149
        %v2668 = vpop.f32.mrf.mxu0
        %v2669 = vadd.f32 0.0, %v2668
        %v2670 = vpop.f32.mrf.mxu0
        %v2671 = vadd.f32 0.0, %v2670
        %2672 = vmatmul.bf16.gmra.mxu0 %v2151
        %v2673 = vpop.f32.mrf.mxu0
        %v2674 = vadd.f32 0.0, %v2673
        %v2675 = vpop.f32.mrf.mxu0
        %v2676 = vadd.f32 0.0, %v2675
        %2677 = vmatmul.bf16.gmra.mxu0 %v2153
        %v2678 = vpop.f32.mrf.mxu0
        %v2679 = vadd.f32 0.0, %v2678
        %v2680 = vpop.f32.mrf.mxu0
        %v2681 = vadd.f32 0.0, %v2680
        %2682 = vmatmul.bf16.gmra.mxu0 %v2155
        %v2683 = vpop.f32.mrf.mxu0
        %v2684 = vadd.f32 0.0, %v2683
        %v2685 = vpop.f32.mrf.mxu0
        %v2686 = vadd.f32 0.0, %v2685
        %2687 = vdwg.mxu0
        %2688 = vmatpush.bf16.msra.mxu0 %v2474
        %2689 = vmatpush.bf16.msra.mxu0 %v2470
        %2690 = vmatpush.bf16.msra.mxu0 %v2466
        %2691 = vmatpush.bf16.msra.mxu0 %v2462
        %2692 = vmatpush.bf16.msra.mxu0 %v2458
        %2693 = vmatpush.bf16.msra.mxu0 %v2454
        %2694 = vmatpush.bf16.msra.mxu0 %v2450
        %2695 = vmatpush.bf16.msra.mxu0 %v2446
        %2696 = vmatmul.bf16.gmra.mxu0 %v2142
        %v2697 = vpop.f32.mrf.mxu0
        %v2698 = vadd.f32 %v2649, %v2697
        %v2699 = vpop.f32.mrf.mxu0
        %v2700 = vadd.f32 %v2651, %v2699
        %2701 = vmatmul.bf16.gmra.mxu0 %v2144
        %v2702 = vpop.f32.mrf.mxu0
        %v2703 = vadd.f32 %v2654, %v2702
        %v2704 = vpop.f32.mrf.mxu0
        %v2705 = vadd.f32 %v2656, %v2704
        %2706 = vmatmul.bf16.gmra.mxu0 %v2146
        %v2707 = vpop.f32.mrf.mxu0
        %v2708 = vadd.f32 %v2659, %v2707
        %v2709 = vpop.f32.mrf.mxu0
        %v2710 = vadd.f32 %v2661, %v2709
        %2711 = vmatmul.bf16.gmra.mxu0 %v2148
        %v2712 = vpop.f32.mrf.mxu0
        %v2713 = vadd.f32 %v2664, %v2712
        %v2714 = vpop.f32.mrf.mxu0
        %v2715 = vadd.f32 %v2666, %v2714
        %2716 = vmatmul.bf16.gmra.mxu0 %v2150
        %v2717 = vpop.f32.mrf.mxu0
        %v2718 = vadd.f32 %v2669, %v2717
        %v2719 = vpop.f32.mrf.mxu0
        %v2720 = vadd.f32 %v2671, %v2719
        %2721 = vmatmul.bf16.gmra.mxu0 %v2152
        %v2722 = vpop.f32.mrf.mxu0
        %v2723 = vadd.f32 %v2674, %v2722
        %v2724 = vpop.f32.mrf.mxu0
        %v2725 = vadd.f32 %v2676, %v2724
        %2726 = vmatmul.bf16.gmra.mxu0 %v2154
        %v2727 = vpop.f32.mrf.mxu0
        %v2728 = vadd.f32 %v2679, %v2727
        %v2729 = vpop.f32.mrf.mxu0
        %v2730 = vadd.f32 %v2681, %v2729
        %2731 = vmatmul.bf16.gmra.mxu0 %v2156
        %v2732 = vpop.f32.mrf.mxu0
        %v2733 = vadd.f32 %v2684, %v2732
        %v2734 = vpop.f32.mrf.mxu0
        %v2735 = vadd.f32 %v2686, %v2734
        %2736 = vdwg.mxu0
        %2737 = vmatpush.bf16.msra.mxu0 %v2443
        %2738 = vmatpush.bf16.msra.mxu0 %v2439
        %2739 = vmatpush.bf16.msra.mxu0 %v2435
        %2740 = vmatpush.bf16.msra.mxu0 %v2431
        %2741 = vmatpush.bf16.msra.mxu0 %v2427
        %2742 = vmatpush.bf16.msra.mxu0 %v2423
        %2743 = vmatpush.bf16.msra.mxu0 %v2419
        %2744 = vmatpush.bf16.msra.mxu0 %v2415
        %2745 = vmatmul.bf16.gmra.mxu0 %v2141
        %v2746 = vpop.f32.mrf.mxu0
        %v2747 = vadd.f32 0.0, %v2746
        %v2748 = vpop.f32.mrf.mxu0
        %v2749 = vadd.f32 0.0, %v2748
        %2750 = vmatmul.bf16.gmra.mxu0 %v2143
        %v2751 = vpop.f32.mrf.mxu0
        %v2752 = vadd.f32 0.0, %v2751
        %v2753 = vpop.f32.mrf.mxu0
        %v2754 = vadd.f32 0.0, %v2753
        %2755 = vmatmul.bf16.gmra.mxu0 %v2145
        %v2756 = vpop.f32.mrf.mxu0
        %v2757 = vadd.f32 0.0, %v2756
        %v2758 = vpop.f32.mrf.mxu0
        %v2759 = vadd.f32 0.0, %v2758
        %2760 = vmatmul.bf16.gmra.mxu0 %v2147
        %v2761 = vpop.f32.mrf.mxu0
        %v2762 = vadd.f32 0.0, %v2761
        %v2763 = vpop.f32.mrf.mxu0
        %v2764 = vadd.f32 0.0, %v2763
        %2765 = vmatmul.bf16.gmra.mxu0 %v2149
        %v2766 = vpop.f32.mrf.mxu0
        %v2767 = vadd.f32 0.0, %v2766
        %v2768 = vpop.f32.mrf.mxu0
        %v2769 = vadd.f32 0.0, %v2768
        %2770 = vmatmul.bf16.gmra.mxu0 %v2151
        %v2771 = vpop.f32.mrf.mxu0
        %v2772 = vadd.f32 0.0, %v2771
        %v2773 = vpop.f32.mrf.mxu0
        %v2774 = vadd.f32 0.0, %v2773
        %2775 = vmatmul.bf16.gmra.mxu0 %v2153
        %v2776 = vpop.f32.mrf.mxu0
        %v2777 = vadd.f32 0.0, %v2776
        %v2778 = vpop.f32.mrf.mxu0
        %v2779 = vadd.f32 0.0, %v2778
        %2780 = vmatmul.bf16.gmra.mxu0 %v2155
        %v2781 = vpop.f32.mrf.mxu0
        %v2782 = vadd.f32 0.0, %v2781
        %v2783 = vpop.f32.mrf.mxu0
        %v2784 = vadd.f32 0.0, %v2783
        %2785 = vdwg.mxu0
        %2786 = vmatpush.bf16.msra.mxu0 %v2475
        %2787 = vmatpush.bf16.msra.mxu0 %v2471
        %2788 = vmatpush.bf16.msra.mxu0 %v2467
        %2789 = vmatpush.bf16.msra.mxu0 %v2463
        %2790 = vmatpush.bf16.msra.mxu0 %v2459
        %2791 = vmatpush.bf16.msra.mxu0 %v2455
        %2792 = vmatpush.bf16.msra.mxu0 %v2451
        %2793 = vmatpush.bf16.msra.mxu0 %v2447
        %2794 = vmatmul.bf16.gmra.mxu0 %v2142
        %v2795 = vpop.f32.mrf.mxu0
        %v2796 = vadd.f32 %v2747, %v2795
        %v2797 = vpop.f32.mrf.mxu0
        %v2798 = vadd.f32 %v2749, %v2797
        %2799 = vmatmul.bf16.gmra.mxu0 %v2144
        %v2800 = vpop.f32.mrf.mxu0
        %v2801 = vadd.f32 %v2752, %v2800
        %v2802 = vpop.f32.mrf.mxu0
        %v2803 = vadd.f32 %v2754, %v2802
        %2804 = vmatmul.bf16.gmra.mxu0 %v2146
        %v2805 = vpop.f32.mrf.mxu0
        %v2806 = vadd.f32 %v2757, %v2805
        %v2807 = vpop.f32.mrf.mxu0
        %v2808 = vadd.f32 %v2759, %v2807
        %2809 = vmatmul.bf16.gmra.mxu0 %v2148
        %v2810 = vpop.f32.mrf.mxu0
        %v2811 = vadd.f32 %v2762, %v2810
        %v2812 = vpop.f32.mrf.mxu0
        %v2813 = vadd.f32 %v2764, %v2812
        %2814 = vmatmul.bf16.gmra.mxu0 %v2150
        %v2815 = vpop.f32.mrf.mxu0
        %v2816 = vadd.f32 %v2767, %v2815
        %v2817 = vpop.f32.mrf.mxu0
        %v2818 = vadd.f32 %v2769, %v2817
        %2819 = vmatmul.bf16.gmra.mxu0 %v2152
        %v2820 = vpop.f32.mrf.mxu0
        %v2821 = vadd.f32 %v2772, %v2820
        %v2822 = vpop.f32.mrf.mxu0
        %v2823 = vadd.f32 %v2774, %v2822
        %2824 = vmatmul.bf16.gmra.mxu0 %v2154
        %v2825 = vpop.f32.mrf.mxu0
        %v2826 = vadd.f32 %v2777, %v2825
        %v2827 = vpop.f32.mrf.mxu0
        %v2828 = vadd.f32 %v2779, %v2827
        %2829 = vmatmul.bf16.gmra.mxu0 %v2156
        %v2830 = vpop.f32.mrf.mxu0
        %v2831 = vadd.f32 %v2782, %v2830
        %v2832 = vpop.f32.mrf.mxu0
        %v2833 = vadd.f32 %v2784, %v2832
        %2834 = vdwg.mxu0
        %2835 = vmatpush.bf16.msra.mxu0 %v2444
        %2836 = vmatpush.bf16.msra.mxu0 %v2440
        %2837 = vmatpush.bf16.msra.mxu0 %v2436
        %2838 = vmatpush.bf16.msra.mxu0 %v2432
        %2839 = vmatpush.bf16.msra.mxu0 %v2428
        %2840 = vmatpush.bf16.msra.mxu0 %v2424
        %2841 = vmatpush.bf16.msra.mxu0 %v2420
        %2842 = vmatpush.bf16.msra.mxu0 %v2416
        %2843 = vmatmul.bf16.gmra.mxu0 %v2141
        %v2844 = vpop.f32.mrf.mxu0
        %v2845 = vadd.f32 0.0, %v2844
        %v2846 = vpop.f32.mrf.mxu0
        %v2847 = vadd.f32 0.0, %v2846
        %2848 = vmatmul.bf16.gmra.mxu0 %v2143
        %v2849 = vpop.f32.mrf.mxu0
        %v2850 = vadd.f32 0.0, %v2849
        %v2851 = vpop.f32.mrf.mxu0
        %v2852 = vadd.f32 0.0, %v2851
        %2853 = vmatmul.bf16.gmra.mxu0 %v2145
        %v2854 = vpop.f32.mrf.mxu0
        %v2855 = vadd.f32 0.0, %v2854
        %v2856 = vpop.f32.mrf.mxu0
        %v2857 = vadd.f32 0.0, %v2856
        %2858 = vmatmul.bf16.gmra.mxu0 %v2147
        %v2859 = vpop.f32.mrf.mxu0
        %v2860 = vadd.f32 0.0, %v2859
        %v2861 = vpop.f32.mrf.mxu0
        %v2862 = vadd.f32 0.0, %v2861
        %2863 = vmatmul.bf16.gmra.mxu0 %v2149
        %v2864 = vpop.f32.mrf.mxu0
        %v2865 = vadd.f32 0.0, %v2864
        %v2866 = vpop.f32.mrf.mxu0
        %v2867 = vadd.f32 0.0, %v2866
        %2868 = vmatmul.bf16.gmra.mxu0 %v2151
        %v2869 = vpop.f32.mrf.mxu0
        %v2870 = vadd.f32 0.0, %v2869
        %v2871 = vpop.f32.mrf.mxu0
        %v2872 = vadd.f32 0.0, %v2871
        %2873 = vmatmul.bf16.gmra.mxu0 %v2153
        %v2874 = vpop.f32.mrf.mxu0
        %v2875 = vadd.f32 0.0, %v2874
        %v2876 = vpop.f32.mrf.mxu0
        %v2877 = vadd.f32 0.0, %v2876
        %2878 = vmatmul.bf16.gmra.mxu0 %v2155
        %v2879 = vpop.f32.mrf.mxu0
        %v2880 = vadd.f32 0.0, %v2879
        %v2881 = vpop.f32.mrf.mxu0
        %v2882 = vadd.f32 0.0, %v2881
        %2883 = vdwg.mxu0
        %2884 = vmatpush.bf16.msra.mxu0 %v2476
        %2885 = vmatpush.bf16.msra.mxu0 %v2472
        %2886 = vmatpush.bf16.msra.mxu0 %v2468
        %2887 = vmatpush.bf16.msra.mxu0 %v2464
        %2888 = vmatpush.bf16.msra.mxu0 %v2460
        %2889 = vmatpush.bf16.msra.mxu0 %v2456
        %2890 = vmatpush.bf16.msra.mxu0 %v2452
        %2891 = vmatpush.bf16.msra.mxu0 %v2448
        %2892 = vmatmul.bf16.gmra.mxu0 %v2142
        %v2893 = vpop.f32.mrf.mxu0
        %v2894 = vadd.f32 %v2845, %v2893
        %v2895 = vpop.f32.mrf.mxu0
        %v2896 = vadd.f32 %v2847, %v2895
        %2897 = vmatmul.bf16.gmra.mxu0 %v2144
        %v2898 = vpop.f32.mrf.mxu0
        %v2899 = vadd.f32 %v2850, %v2898
        %v2900 = vpop.f32.mrf.mxu0
        %v2901 = vadd.f32 %v2852, %v2900
        %2902 = vmatmul.bf16.gmra.mxu0 %v2146
        %v2903 = vpop.f32.mrf.mxu0
        %v2904 = vadd.f32 %v2855, %v2903
        %v2905 = vpop.f32.mrf.mxu0
        %v2906 = vadd.f32 %v2857, %v2905
        %2907 = vmatmul.bf16.gmra.mxu0 %v2148
        %v2908 = vpop.f32.mrf.mxu0
        %v2909 = vadd.f32 %v2860, %v2908
        %v2910 = vpop.f32.mrf.mxu0
        %v2911 = vadd.f32 %v2862, %v2910
        %2912 = vmatmul.bf16.gmra.mxu0 %v2150
        %v2913 = vpop.f32.mrf.mxu0
        %v2914 = vadd.f32 %v2865, %v2913
        %v2915 = vpop.f32.mrf.mxu0
        %v2916 = vadd.f32 %v2867, %v2915
        %2917 = vmatmul.bf16.gmra.mxu0 %v2152
        %v2918 = vpop.f32.mrf.mxu0
        %v2919 = vadd.f32 %v2870, %v2918
        %v2920 = vpop.f32.mrf.mxu0
        %v2921 = vadd.f32 %v2872, %v2920
        %2922 = vmatmul.bf16.gmra.mxu0 %v2154
        %v2923 = vpop.f32.mrf.mxu0
        %v2924 = vadd.f32 %v2875, %v2923
        %v2925 = vpop.f32.mrf.mxu0
        %v2926 = vadd.f32 %v2877, %v2925
        %2927 = vmatmul.bf16.gmra.mxu0 %v2156
        %v2928 = vpop.f32.mrf.mxu0
        %v2929 = vadd.f32 %v2880, %v2928
        %v2930 = vpop.f32.mrf.mxu0
        %v2931 = vadd.f32 %v2882, %v2930
        %2932 = vdwg.mxu0
        %v2933 = vpack.c.bf16 %v2698, %v2600
        %v2934 = vpack.c.bf16 %v2894, %v2796
        %v2935 = vpack.c.bf16 %v2700, %v2602
        %v2936 = vpack.c.bf16 %v2896, %v2798
        %v2937 = vpack.c.bf16 %v2703, %v2605
        %v2938 = vpack.c.bf16 %v2899, %v2801
        %v2939 = vpack.c.bf16 %v2705, %v2607
        %v2940 = vpack.c.bf16 %v2901, %v2803
        %v2941 = vpack.c.bf16 %v2708, %v2610
        %v2942 = vpack.c.bf16 %v2904, %v2806
        %v2943 = vpack.c.bf16 %v2710, %v2612
        %v2944 = vpack.c.bf16 %v2906, %v2808
        %v2945 = vpack.c.bf16 %v2713, %v2615
        %v2946 = vpack.c.bf16 %v2909, %v2811
        %v2947 = vpack.c.bf16 %v2715, %v2617
        %v2948 = vpack.c.bf16 %v2911, %v2813
        %v2949 = vpack.c.bf16 %v2718, %v2620
        %v2950 = vpack.c.bf16 %v2914, %v2816
        %v2951 = vpack.c.bf16 %v2720, %v2622
        %v2952 = vpack.c.bf16 %v2916, %v2818
        %v2953 = vpack.c.bf16 %v2723, %v2625
        %v2954 = vpack.c.bf16 %v2919, %v2821
        %v2955 = vpack.c.bf16 %v2725, %v2627
        %v2956 = vpack.c.bf16 %v2921, %v2823
        %v2957 = vpack.c.bf16 %v2728, %v2630
        %v2958 = vpack.c.bf16 %v2924, %v2826
        %v2959 = vpack.c.bf16 %v2730, %v2632
        %v2960 = vpack.c.bf16 %v2926, %v2828
        %v2961 = vpack.c.bf16 %v2733, %v2635
        %v2962 = vpack.c.bf16 %v2929, %v2831
        %v2963 = vpack.c.bf16 %v2735, %v2637
        %v2964 = vpack.c.bf16 %v2931, %v2833
        %s2965 = scalar_lea.vmem %s6, 4
        %v2966 = vld [vmem:[%s2965] ss:$8 sm:$0xf]
        %v2968 = vperm.slane %v2966, 0
        %v2969 = vperm.slane %v2966, 1
        %v2970 = vperm.slane %v2966, 2
        %v2971 = vperm.slane %v2966, 3
        %v2976 = vpack.c.bf16 %v2969, %v2968
        %v2977 = vpack.c.bf16 %v2971, %v2970
        %v2980 = vunpack.c.l.b16 %v2976
        %v2981 = vunpack.c.h.b16 %v2976
        %v2982 = vunpack.c.l.b16 %v2977
        %v2983 = vunpack.c.h.b16 %v2977
        %v2984 = vpack.c.b16 %v2980, %v2980
        %v2985 = vpack.c.b16 %v2981, %v2981
        %v2986 = vpack.c.b16 %v2982, %v2982
        %v2987 = vpack.c.b16 %v2983, %v2983
        %v2989 = vpack.i.b16 %v2984, %v2984
        %v2991 = vperm.slane %v2989, 0
        %v2993 = vpack.i.b16 %v2985, %v2985
        %v2995 = vperm.slane %v2993, 0
        %v2997 = vpack.i.b16 %v2986, %v2986
        %v2999 = vperm.slane %v2997, 0
        %v3001 = vpack.i.b16 %v2987, %v2987
        %v3003 = vperm.slane %v3001, 0
        %v3004 = vunpack.c.l.bf16 %v2933
        %v3005 = vunpack.c.h.bf16 %v2933
        %v3006 = vunpack.c.l.bf16 %v2934
        %v3007 = vunpack.c.h.bf16 %v2934
        %v3008 = vunpack.c.l.bf16 %v2935
        %v3009 = vunpack.c.h.bf16 %v2935
        %v3010 = vunpack.c.l.bf16 %v2936
        %v3011 = vunpack.c.h.bf16 %v2936
        %v3012 = vunpack.c.l.bf16 %v2937
        %v3013 = vunpack.c.h.bf16 %v2937
        %v3014 = vunpack.c.l.bf16 %v2938
        %v3015 = vunpack.c.h.bf16 %v2938
        %v3016 = vunpack.c.l.bf16 %v2939
        %v3017 = vunpack.c.h.bf16 %v2939
        %v3018 = vunpack.c.l.bf16 %v2940
        %v3019 = vunpack.c.h.bf16 %v2940
        %v3020 = vunpack.c.l.bf16 %v2941
        %v3021 = vunpack.c.h.bf16 %v2941
        %v3022 = vunpack.c.l.bf16 %v2942
        %v3023 = vunpack.c.h.bf16 %v2942
        %v3024 = vunpack.c.l.bf16 %v2943
        %v3025 = vunpack.c.h.bf16 %v2943
        %v3026 = vunpack.c.l.bf16 %v2944
        %v3027 = vunpack.c.h.bf16 %v2944
        %v3028 = vunpack.c.l.bf16 %v2945
        %v3029 = vunpack.c.h.bf16 %v2945
        %v3030 = vunpack.c.l.bf16 %v2946
        %v3031 = vunpack.c.h.bf16 %v2946
        %v3032 = vunpack.c.l.bf16 %v2947
        %v3033 = vunpack.c.h.bf16 %v2947
        %v3034 = vunpack.c.l.bf16 %v2948
        %v3035 = vunpack.c.h.bf16 %v2948
        %v3036 = vunpack.c.l.bf16 %v2949
        %v3037 = vunpack.c.h.bf16 %v2949
        %v3038 = vunpack.c.l.bf16 %v2950
        %v3039 = vunpack.c.h.bf16 %v2950
        %v3040 = vunpack.c.l.bf16 %v2951
        %v3041 = vunpack.c.h.bf16 %v2951
        %v3042 = vunpack.c.l.bf16 %v2952
        %v3043 = vunpack.c.h.bf16 %v2952
        %v3044 = vunpack.c.l.bf16 %v2953
        %v3045 = vunpack.c.h.bf16 %v2953
        %v3046 = vunpack.c.l.bf16 %v2954
        %v3047 = vunpack.c.h.bf16 %v2954
        %v3048 = vunpack.c.l.bf16 %v2955
        %v3049 = vunpack.c.h.bf16 %v2955
        %v3050 = vunpack.c.l.bf16 %v2956
        %v3051 = vunpack.c.h.bf16 %v2956
        %v3052 = vunpack.c.l.bf16 %v2957
        %v3053 = vunpack.c.h.bf16 %v2957
        %v3054 = vunpack.c.l.bf16 %v2958
        %v3055 = vunpack.c.h.bf16 %v2958
        %v3056 = vunpack.c.l.bf16 %v2959
        %v3057 = vunpack.c.h.bf16 %v2959
        %v3058 = vunpack.c.l.bf16 %v2960
        %v3059 = vunpack.c.h.bf16 %v2960
        %v3060 = vunpack.c.l.bf16 %v2961
        %v3061 = vunpack.c.h.bf16 %v2961
        %v3062 = vunpack.c.l.bf16 %v2962
        %v3063 = vunpack.c.h.bf16 %v2962
        %v3064 = vunpack.c.l.bf16 %v2963
        %v3065 = vunpack.c.h.bf16 %v2963
        %v3066 = vunpack.c.l.bf16 %v2964
        %v3067 = vunpack.c.h.bf16 %v2964
        %v3068 = vunpack.c.l.bf16 %v2991
        %v3069 = vunpack.c.l.bf16 %v2995
        %v3070 = vunpack.c.l.bf16 %v2999
        %v3071 = vunpack.c.l.bf16 %v3003
        %v3072 = vadd.f32 %v3004, %v3068
        %v3073 = vadd.f32 %v3005, %v3069
        %v3074 = vadd.f32 %v3006, %v3070
        %v3075 = vadd.f32 %v3007, %v3071
        %v3076 = vadd.f32 %v3008, %v3068
        %v3077 = vadd.f32 %v3009, %v3069
        %v3078 = vadd.f32 %v3010, %v3070
        %v3079 = vadd.f32 %v3011, %v3071
        %v3080 = vadd.f32 %v3012, %v3068
        %v3081 = vadd.f32 %v3013, %v3069
        %v3082 = vadd.f32 %v3014, %v3070
        %v3083 = vadd.f32 %v3015, %v3071
        %v3084 = vadd.f32 %v3016, %v3068
        %v3085 = vadd.f32 %v3017, %v3069
        %v3086 = vadd.f32 %v3018, %v3070
        %v3087 = vadd.f32 %v3019, %v3071
        %v3088 = vadd.f32 %v3020, %v3068
        %v3089 = vadd.f32 %v3021, %v3069
        %v3090 = vadd.f32 %v3022, %v3070
        %v3091 = vadd.f32 %v3023, %v3071
        %v3092 = vadd.f32 %v3024, %v3068
        %v3093 = vadd.f32 %v3025, %v3069
        %v3094 = vadd.f32 %v3026, %v3070
        %v3095 = vadd.f32 %v3027, %v3071
        %v3096 = vadd.f32 %v3028, %v3068
        %v3097 = vadd.f32 %v3029, %v3069
        %v3098 = vadd.f32 %v3030, %v3070
        %v3099 = vadd.f32 %v3031, %v3071
        %v3100 = vadd.f32 %v3032, %v3068
        %v3101 = vadd.f32 %v3033, %v3069
        %v3102 = vadd.f32 %v3034, %v3070
        %v3103 = vadd.f32 %v3035, %v3071
        %v3104 = vadd.f32 %v3036, %v3068
        %v3105 = vadd.f32 %v3037, %v3069
        %v3106 = vadd.f32 %v3038, %v3070
        %v3107 = vadd.f32 %v3039, %v3071
        %v3108 = vadd.f32 %v3040, %v3068
        %v3109 = vadd.f32 %v3041, %v3069
        %v3110 = vadd.f32 %v3042, %v3070
        %v3111 = vadd.f32 %v3043, %v3071
        %v3112 = vadd.f32 %v3044, %v3068
        %v3113 = vadd.f32 %v3045, %v3069
        %v3114 = vadd.f32 %v3046, %v3070
        %v3115 = vadd.f32 %v3047, %v3071
        %v3116 = vadd.f32 %v3048, %v3068
        %v3117 = vadd.f32 %v3049, %v3069
        %v3118 = vadd.f32 %v3050, %v3070
        %v3119 = vadd.f32 %v3051, %v3071
        %v3120 = vadd.f32 %v3052, %v3068
        %v3121 = vadd.f32 %v3053, %v3069
        %v3122 = vadd.f32 %v3054, %v3070
        %v3123 = vadd.f32 %v3055, %v3071
        %v3124 = vadd.f32 %v3056, %v3068
        %v3125 = vadd.f32 %v3057, %v3069
        %v3126 = vadd.f32 %v3058, %v3070
        %v3127 = vadd.f32 %v3059, %v3071
        %v3128 = vadd.f32 %v3060, %v3068
        %v3129 = vadd.f32 %v3061, %v3069
        %v3130 = vadd.f32 %v3062, %v3070
        %v3131 = vadd.f32 %v3063, %v3071
        %v3132 = vadd.f32 %v3064, %v3068
        %v3133 = vadd.f32 %v3065, %v3069
        %v3134 = vadd.f32 %v3066, %v3070
        %v3135 = vadd.f32 %v3067, %v3071
        %v3136 = vpack.c.bf16 %v3073, %v3072
        %v3137 = vpack.c.bf16 %v3075, %v3074
        %v3138 = vpack.c.bf16 %v3077, %v3076
        %v3139 = vpack.c.bf16 %v3079, %v3078
        %v3140 = vpack.c.bf16 %v3081, %v3080
        %v3141 = vpack.c.bf16 %v3083, %v3082
        %v3142 = vpack.c.bf16 %v3085, %v3084
        %v3143 = vpack.c.bf16 %v3087, %v3086
        %v3144 = vpack.c.bf16 %v3089, %v3088
        %v3145 = vpack.c.bf16 %v3091, %v3090
        %v3146 = vpack.c.bf16 %v3093, %v3092
        %v3147 = vpack.c.bf16 %v3095, %v3094
        %v3148 = vpack.c.bf16 %v3097, %v3096
        %v3149 = vpack.c.bf16 %v3099, %v3098
        %v3150 = vpack.c.bf16 %v3101, %v3100
        %v3151 = vpack.c.bf16 %v3103, %v3102
        %v3152 = vpack.c.bf16 %v3105, %v3104
        %v3153 = vpack.c.bf16 %v3107, %v3106
        %v3154 = vpack.c.bf16 %v3109, %v3108
        %v3155 = vpack.c.bf16 %v3111, %v3110
        %v3156 = vpack.c.bf16 %v3113, %v3112
        %v3157 = vpack.c.bf16 %v3115, %v3114
        %v3158 = vpack.c.bf16 %v3117, %v3116
        %v3159 = vpack.c.bf16 %v3119, %v3118
        %v3160 = vpack.c.bf16 %v3121, %v3120
        %v3161 = vpack.c.bf16 %v3123, %v3122
        %v3162 = vpack.c.bf16 %v3125, %v3124
        %v3163 = vpack.c.bf16 %v3127, %v3126
        %v3164 = vpack.c.bf16 %v3129, %v3128
        %v3165 = vpack.c.bf16 %v3131, %v3130
        %v3166 = vpack.c.bf16 %v3133, %v3132
        %v3167 = vpack.c.bf16 %v3135, %v3134
        %p3168 = scmp.ne.s32.totalorder %s31, 3
        // Predicated region
        $region123: #{discriminator_forward.1} parent=113 // pred_check
          %p3169 = pneg %p3168
        $region124: #{discriminator_forward.1} parent=113 // pred_check_branch
          %3171 = sbr.rel (%p3169) target = $region126
        $region125: #{discriminator_forward.1} parent=113 // pred_region
          %v3172 = vld [vmem:[#allocation2] sm:$0xff]
          %v3173 = vunpack.c.l.bf16 %v3136
          %v3174 = vunpack.c.h.bf16 %v3136
          %v3175 = vunpack.c.l.bf16 %v3137
          %v3176 = vunpack.c.h.bf16 %v3137
          %v3177 = vunpack.c.l.bf16 %v3138
          %v3178 = vunpack.c.h.bf16 %v3138
          %v3179 = vunpack.c.l.bf16 %v3139
          %v3180 = vunpack.c.h.bf16 %v3139
          %v3181 = vunpack.c.l.bf16 %v3140
          %v3182 = vunpack.c.h.bf16 %v3140
          %v3183 = vunpack.c.l.bf16 %v3141
          %v3184 = vunpack.c.h.bf16 %v3141
          %v3185 = vunpack.c.l.bf16 %v3142
          %v3186 = vunpack.c.h.bf16 %v3142
          %v3187 = vunpack.c.l.bf16 %v3143
          %v3188 = vunpack.c.h.bf16 %v3143
          %v3189 = vunpack.c.l.bf16 %v3144
          %v3190 = vunpack.c.h.bf16 %v3144
          %v3191 = vunpack.c.l.bf16 %v3145
          %v3192 = vunpack.c.h.bf16 %v3145
          %v3193 = vunpack.c.l.bf16 %v3146
          %v3194 = vunpack.c.h.bf16 %v3146
          %v3195 = vunpack.c.l.bf16 %v3147
          %v3196 = vunpack.c.h.bf16 %v3147
          %v3197 = vunpack.c.l.bf16 %v3148
          %v3198 = vunpack.c.h.bf16 %v3148
          %v3199 = vunpack.c.l.bf16 %v3149
          %v3200 = vunpack.c.h.bf16 %v3149
          %v3201 = vunpack.c.l.bf16 %v3150
          %v3202 = vunpack.c.h.bf16 %v3150
          %v3203 = vunpack.c.l.bf16 %v3151
          %v3204 = vunpack.c.h.bf16 %v3151
          %v3205 = vunpack.c.l.bf16 %v3152
          %v3206 = vunpack.c.h.bf16 %v3152
          %v3207 = vunpack.c.l.bf16 %v3153
          %v3208 = vunpack.c.h.bf16 %v3153
          %v3209 = vunpack.c.l.bf16 %v3154
          %v3210 = vunpack.c.h.bf16 %v3154
          %v3211 = vunpack.c.l.bf16 %v3155
          %v3212 = vunpack.c.h.bf16 %v3155
          %v3213 = vunpack.c.l.bf16 %v3156
          %v3214 = vunpack.c.h.bf16 %v3156
          %v3215 = vunpack.c.l.bf16 %v3157
          %v3216 = vunpack.c.h.bf16 %v3157
          %v3217 = vunpack.c.l.bf16 %v3158
          %v3218 = vunpack.c.h.bf16 %v3158
          %v3219 = vunpack.c.l.bf16 %v3159
          %v3220 = vunpack.c.h.bf16 %v3159
          %v3221 = vunpack.c.l.bf16 %v3160
          %v3222 = vunpack.c.h.bf16 %v3160
          %v3223 = vunpack.c.l.bf16 %v3161
          %v3224 = vunpack.c.h.bf16 %v3161
          %v3225 = vunpack.c.l.bf16 %v3162
          %v3226 = vunpack.c.h.bf16 %v3162
          %v3227 = vunpack.c.l.bf16 %v3163
          %v3228 = vunpack.c.h.bf16 %v3163
          %v3229 = vunpack.c.l.bf16 %v3164
          %v3230 = vunpack.c.h.bf16 %v3164
          %v3231 = vunpack.c.l.bf16 %v3165
          %v3232 = vunpack.c.h.bf16 %v3165
          %v3233 = vunpack.c.l.bf16 %v3166
          %v3234 = vunpack.c.h.bf16 %v3166
          %v3235 = vunpack.c.l.bf16 %v3167
          %v3236 = vunpack.c.h.bf16 %v3167
          %v3237 = vmax.f32 %v3173, %v3177
          %v3238 = vmax.f32 %v3237, %v3181
          %v3239 = vmax.f32 %v3238, %v3185
          %v3240 = vmax.f32 %v3239, %v3189
          %v3241 = vmax.f32 %v3240, %v3193
          %v3242 = vmax.f32 %v3241, %v3197
          %v3243 = vmax.f32 %v3242, %v3201
          %v3244 = vrot.slane %v3243, 4
          %v3245 = vmax.f32 %v3243, %v3244
          %v3246 = vrot.slane %v3245, 2
          %v3247 = vmax.f32 %v3245, %v3246
          %v3248 = vrot.slane %v3247, 1
          %v3249 = vmax.f32 %v3247, %v3248
          %v3250 = vmax.f32 %v3174, %v3178
          %v3251 = vmax.f32 %v3250, %v3182
          %v3252 = vmax.f32 %v3251, %v3186
          %v3253 = vmax.f32 %v3252, %v3190
          %v3254 = vmax.f32 %v3253, %v3194
          %v3255 = vmax.f32 %v3254, %v3198
          %v3256 = vmax.f32 %v3255, %v3202
          %v3257 = vrot.slane %v3256, 4
          %v3258 = vmax.f32 %v3256, %v3257
          %v3259 = vrot.slane %v3258, 2
          %v3260 = vmax.f32 %v3258, %v3259
          %v3261 = vrot.slane %v3260, 1
          %v3262 = vmax.f32 %v3260, %v3261
          %v3263 = vmax.f32 %v3175, %v3179
          %v3264 = vmax.f32 %v3263, %v3183
          %v3265 = vmax.f32 %v3264, %v3187
          %v3266 = vmax.f32 %v3265, %v3191
          %v3267 = vmax.f32 %v3266, %v3195
          %v3268 = vmax.f32 %v3267, %v3199
          %v3269 = vmax.f32 %v3268, %v3203
          %v3270 = vrot.slane %v3269, 4
          %v3271 = vmax.f32 %v3269, %v3270
          %v3272 = vrot.slane %v3271, 2
          %v3273 = vmax.f32 %v3271, %v3272
          %v3274 = vrot.slane %v3273, 1
          %v3275 = vmax.f32 %v3273, %v3274
          %v3276 = vmax.f32 %v3176, %v3180
          %v3277 = vmax.f32 %v3276, %v3184
          %v3278 = vmax.f32 %v3277, %v3188
          %v3279 = vmax.f32 %v3278, %v3192
          %v3280 = vmax.f32 %v3279, %v3196
          %v3281 = vmax.f32 %v3280, %v3200
          %v3282 = vmax.f32 %v3281, %v3204
          %v3283 = vrot.slane %v3282, 4
          %v3284 = vmax.f32 %v3282, %v3283
          %v3285 = vrot.slane %v3284, 2
          %v3286 = vmax.f32 %v3284, %v3285
          %v3287 = vrot.slane %v3286, 1
          %v3288 = vmax.f32 %v3286, %v3287
          %v3289 = vmax.f32 %v3205, %v3209
          %v3290 = vmax.f32 %v3289, %v3213
          %v3291 = vmax.f32 %v3290, %v3217
          %v3292 = vmax.f32 %v3291, %v3221
          %v3293 = vmax.f32 %v3292, %v3225
          %v3294 = vmax.f32 %v3293, %v3229
          %v3295 = vmax.f32 %v3294, %v3233
          %v3296 = vrot.slane %v3295, 4
          %v3297 = vmax.f32 %v3295, %v3296
          %v3298 = vrot.slane %v3297, 2
          %v3299 = vmax.f32 %v3297, %v3298
          %v3300 = vrot.slane %v3299, 1
          %v3301 = vmax.f32 %v3299, %v3300
          %v3302 = vmax.f32 %v3206, %v3210
          %v3303 = vmax.f32 %v3302, %v3214
          %v3304 = vmax.f32 %v3303, %v3218
          %v3305 = vmax.f32 %v3304, %v3222
          %v3306 = vmax.f32 %v3305, %v3226
          %v3307 = vmax.f32 %v3306, %v3230
          %v3308 = vmax.f32 %v3307, %v3234
          %v3309 = vrot.slane %v3308, 4
          %v3310 = vmax.f32 %v3308, %v3309
          %v3311 = vrot.slane %v3310, 2
          %v3312 = vmax.f32 %v3310, %v3311
          %v3313 = vrot.slane %v3312, 1
          %v3314 = vmax.f32 %v3312, %v3313
          %v3315 = vmax.f32 %v3207, %v3211
          %v3316 = vmax.f32 %v3315, %v3215
          %v3317 = vmax.f32 %v3316, %v3219
          %v3318 = vmax.f32 %v3317, %v3223
          %v3319 = vmax.f32 %v3318, %v3227
          %v3320 = vmax.f32 %v3319, %v3231
          %v3321 = vmax.f32 %v3320, %v3235
          %v3322 = vrot.slane %v3321, 4
          %v3323 = vmax.f32 %v3321, %v3322
          %v3324 = vrot.slane %v3323, 2
          %v3325 = vmax.f32 %v3323, %v3324
          %v3326 = vrot.slane %v3325, 1
          %v3327 = vmax.f32 %v3325, %v3326
          %v3328 = vmax.f32 %v3208, %v3212
          %v3329 = vmax.f32 %v3328, %v3216
          %v3330 = vmax.f32 %v3329, %v3220
          %v3331 = vmax.f32 %v3330, %v3224
          %v3332 = vmax.f32 %v3331, %v3228
          %v3333 = vmax.f32 %v3332, %v3232
          %v3334 = vmax.f32 %v3333, %v3236
          %v3335 = vrot.slane %v3334, 4
          %v3336 = vmax.f32 %v3334, %v3335
          %v3337 = vrot.slane %v3336, 2
          %v3338 = vmax.f32 %v3336, %v3337
          %v3339 = vrot.slane %v3338, 1
          %v3340 = vmax.f32 %v3338, %v3339
          %v3341 = vpack.c.bf16 %v3262, %v3249
          %v3342 = vpack.c.bf16 %v3288, %v3275
          %v3343 = vpack.c.bf16 %v3314, %v3301
          %v3344 = vpack.c.bf16 %v3340, %v3327
          %v3345 = vunpack.c.l.bf16 %v3341
          %v3346 = vunpack.c.h.bf16 %v3341
          %v3347 = vunpack.c.l.bf16 %v3342
          %v3348 = vunpack.c.h.bf16 %v3342
          %v3349 = vunpack.c.l.bf16 %v3343
          %v3350 = vunpack.c.h.bf16 %v3343
          %v3351 = vunpack.c.l.bf16 %v3344
          %v3352 = vunpack.c.h.bf16 %v3344
          %v3361 = vrot.slane %v3346, 6
          %v3362 = vrot.slane %v3347, 4
          %v3363 = vrot.slane %v3348, 2
          %v3364 = vrot.slane %v3350, 6
          %v3365 = vrot.slane %v3351, 4
          %v3366 = vrot.slane %v3352, 2
          %vm3367 = vcmask 1041408
          %v3368 = vsel %vm3367, %v3345, %v3361
          %vm3369 = vcmask 1045508
          %v3370 = vsel %vm3369, %v3362, %v3363
          %vm3371 = vcmask 1043456
          %v3372 = vsel %vm3371, %v3368, %v3370
          %v3373 = vsel %vm3367, %v3349, %v3364
          %v3374 = vsel %vm3369, %v3365, %v3366
          %v3375 = vsel %vm3371, %v3373, %v3374
          %vm3376 = vcmask 1044484
          %v3377 = vsel %vm3376, %v3372, %v3372
          %vm3378 = vcmask 1046534
          %v3379 = vsel %vm3378, %v3372, %v3377
          %v3380 = vrot.slane %v3375, 7
          %vm3381 = vcmask 1041409
          %v3382 = vsel %vm3381, %v3380, %v3379
          %vm3383 = vcmask 1043459
          %v3384 = vsel %vm3383, %v3380, %v3382
          %vm3385 = vcmask 1045509
          %v3386 = vsel %vm3385, %v3380, %v3384
          %vm3387 = vcmask 1047559
          %v3388 = vsel %vm3387, %v3380, %v3386
          %v3390 = vmax.f32 %v3172, %v3388
          %3391 = vst [vmem:[#allocation2] sm:$0xff] %v3390
        $region126: #{discriminator_forward.1} parent=113 // pred_fallthru
          _
        %p3392 = scmp.eq.s32.totalorder %s31, 3
        // Predicated region
        $region127: #{discriminator_forward.1} parent=113 // pred_check
          %p3393 = pneg %p3392
        $region128: #{discriminator_forward.1} parent=113 // pred_check_branch
          %3395 = sbr.rel (%p3393) target = $region130
        $region129: #{discriminator_forward.1} parent=113 // pred_region
          %s3396 = smul.u32 %s31, 64
          %v3397 = vlaneseq
          %v3398 = vshrl.u32 %v3397, 7
          %v3399 = vadd.s32 %v3398, 8
          %v3400 = vadd.s32 %v3398, 16
          %v3401 = vadd.s32 %v3398, 24
          %v3402 = vadd.s32 %v3398, 32
          %v3403 = vadd.s32 %v3398, 40
          %v3404 = vadd.s32 %v3398, 48
          %v3405 = vadd.s32 %v3398, 56
          %v3406 = vstv %s3396
          %v3407 = vadd.s32 %v3406, %v3398
          %v3408 = vadd.s32 %v3406, %v3399
          %v3409 = vadd.s32 %v3406, %v3400
          %v3410 = vadd.s32 %v3406, %v3401
          %v3411 = vadd.s32 %v3406, %v3402
          %v3412 = vadd.s32 %v3406, %v3403
          %v3413 = vadd.s32 %v3406, %v3404
          %v3414 = vadd.s32 %v3406, %v3405
          %vm3415 = vcmp.lt.s32.totalorder %v3407, 200
          %vm3416 = vcmp.lt.s32.totalorder %v3408, 200
          %vm3417 = vcmp.lt.s32.totalorder %v3409, 200
          %vm3418 = vcmp.lt.s32.totalorder %v3410, 200
          %vm3419 = vcmp.lt.s32.totalorder %v3411, 200
          %vm3420 = vcmp.lt.s32.totalorder %v3412, 200
          %vm3421 = vcmp.lt.s32.totalorder %v3413, 200
          %vm3422 = vcmp.lt.s32.totalorder %v3414, 200
          %v3423 = vsel %vm3415, 1, 0
          %v3424 = vsel %vm3416, 1, 0
          %v3425 = vsel %vm3417, 1, 0
          %v3426 = vsel %vm3418, 1, 0
          %v3427 = vsel %vm3419, 1, 0
          %v3428 = vsel %vm3420, 1, 0
          %v3429 = vsel %vm3421, 1, 0
          %v3430 = vsel %vm3422, 1, 0
          %vm3431 = vcmp.eq.s32.totalorder %v3423, 1
          %vm3432 = vcmp.eq.s32.totalorder %v3424, 1
          %vm3433 = vcmp.eq.s32.totalorder %v3425, 1
          %vm3434 = vcmp.eq.s32.totalorder %v3426, 1
          %vm3435 = vcmp.eq.s32.totalorder %v3427, 1
          %vm3436 = vcmp.eq.s32.totalorder %v3428, 1
          %vm3437 = vcmp.eq.s32.totalorder %v3429, 1
          %vm3438 = vcmp.eq.s32.totalorder %v3430, 1
          %vm3439 = vmpackc.low %vm3431, %vm3431
          %vm3440 = vmpackc.low %vm3432, %vm3432
          %vm3441 = vmpackc.low %vm3433, %vm3433
          %vm3442 = vmpackc.low %vm3434, %vm3434
          %vm3443 = vmpackc.low %vm3435, %vm3435
          %vm3444 = vmpackc.low %vm3436, %vm3436
          %vm3445 = vmpackc.low %vm3437, %vm3437
          %vm3446 = vmpackc.low %vm3438, %vm3438
          %v3447 = vsel %vm3439, %v3136, 4286644096
          %v3448 = vsel %vm3439, %v3137, 4286644096
          %v3449 = vsel %vm3440, %v3138, 4286644096
          %v3450 = vsel %vm3440, %v3139, 4286644096
          %v3451 = vsel %vm3441, %v3140, 4286644096
          %v3452 = vsel %vm3441, %v3141, 4286644096
          %v3453 = vsel %vm3442, %v3142, 4286644096
          %v3454 = vsel %vm3442, %v3143, 4286644096
          %v3455 = vsel %vm3443, %v3144, 4286644096
          %v3456 = vsel %vm3443, %v3145, 4286644096
          %v3457 = vsel %vm3444, %v3146, 4286644096
          %v3458 = vsel %vm3444, %v3147, 4286644096
          %v3459 = vsel %vm3445, %v3148, 4286644096
          %v3460 = vsel %vm3445, %v3149, 4286644096
          %v3461 = vsel %vm3446, %v3150, 4286644096
          %v3462 = vsel %vm3446, %v3151, 4286644096
          %v3463 = vsel %vm3439, %v3152, 4286644096
          %v3464 = vsel %vm3439, %v3153, 4286644096
          %v3465 = vsel %vm3440, %v3154, 4286644096
          %v3466 = vsel %vm3440, %v3155, 4286644096
          %v3467 = vsel %vm3441, %v3156, 4286644096
          %v3468 = vsel %vm3441, %v3157, 4286644096
          %v3469 = vsel %vm3442, %v3158, 4286644096
          %v3470 = vsel %vm3442, %v3159, 4286644096
          %v3471 = vsel %vm3443, %v3160, 4286644096
          %v3472 = vsel %vm3443, %v3161, 4286644096
          %v3473 = vsel %vm3444, %v3162, 4286644096
          %v3474 = vsel %vm3444, %v3163, 4286644096
          %v3475 = vsel %vm3445, %v3164, 4286644096
          %v3476 = vsel %vm3445, %v3165, 4286644096
          %v3477 = vsel %vm3446, %v3166, 4286644096
          %v3478 = vsel %vm3446, %v3167, 4286644096
          %v3479 = vld [vmem:[#allocation2] sm:$0xff]
          %v3480 = vunpack.c.l.bf16 %v3447
          %v3481 = vunpack.c.h.bf16 %v3447
          %v3482 = vunpack.c.l.bf16 %v3448
          %v3483 = vunpack.c.h.bf16 %v3448
          %v3484 = vunpack.c.l.bf16 %v3449
          %v3485 = vunpack.c.h.bf16 %v3449
          %v3486 = vunpack.c.l.bf16 %v3450
          %v3487 = vunpack.c.h.bf16 %v3450
          %v3488 = vunpack.c.l.bf16 %v3451
          %v3489 = vunpack.c.h.bf16 %v3451
          %v3490 = vunpack.c.l.bf16 %v3452
          %v3491 = vunpack.c.h.bf16 %v3452
          %v3492 = vunpack.c.l.bf16 %v3453
          %v3493 = vunpack.c.h.bf16 %v3453
          %v3494 = vunpack.c.l.bf16 %v3454
          %v3495 = vunpack.c.h.bf16 %v3454
          %v3496 = vunpack.c.l.bf16 %v3455
          %v3497 = vunpack.c.h.bf16 %v3455
          %v3498 = vunpack.c.l.bf16 %v3456
          %v3499 = vunpack.c.h.bf16 %v3456
          %v3500 = vunpack.c.l.bf16 %v3457
          %v3501 = vunpack.c.h.bf16 %v3457
          %v3502 = vunpack.c.l.bf16 %v3458
          %v3503 = vunpack.c.h.bf16 %v3458
          %v3504 = vunpack.c.l.bf16 %v3459
          %v3505 = vunpack.c.h.bf16 %v3459
          %v3506 = vunpack.c.l.bf16 %v3460
          %v3507 = vunpack.c.h.bf16 %v3460
          %v3508 = vunpack.c.l.bf16 %v3461
          %v3509 = vunpack.c.h.bf16 %v3461
          %v3510 = vunpack.c.l.bf16 %v3462
          %v3511 = vunpack.c.h.bf16 %v3462
          %v3512 = vunpack.c.l.bf16 %v3463
          %v3513 = vunpack.c.h.bf16 %v3463
          %v3514 = vunpack.c.l.bf16 %v3464
          %v3515 = vunpack.c.h.bf16 %v3464
          %v3516 = vunpack.c.l.bf16 %v3465
          %v3517 = vunpack.c.h.bf16 %v3465
          %v3518 = vunpack.c.l.bf16 %v3466
          %v3519 = vunpack.c.h.bf16 %v3466
          %v3520 = vunpack.c.l.bf16 %v3467
          %v3521 = vunpack.c.h.bf16 %v3467
          %v3522 = vunpack.c.l.bf16 %v3468
          %v3523 = vunpack.c.h.bf16 %v3468
          %v3524 = vunpack.c.l.bf16 %v3469
          %v3525 = vunpack.c.h.bf16 %v3469
          %v3526 = vunpack.c.l.bf16 %v3470
          %v3527 = vunpack.c.h.bf16 %v3470
          %v3528 = vunpack.c.l.bf16 %v3471
          %v3529 = vunpack.c.h.bf16 %v3471
          %v3530 = vunpack.c.l.bf16 %v3472
          %v3531 = vunpack.c.h.bf16 %v3472
          %v3532 = vunpack.c.l.bf16 %v3473
          %v3533 = vunpack.c.h.bf16 %v3473
          %v3534 = vunpack.c.l.bf16 %v3474
          %v3535 = vunpack.c.h.bf16 %v3474
          %v3536 = vunpack.c.l.bf16 %v3475
          %v3537 = vunpack.c.h.bf16 %v3475
          %v3538 = vunpack.c.l.bf16 %v3476
          %v3539 = vunpack.c.h.bf16 %v3476
          %v3540 = vunpack.c.l.bf16 %v3477
          %v3541 = vunpack.c.h.bf16 %v3477
          %v3542 = vunpack.c.l.bf16 %v3478
          %v3543 = vunpack.c.h.bf16 %v3478
          %v3544 = vmax.f32 %v3480, %v3484
          %v3545 = vmax.f32 %v3544, %v3488
          %v3546 = vmax.f32 %v3545, %v3492
          %v3547 = vmax.f32 %v3546, %v3496
          %v3548 = vmax.f32 %v3547, %v3500
          %v3549 = vmax.f32 %v3548, %v3504
          %v3550 = vmax.f32 %v3549, %v3508
          %v3551 = vrot.slane %v3550, 4
          %v3552 = vmax.f32 %v3550, %v3551
          %v3553 = vrot.slane %v3552, 2
          %v3554 = vmax.f32 %v3552, %v3553
          %v3555 = vrot.slane %v3554, 1
          %v3556 = vmax.f32 %v3554, %v3555
          %v3557 = vmax.f32 %v3481, %v3485
          %v3558 = vmax.f32 %v3557, %v3489
          %v3559 = vmax.f32 %v3558, %v3493
          %v3560 = vmax.f32 %v3559, %v3497
          %v3561 = vmax.f32 %v3560, %v3501
          %v3562 = vmax.f32 %v3561, %v3505
          %v3563 = vmax.f32 %v3562, %v3509
          %v3564 = vrot.slane %v3563, 4
          %v3565 = vmax.f32 %v3563, %v3564
          %v3566 = vrot.slane %v3565, 2
          %v3567 = vmax.f32 %v3565, %v3566
          %v3568 = vrot.slane %v3567, 1
          %v3569 = vmax.f32 %v3567, %v3568
          %v3570 = vmax.f32 %v3482, %v3486
          %v3571 = vmax.f32 %v3570, %v3490
          %v3572 = vmax.f32 %v3571, %v3494
          %v3573 = vmax.f32 %v3572, %v3498
          %v3574 = vmax.f32 %v3573, %v3502
          %v3575 = vmax.f32 %v3574, %v3506
          %v3576 = vmax.f32 %v3575, %v3510
          %v3577 = vrot.slane %v3576, 4
          %v3578 = vmax.f32 %v3576, %v3577
          %v3579 = vrot.slane %v3578, 2
          %v3580 = vmax.f32 %v3578, %v3579
          %v3581 = vrot.slane %v3580, 1
          %v3582 = vmax.f32 %v3580, %v3581
          %v3583 = vmax.f32 %v3483, %v3487
          %v3584 = vmax.f32 %v3583, %v3491
          %v3585 = vmax.f32 %v3584, %v3495
          %v3586 = vmax.f32 %v3585, %v3499
          %v3587 = vmax.f32 %v3586, %v3503
          %v3588 = vmax.f32 %v3587, %v3507
          %v3589 = vmax.f32 %v3588, %v3511
          %v3590 = vrot.slane %v3589, 4
          %v3591 = vmax.f32 %v3589, %v3590
          %v3592 = vrot.slane %v3591, 2
          %v3593 = vmax.f32 %v3591, %v3592
          %v3594 = vrot.slane %v3593, 1
          %v3595 = vmax.f32 %v3593, %v3594
          %v3596 = vmax.f32 %v3512, %v3516
          %v3597 = vmax.f32 %v3596, %v3520
          %v3598 = vmax.f32 %v3597, %v3524
          %v3599 = vmax.f32 %v3598, %v3528
          %v3600 = vmax.f32 %v3599, %v3532
          %v3601 = vmax.f32 %v3600, %v3536
          %v3602 = vmax.f32 %v3601, %v3540
          %v3603 = vrot.slane %v3602, 4
          %v3604 = vmax.f32 %v3602, %v3603
          %v3605 = vrot.slane %v3604, 2
          %v3606 = vmax.f32 %v3604, %v3605
          %v3607 = vrot.slane %v3606, 1
          %v3608 = vmax.f32 %v3606, %v3607
          %v3609 = vmax.f32 %v3513, %v3517
          %v3610 = vmax.f32 %v3609, %v3521
          %v3611 = vmax.f32 %v3610, %v3525
          %v3612 = vmax.f32 %v3611, %v3529
          %v3613 = vmax.f32 %v3612, %v3533
          %v3614 = vmax.f32 %v3613, %v3537
          %v3615 = vmax.f32 %v3614, %v3541
          %v3616 = vrot.slane %v3615, 4
          %v3617 = vmax.f32 %v3615, %v3616
          %v3618 = vrot.slane %v3617, 2
          %v3619 = vmax.f32 %v3617, %v3618
          %v3620 = vrot.slane %v3619, 1
          %v3621 = vmax.f32 %v3619, %v3620
          %v3622 = vmax.f32 %v3514, %v3518
          %v3623 = vmax.f32 %v3622, %v3522
          %v3624 = vmax.f32 %v3623, %v3526
          %v3625 = vmax.f32 %v3624, %v3530
          %v3626 = vmax.f32 %v3625, %v3534
          %v3627 = vmax.f32 %v3626, %v3538
          %v3628 = vmax.f32 %v3627, %v3542
          %v3629 = vrot.slane %v3628, 4
          %v3630 = vmax.f32 %v3628, %v3629
          %v3631 = vrot.slane %v3630, 2
          %v3632 = vmax.f32 %v3630, %v3631
          %v3633 = vrot.slane %v3632, 1
          %v3634 = vmax.f32 %v3632, %v3633
          %v3635 = vmax.f32 %v3515, %v3519
          %v3636 = vmax.f32 %v3635, %v3523
          %v3637 = vmax.f32 %v3636, %v3527
          %v3638 = vmax.f32 %v3637, %v3531
          %v3639 = vmax.f32 %v3638, %v3535
          %v3640 = vmax.f32 %v3639, %v3539
          %v3641 = vmax.f32 %v3640, %v3543
          %v3642 = vrot.slane %v3641, 4
          %v3643 = vmax.f32 %v3641, %v3642
          %v3644 = vrot.slane %v3643, 2
          %v3645 = vmax.f32 %v3643, %v3644
          %v3646 = vrot.slane %v3645, 1
          %v3647 = vmax.f32 %v3645, %v3646
          %v3648 = vpack.c.bf16 %v3569, %v3556
          %v3649 = vpack.c.bf16 %v3595, %v3582
          %v3650 = vpack.c.bf16 %v3621, %v3608
          %v3651 = vpack.c.bf16 %v3647, %v3634
          %v3652 = vunpack.c.l.bf16 %v3648
          %v3653 = vunpack.c.h.bf16 %v3648
          %v3654 = vunpack.c.l.bf16 %v3649
          %v3655 = vunpack.c.h.bf16 %v3649
          %v3656 = vunpack.c.l.bf16 %v3650
          %v3657 = vunpack.c.h.bf16 %v3650
          %v3658 = vunpack.c.l.bf16 %v3651
          %v3659 = vunpack.c.h.bf16 %v3651
          %v3668 = vrot.slane %v3653, 6
          %v3669 = vrot.slane %v3654, 4
          %v3670 = vrot.slane %v3655, 2
          %v3671 = vrot.slane %v3657, 6
          %v3672 = vrot.slane %v3658, 4
          %v3673 = vrot.slane %v3659, 2
          %vm3674 = vcmask 1041408
          %v3675 = vsel %vm3674, %v3652, %v3668
          %vm3676 = vcmask 1045508
          %v3677 = vsel %vm3676, %v3669, %v3670
          %vm3678 = vcmask 1043456
          %v3679 = vsel %vm3678, %v3675, %v3677
          %v3680 = vsel %vm3674, %v3656, %v3671
          %v3681 = vsel %vm3676, %v3672, %v3673
          %v3682 = vsel %vm3678, %v3680, %v3681
          %vm3683 = vcmask 1044484
          %v3684 = vsel %vm3683, %v3679, %v3679
          %vm3685 = vcmask 1046534
          %v3686 = vsel %vm3685, %v3679, %v3684
          %v3687 = vrot.slane %v3682, 7
          %vm3688 = vcmask 1041409
          %v3689 = vsel %vm3688, %v3687, %v3686
          %vm3690 = vcmask 1043459
          %v3691 = vsel %vm3690, %v3687, %v3689
          %vm3692 = vcmask 1045509
          %v3693 = vsel %vm3692, %v3687, %v3691
          %vm3694 = vcmask 1047559
          %v3695 = vsel %vm3694, %v3687, %v3693
          %v3697 = vmax.f32 %v3479, %v3695
          %3698 = vst [vmem:[#allocation2] sm:$0xff] %v3697
          %v3699 = vld [vmem:[#allocation2] sm:$0xff]
          %3701 = vst [vmem:[#allocation1] ss:$4 sm:$0xff] %v3699
          %v3702 = vld.sshfl [vmem:[#allocation1] sm:$0xff pattern:$0x73625140]
          %v3703 = vld.sshfl [vmem:[#allocation1 + $0x8] sm:$0xff pattern:$0x73625140]
          %v3704 = vld.sshfl [vmem:[#allocation1 + $0x10] sm:$0xff pattern:$0x73625140]
          %v3705 = vld.sshfl [vmem:[#allocation1 + $0x18] sm:$0xff pattern:$0x73625140]
          %v3710 = vpack.c.bf16 %v3702, %v3702
          %v3711 = vpack.c.bf16 %v3703, %v3703
          %v3712 = vpack.c.bf16 %v3704, %v3704
          %v3713 = vpack.c.bf16 %v3705, %v3705
          %v3714 = vld [vmem:[%s7] sm:$0xff]
          %v3715 = vld [vmem:[%s7 + $0x8] sm:$0xff]
          %v3716 = vld [vmem:[%s7 + $0x10] sm:$0xff]
          %v3717 = vld [vmem:[%s7 + $0x18] sm:$0xff]
          %v3718 = vld [vmem:[%s7 + $0x20] sm:$0xff]
          %v3719 = vld [vmem:[%s7 + $0x28] sm:$0xff]
          %v3720 = vld [vmem:[%s7 + $0x30] sm:$0xff]
          %v3721 = vld [vmem:[%s7 + $0x38] sm:$0xff]
          %v3722 = vld [vmem:[%s7 + $0x40] sm:$0xff]
          %v3723 = vld [vmem:[%s7 + $0x48] sm:$0xff]
          %v3724 = vld [vmem:[%s7 + $0x50] sm:$0xff]
          %v3725 = vld [vmem:[%s7 + $0x58] sm:$0xff]
          %v3726 = vld [vmem:[%s7 + $0x60] sm:$0xff]
          %v3727 = vld [vmem:[%s7 + $0x68] sm:$0xff]
          %v3728 = vld [vmem:[%s7 + $0x70] sm:$0xff]
          %v3729 = vld [vmem:[%s7 + $0x78] sm:$0xff]
          %v3730 = vld [vmem:[%s7 + $0x80] sm:$0xff]
          %v3731 = vld [vmem:[%s7 + $0x88] sm:$0xff]
          %v3732 = vld [vmem:[%s7 + $0x90] sm:$0xff]
          %v3733 = vld [vmem:[%s7 + $0x98] sm:$0xff]
          %v3734 = vld [vmem:[%s7 + $0xa0] sm:$0xff]
          %v3735 = vld [vmem:[%s7 + $0xa8] sm:$0xff]
          %v3736 = vld [vmem:[%s7 + $0xb0] sm:$0xff]
          %v3737 = vld [vmem:[%s7 + $0xb8] sm:$0xff]
          %v3738 = vld [vmem:[%s7 + $0xc0] sm:$0xff]
          %v3739 = vld [vmem:[%s7 + $0xc8] sm:$0xff]
          %v3740 = vld [vmem:[%s7 + $0xd0] sm:$0xff]
          %v3741 = vld [vmem:[%s7 + $0xd8] sm:$0xff]
          %v3742 = vld [vmem:[%s7 + $0xe0] sm:$0xff]
          %v3743 = vld [vmem:[%s7 + $0xe8] sm:$0xff]
          %v3744 = vld [vmem:[%s7 + $0xf0] sm:$0xff]
          %v3745 = vld [vmem:[%s7 + $0xf8] sm:$0xff]
          %v3746 = vld [vmem:[%s7 + $0x100] sm:$0xff]
          %v3747 = vld [vmem:[%s7 + $0x108] sm:$0xff]
          %v3748 = vld [vmem:[%s7 + $0x110] sm:$0xff]
          %v3749 = vld [vmem:[%s7 + $0x118] sm:$0xff]
          %v3750 = vld [vmem:[%s7 + $0x120] sm:$0xff]
          %v3751 = vld [vmem:[%s7 + $0x128] sm:$0xff]
          %v3752 = vld [vmem:[%s7 + $0x130] sm:$0xff]
          %v3753 = vld [vmem:[%s7 + $0x138] sm:$0xff]
          %v3754 = vld [vmem:[%s7 + $0x140] sm:$0xff]
          %v3755 = vld [vmem:[%s7 + $0x148] sm:$0xff]
          %v3756 = vld [vmem:[%s7 + $0x150] sm:$0xff]
          %v3757 = vld [vmem:[%s7 + $0x158] sm:$0xff]
          %v3758 = vld [vmem:[%s7 + $0x160] sm:$0xff]
          %v3759 = vld [vmem:[%s7 + $0x168] sm:$0xff]
          %v3760 = vld [vmem:[%s7 + $0x170] sm:$0xff]
          %v3761 = vld [vmem:[%s7 + $0x178] sm:$0xff]
          %v3762 = vld [vmem:[%s7 + $0x180] sm:$0xff]
          %v3763 = vld [vmem:[%s7 + $0x188] sm:$0xff]
          %v3764 = vld [vmem:[%s7 + $0x190] sm:$0xff]
          %v3765 = vld [vmem:[%s7 + $0x198] sm:$0xff]
          %v3766 = vld [vmem:[%s7 + $0x1a0] sm:$0xff]
          %v3767 = vld [vmem:[%s7 + $0x1a8] sm:$0xff]
          %v3768 = vld [vmem:[%s7 + $0x1b0] sm:$0xff]
          %v3769 = vld [vmem:[%s7 + $0x1b8] sm:$0xff]
          %v3770 = vld [vmem:[%s7 + $0x1c0] sm:$0xff]
          %v3771 = vld [vmem:[%s7 + $0x1c8] sm:$0xff]
          %v3772 = vld [vmem:[%s7 + $0x1d0] sm:$0xff]
          %v3773 = vld [vmem:[%s7 + $0x1d8] sm:$0xff]
          %v3774 = vld [vmem:[%s7 + $0x1e0] sm:$0xff]
          %v3775 = vld [vmem:[%s7 + $0x1e8] sm:$0xff]
          %v3776 = vld [vmem:[%s7 + $0x1f0] sm:$0xff]
          %v3777 = vld [vmem:[%s7 + $0x1f8] sm:$0xff]
          %v3778 = vld [vmem:[%s14] ss:$8 sm:$0x3]
          %v3780 = vperm.slane %v3778, 0
          %v3781 = vperm.slane %v3778, 1
          %v3848 = vunpack.c.l.b16 %v3714
          %v3849 = vunpack.c.h.b16 %v3714
          %v3850 = vunpack.c.l.b16 %v3715
          %v3851 = vunpack.c.h.b16 %v3715
          %v3852 = vunpack.c.l.b16 %v3716
          %v3853 = vunpack.c.h.b16 %v3716
          %v3854 = vunpack.c.l.b16 %v3717
          %v3855 = vunpack.c.h.b16 %v3717
          %v3856 = vunpack.c.l.b16 %v3718
          %v3857 = vunpack.c.h.b16 %v3718
          %v3858 = vunpack.c.l.b16 %v3719
          %v3859 = vunpack.c.h.b16 %v3719
          %v3860 = vunpack.c.l.b16 %v3720
          %v3861 = vunpack.c.h.b16 %v3720
          %v3862 = vunpack.c.l.b16 %v3721
          %v3863 = vunpack.c.h.b16 %v3721
          %v3864 = vunpack.c.l.b16 %v3722
          %v3865 = vunpack.c.h.b16 %v3722
          %v3866 = vunpack.c.l.b16 %v3723
          %v3867 = vunpack.c.h.b16 %v3723
          %v3868 = vunpack.c.l.b16 %v3724
          %v3869 = vunpack.c.h.b16 %v3724
          %v3870 = vunpack.c.l.b16 %v3725
          %v3871 = vunpack.c.h.b16 %v3725
          %v3872 = vunpack.c.l.b16 %v3726
          %v3873 = vunpack.c.h.b16 %v3726
          %v3874 = vunpack.c.l.b16 %v3727
          %v3875 = vunpack.c.h.b16 %v3727
          %v3876 = vunpack.c.l.b16 %v3728
          %v3877 = vunpack.c.h.b16 %v3728
          %v3878 = vunpack.c.l.b16 %v3729
          %v3879 = vunpack.c.h.b16 %v3729
          %v3880 = vunpack.c.l.b16 %v3730
          %v3881 = vunpack.c.h.b16 %v3730
          %v3882 = vunpack.c.l.b16 %v3731
          %v3883 = vunpack.c.h.b16 %v3731
          %v3884 = vunpack.c.l.b16 %v3732
          %v3885 = vunpack.c.h.b16 %v3732
          %v3886 = vunpack.c.l.b16 %v3733
          %v3887 = vunpack.c.h.b16 %v3733
          %v3888 = vunpack.c.l.b16 %v3734
          %v3889 = vunpack.c.h.b16 %v3734
          %v3890 = vunpack.c.l.b16 %v3735
          %v3891 = vunpack.c.h.b16 %v3735
          %v3892 = vunpack.c.l.b16 %v3736
          %v3893 = vunpack.c.h.b16 %v3736
          %v3894 = vunpack.c.l.b16 %v3737
          %v3895 = vunpack.c.h.b16 %v3737
          %v3896 = vunpack.c.l.b16 %v3738
          %v3897 = vunpack.c.h.b16 %v3738
          %v3898 = vunpack.c.l.b16 %v3739
          %v3899 = vunpack.c.h.b16 %v3739
          %v3900 = vunpack.c.l.b16 %v3740
          %v3901 = vunpack.c.h.b16 %v3740
          %v3902 = vunpack.c.l.b16 %v3741
          %v3903 = vunpack.c.h.b16 %v3741
          %v3904 = vunpack.c.l.b16 %v3742
          %v3905 = vunpack.c.h.b16 %v3742
          %v3906 = vunpack.c.l.b16 %v3743
          %v3907 = vunpack.c.h.b16 %v3743
          %v3908 = vunpack.c.l.b16 %v3744
          %v3909 = vunpack.c.h.b16 %v3744
          %v3910 = vunpack.c.l.b16 %v3745
          %v3911 = vunpack.c.h.b16 %v3745
          %v3912 = vunpack.c.l.b16 %v3746
          %v3913 = vunpack.c.h.b16 %v3746
          %v3914 = vunpack.c.l.b16 %v3747
          %v3915 = vunpack.c.h.b16 %v3747
          %v3916 = vunpack.c.l.b16 %v3748
          %v3917 = vunpack.c.h.b16 %v3748
          %v3918 = vunpack.c.l.b16 %v3749
          %v3919 = vunpack.c.h.b16 %v3749
          %v3920 = vunpack.c.l.b16 %v3750
          %v3921 = vunpack.c.h.b16 %v3750
          %v3922 = vunpack.c.l.b16 %v3751
          %v3923 = vunpack.c.h.b16 %v3751
          %v3924 = vunpack.c.l.b16 %v3752
          %v3925 = vunpack.c.h.b16 %v3752
          %v3926 = vunpack.c.l.b16 %v3753
          %v3927 = vunpack.c.h.b16 %v3753
          %v3928 = vunpack.c.l.b16 %v3754
          %v3929 = vunpack.c.h.b16 %v3754
          %v3930 = vunpack.c.l.b16 %v3755
          %v3931 = vunpack.c.h.b16 %v3755
          %v3932 = vunpack.c.l.b16 %v3756
          %v3933 = vunpack.c.h.b16 %v3756
          %v3934 = vunpack.c.l.b16 %v3757
          %v3935 = vunpack.c.h.b16 %v3757
          %v3936 = vunpack.c.l.b16 %v3758
          %v3937 = vunpack.c.h.b16 %v3758
          %v3938 = vunpack.c.l.b16 %v3759
          %v3939 = vunpack.c.h.b16 %v3759
          %v3940 = vunpack.c.l.b16 %v3760
          %v3941 = vunpack.c.h.b16 %v3760
          %v3942 = vunpack.c.l.b16 %v3761
          %v3943 = vunpack.c.h.b16 %v3761
          %v3944 = vunpack.c.l.b16 %v3762
          %v3945 = vunpack.c.h.b16 %v3762
          %v3946 = vunpack.c.l.b16 %v3763
          %v3947 = vunpack.c.h.b16 %v3763
          %v3948 = vunpack.c.l.b16 %v3764
          %v3949 = vunpack.c.h.b16 %v3764
          %v3950 = vunpack.c.l.b16 %v3765
          %v3951 = vunpack.c.h.b16 %v3765
          %v3952 = vunpack.c.l.b16 %v3766
          %v3953 = vunpack.c.h.b16 %v3766
          %v3954 = vunpack.c.l.b16 %v3767
          %v3955 = vunpack.c.h.b16 %v3767
          %v3956 = vunpack.c.l.b16 %v3768
          %v3957 = vunpack.c.h.b16 %v3768
          %v3958 = vunpack.c.l.b16 %v3769
          %v3959 = vunpack.c.h.b16 %v3769
          %v3960 = vunpack.c.l.b16 %v3770
          %v3961 = vunpack.c.h.b16 %v3770
          %v3962 = vunpack.c.l.b16 %v3771
          %v3963 = vunpack.c.h.b16 %v3771
          %v3964 = vunpack.c.l.b16 %v3772
          %v3965 = vunpack.c.h.b16 %v3772
          %v3966 = vunpack.c.l.b16 %v3773
          %v3967 = vunpack.c.h.b16 %v3773
          %v3968 = vunpack.c.l.b16 %v3774
          %v3969 = vunpack.c.h.b16 %v3774
          %v3970 = vunpack.c.l.b16 %v3775
          %v3971 = vunpack.c.h.b16 %v3775
          %v3972 = vunpack.c.l.b16 %v3776
          %v3973 = vunpack.c.h.b16 %v3776
          %v3974 = vunpack.c.l.b16 %v3777
          %v3975 = vunpack.c.h.b16 %v3777
          %v3976 = vpack.c.b16 %v3850, %v3848
          %v3977 = vpack.c.b16 %v3851, %v3849
          %v3978 = vpack.c.b16 %v3854, %v3852
          %v3979 = vpack.c.b16 %v3855, %v3853
          %v3980 = vpack.c.b16 %v3858, %v3856
          %v3981 = vpack.c.b16 %v3859, %v3857
          %v3982 = vpack.c.b16 %v3862, %v3860
          %v3983 = vpack.c.b16 %v3863, %v3861
          %v3984 = vpack.c.b16 %v3866, %v3864
          %v3985 = vpack.c.b16 %v3867, %v3865
          %v3986 = vpack.c.b16 %v3870, %v3868
          %v3987 = vpack.c.b16 %v3871, %v3869
          %v3988 = vpack.c.b16 %v3874, %v3872
          %v3989 = vpack.c.b16 %v3875, %v3873
          %v3990 = vpack.c.b16 %v3878, %v3876
          %v3991 = vpack.c.b16 %v3879, %v3877
          %v3992 = vpack.c.b16 %v3882, %v3880
          %v3993 = vpack.c.b16 %v3883, %v3881
          %v3994 = vpack.c.b16 %v3886, %v3884
          %v3995 = vpack.c.b16 %v3887, %v3885
          %v3996 = vpack.c.b16 %v3890, %v3888
          %v3997 = vpack.c.b16 %v3891, %v3889
          %v3998 = vpack.c.b16 %v3894, %v3892
          %v3999 = vpack.c.b16 %v3895, %v3893
          %v4000 = vpack.c.b16 %v3898, %v3896
          %v4001 = vpack.c.b16 %v3899, %v3897
          %v4002 = vpack.c.b16 %v3902, %v3900
          %v4003 = vpack.c.b16 %v3903, %v3901
          %v4004 = vpack.c.b16 %v3906, %v3904
          %v4005 = vpack.c.b16 %v3907, %v3905
          %v4006 = vpack.c.b16 %v3910, %v3908
          %v4007 = vpack.c.b16 %v3911, %v3909
          %v4008 = vpack.c.b16 %v3914, %v3912
          %v4009 = vpack.c.b16 %v3915, %v3913
          %v4010 = vpack.c.b16 %v3918, %v3916
          %v4011 = vpack.c.b16 %v3919, %v3917
          %v4012 = vpack.c.b16 %v3922, %v3920
          %v4013 = vpack.c.b16 %v3923, %v3921
          %v4014 = vpack.c.b16 %v3926, %v3924
          %v4015 = vpack.c.b16 %v3927, %v3925
          %v4016 = vpack.c.b16 %v3930, %v3928
          %v4017 = vpack.c.b16 %v3931, %v3929
          %v4018 = vpack.c.b16 %v3934, %v3932
          %v4019 = vpack.c.b16 %v3935, %v3933
          %v4020 = vpack.c.b16 %v3938, %v3936
          %v4021 = vpack.c.b16 %v3939, %v3937
          %v4022 = vpack.c.b16 %v3942, %v3940
          %v4023 = vpack.c.b16 %v3943, %v3941
          %v4024 = vpack.c.b16 %v3946, %v3944
          %v4025 = vpack.c.b16 %v3947, %v3945
          %v4026 = vpack.c.b16 %v3950, %v3948
          %v4027 = vpack.c.b16 %v3951, %v3949
          %v4028 = vpack.c.b16 %v3954, %v3952
          %v4029 = vpack.c.b16 %v3955, %v3953
          %v4030 = vpack.c.b16 %v3958, %v3956
          %v4031 = vpack.c.b16 %v3959, %v3957
          %v4032 = vpack.c.b16 %v3962, %v3960
          %v4033 = vpack.c.b16 %v3963, %v3961
          %v4034 = vpack.c.b16 %v3966, %v3964
          %v4035 = vpack.c.b16 %v3967, %v3965
          %v4036 = vpack.c.b16 %v3970, %v3968
          %v4037 = vpack.c.b16 %v3971, %v3969
          %v4038 = vpack.c.b16 %v3974, %v3972
          %v4039 = vpack.c.b16 %v3975, %v3973
          %4104 = vmatpush.bf16.msra.mxu0 %v3990
          %4105 = vmatpush.bf16.msra.mxu0 %v3988
          %4106 = vmatpush.bf16.msra.mxu0 %v3986
          %4107 = vmatpush.bf16.msra.mxu0 %v3984
          %4108 = vmatpush.bf16.msra.mxu0 %v3982
          %4109 = vmatpush.bf16.msra.mxu0 %v3980
          %4110 = vmatpush.bf16.msra.mxu0 %v3978
          %4111 = vmatpush.bf16.msra.mxu0 %v3976
          %4112 = vmatmul.bf16.gmra.mxu0 %v3710
          %v4113 = vpop.f32.mrf.mxu0
          %v4114 = vadd.f32 %v3780, %v4113
          %v4115 = vpop.f32.mrf.mxu0
          %4116 = vdwg.mxu0
          %4117 = vmatpush.bf16.msra.mxu0 %v4006
          %4118 = vmatpush.bf16.msra.mxu0 %v4004
          %4119 = vmatpush.bf16.msra.mxu0 %v4002
          %4120 = vmatpush.bf16.msra.mxu0 %v4000
          %4121 = vmatpush.bf16.msra.mxu0 %v3998
          %4122 = vmatpush.bf16.msra.mxu0 %v3996
          %4123 = vmatpush.bf16.msra.mxu0 %v3994
          %4124 = vmatpush.bf16.msra.mxu0 %v3992
          %4125 = vmatmul.bf16.gmra.mxu0 %v3711
          %v4126 = vpop.f32.mrf.mxu0
          %v4127 = vadd.f32 %v4114, %v4126
          %v4128 = vpop.f32.mrf.mxu0
          %4129 = vdwg.mxu0
          %4130 = vmatpush.bf16.msra.mxu0 %v4022
          %4131 = vmatpush.bf16.msra.mxu0 %v4020
          %4132 = vmatpush.bf16.msra.mxu0 %v4018
          %4133 = vmatpush.bf16.msra.mxu0 %v4016
          %4134 = vmatpush.bf16.msra.mxu0 %v4014
          %4135 = vmatpush.bf16.msra.mxu0 %v4012
          %4136 = vmatpush.bf16.msra.mxu0 %v4010
          %4137 = vmatpush.bf16.msra.mxu0 %v4008
          %4138 = vmatmul.bf16.gmra.mxu0 %v3712
          %v4139 = vpop.f32.mrf.mxu0
          %v4140 = vadd.f32 %v4127, %v4139
          %v4141 = vpop.f32.mrf.mxu0
          %4142 = vdwg.mxu0
          %4143 = vmatpush.bf16.msra.mxu0 %v4038
          %4144 = vmatpush.bf16.msra.mxu0 %v4036
          %4145 = vmatpush.bf16.msra.mxu0 %v4034
          %4146 = vmatpush.bf16.msra.mxu0 %v4032
          %4147 = vmatpush.bf16.msra.mxu0 %v4030
          %4148 = vmatpush.bf16.msra.mxu0 %v4028
          %4149 = vmatpush.bf16.msra.mxu0 %v4026
          %4150 = vmatpush.bf16.msra.mxu0 %v4024
          %4151 = vmatmul.bf16.gmra.mxu0 %v3713
          %v4152 = vpop.f32.mrf.mxu0
          %v4153 = vadd.f32 %v4140, %v4152
          %v4154 = vpop.f32.mrf.mxu0
          %4155 = vdwg.mxu0
          %4156 = vmatpush.bf16.msra.mxu0 %v3991
          %4157 = vmatpush.bf16.msra.mxu0 %v3989
          %4158 = vmatpush.bf16.msra.mxu0 %v3987
          %4159 = vmatpush.bf16.msra.mxu0 %v3985
          %4160 = vmatpush.bf16.msra.mxu0 %v3983
          %4161 = vmatpush.bf16.msra.mxu0 %v3981
          %4162 = vmatpush.bf16.msra.mxu0 %v3979
          %4163 = vmatpush.bf16.msra.mxu0 %v3977
          %4164 = vmatmul.bf16.gmra.mxu0 %v3710
          %v4165 = vpop.f32.mrf.mxu0
          %v4166 = vadd.f32 %v3781, %v4165
          %v4167 = vpop.f32.mrf.mxu0
          %4168 = vdwg.mxu0
          %4169 = vmatpush.bf16.msra.mxu0 %v4007
          %4170 = vmatpush.bf16.msra.mxu0 %v4005
          %4171 = vmatpush.bf16.msra.mxu0 %v4003
          %4172 = vmatpush.bf16.msra.mxu0 %v4001
          %4173 = vmatpush.bf16.msra.mxu0 %v3999
          %4174 = vmatpush.bf16.msra.mxu0 %v3997
          %4175 = vmatpush.bf16.msra.mxu0 %v3995
          %4176 = vmatpush.bf16.msra.mxu0 %v3993
          %4177 = vmatmul.bf16.gmra.mxu0 %v3711
          %v4178 = vpop.f32.mrf.mxu0
          %v4179 = vadd.f32 %v4166, %v4178
          %v4180 = vpop.f32.mrf.mxu0
          %4181 = vdwg.mxu0
          %4182 = vmatpush.bf16.msra.mxu0 %v4023
          %4183 = vmatpush.bf16.msra.mxu0 %v4021
          %4184 = vmatpush.bf16.msra.mxu0 %v4019
          %4185 = vmatpush.bf16.msra.mxu0 %v4017
          %4186 = vmatpush.bf16.msra.mxu0 %v4015
          %4187 = vmatpush.bf16.msra.mxu0 %v4013
          %4188 = vmatpush.bf16.msra.mxu0 %v4011
          %4189 = vmatpush.bf16.msra.mxu0 %v4009
          %4190 = vmatmul.bf16.gmra.mxu0 %v3712
          %v4191 = vpop.f32.mrf.mxu0
          %v4192 = vadd.f32 %v4179, %v4191
          %v4193 = vpop.f32.mrf.mxu0
          %4194 = vdwg.mxu0
          %4195 = vmatpush.bf16.msra.mxu0 %v4039
          %4196 = vmatpush.bf16.msra.mxu0 %v4037
          %4197 = vmatpush.bf16.msra.mxu0 %v4035
          %4198 = vmatpush.bf16.msra.mxu0 %v4033
          %4199 = vmatpush.bf16.msra.mxu0 %v4031
          %4200 = vmatpush.bf16.msra.mxu0 %v4029
          %4201 = vmatpush.bf16.msra.mxu0 %v4027
          %4202 = vmatpush.bf16.msra.mxu0 %v4025
          %4203 = vmatmul.bf16.gmra.mxu0 %v3713
          %v4204 = vpop.f32.mrf.mxu0
          %v4205 = vadd.f32 %v4192, %v4204
          %v4206 = vpop.f32.mrf.mxu0
          %4207 = vdwg.mxu0
          %v4208 = vmax.f32 %v4153, 0.0
          %v4209 = vmax.f32 %v4205, 0.0
          %v4210 = vpack.c.bf16 %v4208, %v4208
          %v4211 = vpack.c.bf16 %v4209, %v4209
          %v4212 = vld [vmem:[%s8] sm:$0xff]
          %v4213 = vld [vmem:[%s8 + $0x8] sm:$0xff]
          %v4214 = vld [vmem:[%s8 + $0x10] sm:$0xff]
          %v4215 = vld [vmem:[%s8 + $0x18] sm:$0xff]
          %v4216 = vld [vmem:[%s8 + $0x20] sm:$0xff]
          %v4217 = vld [vmem:[%s8 + $0x28] sm:$0xff]
          %v4218 = vld [vmem:[%s8 + $0x30] sm:$0xff]
          %v4219 = vld [vmem:[%s8 + $0x38] sm:$0xff]
          %v4220 = vld [vmem:[%s8 + $0x40] sm:$0xff]
          %v4221 = vld [vmem:[%s8 + $0x48] sm:$0xff]
          %v4222 = vld [vmem:[%s8 + $0x50] sm:$0xff]
          %v4223 = vld [vmem:[%s8 + $0x58] sm:$0xff]
          %v4224 = vld [vmem:[%s8 + $0x60] sm:$0xff]
          %v4225 = vld [vmem:[%s8 + $0x68] sm:$0xff]
          %v4226 = vld [vmem:[%s8 + $0x70] sm:$0xff]
          %v4227 = vld [vmem:[%s8 + $0x78] sm:$0xff]
          %v4228 = vld [vmem:[%s8 + $0x80] sm:$0xff]
          %v4229 = vld [vmem:[%s8 + $0x88] sm:$0xff]
          %v4230 = vld [vmem:[%s8 + $0x90] sm:$0xff]
          %v4231 = vld [vmem:[%s8 + $0x98] sm:$0xff]
          %v4232 = vld [vmem:[%s8 + $0xa0] sm:$0xff]
          %v4233 = vld [vmem:[%s8 + $0xa8] sm:$0xff]
          %v4234 = vld [vmem:[%s8 + $0xb0] sm:$0xff]
          %v4235 = vld [vmem:[%s8 + $0xb8] sm:$0xff]
          %v4236 = vld [vmem:[%s8 + $0xc0] sm:$0xff]
          %v4237 = vld [vmem:[%s8 + $0xc8] sm:$0xff]
          %v4238 = vld [vmem:[%s8 + $0xd0] sm:$0xff]
          %v4239 = vld [vmem:[%s8 + $0xd8] sm:$0xff]
          %v4240 = vld [vmem:[%s8 + $0xe0] sm:$0xff]
          %v4241 = vld [vmem:[%s8 + $0xe8] sm:$0xff]
          %v4242 = vld [vmem:[%s8 + $0xf0] sm:$0xff]
          %v4243 = vld [vmem:[%s8 + $0xf8] sm:$0xff]
          %v4244 = vld [vmem:[%s8 + $0x100] sm:$0xff]
          %v4245 = vld [vmem:[%s8 + $0x108] sm:$0xff]
          %v4246 = vld [vmem:[%s8 + $0x110] sm:$0xff]
          %v4247 = vld [vmem:[%s8 + $0x118] sm:$0xff]
          %v4248 = vld [vmem:[%s8 + $0x120] sm:$0xff]
          %v4249 = vld [vmem:[%s8 + $0x128] sm:$0xff]
          %v4250 = vld [vmem:[%s8 + $0x130] sm:$0xff]
          %v4251 = vld [vmem:[%s8 + $0x138] sm:$0xff]
          %v4252 = vld [vmem:[%s8 + $0x140] sm:$0xff]
          %v4253 = vld [vmem:[%s8 + $0x148] sm:$0xff]
          %v4254 = vld [vmem:[%s8 + $0x150] sm:$0xff]
          %v4255 = vld [vmem:[%s8 + $0x158] sm:$0xff]
          %v4256 = vld [vmem:[%s8 + $0x160] sm:$0xff]
          %v4257 = vld [vmem:[%s8 + $0x168] sm:$0xff]
          %v4258 = vld [vmem:[%s8 + $0x170] sm:$0xff]
          %v4259 = vld [vmem:[%s8 + $0x178] sm:$0xff]
          %v4260 = vld [vmem:[%s8 + $0x180] sm:$0xff]
          %v4261 = vld [vmem:[%s8 + $0x188] sm:$0xff]
          %v4262 = vld [vmem:[%s8 + $0x190] sm:$0xff]
          %v4263 = vld [vmem:[%s8 + $0x198] sm:$0xff]
          %v4264 = vld [vmem:[%s8 + $0x1a0] sm:$0xff]
          %v4265 = vld [vmem:[%s8 + $0x1a8] sm:$0xff]
          %v4266 = vld [vmem:[%s8 + $0x1b0] sm:$0xff]
          %v4267 = vld [vmem:[%s8 + $0x1b8] sm:$0xff]
          %v4268 = vld [vmem:[%s8 + $0x1c0] sm:$0xff]
          %v4269 = vld [vmem:[%s8 + $0x1c8] sm:$0xff]
          %v4270 = vld [vmem:[%s8 + $0x1d0] sm:$0xff]
          %v4271 = vld [vmem:[%s8 + $0x1d8] sm:$0xff]
          %v4272 = vld [vmem:[%s8 + $0x1e0] sm:$0xff]
          %v4273 = vld [vmem:[%s8 + $0x1e8] sm:$0xff]
          %v4274 = vld [vmem:[%s8 + $0x1f0] sm:$0xff]
          %v4275 = vld [vmem:[%s8 + $0x1f8] sm:$0xff]
          %v4276 = vld [vmem:[%s8 + $0x200] sm:$0xff]
          %v4277 = vld [vmem:[%s8 + $0x208] sm:$0xff]
          %v4278 = vld [vmem:[%s8 + $0x210] sm:$0xff]
          %v4279 = vld [vmem:[%s8 + $0x218] sm:$0xff]
          %v4280 = vld [vmem:[%s8 + $0x220] sm:$0xff]
          %v4281 = vld [vmem:[%s8 + $0x228] sm:$0xff]
          %v4282 = vld [vmem:[%s8 + $0x230] sm:$0xff]
          %v4283 = vld [vmem:[%s8 + $0x238] sm:$0xff]
          %v4284 = vld [vmem:[%s8 + $0x240] sm:$0xff]
          %v4285 = vld [vmem:[%s8 + $0x248] sm:$0xff]
          %v4286 = vld [vmem:[%s8 + $0x250] sm:$0xff]
          %v4287 = vld [vmem:[%s8 + $0x258] sm:$0xff]
          %v4288 = vld [vmem:[%s8 + $0x260] sm:$0xff]
          %v4289 = vld [vmem:[%s8 + $0x268] sm:$0xff]
          %v4290 = vld [vmem:[%s8 + $0x270] sm:$0xff]
          %v4291 = vld [vmem:[%s8 + $0x278] sm:$0xff]
          %v4292 = vld [vmem:[%s8 + $0x280] sm:$0xff]
          %v4293 = vld [vmem:[%s8 + $0x288] sm:$0xff]
          %v4294 = vld [vmem:[%s8 + $0x290] sm:$0xff]
          %v4295 = vld [vmem:[%s8 + $0x298] sm:$0xff]
          %v4296 = vld [vmem:[%s8 + $0x2a0] sm:$0xff]
          %v4297 = vld [vmem:[%s8 + $0x2a8] sm:$0xff]
          %v4298 = vld [vmem:[%s8 + $0x2b0] sm:$0xff]
          %v4299 = vld [vmem:[%s8 + $0x2b8] sm:$0xff]
          %v4300 = vld [vmem:[%s8 + $0x2c0] sm:$0xff]
          %v4301 = vld [vmem:[%s8 + $0x2c8] sm:$0xff]
          %v4302 = vld [vmem:[%s8 + $0x2d0] sm:$0xff]
          %v4303 = vld [vmem:[%s8 + $0x2d8] sm:$0xff]
          %v4304 = vld [vmem:[%s8 + $0x2e0] sm:$0xff]
          %v4305 = vld [vmem:[%s8 + $0x2e8] sm:$0xff]
          %v4306 = vld [vmem:[%s8 + $0x2f0] sm:$0xff]
          %v4307 = vld [vmem:[%s8 + $0x2f8] sm:$0xff]
          %v4308 = vld [vmem:[%s8 + $0x300] sm:$0xff]
          %v4309 = vld [vmem:[%s8 + $0x308] sm:$0xff]
          %v4310 = vld [vmem:[%s8 + $0x310] sm:$0xff]
          %v4311 = vld [vmem:[%s8 + $0x318] sm:$0xff]
          %v4312 = vld [vmem:[%s8 + $0x320] sm:$0xff]
          %v4313 = vld [vmem:[%s8 + $0x328] sm:$0xff]
          %v4314 = vld [vmem:[%s8 + $0x330] sm:$0xff]
          %v4315 = vld [vmem:[%s8 + $0x338] sm:$0xff]
          %v4316 = vld [vmem:[%s8 + $0x340] sm:$0xff]
          %v4317 = vld [vmem:[%s8 + $0x348] sm:$0xff]
          %v4318 = vld [vmem:[%s8 + $0x350] sm:$0xff]
          %v4319 = vld [vmem:[%s8 + $0x358] sm:$0xff]
          %v4320 = vld [vmem:[%s8 + $0x360] sm:$0xff]
          %v4321 = vld [vmem:[%s8 + $0x368] sm:$0xff]
          %v4322 = vld [vmem:[%s8 + $0x370] sm:$0xff]
          %v4323 = vld [vmem:[%s8 + $0x378] sm:$0xff]
          %v4324 = vld [vmem:[%s8 + $0x380] sm:$0xff]
          %v4325 = vld [vmem:[%s8 + $0x388] sm:$0xff]
          %v4326 = vld [vmem:[%s8 + $0x390] sm:$0xff]
          %v4327 = vld [vmem:[%s8 + $0x398] sm:$0xff]
          %v4328 = vld [vmem:[%s8 + $0x3a0] sm:$0xff]
          %v4329 = vld [vmem:[%s8 + $0x3a8] sm:$0xff]
          %v4330 = vld [vmem:[%s8 + $0x3b0] sm:$0xff]
          %v4331 = vld [vmem:[%s8 + $0x3b8] sm:$0xff]
          %v4332 = vld [vmem:[%s8 + $0x3c0] sm:$0xff]
          %v4333 = vld [vmem:[%s8 + $0x3c8] sm:$0xff]
          %v4334 = vld [vmem:[%s8 + $0x3d0] sm:$0xff]
          %v4335 = vld [vmem:[%s8 + $0x3d8] sm:$0xff]
          %v4336 = vld [vmem:[%s8 + $0x3e0] sm:$0xff]
          %v4337 = vld [vmem:[%s8 + $0x3e8] sm:$0xff]
          %v4338 = vld [vmem:[%s8 + $0x3f0] sm:$0xff]
          %v4339 = vld [vmem:[%s8 + $0x3f8] sm:$0xff]
          %v4340 = vld [vmem:[%s8 + $0x400] sm:$0xff]
          %v4341 = vld [vmem:[%s8 + $0x408] sm:$0xff]
          %v4342 = vld [vmem:[%s8 + $0x410] sm:$0xff]
          %v4343 = vld [vmem:[%s8 + $0x418] sm:$0xff]
          %v4344 = vld [vmem:[%s8 + $0x420] sm:$0xff]
          %v4345 = vld [vmem:[%s8 + $0x428] sm:$0xff]
          %v4346 = vld [vmem:[%s8 + $0x430] sm:$0xff]
          %v4347 = vld [vmem:[%s8 + $0x438] sm:$0xff]
          %v4348 = vld [vmem:[%s8 + $0x440] sm:$0xff]
          %v4349 = vld [vmem:[%s8 + $0x448] sm:$0xff]
          %v4350 = vld [vmem:[%s8 + $0x450] sm:$0xff]
          %v4351 = vld [vmem:[%s8 + $0x458] sm:$0xff]
          %v4352 = vld [vmem:[%s8 + $0x460] sm:$0xff]
          %v4353 = vld [vmem:[%s8 + $0x468] sm:$0xff]
          %v4354 = vld [vmem:[%s8 + $0x470] sm:$0xff]
          %v4355 = vld [vmem:[%s8 + $0x478] sm:$0xff]
          %v4356 = vld [vmem:[%s8 + $0x480] sm:$0xff]
          %v4357 = vld [vmem:[%s8 + $0x488] sm:$0xff]
          %v4358 = vld [vmem:[%s8 + $0x490] sm:$0xff]
          %v4359 = vld [vmem:[%s8 + $0x498] sm:$0xff]
          %v4360 = vld [vmem:[%s8 + $0x4a0] sm:$0xff]
          %v4361 = vld [vmem:[%s8 + $0x4a8] sm:$0xff]
          %v4362 = vld [vmem:[%s8 + $0x4b0] sm:$0xff]
          %v4363 = vld [vmem:[%s8 + $0x4b8] sm:$0xff]
          %v4364 = vld [vmem:[%s8 + $0x4c0] sm:$0xff]
          %v4365 = vld [vmem:[%s8 + $0x4c8] sm:$0xff]
          %v4366 = vld [vmem:[%s8 + $0x4d0] sm:$0xff]
          %v4367 = vld [vmem:[%s8 + $0x4d8] sm:$0xff]
          %v4368 = vld [vmem:[%s8 + $0x4e0] sm:$0xff]
          %v4369 = vld [vmem:[%s8 + $0x4e8] sm:$0xff]
          %v4370 = vld [vmem:[%s8 + $0x4f0] sm:$0xff]
          %v4371 = vld [vmem:[%s8 + $0x4f8] sm:$0xff]
          %v4372 = vld [vmem:[%s8 + $0x500] sm:$0xff]
          %v4373 = vld [vmem:[%s8 + $0x508] sm:$0xff]
          %v4374 = vld [vmem:[%s8 + $0x510] sm:$0xff]
          %v4375 = vld [vmem:[%s8 + $0x518] sm:$0xff]
          %v4376 = vld [vmem:[%s8 + $0x520] sm:$0xff]
          %v4377 = vld [vmem:[%s8 + $0x528] sm:$0xff]
          %v4378 = vld [vmem:[%s8 + $0x530] sm:$0xff]
          %v4379 = vld [vmem:[%s8 + $0x538] sm:$0xff]
          %v4380 = vld [vmem:[%s8 + $0x540] sm:$0xff]
          %v4381 = vld [vmem:[%s8 + $0x548] sm:$0xff]
          %v4382 = vld [vmem:[%s8 + $0x550] sm:$0xff]
          %v4383 = vld [vmem:[%s8 + $0x558] sm:$0xff]
          %v4384 = vld [vmem:[%s8 + $0x560] sm:$0xff]
          %v4385 = vld [vmem:[%s8 + $0x568] sm:$0xff]
          %v4386 = vld [vmem:[%s8 + $0x570] sm:$0xff]
          %v4387 = vld [vmem:[%s8 + $0x578] sm:$0xff]
          %v4388 = vld [vmem:[%s8 + $0x580] sm:$0xff]
          %v4389 = vld [vmem:[%s8 + $0x588] sm:$0xff]
          %v4390 = vld [vmem:[%s8 + $0x590] sm:$0xff]
          %v4391 = vld [vmem:[%s8 + $0x598] sm:$0xff]
          %v4392 = vld [vmem:[%s8 + $0x5a0] sm:$0xff]
          %v4393 = vld [vmem:[%s8 + $0x5a8] sm:$0xff]
          %v4394 = vld [vmem:[%s8 + $0x5b0] sm:$0xff]
          %v4395 = vld [vmem:[%s8 + $0x5b8] sm:$0xff]
          %v4396 = vld [vmem:[%s8 + $0x5c0] sm:$0xff]
          %v4397 = vld [vmem:[%s8 + $0x5c8] sm:$0xff]
          %v4398 = vld [vmem:[%s8 + $0x5d0] sm:$0xff]
          %v4399 = vld [vmem:[%s8 + $0x5d8] sm:$0xff]
          %v4400 = vld [vmem:[%s8 + $0x5e0] sm:$0xff]
          %v4401 = vld [vmem:[%s8 + $0x5e8] sm:$0xff]
          %v4402 = vld [vmem:[%s8 + $0x5f0] sm:$0xff]
          %v4403 = vld [vmem:[%s8 + $0x5f8] sm:$0xff]
          %v4404 = vld [vmem:[%s8 + $0x600] sm:$0xff]
          %v4405 = vld [vmem:[%s8 + $0x608] sm:$0xff]
          %v4406 = vld [vmem:[%s8 + $0x610] sm:$0xff]
          %v4407 = vld [vmem:[%s8 + $0x618] sm:$0xff]
          %v4408 = vld [vmem:[%s8 + $0x620] sm:$0xff]
          %v4409 = vld [vmem:[%s8 + $0x628] sm:$0xff]
          %v4410 = vld [vmem:[%s8 + $0x630] sm:$0xff]
          %v4411 = vld [vmem:[%s8 + $0x638] sm:$0xff]
          %v4412 = vld [vmem:[%s8 + $0x640] sm:$0xff]
          %v4413 = vld [vmem:[%s8 + $0x648] sm:$0xff]
          %v4414 = vld [vmem:[%s8 + $0x650] sm:$0xff]
          %v4415 = vld [vmem:[%s8 + $0x658] sm:$0xff]
          %v4416 = vld [vmem:[%s8 + $0x660] sm:$0xff]
          %v4417 = vld [vmem:[%s8 + $0x668] sm:$0xff]
          %v4418 = vld [vmem:[%s8 + $0x670] sm:$0xff]
          %v4419 = vld [vmem:[%s8 + $0x678] sm:$0xff]
          %v4420 = vld [vmem:[%s8 + $0x680] sm:$0xff]
          %v4421 = vld [vmem:[%s8 + $0x688] sm:$0xff]
          %v4422 = vld [vmem:[%s8 + $0x690] sm:$0xff]
          %v4423 = vld [vmem:[%s8 + $0x698] sm:$0xff]
          %v4424 = vld [vmem:[%s8 + $0x6a0] sm:$0xff]
          %v4425 = vld [vmem:[%s8 + $0x6a8] sm:$0xff]
          %v4426 = vld [vmem:[%s8 + $0x6b0] sm:$0xff]
          %v4427 = vld [vmem:[%s8 + $0x6b8] sm:$0xff]
          %v4428 = vld [vmem:[%s8 + $0x6c0] sm:$0xff]
          %v4429 = vld [vmem:[%s8 + $0x6c8] sm:$0xff]
          %v4430 = vld [vmem:[%s8 + $0x6d0] sm:$0xff]
          %v4431 = vld [vmem:[%s8 + $0x6d8] sm:$0xff]
          %v4432 = vld [vmem:[%s8 + $0x6e0] sm:$0xff]
          %v4433 = vld [vmem:[%s8 + $0x6e8] sm:$0xff]
          %v4434 = vld [vmem:[%s8 + $0x6f0] sm:$0xff]
          %v4435 = vld [vmem:[%s8 + $0x6f8] sm:$0xff]
          %v4436 = vld [vmem:[%s8 + $0x700] sm:$0xff]
          %v4437 = vld [vmem:[%s8 + $0x708] sm:$0xff]
          %v4438 = vld [vmem:[%s8 + $0x710] sm:$0xff]
          %v4439 = vld [vmem:[%s8 + $0x718] sm:$0xff]
          %v4440 = vld [vmem:[%s8 + $0x720] sm:$0xff]
          %v4441 = vld [vmem:[%s8 + $0x728] sm:$0xff]
          %v4442 = vld [vmem:[%s8 + $0x730] sm:$0xff]
          %v4443 = vld [vmem:[%s8 + $0x738] sm:$0xff]
          %v4444 = vld [vmem:[%s8 + $0x740] sm:$0xff]
          %v4445 = vld [vmem:[%s8 + $0x748] sm:$0xff]
          %v4446 = vld [vmem:[%s8 + $0x750] sm:$0xff]
          %v4447 = vld [vmem:[%s8 + $0x758] sm:$0xff]
          %v4448 = vld [vmem:[%s8 + $0x760] sm:$0xff]
          %v4449 = vld [vmem:[%s8 + $0x768] sm:$0xff]
          %v4450 = vld [vmem:[%s8 + $0x770] sm:$0xff]
          %v4451 = vld [vmem:[%s8 + $0x778] sm:$0xff]
          %v4452 = vld [vmem:[%s8 + $0x780] sm:$0xff]
          %v4453 = vld [vmem:[%s8 + $0x788] sm:$0xff]
          %v4454 = vld [vmem:[%s8 + $0x790] sm:$0xff]
          %v4455 = vld [vmem:[%s8 + $0x798] sm:$0xff]
          %v4456 = vld [vmem:[%s8 + $0x7a0] sm:$0xff]
          %v4457 = vld [vmem:[%s8 + $0x7a8] sm:$0xff]
          %v4458 = vld [vmem:[%s8 + $0x7b0] sm:$0xff]
          %v4459 = vld [vmem:[%s8 + $0x7b8] sm:$0xff]
          %v4460 = vld [vmem:[%s8 + $0x7c0] sm:$0xff]
          %v4461 = vld [vmem:[%s8 + $0x7c8] sm:$0xff]
          %v4462 = vld [vmem:[%s8 + $0x7d0] sm:$0xff]
          %v4463 = vld [vmem:[%s8 + $0x7d8] sm:$0xff]
          %v4464 = vld [vmem:[%s8 + $0x7e0] sm:$0xff]
          %v4465 = vld [vmem:[%s8 + $0x7e8] sm:$0xff]
          %v4466 = vld [vmem:[%s8 + $0x7f0] sm:$0xff]
          %v4467 = vld [vmem:[%s8 + $0x7f8] sm:$0xff]
          %s4468 = scalar_lea.vmem %s14, 1
          %v4469 = vld [vmem:[%s4468] ss:$8 sm:$0xf]
          %v4470 = vld [vmem:[%s4468] ss:$8 sm:$0xf0]
          %v4471 = vor.u32 %v4469, %v4470
          %s4472 = scalar_lea.vmem %s14, 65
          %v4473 = vld [vmem:[%s4472] ss:$8 sm:$0xf]
          %v4474 = vld [vmem:[%s4472] ss:$8 sm:$0xf0]
          %v4475 = vor.u32 %v4473, %v4474
          %v4478 = vperm.slane %v4471, 0
          %v4479 = vperm.slane %v4471, 1
          %v4480 = vperm.slane %v4471, 2
          %v4481 = vperm.slane %v4471, 3
          %v4482 = vperm.slane %v4471, 4
          %v4483 = vperm.slane %v4471, 5
          %v4484 = vperm.slane %v4471, 6
          %v4485 = vperm.slane %v4471, 7
          %v4486 = vperm.slane %v4475, 0
          %v4487 = vperm.slane %v4475, 1
          %v4488 = vperm.slane %v4475, 2
          %v4489 = vperm.slane %v4475, 3
          %v4490 = vperm.slane %v4475, 4
          %v4491 = vperm.slane %v4475, 5
          %v4492 = vperm.slane %v4475, 6
          %v4493 = vperm.slane %v4475, 7
          %v4766 = vunpack.c.l.b16 %v4212
          %v4767 = vunpack.c.h.b16 %v4212
          %v4768 = vunpack.c.l.b16 %v4213
          %v4769 = vunpack.c.h.b16 %v4213
          %v4770 = vunpack.c.l.b16 %v4214
          %v4771 = vunpack.c.h.b16 %v4214
          %v4772 = vunpack.c.l.b16 %v4215
          %v4773 = vunpack.c.h.b16 %v4215
          %v4774 = vunpack.c.l.b16 %v4216
          %v4775 = vunpack.c.h.b16 %v4216
          %v4776 = vunpack.c.l.b16 %v4217
          %v4777 = vunpack.c.h.b16 %v4217
          %v4778 = vunpack.c.l.b16 %v4218
          %v4779 = vunpack.c.h.b16 %v4218
          %v4780 = vunpack.c.l.b16 %v4219
          %v4781 = vunpack.c.h.b16 %v4219
          %v4782 = vunpack.c.l.b16 %v4220
          %v4783 = vunpack.c.h.b16 %v4220
          %v4784 = vunpack.c.l.b16 %v4221
          %v4785 = vunpack.c.h.b16 %v4221
          %v4786 = vunpack.c.l.b16 %v4222
          %v4787 = vunpack.c.h.b16 %v4222
          %v4788 = vunpack.c.l.b16 %v4223
          %v4789 = vunpack.c.h.b16 %v4223
          %v4790 = vunpack.c.l.b16 %v4224
          %v4791 = vunpack.c.h.b16 %v4224
          %v4792 = vunpack.c.l.b16 %v4225
          %v4793 = vunpack.c.h.b16 %v4225
          %v4794 = vunpack.c.l.b16 %v4226
          %v4795 = vunpack.c.h.b16 %v4226
          %v4796 = vunpack.c.l.b16 %v4227
          %v4797 = vunpack.c.h.b16 %v4227
          %v4798 = vunpack.c.l.b16 %v4228
          %v4799 = vunpack.c.h.b16 %v4228
          %v4800 = vunpack.c.l.b16 %v4229
          %v4801 = vunpack.c.h.b16 %v4229
          %v4802 = vunpack.c.l.b16 %v4230
          %v4803 = vunpack.c.h.b16 %v4230
          %v4804 = vunpack.c.l.b16 %v4231
          %v4805 = vunpack.c.h.b16 %v4231
          %v4806 = vunpack.c.l.b16 %v4232
          %v4807 = vunpack.c.h.b16 %v4232
          %v4808 = vunpack.c.l.b16 %v4233
          %v4809 = vunpack.c.h.b16 %v4233
          %v4810 = vunpack.c.l.b16 %v4234
          %v4811 = vunpack.c.h.b16 %v4234
          %v4812 = vunpack.c.l.b16 %v4235
          %v4813 = vunpack.c.h.b16 %v4235
          %v4814 = vunpack.c.l.b16 %v4236
          %v4815 = vunpack.c.h.b16 %v4236
          %v4816 = vunpack.c.l.b16 %v4237
          %v4817 = vunpack.c.h.b16 %v4237
          %v4818 = vunpack.c.l.b16 %v4238
          %v4819 = vunpack.c.h.b16 %v4238
          %v4820 = vunpack.c.l.b16 %v4239
          %v4821 = vunpack.c.h.b16 %v4239
          %v4822 = vunpack.c.l.b16 %v4240
          %v4823 = vunpack.c.h.b16 %v4240
          %v4824 = vunpack.c.l.b16 %v4241
          %v4825 = vunpack.c.h.b16 %v4241
          %v4826 = vunpack.c.l.b16 %v4242
          %v4827 = vunpack.c.h.b16 %v4242
          %v4828 = vunpack.c.l.b16 %v4243
          %v4829 = vunpack.c.h.b16 %v4243
          %v4830 = vunpack.c.l.b16 %v4244
          %v4831 = vunpack.c.h.b16 %v4244
          %v4832 = vunpack.c.l.b16 %v4245
          %v4833 = vunpack.c.h.b16 %v4245
          %v4834 = vunpack.c.l.b16 %v4246
          %v4835 = vunpack.c.h.b16 %v4246
          %v4836 = vunpack.c.l.b16 %v4247
          %v4837 = vunpack.c.h.b16 %v4247
          %v4838 = vunpack.c.l.b16 %v4248
          %v4839 = vunpack.c.h.b16 %v4248
          %v4840 = vunpack.c.l.b16 %v4249
          %v4841 = vunpack.c.h.b16 %v4249
          %v4842 = vunpack.c.l.b16 %v4250
          %v4843 = vunpack.c.h.b16 %v4250
          %v4844 = vunpack.c.l.b16 %v4251
          %v4845 = vunpack.c.h.b16 %v4251
          %v4846 = vunpack.c.l.b16 %v4252
          %v4847 = vunpack.c.h.b16 %v4252
          %v4848 = vunpack.c.l.b16 %v4253
          %v4849 = vunpack.c.h.b16 %v4253
          %v4850 = vunpack.c.l.b16 %v4254
          %v4851 = vunpack.c.h.b16 %v4254
          %v4852 = vunpack.c.l.b16 %v4255
          %v4853 = vunpack.c.h.b16 %v4255
          %v4854 = vunpack.c.l.b16 %v4256
          %v4855 = vunpack.c.h.b16 %v4256
          %v4856 = vunpack.c.l.b16 %v4257
          %v4857 = vunpack.c.h.b16 %v4257
          %v4858 = vunpack.c.l.b16 %v4258
          %v4859 = vunpack.c.h.b16 %v4258
          %v4860 = vunpack.c.l.b16 %v4259
          %v4861 = vunpack.c.h.b16 %v4259
          %v4862 = vunpack.c.l.b16 %v4260
          %v4863 = vunpack.c.h.b16 %v4260
          %v4864 = vunpack.c.l.b16 %v4261
          %v4865 = vunpack.c.h.b16 %v4261
          %v4866 = vunpack.c.l.b16 %v4262
          %v4867 = vunpack.c.h.b16 %v4262
          %v4868 = vunpack.c.l.b16 %v4263
          %v4869 = vunpack.c.h.b16 %v4263
          %v4870 = vunpack.c.l.b16 %v4264
          %v4871 = vunpack.c.h.b16 %v4264
          %v4872 = vunpack.c.l.b16 %v4265
          %v4873 = vunpack.c.h.b16 %v4265
          %v4874 = vunpack.c.l.b16 %v4266
          %v4875 = vunpack.c.h.b16 %v4266
          %v4876 = vunpack.c.l.b16 %v4267
          %v4877 = vunpack.c.h.b16 %v4267
          %v4878 = vunpack.c.l.b16 %v4268
          %v4879 = vunpack.c.h.b16 %v4268
          %v4880 = vunpack.c.l.b16 %v4269
          %v4881 = vunpack.c.h.b16 %v4269
          %v4882 = vunpack.c.l.b16 %v4270
          %v4883 = vunpack.c.h.b16 %v4270
          %v4884 = vunpack.c.l.b16 %v4271
          %v4885 = vunpack.c.h.b16 %v4271
          %v4886 = vunpack.c.l.b16 %v4272
          %v4887 = vunpack.c.h.b16 %v4272
          %v4888 = vunpack.c.l.b16 %v4273
          %v4889 = vunpack.c.h.b16 %v4273
          %v4890 = vunpack.c.l.b16 %v4274
          %v4891 = vunpack.c.h.b16 %v4274
          %v4892 = vunpack.c.l.b16 %v4275
          %v4893 = vunpack.c.h.b16 %v4275
          %v4894 = vunpack.c.l.b16 %v4276
          %v4895 = vunpack.c.h.b16 %v4276
          %v4896 = vunpack.c.l.b16 %v4277
          %v4897 = vunpack.c.h.b16 %v4277
          %v4898 = vunpack.c.l.b16 %v4278
          %v4899 = vunpack.c.h.b16 %v4278
          %v4900 = vunpack.c.l.b16 %v4279
          %v4901 = vunpack.c.h.b16 %v4279
          %v4902 = vunpack.c.l.b16 %v4280
          %v4903 = vunpack.c.h.b16 %v4280
          %v4904 = vunpack.c.l.b16 %v4281
          %v4905 = vunpack.c.h.b16 %v4281
          %v4906 = vunpack.c.l.b16 %v4282
          %v4907 = vunpack.c.h.b16 %v4282
          %v4908 = vunpack.c.l.b16 %v4283
          %v4909 = vunpack.c.h.b16 %v4283
          %v4910 = vunpack.c.l.b16 %v4284
          %v4911 = vunpack.c.h.b16 %v4284
          %v4912 = vunpack.c.l.b16 %v4285
          %v4913 = vunpack.c.h.b16 %v4285
          %v4914 = vunpack.c.l.b16 %v4286
          %v4915 = vunpack.c.h.b16 %v4286
          %v4916 = vunpack.c.l.b16 %v4287
          %v4917 = vunpack.c.h.b16 %v4287
          %v4918 = vunpack.c.l.b16 %v4288
          %v4919 = vunpack.c.h.b16 %v4288
          %v4920 = vunpack.c.l.b16 %v4289
          %v4921 = vunpack.c.h.b16 %v4289
          %v4922 = vunpack.c.l.b16 %v4290
          %v4923 = vunpack.c.h.b16 %v4290
          %v4924 = vunpack.c.l.b16 %v4291
          %v4925 = vunpack.c.h.b16 %v4291
          %v4926 = vunpack.c.l.b16 %v4292
          %v4927 = vunpack.c.h.b16 %v4292
          %v4928 = vunpack.c.l.b16 %v4293
          %v4929 = vunpack.c.h.b16 %v4293
          %v4930 = vunpack.c.l.b16 %v4294
          %v4931 = vunpack.c.h.b16 %v4294
          %v4932 = vunpack.c.l.b16 %v4295
          %v4933 = vunpack.c.h.b16 %v4295
          %v4934 = vunpack.c.l.b16 %v4296
          %v4935 = vunpack.c.h.b16 %v4296
          %v4936 = vunpack.c.l.b16 %v4297
          %v4937 = vunpack.c.h.b16 %v4297
          %v4938 = vunpack.c.l.b16 %v4298
          %v4939 = vunpack.c.h.b16 %v4298
          %v4940 = vunpack.c.l.b16 %v4299
          %v4941 = vunpack.c.h.b16 %v4299
          %v4942 = vunpack.c.l.b16 %v4300
          %v4943 = vunpack.c.h.b16 %v4300
          %v4944 = vunpack.c.l.b16 %v4301
          %v4945 = vunpack.c.h.b16 %v4301
          %v4946 = vunpack.c.l.b16 %v4302
          %v4947 = vunpack.c.h.b16 %v4302
          %v4948 = vunpack.c.l.b16 %v4303
          %v4949 = vunpack.c.h.b16 %v4303
          %v4950 = vunpack.c.l.b16 %v4304
          %v4951 = vunpack.c.h.b16 %v4304
          %v4952 = vunpack.c.l.b16 %v4305
          %v4953 = vunpack.c.h.b16 %v4305
          %v4954 = vunpack.c.l.b16 %v4306
          %v4955 = vunpack.c.h.b16 %v4306
          %v4956 = vunpack.c.l.b16 %v4307
          %v4957 = vunpack.c.h.b16 %v4307
          %v4958 = vunpack.c.l.b16 %v4308
          %v4959 = vunpack.c.h.b16 %v4308
          %v4960 = vunpack.c.l.b16 %v4309
          %v4961 = vunpack.c.h.b16 %v4309
          %v4962 = vunpack.c.l.b16 %v4310
          %v4963 = vunpack.c.h.b16 %v4310
          %v4964 = vunpack.c.l.b16 %v4311
          %v4965 = vunpack.c.h.b16 %v4311
          %v4966 = vunpack.c.l.b16 %v4312
          %v4967 = vunpack.c.h.b16 %v4312
          %v4968 = vunpack.c.l.b16 %v4313
          %v4969 = vunpack.c.h.b16 %v4313
          %v4970 = vunpack.c.l.b16 %v4314
          %v4971 = vunpack.c.h.b16 %v4314
          %v4972 = vunpack.c.l.b16 %v4315
          %v4973 = vunpack.c.h.b16 %v4315
          %v4974 = vunpack.c.l.b16 %v4316
          %v4975 = vunpack.c.h.b16 %v4316
          %v4976 = vunpack.c.l.b16 %v4317
          %v4977 = vunpack.c.h.b16 %v4317
          %v4978 = vunpack.c.l.b16 %v4318
          %v4979 = vunpack.c.h.b16 %v4318
          %v4980 = vunpack.c.l.b16 %v4319
          %v4981 = vunpack.c.h.b16 %v4319
          %v4982 = vunpack.c.l.b16 %v4320
          %v4983 = vunpack.c.h.b16 %v4320
          %v4984 = vunpack.c.l.b16 %v4321
          %v4985 = vunpack.c.h.b16 %v4321
          %v4986 = vunpack.c.l.b16 %v4322
          %v4987 = vunpack.c.h.b16 %v4322
          %v4988 = vunpack.c.l.b16 %v4323
          %v4989 = vunpack.c.h.b16 %v4323
          %v4990 = vunpack.c.l.b16 %v4324
          %v4991 = vunpack.c.h.b16 %v4324
          %v4992 = vunpack.c.l.b16 %v4325
          %v4993 = vunpack.c.h.b16 %v4325
          %v4994 = vunpack.c.l.b16 %v4326
          %v4995 = vunpack.c.h.b16 %v4326
          %v4996 = vunpack.c.l.b16 %v4327
          %v4997 = vunpack.c.h.b16 %v4327
          %v4998 = vunpack.c.l.b16 %v4328
          %v4999 = vunpack.c.h.b16 %v4328
          %v5000 = vunpack.c.l.b16 %v4329
          %v5001 = vunpack.c.h.b16 %v4329
          %v5002 = vunpack.c.l.b16 %v4330
          %v5003 = vunpack.c.h.b16 %v4330
          %v5004 = vunpack.c.l.b16 %v4331
          %v5005 = vunpack.c.h.b16 %v4331
          %v5006 = vunpack.c.l.b16 %v4332
          %v5007 = vunpack.c.h.b16 %v4332
          %v5008 = vunpack.c.l.b16 %v4333
          %v5009 = vunpack.c.h.b16 %v4333
          %v5010 = vunpack.c.l.b16 %v4334
          %v5011 = vunpack.c.h.b16 %v4334
          %v5012 = vunpack.c.l.b16 %v4335
          %v5013 = vunpack.c.h.b16 %v4335
          %v5014 = vunpack.c.l.b16 %v4336
          %v5015 = vunpack.c.h.b16 %v4336
          %v5016 = vunpack.c.l.b16 %v4337
          %v5017 = vunpack.c.h.b16 %v4337
          %v5018 = vunpack.c.l.b16 %v4338
          %v5019 = vunpack.c.h.b16 %v4338
          %v5020 = vunpack.c.l.b16 %v4339
          %v5021 = vunpack.c.h.b16 %v4339
          %v5022 = vunpack.c.l.b16 %v4340
          %v5023 = vunpack.c.h.b16 %v4340
          %v5024 = vunpack.c.l.b16 %v4341
          %v5025 = vunpack.c.h.b16 %v4341
          %v5026 = vunpack.c.l.b16 %v4342
          %v5027 = vunpack.c.h.b16 %v4342
          %v5028 = vunpack.c.l.b16 %v4343
          %v5029 = vunpack.c.h.b16 %v4343
          %v5030 = vunpack.c.l.b16 %v4344
          %v5031 = vunpack.c.h.b16 %v4344
          %v5032 = vunpack.c.l.b16 %v4345
          %v5033 = vunpack.c.h.b16 %v4345
          %v5034 = vunpack.c.l.b16 %v4346
          %v5035 = vunpack.c.h.b16 %v4346
          %v5036 = vunpack.c.l.b16 %v4347
          %v5037 = vunpack.c.h.b16 %v4347
          %v5038 = vunpack.c.l.b16 %v4348
          %v5039 = vunpack.c.h.b16 %v4348
          %v5040 = vunpack.c.l.b16 %v4349
          %v5041 = vunpack.c.h.b16 %v4349
          %v5042 = vunpack.c.l.b16 %v4350
          %v5043 = vunpack.c.h.b16 %v4350
          %v5044 = vunpack.c.l.b16 %v4351
          %v5045 = vunpack.c.h.b16 %v4351
          %v5046 = vunpack.c.l.b16 %v4352
          %v5047 = vunpack.c.h.b16 %v4352
          %v5048 = vunpack.c.l.b16 %v4353
          %v5049 = vunpack.c.h.b16 %v4353
          %v5050 = vunpack.c.l.b16 %v4354
          %v5051 = vunpack.c.h.b16 %v4354
          %v5052 = vunpack.c.l.b16 %v4355
          %v5053 = vunpack.c.h.b16 %v4355
          %v5054 = vunpack.c.l.b16 %v4356
          %v5055 = vunpack.c.h.b16 %v4356
          %v5056 = vunpack.c.l.b16 %v4357
          %v5057 = vunpack.c.h.b16 %v4357
          %v5058 = vunpack.c.l.b16 %v4358
          %v5059 = vunpack.c.h.b16 %v4358
          %v5060 = vunpack.c.l.b16 %v4359
          %v5061 = vunpack.c.h.b16 %v4359
          %v5062 = vunpack.c.l.b16 %v4360
          %v5063 = vunpack.c.h.b16 %v4360
          %v5064 = vunpack.c.l.b16 %v4361
          %v5065 = vunpack.c.h.b16 %v4361
          %v5066 = vunpack.c.l.b16 %v4362
          %v5067 = vunpack.c.h.b16 %v4362
          %v5068 = vunpack.c.l.b16 %v4363
          %v5069 = vunpack.c.h.b16 %v4363
          %v5070 = vunpack.c.l.b16 %v4364
          %v5071 = vunpack.c.h.b16 %v4364
          %v5072 = vunpack.c.l.b16 %v4365
          %v5073 = vunpack.c.h.b16 %v4365
          %v5074 = vunpack.c.l.b16 %v4366
          %v5075 = vunpack.c.h.b16 %v4366
          %v5076 = vunpack.c.l.b16 %v4367
          %v5077 = vunpack.c.h.b16 %v4367
          %v5078 = vunpack.c.l.b16 %v4368
          %v5079 = vunpack.c.h.b16 %v4368
          %v5080 = vunpack.c.l.b16 %v4369
          %v5081 = vunpack.c.h.b16 %v4369
          %v5082 = vunpack.c.l.b16 %v4370
          %v5083 = vunpack.c.h.b16 %v4370
          %v5084 = vunpack.c.l.b16 %v4371
          %v5085 = vunpack.c.h.b16 %v4371
          %v5086 = vunpack.c.l.b16 %v4372
          %v5087 = vunpack.c.h.b16 %v4372
          %v5088 = vunpack.c.l.b16 %v4373
          %v5089 = vunpack.c.h.b16 %v4373
          %v5090 = vunpack.c.l.b16 %v4374
          %v5091 = vunpack.c.h.b16 %v4374
          %v5092 = vunpack.c.l.b16 %v4375
          %v5093 = vunpack.c.h.b16 %v4375
          %v5094 = vunpack.c.l.b16 %v4376
          %v5095 = vunpack.c.h.b16 %v4376
          %v5096 = vunpack.c.l.b16 %v4377
          %v5097 = vunpack.c.h.b16 %v4377
          %v5098 = vunpack.c.l.b16 %v4378
          %v5099 = vunpack.c.h.b16 %v4378
          %v5100 = vunpack.c.l.b16 %v4379
          %v5101 = vunpack.c.h.b16 %v4379
          %v5102 = vunpack.c.l.b16 %v4380
          %v5103 = vunpack.c.h.b16 %v4380
          %v5104 = vunpack.c.l.b16 %v4381
          %v5105 = vunpack.c.h.b16 %v4381
          %v5106 = vunpack.c.l.b16 %v4382
          %v5107 = vunpack.c.h.b16 %v4382
          %v5108 = vunpack.c.l.b16 %v4383
          %v5109 = vunpack.c.h.b16 %v4383
          %v5110 = vunpack.c.l.b16 %v4384
          %v5111 = vunpack.c.h.b16 %v4384
          %v5112 = vunpack.c.l.b16 %v4385
          %v5113 = vunpack.c.h.b16 %v4385
          %v5114 = vunpack.c.l.b16 %v4386
          %v5115 = vunpack.c.h.b16 %v4386
          %v5116 = vunpack.c.l.b16 %v4387
          %v5117 = vunpack.c.h.b16 %v4387
          %v5118 = vunpack.c.l.b16 %v4388
          %v5119 = vunpack.c.h.b16 %v4388
          %v5120 = vunpack.c.l.b16 %v4389
          %v5121 = vunpack.c.h.b16 %v4389
          %v5122 = vunpack.c.l.b16 %v4390
          %v5123 = vunpack.c.h.b16 %v4390
          %v5124 = vunpack.c.l.b16 %v4391
          %v5125 = vunpack.c.h.b16 %v4391
          %v5126 = vunpack.c.l.b16 %v4392
          %v5127 = vunpack.c.h.b16 %v4392
          %v5128 = vunpack.c.l.b16 %v4393
          %v5129 = vunpack.c.h.b16 %v4393
          %v5130 = vunpack.c.l.b16 %v4394
          %v5131 = vunpack.c.h.b16 %v4394
          %v5132 = vunpack.c.l.b16 %v4395
          %v5133 = vunpack.c.h.b16 %v4395
          %v5134 = vunpack.c.l.b16 %v4396
          %v5135 = vunpack.c.h.b16 %v4396
          %v5136 = vunpack.c.l.b16 %v4397
          %v5137 = vunpack.c.h.b16 %v4397
          %v5138 = vunpack.c.l.b16 %v4398
          %v5139 = vunpack.c.h.b16 %v4398
          %v5140 = vunpack.c.l.b16 %v4399
          %v5141 = vunpack.c.h.b16 %v4399
          %v5142 = vunpack.c.l.b16 %v4400
          %v5143 = vunpack.c.h.b16 %v4400
          %v5144 = vunpack.c.l.b16 %v4401
          %v5145 = vunpack.c.h.b16 %v4401
          %v5146 = vunpack.c.l.b16 %v4402
          %v5147 = vunpack.c.h.b16 %v4402
          %v5148 = vunpack.c.l.b16 %v4403
          %v5149 = vunpack.c.h.b16 %v4403
          %v5150 = vunpack.c.l.b16 %v4404
          %v5151 = vunpack.c.h.b16 %v4404
          %v5152 = vunpack.c.l.b16 %v4405
          %v5153 = vunpack.c.h.b16 %v4405
          %v5154 = vunpack.c.l.b16 %v4406
          %v5155 = vunpack.c.h.b16 %v4406
          %v5156 = vunpack.c.l.b16 %v4407
          %v5157 = vunpack.c.h.b16 %v4407
          %v5158 = vunpack.c.l.b16 %v4408
          %v5159 = vunpack.c.h.b16 %v4408
          %v5160 = vunpack.c.l.b16 %v4409
          %v5161 = vunpack.c.h.b16 %v4409
          %v5162 = vunpack.c.l.b16 %v4410
          %v5163 = vunpack.c.h.b16 %v4410
          %v5164 = vunpack.c.l.b16 %v4411
          %v5165 = vunpack.c.h.b16 %v4411
          %v5166 = vunpack.c.l.b16 %v4412
          %v5167 = vunpack.c.h.b16 %v4412
          %v5168 = vunpack.c.l.b16 %v4413
          %v5169 = vunpack.c.h.b16 %v4413
          %v5170 = vunpack.c.l.b16 %v4414
          %v5171 = vunpack.c.h.b16 %v4414
          %v5172 = vunpack.c.l.b16 %v4415
          %v5173 = vunpack.c.h.b16 %v4415
          %v5174 = vunpack.c.l.b16 %v4416
          %v5175 = vunpack.c.h.b16 %v4416
          %v5176 = vunpack.c.l.b16 %v4417
          %v5177 = vunpack.c.h.b16 %v4417
          %v5178 = vunpack.c.l.b16 %v4418
          %v5179 = vunpack.c.h.b16 %v4418
          %v5180 = vunpack.c.l.b16 %v4419
          %v5181 = vunpack.c.h.b16 %v4419
          %v5182 = vunpack.c.l.b16 %v4420
          %v5183 = vunpack.c.h.b16 %v4420
          %v5184 = vunpack.c.l.b16 %v4421
          %v5185 = vunpack.c.h.b16 %v4421
          %v5186 = vunpack.c.l.b16 %v4422
          %v5187 = vunpack.c.h.b16 %v4422
          %v5188 = vunpack.c.l.b16 %v4423
          %v5189 = vunpack.c.h.b16 %v4423
          %v5190 = vunpack.c.l.b16 %v4424
          %v5191 = vunpack.c.h.b16 %v4424
          %v5192 = vunpack.c.l.b16 %v4425
          %v5193 = vunpack.c.h.b16 %v4425
          %v5194 = vunpack.c.l.b16 %v4426
          %v5195 = vunpack.c.h.b16 %v4426
          %v5196 = vunpack.c.l.b16 %v4427
          %v5197 = vunpack.c.h.b16 %v4427
          %v5198 = vunpack.c.l.b16 %v4428
          %v5199 = vunpack.c.h.b16 %v4428
          %v5200 = vunpack.c.l.b16 %v4429
          %v5201 = vunpack.c.h.b16 %v4429
          %v5202 = vunpack.c.l.b16 %v4430
          %v5203 = vunpack.c.h.b16 %v4430
          %v5204 = vunpack.c.l.b16 %v4431
          %v5205 = vunpack.c.h.b16 %v4431
          %v5206 = vunpack.c.l.b16 %v4432
          %v5207 = vunpack.c.h.b16 %v4432
          %v5208 = vunpack.c.l.b16 %v4433
          %v5209 = vunpack.c.h.b16 %v4433
          %v5210 = vunpack.c.l.b16 %v4434
          %v5211 = vunpack.c.h.b16 %v4434
          %v5212 = vunpack.c.l.b16 %v4435
          %v5213 = vunpack.c.h.b16 %v4435
          %v5214 = vunpack.c.l.b16 %v4436
          %v5215 = vunpack.c.h.b16 %v4436
          %v5216 = vunpack.c.l.b16 %v4437
          %v5217 = vunpack.c.h.b16 %v4437
          %v5218 = vunpack.c.l.b16 %v4438
          %v5219 = vunpack.c.h.b16 %v4438
          %v5220 = vunpack.c.l.b16 %v4439
          %v5221 = vunpack.c.h.b16 %v4439
          %v5222 = vunpack.c.l.b16 %v4440
          %v5223 = vunpack.c.h.b16 %v4440
          %v5224 = vunpack.c.l.b16 %v4441
          %v5225 = vunpack.c.h.b16 %v4441
          %v5226 = vunpack.c.l.b16 %v4442
          %v5227 = vunpack.c.h.b16 %v4442
          %v5228 = vunpack.c.l.b16 %v4443
          %v5229 = vunpack.c.h.b16 %v4443
          %v5230 = vunpack.c.l.b16 %v4444
          %v5231 = vunpack.c.h.b16 %v4444
          %v5232 = vunpack.c.l.b16 %v4445
          %v5233 = vunpack.c.h.b16 %v4445
          %v5234 = vunpack.c.l.b16 %v4446
          %v5235 = vunpack.c.h.b16 %v4446
          %v5236 = vunpack.c.l.b16 %v4447
          %v5237 = vunpack.c.h.b16 %v4447
          %v5238 = vunpack.c.l.b16 %v4448
          %v5239 = vunpack.c.h.b16 %v4448
          %v5240 = vunpack.c.l.b16 %v4449
          %v5241 = vunpack.c.h.b16 %v4449
          %v5242 = vunpack.c.l.b16 %v4450
          %v5243 = vunpack.c.h.b16 %v4450
          %v5244 = vunpack.c.l.b16 %v4451
          %v5245 = vunpack.c.h.b16 %v4451
          %v5246 = vunpack.c.l.b16 %v4452
          %v5247 = vunpack.c.h.b16 %v4452
          %v5248 = vunpack.c.l.b16 %v4453
          %v5249 = vunpack.c.h.b16 %v4453
          %v5250 = vunpack.c.l.b16 %v4454
          %v5251 = vunpack.c.h.b16 %v4454
          %v5252 = vunpack.c.l.b16 %v4455
          %v5253 = vunpack.c.h.b16 %v4455
          %v5254 = vunpack.c.l.b16 %v4456
          %v5255 = vunpack.c.h.b16 %v4456
          %v5256 = vunpack.c.l.b16 %v4457
          %v5257 = vunpack.c.h.b16 %v4457
          %v5258 = vunpack.c.l.b16 %v4458
          %v5259 = vunpack.c.h.b16 %v4458
          %v5260 = vunpack.c.l.b16 %v4459
          %v5261 = vunpack.c.h.b16 %v4459
          %v5262 = vunpack.c.l.b16 %v4460
          %v5263 = vunpack.c.h.b16 %v4460
          %v5264 = vunpack.c.l.b16 %v4461
          %v5265 = vunpack.c.h.b16 %v4461
          %v5266 = vunpack.c.l.b16 %v4462
          %v5267 = vunpack.c.h.b16 %v4462
          %v5268 = vunpack.c.l.b16 %v4463
          %v5269 = vunpack.c.h.b16 %v4463
          %v5270 = vunpack.c.l.b16 %v4464
          %v5271 = vunpack.c.h.b16 %v4464
          %v5272 = vunpack.c.l.b16 %v4465
          %v5273 = vunpack.c.h.b16 %v4465
          %v5274 = vunpack.c.l.b16 %v4466
          %v5275 = vunpack.c.h.b16 %v4466
          %v5276 = vunpack.c.l.b16 %v4467
          %v5277 = vunpack.c.h.b16 %v4467
          %v5278 = vpack.c.b16 %v4782, %v4766
          %v5279 = vpack.c.b16 %v4783, %v4767
          %v5280 = vpack.c.b16 %v4784, %v4768
          %v5281 = vpack.c.b16 %v4785, %v4769
          %v5282 = vpack.c.b16 %v4786, %v4770
          %v5283 = vpack.c.b16 %v4787, %v4771
          %v5284 = vpack.c.b16 %v4788, %v4772
          %v5285 = vpack.c.b16 %v4789, %v4773
          %v5286 = vpack.c.b16 %v4790, %v4774
          %v5287 = vpack.c.b16 %v4791, %v4775
          %v5288 = vpack.c.b16 %v4792, %v4776
          %v5289 = vpack.c.b16 %v4793, %v4777
          %v5290 = vpack.c.b16 %v4794, %v4778
          %v5291 = vpack.c.b16 %v4795, %v4779
          %v5292 = vpack.c.b16 %v4796, %v4780
          %v5293 = vpack.c.b16 %v4797, %v4781
          %v5294 = vpack.c.b16 %v4814, %v4798
          %v5295 = vpack.c.b16 %v4815, %v4799
          %v5296 = vpack.c.b16 %v4816, %v4800
          %v5297 = vpack.c.b16 %v4817, %v4801
          %v5298 = vpack.c.b16 %v4818, %v4802
          %v5299 = vpack.c.b16 %v4819, %v4803
          %v5300 = vpack.c.b16 %v4820, %v4804
          %v5301 = vpack.c.b16 %v4821, %v4805
          %v5302 = vpack.c.b16 %v4822, %v4806
          %v5303 = vpack.c.b16 %v4823, %v4807
          %v5304 = vpack.c.b16 %v4824, %v4808
          %v5305 = vpack.c.b16 %v4825, %v4809
          %v5306 = vpack.c.b16 %v4826, %v4810
          %v5307 = vpack.c.b16 %v4827, %v4811
          %v5308 = vpack.c.b16 %v4828, %v4812
          %v5309 = vpack.c.b16 %v4829, %v4813
          %v5310 = vpack.c.b16 %v4846, %v4830
          %v5311 = vpack.c.b16 %v4847, %v4831
          %v5312 = vpack.c.b16 %v4848, %v4832
          %v5313 = vpack.c.b16 %v4849, %v4833
          %v5314 = vpack.c.b16 %v4850, %v4834
          %v5315 = vpack.c.b16 %v4851, %v4835
          %v5316 = vpack.c.b16 %v4852, %v4836
          %v5317 = vpack.c.b16 %v4853, %v4837
          %v5318 = vpack.c.b16 %v4854, %v4838
          %v5319 = vpack.c.b16 %v4855, %v4839
          %v5320 = vpack.c.b16 %v4856, %v4840
          %v5321 = vpack.c.b16 %v4857, %v4841
          %v5322 = vpack.c.b16 %v4858, %v4842
          %v5323 = vpack.c.b16 %v4859, %v4843
          %v5324 = vpack.c.b16 %v4860, %v4844
          %v5325 = vpack.c.b16 %v4861, %v4845
          %v5326 = vpack.c.b16 %v4878, %v4862
          %v5327 = vpack.c.b16 %v4879, %v4863
          %v5328 = vpack.c.b16 %v4880, %v4864
          %v5329 = vpack.c.b16 %v4881, %v4865
          %v5330 = vpack.c.b16 %v4882, %v4866
          %v5331 = vpack.c.b16 %v4883, %v4867
          %v5332 = vpack.c.b16 %v4884, %v4868
          %v5333 = vpack.c.b16 %v4885, %v4869
          %v5334 = vpack.c.b16 %v4886, %v4870
          %v5335 = vpack.c.b16 %v4887, %v4871
          %v5336 = vpack.c.b16 %v4888, %v4872
          %v5337 = vpack.c.b16 %v4889, %v4873
          %v5338 = vpack.c.b16 %v4890, %v4874
          %v5339 = vpack.c.b16 %v4891, %v4875
          %v5340 = vpack.c.b16 %v4892, %v4876
          %v5341 = vpack.c.b16 %v4893, %v4877
          %v5342 = vpack.c.b16 %v4910, %v4894
          %v5343 = vpack.c.b16 %v4911, %v4895
          %v5344 = vpack.c.b16 %v4912, %v4896
          %v5345 = vpack.c.b16 %v4913, %v4897
          %v5346 = vpack.c.b16 %v4914, %v4898
          %v5347 = vpack.c.b16 %v4915, %v4899
          %v5348 = vpack.c.b16 %v4916, %v4900
          %v5349 = vpack.c.b16 %v4917, %v4901
          %v5350 = vpack.c.b16 %v4918, %v4902
          %v5351 = vpack.c.b16 %v4919, %v4903
          %v5352 = vpack.c.b16 %v4920, %v4904
          %v5353 = vpack.c.b16 %v4921, %v4905
          %v5354 = vpack.c.b16 %v4922, %v4906
          %v5355 = vpack.c.b16 %v4923, %v4907
          %v5356 = vpack.c.b16 %v4924, %v4908
          %v5357 = vpack.c.b16 %v4925, %v4909
          %v5358 = vpack.c.b16 %v4942, %v4926
          %v5359 = vpack.c.b16 %v4943, %v4927
          %v5360 = vpack.c.b16 %v4944, %v4928
          %v5361 = vpack.c.b16 %v4945, %v4929
          %v5362 = vpack.c.b16 %v4946, %v4930
          %v5363 = vpack.c.b16 %v4947, %v4931
          %v5364 = vpack.c.b16 %v4948, %v4932
          %v5365 = vpack.c.b16 %v4949, %v4933
          %v5366 = vpack.c.b16 %v4950, %v4934
          %v5367 = vpack.c.b16 %v4951, %v4935
          %v5368 = vpack.c.b16 %v4952, %v4936
          %v5369 = vpack.c.b16 %v4953, %v4937
          %v5370 = vpack.c.b16 %v4954, %v4938
          %v5371 = vpack.c.b16 %v4955, %v4939
          %v5372 = vpack.c.b16 %v4956, %v4940
          %v5373 = vpack.c.b16 %v4957, %v4941
          %v5374 = vpack.c.b16 %v4974, %v4958
          %v5375 = vpack.c.b16 %v4975, %v4959
          %v5376 = vpack.c.b16 %v4976, %v4960
          %v5377 = vpack.c.b16 %v4977, %v4961
          %v5378 = vpack.c.b16 %v4978, %v4962
          %v5379 = vpack.c.b16 %v4979, %v4963
          %v5380 = vpack.c.b16 %v4980, %v4964
          %v5381 = vpack.c.b16 %v4981, %v4965
          %v5382 = vpack.c.b16 %v4982, %v4966
          %v5383 = vpack.c.b16 %v4983, %v4967
          %v5384 = vpack.c.b16 %v4984, %v4968
          %v5385 = vpack.c.b16 %v4985, %v4969
          %v5386 = vpack.c.b16 %v4986, %v4970
          %v5387 = vpack.c.b16 %v4987, %v4971
          %v5388 = vpack.c.b16 %v4988, %v4972
          %v5389 = vpack.c.b16 %v4989, %v4973
          %v5390 = vpack.c.b16 %v5006, %v4990
          %v5391 = vpack.c.b16 %v5007, %v4991
          %v5392 = vpack.c.b16 %v5008, %v4992
          %v5393 = vpack.c.b16 %v5009, %v4993
          %v5394 = vpack.c.b16 %v5010, %v4994
          %v5395 = vpack.c.b16 %v5011, %v4995
          %v5396 = vpack.c.b16 %v5012, %v4996
          %v5397 = vpack.c.b16 %v5013, %v4997
          %v5398 = vpack.c.b16 %v5014, %v4998
          %v5399 = vpack.c.b16 %v5015, %v4999
          %v5400 = vpack.c.b16 %v5016, %v5000
          %v5401 = vpack.c.b16 %v5017, %v5001
          %v5402 = vpack.c.b16 %v5018, %v5002
          %v5403 = vpack.c.b16 %v5019, %v5003
          %v5404 = vpack.c.b16 %v5020, %v5004
          %v5405 = vpack.c.b16 %v5021, %v5005
          %v5406 = vpack.c.b16 %v5038, %v5022
          %v5407 = vpack.c.b16 %v5039, %v5023
          %v5408 = vpack.c.b16 %v5040, %v5024
          %v5409 = vpack.c.b16 %v5041, %v5025
          %v5410 = vpack.c.b16 %v5042, %v5026
          %v5411 = vpack.c.b16 %v5043, %v5027
          %v5412 = vpack.c.b16 %v5044, %v5028
          %v5413 = vpack.c.b16 %v5045, %v5029
          %v5414 = vpack.c.b16 %v5046, %v5030
          %v5415 = vpack.c.b16 %v5047, %v5031
          %v5416 = vpack.c.b16 %v5048, %v5032
          %v5417 = vpack.c.b16 %v5049, %v5033
          %v5418 = vpack.c.b16 %v5050, %v5034
          %v5419 = vpack.c.b16 %v5051, %v5035
          %v5420 = vpack.c.b16 %v5052, %v5036
          %v5421 = vpack.c.b16 %v5053, %v5037
          %v5422 = vpack.c.b16 %v5070, %v5054
          %v5423 = vpack.c.b16 %v5071, %v5055
          %v5424 = vpack.c.b16 %v5072, %v5056
          %v5425 = vpack.c.b16 %v5073, %v5057
          %v5426 = vpack.c.b16 %v5074, %v5058
          %v5427 = vpack.c.b16 %v5075, %v5059
          %v5428 = vpack.c.b16 %v5076, %v5060
          %v5429 = vpack.c.b16 %v5077, %v5061
          %v5430 = vpack.c.b16 %v5078, %v5062
          %v5431 = vpack.c.b16 %v5079, %v5063
          %v5432 = vpack.c.b16 %v5080, %v5064
          %v5433 = vpack.c.b16 %v5081, %v5065
          %v5434 = vpack.c.b16 %v5082, %v5066
          %v5435 = vpack.c.b16 %v5083, %v5067
          %v5436 = vpack.c.b16 %v5084, %v5068
          %v5437 = vpack.c.b16 %v5085, %v5069
          %v5438 = vpack.c.b16 %v5102, %v5086
          %v5439 = vpack.c.b16 %v5103, %v5087
          %v5440 = vpack.c.b16 %v5104, %v5088
          %v5441 = vpack.c.b16 %v5105, %v5089
          %v5442 = vpack.c.b16 %v5106, %v5090
          %v5443 = vpack.c.b16 %v5107, %v5091
          %v5444 = vpack.c.b16 %v5108, %v5092
          %v5445 = vpack.c.b16 %v5109, %v5093
          %v5446 = vpack.c.b16 %v5110, %v5094
          %v5447 = vpack.c.b16 %v5111, %v5095
          %v5448 = vpack.c.b16 %v5112, %v5096
          %v5449 = vpack.c.b16 %v5113, %v5097
          %v5450 = vpack.c.b16 %v5114, %v5098
          %v5451 = vpack.c.b16 %v5115, %v5099
          %v5452 = vpack.c.b16 %v5116, %v5100
          %v5453 = vpack.c.b16 %v5117, %v5101
          %v5454 = vpack.c.b16 %v5134, %v5118
          %v5455 = vpack.c.b16 %v5135, %v5119
          %v5456 = vpack.c.b16 %v5136, %v5120
          %v5457 = vpack.c.b16 %v5137, %v5121
          %v5458 = vpack.c.b16 %v5138, %v5122
          %v5459 = vpack.c.b16 %v5139, %v5123
          %v5460 = vpack.c.b16 %v5140, %v5124
          %v5461 = vpack.c.b16 %v5141, %v5125
          %v5462 = vpack.c.b16 %v5142, %v5126
          %v5463 = vpack.c.b16 %v5143, %v5127
          %v5464 = vpack.c.b16 %v5144, %v5128
          %v5465 = vpack.c.b16 %v5145, %v5129
          %v5466 = vpack.c.b16 %v5146, %v5130
          %v5467 = vpack.c.b16 %v5147, %v5131
          %v5468 = vpack.c.b16 %v5148, %v5132
          %v5469 = vpack.c.b16 %v5149, %v5133
          %v5470 = vpack.c.b16 %v5166, %v5150
          %v5471 = vpack.c.b16 %v5167, %v5151
          %v5472 = vpack.c.b16 %v5168, %v5152
          %v5473 = vpack.c.b16 %v5169, %v5153
          %v5474 = vpack.c.b16 %v5170, %v5154
          %v5475 = vpack.c.b16 %v5171, %v5155
          %v5476 = vpack.c.b16 %v5172, %v5156
          %v5477 = vpack.c.b16 %v5173, %v5157
          %v5478 = vpack.c.b16 %v5174, %v5158
          %v5479 = vpack.c.b16 %v5175, %v5159
          %v5480 = vpack.c.b16 %v5176, %v5160
          %v5481 = vpack.c.b16 %v5177, %v5161
          %v5482 = vpack.c.b16 %v5178, %v5162
          %v5483 = vpack.c.b16 %v5179, %v5163
          %v5484 = vpack.c.b16 %v5180, %v5164
          %v5485 = vpack.c.b16 %v5181, %v5165
          %v5486 = vpack.c.b16 %v5198, %v5182
          %v5487 = vpack.c.b16 %v5199, %v5183
          %v5488 = vpack.c.b16 %v5200, %v5184
          %v5489 = vpack.c.b16 %v5201, %v5185
          %v5490 = vpack.c.b16 %v5202, %v5186
          %v5491 = vpack.c.b16 %v5203, %v5187
          %v5492 = vpack.c.b16 %v5204, %v5188
          %v5493 = vpack.c.b16 %v5205, %v5189
          %v5494 = vpack.c.b16 %v5206, %v5190
          %v5495 = vpack.c.b16 %v5207, %v5191
          %v5496 = vpack.c.b16 %v5208, %v5192
          %v5497 = vpack.c.b16 %v5209, %v5193
          %v5498 = vpack.c.b16 %v5210, %v5194
          %v5499 = vpack.c.b16 %v5211, %v5195
          %v5500 = vpack.c.b16 %v5212, %v5196
          %v5501 = vpack.c.b16 %v5213, %v5197
          %v5502 = vpack.c.b16 %v5230, %v5214
          %v5503 = vpack.c.b16 %v5231, %v5215
          %v5504 = vpack.c.b16 %v5232, %v5216
          %v5505 = vpack.c.b16 %v5233, %v5217
          %v5506 = vpack.c.b16 %v5234, %v5218
          %v5507 = vpack.c.b16 %v5235, %v5219
          %v5508 = vpack.c.b16 %v5236, %v5220
          %v5509 = vpack.c.b16 %v5237, %v5221
          %v5510 = vpack.c.b16 %v5238, %v5222
          %v5511 = vpack.c.b16 %v5239, %v5223
          %v5512 = vpack.c.b16 %v5240, %v5224
          %v5513 = vpack.c.b16 %v5241, %v5225
          %v5514 = vpack.c.b16 %v5242, %v5226
          %v5515 = vpack.c.b16 %v5243, %v5227
          %v5516 = vpack.c.b16 %v5244, %v5228
          %v5517 = vpack.c.b16 %v5245, %v5229
          %v5518 = vpack.c.b16 %v5262, %v5246
          %v5519 = vpack.c.b16 %v5263, %v5247
          %v5520 = vpack.c.b16 %v5264, %v5248
          %v5521 = vpack.c.b16 %v5265, %v5249
          %v5522 = vpack.c.b16 %v5266, %v5250
          %v5523 = vpack.c.b16 %v5267, %v5251
          %v5524 = vpack.c.b16 %v5268, %v5252
          %v5525 = vpack.c.b16 %v5269, %v5253
          %v5526 = vpack.c.b16 %v5270, %v5254
          %v5527 = vpack.c.b16 %v5271, %v5255
          %v5528 = vpack.c.b16 %v5272, %v5256
          %v5529 = vpack.c.b16 %v5273, %v5257
          %v5530 = vpack.c.b16 %v5274, %v5258
          %v5531 = vpack.c.b16 %v5275, %v5259
          %v5532 = vpack.c.b16 %v5276, %v5260
          %v5533 = vpack.c.b16 %v5277, %v5261
          %5790 = vmatpush.bf16.msra.mxu0 %v5390
          %5791 = vmatpush.bf16.msra.mxu0 %v5374
          %5792 = vmatpush.bf16.msra.mxu0 %v5358
          %5793 = vmatpush.bf16.msra.mxu0 %v5342
          %5794 = vmatpush.bf16.msra.mxu0 %v5326
          %5795 = vmatpush.bf16.msra.mxu0 %v5310
          %5796 = vmatpush.bf16.msra.mxu0 %v5294
          %5797 = vmatpush.bf16.msra.mxu0 %v5278
          %5798 = vmatmul.bf16.gmra.mxu0 %v4210
          %v5799 = vpop.f32.mrf.mxu0
          %v5800 = vadd.f32 %v4478, %v5799
          %v5801 = vpop.f32.mrf.mxu0
          %5802 = vdwg.mxu0
          %5803 = vmatpush.bf16.msra.mxu0 %v5518
          %5804 = vmatpush.bf16.msra.mxu0 %v5502
          %5805 = vmatpush.bf16.msra.mxu0 %v5486
          %5806 = vmatpush.bf16.msra.mxu0 %v5470
          %5807 = vmatpush.bf16.msra.mxu0 %v5454
          %5808 = vmatpush.bf16.msra.mxu0 %v5438
          %5809 = vmatpush.bf16.msra.mxu0 %v5422
          %5810 = vmatpush.bf16.msra.mxu0 %v5406
          %5811 = vmatmul.bf16.gmra.mxu0 %v4211
          %v5812 = vpop.f32.mrf.mxu0
          %v5813 = vadd.f32 %v5800, %v5812
          %v5814 = vpop.f32.mrf.mxu0
          %5815 = vdwg.mxu0
          %5816 = vmatpush.bf16.msra.mxu0 %v5391
          %5817 = vmatpush.bf16.msra.mxu0 %v5375
          %5818 = vmatpush.bf16.msra.mxu0 %v5359
          %5819 = vmatpush.bf16.msra.mxu0 %v5343
          %5820 = vmatpush.bf16.msra.mxu0 %v5327
          %5821 = vmatpush.bf16.msra.mxu0 %v5311
          %5822 = vmatpush.bf16.msra.mxu0 %v5295
          %5823 = vmatpush.bf16.msra.mxu0 %v5279
          %5824 = vmatmul.bf16.gmra.mxu0 %v4210
          %v5825 = vpop.f32.mrf.mxu0
          %v5826 = vadd.f32 %v4479, %v5825
          %v5827 = vpop.f32.mrf.mxu0
          %5828 = vdwg.mxu0
          %5829 = vmatpush.bf16.msra.mxu0 %v5519
          %5830 = vmatpush.bf16.msra.mxu0 %v5503
          %5831 = vmatpush.bf16.msra.mxu0 %v5487
          %5832 = vmatpush.bf16.msra.mxu0 %v5471
          %5833 = vmatpush.bf16.msra.mxu0 %v5455
          %5834 = vmatpush.bf16.msra.mxu0 %v5439
          %5835 = vmatpush.bf16.msra.mxu0 %v5423
          %5836 = vmatpush.bf16.msra.mxu0 %v5407
          %5837 = vmatmul.bf16.gmra.mxu0 %v4211
          %v5838 = vpop.f32.mrf.mxu0
          %v5839 = vadd.f32 %v5826, %v5838
          %v5840 = vpop.f32.mrf.mxu0
          %5841 = vdwg.mxu0
          %5842 = vmatpush.bf16.msra.mxu0 %v5392
          %5843 = vmatpush.bf16.msra.mxu0 %v5376
          %5844 = vmatpush.bf16.msra.mxu0 %v5360
          %5845 = vmatpush.bf16.msra.mxu0 %v5344
          %5846 = vmatpush.bf16.msra.mxu0 %v5328
          %5847 = vmatpush.bf16.msra.mxu0 %v5312
          %5848 = vmatpush.bf16.msra.mxu0 %v5296
          %5849 = vmatpush.bf16.msra.mxu0 %v5280
          %5850 = vmatmul.bf16.gmra.mxu0 %v4210
          %v5851 = vpop.f32.mrf.mxu0
          %v5852 = vadd.f32 %v4480, %v5851
          %v5853 = vpop.f32.mrf.mxu0
          %5854 = vdwg.mxu0
          %5855 = vmatpush.bf16.msra.mxu0 %v5520
          %5856 = vmatpush.bf16.msra.mxu0 %v5504
          %5857 = vmatpush.bf16.msra.mxu0 %v5488
          %5858 = vmatpush.bf16.msra.mxu0 %v5472
          %5859 = vmatpush.bf16.msra.mxu0 %v5456
          %5860 = vmatpush.bf16.msra.mxu0 %v5440
          %5861 = vmatpush.bf16.msra.mxu0 %v5424
          %5862 = vmatpush.bf16.msra.mxu0 %v5408
          %5863 = vmatmul.bf16.gmra.mxu0 %v4211
          %v5864 = vpop.f32.mrf.mxu0
          %v5865 = vadd.f32 %v5852, %v5864
          %v5866 = vpop.f32.mrf.mxu0
          %5867 = vdwg.mxu0
          %5868 = vmatpush.bf16.msra.mxu0 %v5393
          %5869 = vmatpush.bf16.msra.mxu0 %v5377
          %5870 = vmatpush.bf16.msra.mxu0 %v5361
          %5871 = vmatpush.bf16.msra.mxu0 %v5345
          %5872 = vmatpush.bf16.msra.mxu0 %v5329
          %5873 = vmatpush.bf16.msra.mxu0 %v5313
          %5874 = vmatpush.bf16.msra.mxu0 %v5297
          %5875 = vmatpush.bf16.msra.mxu0 %v5281
          %5876 = vmatmul.bf16.gmra.mxu0 %v4210
          %v5877 = vpop.f32.mrf.mxu0
          %v5878 = vadd.f32 %v4481, %v5877
          %v5879 = vpop.f32.mrf.mxu0
          %5880 = vdwg.mxu0
          %5881 = vmatpush.bf16.msra.mxu0 %v5521
          %5882 = vmatpush.bf16.msra.mxu0 %v5505
          %5883 = vmatpush.bf16.msra.mxu0 %v5489
          %5884 = vmatpush.bf16.msra.mxu0 %v5473
          %5885 = vmatpush.bf16.msra.mxu0 %v5457
          %5886 = vmatpush.bf16.msra.mxu0 %v5441
          %5887 = vmatpush.bf16.msra.mxu0 %v5425
          %5888 = vmatpush.bf16.msra.mxu0 %v5409
          %5889 = vmatmul.bf16.gmra.mxu0 %v4211
          %v5890 = vpop.f32.mrf.mxu0
          %v5891 = vadd.f32 %v5878, %v5890
          %v5892 = vpop.f32.mrf.mxu0
          %5893 = vdwg.mxu0
          %5894 = vmatpush.bf16.msra.mxu0 %v5394
          %5895 = vmatpush.bf16.msra.mxu0 %v5378
          %5896 = vmatpush.bf16.msra.mxu0 %v5362
          %5897 = vmatpush.bf16.msra.mxu0 %v5346
          %5898 = vmatpush.bf16.msra.mxu0 %v5330
          %5899 = vmatpush.bf16.msra.mxu0 %v5314
          %5900 = vmatpush.bf16.msra.mxu0 %v5298
          %5901 = vmatpush.bf16.msra.mxu0 %v5282
          %5902 = vmatmul.bf16.gmra.mxu0 %v4210
          %v5903 = vpop.f32.mrf.mxu0
          %v5904 = vadd.f32 %v4482, %v5903
          %v5905 = vpop.f32.mrf.mxu0
          %5906 = vdwg.mxu0
          %5907 = vmatpush.bf16.msra.mxu0 %v5522
          %5908 = vmatpush.bf16.msra.mxu0 %v5506
          %5909 = vmatpush.bf16.msra.mxu0 %v5490
          %5910 = vmatpush.bf16.msra.mxu0 %v5474
          %5911 = vmatpush.bf16.msra.mxu0 %v5458
          %5912 = vmatpush.bf16.msra.mxu0 %v5442
          %5913 = vmatpush.bf16.msra.mxu0 %v5426
          %5914 = vmatpush.bf16.msra.mxu0 %v5410
          %5915 = vmatmul.bf16.gmra.mxu0 %v4211
          %v5916 = vpop.f32.mrf.mxu0
          %v5917 = vadd.f32 %v5904, %v5916
          %v5918 = vpop.f32.mrf.mxu0
          %5919 = vdwg.mxu0
          %5920 = vmatpush.bf16.msra.mxu0 %v5395
          %5921 = vmatpush.bf16.msra.mxu0 %v5379
          %5922 = vmatpush.bf16.msra.mxu0 %v5363
          %5923 = vmatpush.bf16.msra.mxu0 %v5347
          %5924 = vmatpush.bf16.msra.mxu0 %v5331
          %5925 = vmatpush.bf16.msra.mxu0 %v5315
          %5926 = vmatpush.bf16.msra.mxu0 %v5299
          %5927 = vmatpush.bf16.msra.mxu0 %v5283
          %5928 = vmatmul.bf16.gmra.mxu0 %v4210
          %v5929 = vpop.f32.mrf.mxu0
          %v5930 = vadd.f32 %v4483, %v5929
          %v5931 = vpop.f32.mrf.mxu0
          %5932 = vdwg.mxu0
          %5933 = vmatpush.bf16.msra.mxu0 %v5523
          %5934 = vmatpush.bf16.msra.mxu0 %v5507
          %5935 = vmatpush.bf16.msra.mxu0 %v5491
          %5936 = vmatpush.bf16.msra.mxu0 %v5475
          %5937 = vmatpush.bf16.msra.mxu0 %v5459
          %5938 = vmatpush.bf16.msra.mxu0 %v5443
          %5939 = vmatpush.bf16.msra.mxu0 %v5427
          %5940 = vmatpush.bf16.msra.mxu0 %v5411
          %5941 = vmatmul.bf16.gmra.mxu0 %v4211
          %v5942 = vpop.f32.mrf.mxu0
          %v5943 = vadd.f32 %v5930, %v5942
          %v5944 = vpop.f32.mrf.mxu0
          %5945 = vdwg.mxu0
          %5946 = vmatpush.bf16.msra.mxu0 %v5396
          %5947 = vmatpush.bf16.msra.mxu0 %v5380
          %5948 = vmatpush.bf16.msra.mxu0 %v5364
          %5949 = vmatpush.bf16.msra.mxu0 %v5348
          %5950 = vmatpush.bf16.msra.mxu0 %v5332
          %5951 = vmatpush.bf16.msra.mxu0 %v5316
          %5952 = vmatpush.bf16.msra.mxu0 %v5300
          %5953 = vmatpush.bf16.msra.mxu0 %v5284
          %5954 = vmatmul.bf16.gmra.mxu0 %v4210
          %v5955 = vpop.f32.mrf.mxu0
          %v5956 = vadd.f32 %v4484, %v5955
          %v5957 = vpop.f32.mrf.mxu0
          %5958 = vdwg.mxu0
          %5959 = vmatpush.bf16.msra.mxu0 %v5524
          %5960 = vmatpush.bf16.msra.mxu0 %v5508
          %5961 = vmatpush.bf16.msra.mxu0 %v5492
          %5962 = vmatpush.bf16.msra.mxu0 %v5476
          %5963 = vmatpush.bf16.msra.mxu0 %v5460
          %5964 = vmatpush.bf16.msra.mxu0 %v5444
          %5965 = vmatpush.bf16.msra.mxu0 %v5428
          %5966 = vmatpush.bf16.msra.mxu0 %v5412
          %5967 = vmatmul.bf16.gmra.mxu0 %v4211
          %v5968 = vpop.f32.mrf.mxu0
          %v5969 = vadd.f32 %v5956, %v5968
          %v5970 = vpop.f32.mrf.mxu0
          %5971 = vdwg.mxu0
          %5972 = vmatpush.bf16.msra.mxu0 %v5397
          %5973 = vmatpush.bf16.msra.mxu0 %v5381
          %5974 = vmatpush.bf16.msra.mxu0 %v5365
          %5975 = vmatpush.bf16.msra.mxu0 %v5349
          %5976 = vmatpush.bf16.msra.mxu0 %v5333
          %5977 = vmatpush.bf16.msra.mxu0 %v5317
          %5978 = vmatpush.bf16.msra.mxu0 %v5301
          %5979 = vmatpush.bf16.msra.mxu0 %v5285
          %5980 = vmatmul.bf16.gmra.mxu0 %v4210
          %v5981 = vpop.f32.mrf.mxu0
          %v5982 = vadd.f32 %v4485, %v5981
          %v5983 = vpop.f32.mrf.mxu0
          %5984 = vdwg.mxu0
          %5985 = vmatpush.bf16.msra.mxu0 %v5525
          %5986 = vmatpush.bf16.msra.mxu0 %v5509
          %5987 = vmatpush.bf16.msra.mxu0 %v5493
          %5988 = vmatpush.bf16.msra.mxu0 %v5477
          %5989 = vmatpush.bf16.msra.mxu0 %v5461
          %5990 = vmatpush.bf16.msra.mxu0 %v5445
          %5991 = vmatpush.bf16.msra.mxu0 %v5429
          %5992 = vmatpush.bf16.msra.mxu0 %v5413
          %5993 = vmatmul.bf16.gmra.mxu0 %v4211
          %v5994 = vpop.f32.mrf.mxu0
          %v5995 = vadd.f32 %v5982, %v5994
          %v5996 = vpop.f32.mrf.mxu0
          %5997 = vdwg.mxu0
          %5998 = vmatpush.bf16.msra.mxu0 %v5398
          %5999 = vmatpush.bf16.msra.mxu0 %v5382
          %6000 = vmatpush.bf16.msra.mxu0 %v5366
          %6001 = vmatpush.bf16.msra.mxu0 %v5350
          %6002 = vmatpush.bf16.msra.mxu0 %v5334
          %6003 = vmatpush.bf16.msra.mxu0 %v5318
          %6004 = vmatpush.bf16.msra.mxu0 %v5302
          %6005 = vmatpush.bf16.msra.mxu0 %v5286
          %6006 = vmatmul.bf16.gmra.mxu0 %v4210
          %v6007 = vpop.f32.mrf.mxu0
          %v6008 = vadd.f32 %v4486, %v6007
          %v6009 = vpop.f32.mrf.mxu0
          %6010 = vdwg.mxu0
          %6011 = vmatpush.bf16.msra.mxu0 %v5526
          %6012 = vmatpush.bf16.msra.mxu0 %v5510
          %6013 = vmatpush.bf16.msra.mxu0 %v5494
          %6014 = vmatpush.bf16.msra.mxu0 %v5478
          %6015 = vmatpush.bf16.msra.mxu0 %v5462
          %6016 = vmatpush.bf16.msra.mxu0 %v5446
          %6017 = vmatpush.bf16.msra.mxu0 %v5430
          %6018 = vmatpush.bf16.msra.mxu0 %v5414
          %6019 = vmatmul.bf16.gmra.mxu0 %v4211
          %v6020 = vpop.f32.mrf.mxu0
          %v6021 = vadd.f32 %v6008, %v6020
          %v6022 = vpop.f32.mrf.mxu0
          %6023 = vdwg.mxu0
          %6024 = vmatpush.bf16.msra.mxu0 %v5399
          %6025 = vmatpush.bf16.msra.mxu0 %v5383
          %6026 = vmatpush.bf16.msra.mxu0 %v5367
          %6027 = vmatpush.bf16.msra.mxu0 %v5351
          %6028 = vmatpush.bf16.msra.mxu0 %v5335
          %6029 = vmatpush.bf16.msra.mxu0 %v5319
          %6030 = vmatpush.bf16.msra.mxu0 %v5303
          %6031 = vmatpush.bf16.msra.mxu0 %v5287
          %6032 = vmatmul.bf16.gmra.mxu0 %v4210
          %v6033 = vpop.f32.mrf.mxu0
          %v6034 = vadd.f32 %v4487, %v6033
          %v6035 = vpop.f32.mrf.mxu0
          %6036 = vdwg.mxu0
          %6037 = vmatpush.bf16.msra.mxu0 %v5527
          %6038 = vmatpush.bf16.msra.mxu0 %v5511
          %6039 = vmatpush.bf16.msra.mxu0 %v5495
          %6040 = vmatpush.bf16.msra.mxu0 %v5479
          %6041 = vmatpush.bf16.msra.mxu0 %v5463
          %6042 = vmatpush.bf16.msra.mxu0 %v5447
          %6043 = vmatpush.bf16.msra.mxu0 %v5431
          %6044 = vmatpush.bf16.msra.mxu0 %v5415
          %6045 = vmatmul.bf16.gmra.mxu0 %v4211
          %v6046 = vpop.f32.mrf.mxu0
          %v6047 = vadd.f32 %v6034, %v6046
          %v6048 = vpop.f32.mrf.mxu0
          %6049 = vdwg.mxu0
          %6050 = vmatpush.bf16.msra.mxu0 %v5400
          %6051 = vmatpush.bf16.msra.mxu0 %v5384
          %6052 = vmatpush.bf16.msra.mxu0 %v5368
          %6053 = vmatpush.bf16.msra.mxu0 %v5352
          %6054 = vmatpush.bf16.msra.mxu0 %v5336
          %6055 = vmatpush.bf16.msra.mxu0 %v5320
          %6056 = vmatpush.bf16.msra.mxu0 %v5304
          %6057 = vmatpush.bf16.msra.mxu0 %v5288
          %6058 = vmatmul.bf16.gmra.mxu0 %v4210
          %v6059 = vpop.f32.mrf.mxu0
          %v6060 = vadd.f32 %v4488, %v6059
          %v6061 = vpop.f32.mrf.mxu0
          %6062 = vdwg.mxu0
          %6063 = vmatpush.bf16.msra.mxu0 %v5528
          %6064 = vmatpush.bf16.msra.mxu0 %v5512
          %6065 = vmatpush.bf16.msra.mxu0 %v5496
          %6066 = vmatpush.bf16.msra.mxu0 %v5480
          %6067 = vmatpush.bf16.msra.mxu0 %v5464
          %6068 = vmatpush.bf16.msra.mxu0 %v5448
          %6069 = vmatpush.bf16.msra.mxu0 %v5432
          %6070 = vmatpush.bf16.msra.mxu0 %v5416
          %6071 = vmatmul.bf16.gmra.mxu0 %v4211
          %v6072 = vpop.f32.mrf.mxu0
          %v6073 = vadd.f32 %v6060, %v6072
          %v6074 = vpop.f32.mrf.mxu0
          %6075 = vdwg.mxu0
          %6076 = vmatpush.bf16.msra.mxu0 %v5401
          %6077 = vmatpush.bf16.msra.mxu0 %v5385
          %6078 = vmatpush.bf16.msra.mxu0 %v5369
          %6079 = vmatpush.bf16.msra.mxu0 %v5353
          %6080 = vmatpush.bf16.msra.mxu0 %v5337
          %6081 = vmatpush.bf16.msra.mxu0 %v5321
          %6082 = vmatpush.bf16.msra.mxu0 %v5305
          %6083 = vmatpush.bf16.msra.mxu0 %v5289
          %6084 = vmatmul.bf16.gmra.mxu0 %v4210
          %v6085 = vpop.f32.mrf.mxu0
          %v6086 = vadd.f32 %v4489, %v6085
          %v6087 = vpop.f32.mrf.mxu0
          %6088 = vdwg.mxu0
          %6089 = vmatpush.bf16.msra.mxu0 %v5529
          %6090 = vmatpush.bf16.msra.mxu0 %v5513
          %6091 = vmatpush.bf16.msra.mxu0 %v5497
          %6092 = vmatpush.bf16.msra.mxu0 %v5481
          %6093 = vmatpush.bf16.msra.mxu0 %v5465
          %6094 = vmatpush.bf16.msra.mxu0 %v5449
          %6095 = vmatpush.bf16.msra.mxu0 %v5433
          %6096 = vmatpush.bf16.msra.mxu0 %v5417
          %6097 = vmatmul.bf16.gmra.mxu0 %v4211
          %v6098 = vpop.f32.mrf.mxu0
          %v6099 = vadd.f32 %v6086, %v6098
          %v6100 = vpop.f32.mrf.mxu0
          %6101 = vdwg.mxu0
          %6102 = vmatpush.bf16.msra.mxu0 %v5402
          %6103 = vmatpush.bf16.msra.mxu0 %v5386
          %6104 = vmatpush.bf16.msra.mxu0 %v5370
          %6105 = vmatpush.bf16.msra.mxu0 %v5354
          %6106 = vmatpush.bf16.msra.mxu0 %v5338
          %6107 = vmatpush.bf16.msra.mxu0 %v5322
          %6108 = vmatpush.bf16.msra.mxu0 %v5306
          %6109 = vmatpush.bf16.msra.mxu0 %v5290
          %6110 = vmatmul.bf16.gmra.mxu0 %v4210
          %v6111 = vpop.f32.mrf.mxu0
          %v6112 = vadd.f32 %v4490, %v6111
          %v6113 = vpop.f32.mrf.mxu0
          %6114 = vdwg.mxu0
          %6115 = vmatpush.bf16.msra.mxu0 %v5530
          %6116 = vmatpush.bf16.msra.mxu0 %v5514
          %6117 = vmatpush.bf16.msra.mxu0 %v5498
          %6118 = vmatpush.bf16.msra.mxu0 %v5482
          %6119 = vmatpush.bf16.msra.mxu0 %v5466
          %6120 = vmatpush.bf16.msra.mxu0 %v5450
          %6121 = vmatpush.bf16.msra.mxu0 %v5434
          %6122 = vmatpush.bf16.msra.mxu0 %v5418
          %6123 = vmatmul.bf16.gmra.mxu0 %v4211
          %v6124 = vpop.f32.mrf.mxu0
          %v6125 = vadd.f32 %v6112, %v6124
          %v6126 = vpop.f32.mrf.mxu0
          %6127 = vdwg.mxu0
          %6128 = vmatpush.bf16.msra.mxu0 %v5403
          %6129 = vmatpush.bf16.msra.mxu0 %v5387
          %6130 = vmatpush.bf16.msra.mxu0 %v5371
          %6131 = vmatpush.bf16.msra.mxu0 %v5355
          %6132 = vmatpush.bf16.msra.mxu0 %v5339
          %6133 = vmatpush.bf16.msra.mxu0 %v5323
          %6134 = vmatpush.bf16.msra.mxu0 %v5307
          %6135 = vmatpush.bf16.msra.mxu0 %v5291
          %6136 = vmatmul.bf16.gmra.mxu0 %v4210
          %v6137 = vpop.f32.mrf.mxu0
          %v6138 = vadd.f32 %v4491, %v6137
          %v6139 = vpop.f32.mrf.mxu0
          %6140 = vdwg.mxu0
          %6141 = vmatpush.bf16.msra.mxu0 %v5531
          %6142 = vmatpush.bf16.msra.mxu0 %v5515
          %6143 = vmatpush.bf16.msra.mxu0 %v5499
          %6144 = vmatpush.bf16.msra.mxu0 %v5483
          %6145 = vmatpush.bf16.msra.mxu0 %v5467
          %6146 = vmatpush.bf16.msra.mxu0 %v5451
          %6147 = vmatpush.bf16.msra.mxu0 %v5435
          %6148 = vmatpush.bf16.msra.mxu0 %v5419
          %6149 = vmatmul.bf16.gmra.mxu0 %v4211
          %v6150 = vpop.f32.mrf.mxu0
          %v6151 = vadd.f32 %v6138, %v6150
          %v6152 = vpop.f32.mrf.mxu0
          %6153 = vdwg.mxu0
          %6154 = vmatpush.bf16.msra.mxu0 %v5404
          %6155 = vmatpush.bf16.msra.mxu0 %v5388
          %6156 = vmatpush.bf16.msra.mxu0 %v5372
          %6157 = vmatpush.bf16.msra.mxu0 %v5356
          %6158 = vmatpush.bf16.msra.mxu0 %v5340
          %6159 = vmatpush.bf16.msra.mxu0 %v5324
          %6160 = vmatpush.bf16.msra.mxu0 %v5308
          %6161 = vmatpush.bf16.msra.mxu0 %v5292
          %6162 = vmatmul.bf16.gmra.mxu0 %v4210
          %v6163 = vpop.f32.mrf.mxu0
          %v6164 = vadd.f32 %v4492, %v6163
          %v6165 = vpop.f32.mrf.mxu0
          %6166 = vdwg.mxu0
          %6167 = vmatpush.bf16.msra.mxu0 %v5532
          %6168 = vmatpush.bf16.msra.mxu0 %v5516
          %6169 = vmatpush.bf16.msra.mxu0 %v5500
          %6170 = vmatpush.bf16.msra.mxu0 %v5484
          %6171 = vmatpush.bf16.msra.mxu0 %v5468
          %6172 = vmatpush.bf16.msra.mxu0 %v5452
          %6173 = vmatpush.bf16.msra.mxu0 %v5436
          %6174 = vmatpush.bf16.msra.mxu0 %v5420
          %6175 = vmatmul.bf16.gmra.mxu0 %v4211
          %v6176 = vpop.f32.mrf.mxu0
          %v6177 = vadd.f32 %v6164, %v6176
          %v6178 = vpop.f32.mrf.mxu0
          %6179 = vdwg.mxu0
          %6180 = vmatpush.bf16.msra.mxu0 %v5405
          %6181 = vmatpush.bf16.msra.mxu0 %v5389
          %6182 = vmatpush.bf16.msra.mxu0 %v5373
          %6183 = vmatpush.bf16.msra.mxu0 %v5357
          %6184 = vmatpush.bf16.msra.mxu0 %v5341
          %6185 = vmatpush.bf16.msra.mxu0 %v5325
          %6186 = vmatpush.bf16.msra.mxu0 %v5309
          %6187 = vmatpush.bf16.msra.mxu0 %v5293
          %6188 = vmatmul.bf16.gmra.mxu0 %v4210
          %v6189 = vpop.f32.mrf.mxu0
          %v6190 = vadd.f32 %v4493, %v6189
          %v6191 = vpop.f32.mrf.mxu0
          %6192 = vdwg.mxu0
          %6193 = vmatpush.bf16.msra.mxu0 %v5533
          %6194 = vmatpush.bf16.msra.mxu0 %v5517
          %6195 = vmatpush.bf16.msra.mxu0 %v5501
          %6196 = vmatpush.bf16.msra.mxu0 %v5485
          %6197 = vmatpush.bf16.msra.mxu0 %v5469
          %6198 = vmatpush.bf16.msra.mxu0 %v5453
          %6199 = vmatpush.bf16.msra.mxu0 %v5437
          %6200 = vmatpush.bf16.msra.mxu0 %v5421
          %6201 = vmatmul.bf16.gmra.mxu0 %v4211
          %v6202 = vpop.f32.mrf.mxu0
          %v6203 = vadd.f32 %v6190, %v6202
          %v6204 = vpop.f32.mrf.mxu0
          %6205 = vdwg.mxu0
          %v6206 = vpack.c.bf16 %v5813, %v5813
          %v6207 = vpack.c.bf16 %v5839, %v5839
          %v6208 = vpack.c.bf16 %v5865, %v5865
          %v6209 = vpack.c.bf16 %v5891, %v5891
          %v6210 = vpack.c.bf16 %v5917, %v5917
          %v6211 = vpack.c.bf16 %v5943, %v5943
          %v6212 = vpack.c.bf16 %v5969, %v5969
          %v6213 = vpack.c.bf16 %v5995, %v5995
          %v6214 = vpack.c.bf16 %v6021, %v6021
          %v6215 = vpack.c.bf16 %v6047, %v6047
          %v6216 = vpack.c.bf16 %v6073, %v6073
          %v6217 = vpack.c.bf16 %v6099, %v6099
          %v6218 = vpack.c.bf16 %v6125, %v6125
          %v6219 = vpack.c.bf16 %v6151, %v6151
          %v6220 = vpack.c.bf16 %v6177, %v6177
          %v6221 = vpack.c.bf16 %v6203, %v6203
          %v6222 = vld [vmem:[%s9] sm:$0xff]
          %v6223 = vld [vmem:[%s9 + $0x8] sm:$0xff]
          %v6224 = vld [vmem:[%s9 + $0x10] sm:$0xff]
          %v6225 = vld [vmem:[%s9 + $0x18] sm:$0xff]
          %v6226 = vld [vmem:[%s9 + $0x20] sm:$0xff]
          %v6227 = vld [vmem:[%s9 + $0x28] sm:$0xff]
          %v6228 = vld [vmem:[%s9 + $0x30] sm:$0xff]
          %v6229 = vld [vmem:[%s9 + $0x38] sm:$0xff]
          %v6230 = vld [vmem:[%s9 + $0x40] sm:$0xff]
          %v6231 = vld [vmem:[%s9 + $0x48] sm:$0xff]
          %v6232 = vld [vmem:[%s9 + $0x50] sm:$0xff]
          %v6233 = vld [vmem:[%s9 + $0x58] sm:$0xff]
          %v6234 = vld [vmem:[%s9 + $0x60] sm:$0xff]
          %v6235 = vld [vmem:[%s9 + $0x68] sm:$0xff]
          %v6236 = vld [vmem:[%s9 + $0x70] sm:$0xff]
          %v6237 = vld [vmem:[%s9 + $0x78] sm:$0xff]
          %v6238 = vld [vmem:[%s9 + $0x80] sm:$0xff]
          %v6239 = vld [vmem:[%s9 + $0x88] sm:$0xff]
          %v6240 = vld [vmem:[%s9 + $0x90] sm:$0xff]
          %v6241 = vld [vmem:[%s9 + $0x98] sm:$0xff]
          %v6242 = vld [vmem:[%s9 + $0xa0] sm:$0xff]
          %v6243 = vld [vmem:[%s9 + $0xa8] sm:$0xff]
          %v6244 = vld [vmem:[%s9 + $0xb0] sm:$0xff]
          %v6245 = vld [vmem:[%s9 + $0xb8] sm:$0xff]
          %v6246 = vld [vmem:[%s9 + $0xc0] sm:$0xff]
          %v6247 = vld [vmem:[%s9 + $0xc8] sm:$0xff]
          %v6248 = vld [vmem:[%s9 + $0xd0] sm:$0xff]
          %v6249 = vld [vmem:[%s9 + $0xd8] sm:$0xff]
          %v6250 = vld [vmem:[%s9 + $0xe0] sm:$0xff]
          %v6251 = vld [vmem:[%s9 + $0xe8] sm:$0xff]
          %v6252 = vld [vmem:[%s9 + $0xf0] sm:$0xff]
          %v6253 = vld [vmem:[%s9 + $0xf8] sm:$0xff]
          %v6254 = vld [vmem:[%s9 + $0x100] sm:$0xff]
          %v6255 = vld [vmem:[%s9 + $0x108] sm:$0xff]
          %v6256 = vld [vmem:[%s9 + $0x110] sm:$0xff]
          %v6257 = vld [vmem:[%s9 + $0x118] sm:$0xff]
          %v6258 = vld [vmem:[%s9 + $0x120] sm:$0xff]
          %v6259 = vld [vmem:[%s9 + $0x128] sm:$0xff]
          %v6260 = vld [vmem:[%s9 + $0x130] sm:$0xff]
          %v6261 = vld [vmem:[%s9 + $0x138] sm:$0xff]
          %v6262 = vld [vmem:[%s9 + $0x140] sm:$0xff]
          %v6263 = vld [vmem:[%s9 + $0x148] sm:$0xff]
          %v6264 = vld [vmem:[%s9 + $0x150] sm:$0xff]
          %v6265 = vld [vmem:[%s9 + $0x158] sm:$0xff]
          %v6266 = vld [vmem:[%s9 + $0x160] sm:$0xff]
          %v6267 = vld [vmem:[%s9 + $0x168] sm:$0xff]
          %v6268 = vld [vmem:[%s9 + $0x170] sm:$0xff]
          %v6269 = vld [vmem:[%s9 + $0x178] sm:$0xff]
          %v6270 = vld [vmem:[%s9 + $0x180] sm:$0xff]
          %v6271 = vld [vmem:[%s9 + $0x188] sm:$0xff]
          %v6272 = vld [vmem:[%s9 + $0x190] sm:$0xff]
          %v6273 = vld [vmem:[%s9 + $0x198] sm:$0xff]
          %v6274 = vld [vmem:[%s9 + $0x1a0] sm:$0xff]
          %v6275 = vld [vmem:[%s9 + $0x1a8] sm:$0xff]
          %v6276 = vld [vmem:[%s9 + $0x1b0] sm:$0xff]
          %v6277 = vld [vmem:[%s9 + $0x1b8] sm:$0xff]
          %v6278 = vld [vmem:[%s9 + $0x1c0] sm:$0xff]
          %v6279 = vld [vmem:[%s9 + $0x1c8] sm:$0xff]
          %v6280 = vld [vmem:[%s9 + $0x1d0] sm:$0xff]
          %v6281 = vld [vmem:[%s9 + $0x1d8] sm:$0xff]
          %v6282 = vld [vmem:[%s9 + $0x1e0] sm:$0xff]
          %v6283 = vld [vmem:[%s9 + $0x1e8] sm:$0xff]
          %v6284 = vld [vmem:[%s9 + $0x1f0] sm:$0xff]
          %v6285 = vld [vmem:[%s9 + $0x1f8] sm:$0xff]
          %v6286 = vld [vmem:[%s9 + $0x200] sm:$0xff]
          %v6287 = vld [vmem:[%s9 + $0x208] sm:$0xff]
          %v6288 = vld [vmem:[%s9 + $0x210] sm:$0xff]
          %v6289 = vld [vmem:[%s9 + $0x218] sm:$0xff]
          %v6290 = vld [vmem:[%s9 + $0x220] sm:$0xff]
          %v6291 = vld [vmem:[%s9 + $0x228] sm:$0xff]
          %v6292 = vld [vmem:[%s9 + $0x230] sm:$0xff]
          %v6293 = vld [vmem:[%s9 + $0x238] sm:$0xff]
          %v6294 = vld [vmem:[%s9 + $0x240] sm:$0xff]
          %v6295 = vld [vmem:[%s9 + $0x248] sm:$0xff]
          %v6296 = vld [vmem:[%s9 + $0x250] sm:$0xff]
          %v6297 = vld [vmem:[%s9 + $0x258] sm:$0xff]
          %v6298 = vld [vmem:[%s9 + $0x260] sm:$0xff]
          %v6299 = vld [vmem:[%s9 + $0x268] sm:$0xff]
          %v6300 = vld [vmem:[%s9 + $0x270] sm:$0xff]
          %v6301 = vld [vmem:[%s9 + $0x278] sm:$0xff]
          %v6302 = vld [vmem:[%s9 + $0x280] sm:$0xff]
          %v6303 = vld [vmem:[%s9 + $0x288] sm:$0xff]
          %v6304 = vld [vmem:[%s9 + $0x290] sm:$0xff]
          %v6305 = vld [vmem:[%s9 + $0x298] sm:$0xff]
          %v6306 = vld [vmem:[%s9 + $0x2a0] sm:$0xff]
          %v6307 = vld [vmem:[%s9 + $0x2a8] sm:$0xff]
          %v6308 = vld [vmem:[%s9 + $0x2b0] sm:$0xff]
          %v6309 = vld [vmem:[%s9 + $0x2b8] sm:$0xff]
          %v6310 = vld [vmem:[%s9 + $0x2c0] sm:$0xff]
          %v6311 = vld [vmem:[%s9 + $0x2c8] sm:$0xff]
          %v6312 = vld [vmem:[%s9 + $0x2d0] sm:$0xff]
          %v6313 = vld [vmem:[%s9 + $0x2d8] sm:$0xff]
          %v6314 = vld [vmem:[%s9 + $0x2e0] sm:$0xff]
          %v6315 = vld [vmem:[%s9 + $0x2e8] sm:$0xff]
          %v6316 = vld [vmem:[%s9 + $0x2f0] sm:$0xff]
          %v6317 = vld [vmem:[%s9 + $0x2f8] sm:$0xff]
          %v6318 = vld [vmem:[%s9 + $0x300] sm:$0xff]
          %v6319 = vld [vmem:[%s9 + $0x308] sm:$0xff]
          %v6320 = vld [vmem:[%s9 + $0x310] sm:$0xff]
          %v6321 = vld [vmem:[%s9 + $0x318] sm:$0xff]
          %v6322 = vld [vmem:[%s9 + $0x320] sm:$0xff]
          %v6323 = vld [vmem:[%s9 + $0x328] sm:$0xff]
          %v6324 = vld [vmem:[%s9 + $0x330] sm:$0xff]
          %v6325 = vld [vmem:[%s9 + $0x338] sm:$0xff]
          %v6326 = vld [vmem:[%s9 + $0x340] sm:$0xff]
          %v6327 = vld [vmem:[%s9 + $0x348] sm:$0xff]
          %v6328 = vld [vmem:[%s9 + $0x350] sm:$0xff]
          %v6329 = vld [vmem:[%s9 + $0x358] sm:$0xff]
          %v6330 = vld [vmem:[%s9 + $0x360] sm:$0xff]
          %v6331 = vld [vmem:[%s9 + $0x368] sm:$0xff]
          %v6332 = vld [vmem:[%s9 + $0x370] sm:$0xff]
          %v6333 = vld [vmem:[%s9 + $0x378] sm:$0xff]
          %v6334 = vld [vmem:[%s9 + $0x380] sm:$0xff]
          %v6335 = vld [vmem:[%s9 + $0x388] sm:$0xff]
          %v6336 = vld [vmem:[%s9 + $0x390] sm:$0xff]
          %v6337 = vld [vmem:[%s9 + $0x398] sm:$0xff]
          %v6338 = vld [vmem:[%s9 + $0x3a0] sm:$0xff]
          %v6339 = vld [vmem:[%s9 + $0x3a8] sm:$0xff]
          %v6340 = vld [vmem:[%s9 + $0x3b0] sm:$0xff]
          %v6341 = vld [vmem:[%s9 + $0x3b8] sm:$0xff]
          %v6342 = vld [vmem:[%s9 + $0x3c0] sm:$0xff]
          %v6343 = vld [vmem:[%s9 + $0x3c8] sm:$0xff]
          %v6344 = vld [vmem:[%s9 + $0x3d0] sm:$0xff]
          %v6345 = vld [vmem:[%s9 + $0x3d8] sm:$0xff]
          %v6346 = vld [vmem:[%s9 + $0x3e0] sm:$0xff]
          %v6347 = vld [vmem:[%s9 + $0x3e8] sm:$0xff]
          %v6348 = vld [vmem:[%s9 + $0x3f0] sm:$0xff]
          %v6349 = vld [vmem:[%s9 + $0x3f8] sm:$0xff]
          %v6350 = vld [vmem:[%s9 + $0x400] sm:$0xff]
          %v6351 = vld [vmem:[%s9 + $0x408] sm:$0xff]
          %v6352 = vld [vmem:[%s9 + $0x410] sm:$0xff]
          %v6353 = vld [vmem:[%s9 + $0x418] sm:$0xff]
          %v6354 = vld [vmem:[%s9 + $0x420] sm:$0xff]
          %v6355 = vld [vmem:[%s9 + $0x428] sm:$0xff]
          %v6356 = vld [vmem:[%s9 + $0x430] sm:$0xff]
          %v6357 = vld [vmem:[%s9 + $0x438] sm:$0xff]
          %v6358 = vld [vmem:[%s9 + $0x440] sm:$0xff]
          %v6359 = vld [vmem:[%s9 + $0x448] sm:$0xff]
          %v6360 = vld [vmem:[%s9 + $0x450] sm:$0xff]
          %v6361 = vld [vmem:[%s9 + $0x458] sm:$0xff]
          %v6362 = vld [vmem:[%s9 + $0x460] sm:$0xff]
          %v6363 = vld [vmem:[%s9 + $0x468] sm:$0xff]
          %v6364 = vld [vmem:[%s9 + $0x470] sm:$0xff]
          %v6365 = vld [vmem:[%s9 + $0x478] sm:$0xff]
          %v6366 = vld [vmem:[%s9 + $0x480] sm:$0xff]
          %v6367 = vld [vmem:[%s9 + $0x488] sm:$0xff]
          %v6368 = vld [vmem:[%s9 + $0x490] sm:$0xff]
          %v6369 = vld [vmem:[%s9 + $0x498] sm:$0xff]
          %v6370 = vld [vmem:[%s9 + $0x4a0] sm:$0xff]
          %v6371 = vld [vmem:[%s9 + $0x4a8] sm:$0xff]
          %v6372 = vld [vmem:[%s9 + $0x4b0] sm:$0xff]
          %v6373 = vld [vmem:[%s9 + $0x4b8] sm:$0xff]
          %v6374 = vld [vmem:[%s9 + $0x4c0] sm:$0xff]
          %v6375 = vld [vmem:[%s9 + $0x4c8] sm:$0xff]
          %v6376 = vld [vmem:[%s9 + $0x4d0] sm:$0xff]
          %v6377 = vld [vmem:[%s9 + $0x4d8] sm:$0xff]
          %v6378 = vld [vmem:[%s9 + $0x4e0] sm:$0xff]
          %v6379 = vld [vmem:[%s9 + $0x4e8] sm:$0xff]
          %v6380 = vld [vmem:[%s9 + $0x4f0] sm:$0xff]
          %v6381 = vld [vmem:[%s9 + $0x4f8] sm:$0xff]
          %v6382 = vld [vmem:[%s9 + $0x500] sm:$0xff]
          %v6383 = vld [vmem:[%s9 + $0x508] sm:$0xff]
          %v6384 = vld [vmem:[%s9 + $0x510] sm:$0xff]
          %v6385 = vld [vmem:[%s9 + $0x518] sm:$0xff]
          %v6386 = vld [vmem:[%s9 + $0x520] sm:$0xff]
          %v6387 = vld [vmem:[%s9 + $0x528] sm:$0xff]
          %v6388 = vld [vmem:[%s9 + $0x530] sm:$0xff]
          %v6389 = vld [vmem:[%s9 + $0x538] sm:$0xff]
          %v6390 = vld [vmem:[%s9 + $0x540] sm:$0xff]
          %v6391 = vld [vmem:[%s9 + $0x548] sm:$0xff]
          %v6392 = vld [vmem:[%s9 + $0x550] sm:$0xff]
          %v6393 = vld [vmem:[%s9 + $0x558] sm:$0xff]
          %v6394 = vld [vmem:[%s9 + $0x560] sm:$0xff]
          %v6395 = vld [vmem:[%s9 + $0x568] sm:$0xff]
          %v6396 = vld [vmem:[%s9 + $0x570] sm:$0xff]
          %v6397 = vld [vmem:[%s9 + $0x578] sm:$0xff]
          %v6398 = vld [vmem:[%s9 + $0x580] sm:$0xff]
          %v6399 = vld [vmem:[%s9 + $0x588] sm:$0xff]
          %v6400 = vld [vmem:[%s9 + $0x590] sm:$0xff]
          %v6401 = vld [vmem:[%s9 + $0x598] sm:$0xff]
          %v6402 = vld [vmem:[%s9 + $0x5a0] sm:$0xff]
          %v6403 = vld [vmem:[%s9 + $0x5a8] sm:$0xff]
          %v6404 = vld [vmem:[%s9 + $0x5b0] sm:$0xff]
          %v6405 = vld [vmem:[%s9 + $0x5b8] sm:$0xff]
          %v6406 = vld [vmem:[%s9 + $0x5c0] sm:$0xff]
          %v6407 = vld [vmem:[%s9 + $0x5c8] sm:$0xff]
          %v6408 = vld [vmem:[%s9 + $0x5d0] sm:$0xff]
          %v6409 = vld [vmem:[%s9 + $0x5d8] sm:$0xff]
          %v6410 = vld [vmem:[%s9 + $0x5e0] sm:$0xff]
          %v6411 = vld [vmem:[%s9 + $0x5e8] sm:$0xff]
          %v6412 = vld [vmem:[%s9 + $0x5f0] sm:$0xff]
          %v6413 = vld [vmem:[%s9 + $0x5f8] sm:$0xff]
          %v6414 = vld [vmem:[%s9 + $0x600] sm:$0xff]
          %v6415 = vld [vmem:[%s9 + $0x608] sm:$0xff]
          %v6416 = vld [vmem:[%s9 + $0x610] sm:$0xff]
          %v6417 = vld [vmem:[%s9 + $0x618] sm:$0xff]
          %v6418 = vld [vmem:[%s9 + $0x620] sm:$0xff]
          %v6419 = vld [vmem:[%s9 + $0x628] sm:$0xff]
          %v6420 = vld [vmem:[%s9 + $0x630] sm:$0xff]
          %v6421 = vld [vmem:[%s9 + $0x638] sm:$0xff]
          %v6422 = vld [vmem:[%s9 + $0x640] sm:$0xff]
          %v6423 = vld [vmem:[%s9 + $0x648] sm:$0xff]
          %v6424 = vld [vmem:[%s9 + $0x650] sm:$0xff]
          %v6425 = vld [vmem:[%s9 + $0x658] sm:$0xff]
          %v6426 = vld [vmem:[%s9 + $0x660] sm:$0xff]
          %v6427 = vld [vmem:[%s9 + $0x668] sm:$0xff]
          %v6428 = vld [vmem:[%s9 + $0x670] sm:$0xff]
          %v6429 = vld [vmem:[%s9 + $0x678] sm:$0xff]
          %v6430 = vld [vmem:[%s9 + $0x680] sm:$0xff]
          %v6431 = vld [vmem:[%s9 + $0x688] sm:$0xff]
          %v6432 = vld [vmem:[%s9 + $0x690] sm:$0xff]
          %v6433 = vld [vmem:[%s9 + $0x698] sm:$0xff]
          %v6434 = vld [vmem:[%s9 + $0x6a0] sm:$0xff]
          %v6435 = vld [vmem:[%s9 + $0x6a8] sm:$0xff]
          %v6436 = vld [vmem:[%s9 + $0x6b0] sm:$0xff]
          %v6437 = vld [vmem:[%s9 + $0x6b8] sm:$0xff]
          %v6438 = vld [vmem:[%s9 + $0x6c0] sm:$0xff]
          %v6439 = vld [vmem:[%s9 + $0x6c8] sm:$0xff]
          %v6440 = vld [vmem:[%s9 + $0x6d0] sm:$0xff]
          %v6441 = vld [vmem:[%s9 + $0x6d8] sm:$0xff]
          %v6442 = vld [vmem:[%s9 + $0x6e0] sm:$0xff]
          %v6443 = vld [vmem:[%s9 + $0x6e8] sm:$0xff]
          %v6444 = vld [vmem:[%s9 + $0x6f0] sm:$0xff]
          %v6445 = vld [vmem:[%s9 + $0x6f8] sm:$0xff]
          %v6446 = vld [vmem:[%s9 + $0x700] sm:$0xff]
          %v6447 = vld [vmem:[%s9 + $0x708] sm:$0xff]
          %v6448 = vld [vmem:[%s9 + $0x710] sm:$0xff]
          %v6449 = vld [vmem:[%s9 + $0x718] sm:$0xff]
          %v6450 = vld [vmem:[%s9 + $0x720] sm:$0xff]
          %v6451 = vld [vmem:[%s9 + $0x728] sm:$0xff]
          %v6452 = vld [vmem:[%s9 + $0x730] sm:$0xff]
          %v6453 = vld [vmem:[%s9 + $0x738] sm:$0xff]
          %v6454 = vld [vmem:[%s9 + $0x740] sm:$0xff]
          %v6455 = vld [vmem:[%s9 + $0x748] sm:$0xff]
          %v6456 = vld [vmem:[%s9 + $0x750] sm:$0xff]
          %v6457 = vld [vmem:[%s9 + $0x758] sm:$0xff]
          %v6458 = vld [vmem:[%s9 + $0x760] sm:$0xff]
          %v6459 = vld [vmem:[%s9 + $0x768] sm:$0xff]
          %v6460 = vld [vmem:[%s9 + $0x770] sm:$0xff]
          %v6461 = vld [vmem:[%s9 + $0x778] sm:$0xff]
          %v6462 = vld [vmem:[%s9 + $0x780] sm:$0xff]
          %v6463 = vld [vmem:[%s9 + $0x788] sm:$0xff]
          %v6464 = vld [vmem:[%s9 + $0x790] sm:$0xff]
          %v6465 = vld [vmem:[%s9 + $0x798] sm:$0xff]
          %v6466 = vld [vmem:[%s9 + $0x7a0] sm:$0xff]
          %v6467 = vld [vmem:[%s9 + $0x7a8] sm:$0xff]
          %v6468 = vld [vmem:[%s9 + $0x7b0] sm:$0xff]
          %v6469 = vld [vmem:[%s9 + $0x7b8] sm:$0xff]
          %v6470 = vld [vmem:[%s9 + $0x7c0] sm:$0xff]
          %v6471 = vld [vmem:[%s9 + $0x7c8] sm:$0xff]
          %v6472 = vld [vmem:[%s9 + $0x7d0] sm:$0xff]
          %v6473 = vld [vmem:[%s9 + $0x7d8] sm:$0xff]
          %v6474 = vld [vmem:[%s9 + $0x7e0] sm:$0xff]
          %v6475 = vld [vmem:[%s9 + $0x7e8] sm:$0xff]
          %v6476 = vld [vmem:[%s9 + $0x7f0] sm:$0xff]
          %v6477 = vld [vmem:[%s9 + $0x7f8] sm:$0xff]
          %v6478 = vld [vmem:[%s9 + $0x800] sm:$0xff]
          %v6479 = vld [vmem:[%s9 + $0x808] sm:$0xff]
          %v6480 = vld [vmem:[%s9 + $0x810] sm:$0xff]
          %v6481 = vld [vmem:[%s9 + $0x818] sm:$0xff]
          %v6482 = vld [vmem:[%s9 + $0x820] sm:$0xff]
          %v6483 = vld [vmem:[%s9 + $0x828] sm:$0xff]
          %v6484 = vld [vmem:[%s9 + $0x830] sm:$0xff]
          %v6485 = vld [vmem:[%s9 + $0x838] sm:$0xff]
          %v6486 = vld [vmem:[%s9 + $0x840] sm:$0xff]
          %v6487 = vld [vmem:[%s9 + $0x848] sm:$0xff]
          %v6488 = vld [vmem:[%s9 + $0x850] sm:$0xff]
          %v6489 = vld [vmem:[%s9 + $0x858] sm:$0xff]
          %v6490 = vld [vmem:[%s9 + $0x860] sm:$0xff]
          %v6491 = vld [vmem:[%s9 + $0x868] sm:$0xff]
          %v6492 = vld [vmem:[%s9 + $0x870] sm:$0xff]
          %v6493 = vld [vmem:[%s9 + $0x878] sm:$0xff]
          %v6494 = vld [vmem:[%s9 + $0x880] sm:$0xff]
          %v6495 = vld [vmem:[%s9 + $0x888] sm:$0xff]
          %v6496 = vld [vmem:[%s9 + $0x890] sm:$0xff]
          %v6497 = vld [vmem:[%s9 + $0x898] sm:$0xff]
          %v6498 = vld [vmem:[%s9 + $0x8a0] sm:$0xff]
          %v6499 = vld [vmem:[%s9 + $0x8a8] sm:$0xff]
          %v6500 = vld [vmem:[%s9 + $0x8b0] sm:$0xff]
          %v6501 = vld [vmem:[%s9 + $0x8b8] sm:$0xff]
          %v6502 = vld [vmem:[%s9 + $0x8c0] sm:$0xff]
          %v6503 = vld [vmem:[%s9 + $0x8c8] sm:$0xff]
          %v6504 = vld [vmem:[%s9 + $0x8d0] sm:$0xff]
          %v6505 = vld [vmem:[%s9 + $0x8d8] sm:$0xff]
          %v6506 = vld [vmem:[%s9 + $0x8e0] sm:$0xff]
          %v6507 = vld [vmem:[%s9 + $0x8e8] sm:$0xff]
          %v6508 = vld [vmem:[%s9 + $0x8f0] sm:$0xff]
          %v6509 = vld [vmem:[%s9 + $0x8f8] sm:$0xff]
          %v6510 = vld [vmem:[%s9 + $0x900] sm:$0xff]
          %v6511 = vld [vmem:[%s9 + $0x908] sm:$0xff]
          %v6512 = vld [vmem:[%s9 + $0x910] sm:$0xff]
          %v6513 = vld [vmem:[%s9 + $0x918] sm:$0xff]
          %v6514 = vld [vmem:[%s9 + $0x920] sm:$0xff]
          %v6515 = vld [vmem:[%s9 + $0x928] sm:$0xff]
          %v6516 = vld [vmem:[%s9 + $0x930] sm:$0xff]
          %v6517 = vld [vmem:[%s9 + $0x938] sm:$0xff]
          %v6518 = vld [vmem:[%s9 + $0x940] sm:$0xff]
          %v6519 = vld [vmem:[%s9 + $0x948] sm:$0xff]
          %v6520 = vld [vmem:[%s9 + $0x950] sm:$0xff]
          %v6521 = vld [vmem:[%s9 + $0x958] sm:$0xff]
          %v6522 = vld [vmem:[%s9 + $0x960] sm:$0xff]
          %v6523 = vld [vmem:[%s9 + $0x968] sm:$0xff]
          %v6524 = vld [vmem:[%s9 + $0x970] sm:$0xff]
          %v6525 = vld [vmem:[%s9 + $0x978] sm:$0xff]
          %v6526 = vld [vmem:[%s9 + $0x980] sm:$0xff]
          %v6527 = vld [vmem:[%s9 + $0x988] sm:$0xff]
          %v6528 = vld [vmem:[%s9 + $0x990] sm:$0xff]
          %v6529 = vld [vmem:[%s9 + $0x998] sm:$0xff]
          %v6530 = vld [vmem:[%s9 + $0x9a0] sm:$0xff]
          %v6531 = vld [vmem:[%s9 + $0x9a8] sm:$0xff]
          %v6532 = vld [vmem:[%s9 + $0x9b0] sm:$0xff]
          %v6533 = vld [vmem:[%s9 + $0x9b8] sm:$0xff]
          %v6534 = vld [vmem:[%s9 + $0x9c0] sm:$0xff]
          %v6535 = vld [vmem:[%s9 + $0x9c8] sm:$0xff]
          %v6536 = vld [vmem:[%s9 + $0x9d0] sm:$0xff]
          %v6537 = vld [vmem:[%s9 + $0x9d8] sm:$0xff]
          %v6538 = vld [vmem:[%s9 + $0x9e0] sm:$0xff]
          %v6539 = vld [vmem:[%s9 + $0x9e8] sm:$0xff]
          %v6540 = vld [vmem:[%s9 + $0x9f0] sm:$0xff]
          %v6541 = vld [vmem:[%s9 + $0x9f8] sm:$0xff]
          %v6542 = vld [vmem:[%s9 + $0xa00] sm:$0xff]
          %v6543 = vld [vmem:[%s9 + $0xa08] sm:$0xff]
          %v6544 = vld [vmem:[%s9 + $0xa10] sm:$0xff]
          %v6545 = vld [vmem:[%s9 + $0xa18] sm:$0xff]
          %v6546 = vld [vmem:[%s9 + $0xa20] sm:$0xff]
          %v6547 = vld [vmem:[%s9 + $0xa28] sm:$0xff]
          %v6548 = vld [vmem:[%s9 + $0xa30] sm:$0xff]
          %v6549 = vld [vmem:[%s9 + $0xa38] sm:$0xff]
          %v6550 = vld [vmem:[%s9 + $0xa40] sm:$0xff]
          %v6551 = vld [vmem:[%s9 + $0xa48] sm:$0xff]
          %v6552 = vld [vmem:[%s9 + $0xa50] sm:$0xff]
          %v6553 = vld [vmem:[%s9 + $0xa58] sm:$0xff]
          %v6554 = vld [vmem:[%s9 + $0xa60] sm:$0xff]
          %v6555 = vld [vmem:[%s9 + $0xa68] sm:$0xff]
          %v6556 = vld [vmem:[%s9 + $0xa70] sm:$0xff]
          %v6557 = vld [vmem:[%s9 + $0xa78] sm:$0xff]
          %v6558 = vld [vmem:[%s9 + $0xa80] sm:$0xff]
          %v6559 = vld [vmem:[%s9 + $0xa88] sm:$0xff]
          %v6560 = vld [vmem:[%s9 + $0xa90] sm:$0xff]
          %v6561 = vld [vmem:[%s9 + $0xa98] sm:$0xff]
          %v6562 = vld [vmem:[%s9 + $0xaa0] sm:$0xff]
          %v6563 = vld [vmem:[%s9 + $0xaa8] sm:$0xff]
          %v6564 = vld [vmem:[%s9 + $0xab0] sm:$0xff]
          %v6565 = vld [vmem:[%s9 + $0xab8] sm:$0xff]
          %v6566 = vld [vmem:[%s9 + $0xac0] sm:$0xff]
          %v6567 = vld [vmem:[%s9 + $0xac8] sm:$0xff]
          %v6568 = vld [vmem:[%s9 + $0xad0] sm:$0xff]
          %v6569 = vld [vmem:[%s9 + $0xad8] sm:$0xff]
          %v6570 = vld [vmem:[%s9 + $0xae0] sm:$0xff]
          %v6571 = vld [vmem:[%s9 + $0xae8] sm:$0xff]
          %v6572 = vld [vmem:[%s9 + $0xaf0] sm:$0xff]
          %v6573 = vld [vmem:[%s9 + $0xaf8] sm:$0xff]
          %v6574 = vld [vmem:[%s9 + $0xb00] sm:$0xff]
          %v6575 = vld [vmem:[%s9 + $0xb08] sm:$0xff]
          %v6576 = vld [vmem:[%s9 + $0xb10] sm:$0xff]
          %v6577 = vld [vmem:[%s9 + $0xb18] sm:$0xff]
          %v6578 = vld [vmem:[%s9 + $0xb20] sm:$0xff]
          %v6579 = vld [vmem:[%s9 + $0xb28] sm:$0xff]
          %v6580 = vld [vmem:[%s9 + $0xb30] sm:$0xff]
          %v6581 = vld [vmem:[%s9 + $0xb38] sm:$0xff]
          %v6582 = vld [vmem:[%s9 + $0xb40] sm:$0xff]
          %v6583 = vld [vmem:[%s9 + $0xb48] sm:$0xff]
          %v6584 = vld [vmem:[%s9 + $0xb50] sm:$0xff]
          %v6585 = vld [vmem:[%s9 + $0xb58] sm:$0xff]
          %v6586 = vld [vmem:[%s9 + $0xb60] sm:$0xff]
          %v6587 = vld [vmem:[%s9 + $0xb68] sm:$0xff]
          %v6588 = vld [vmem:[%s9 + $0xb70] sm:$0xff]
          %v6589 = vld [vmem:[%s9 + $0xb78] sm:$0xff]
          %v6590 = vld [vmem:[%s9 + $0xb80] sm:$0xff]
          %v6591 = vld [vmem:[%s9 + $0xb88] sm:$0xff]
          %v6592 = vld [vmem:[%s9 + $0xb90] sm:$0xff]
          %v6593 = vld [vmem:[%s9 + $0xb98] sm:$0xff]
          %v6594 = vld [vmem:[%s9 + $0xba0] sm:$0xff]
          %v6595 = vld [vmem:[%s9 + $0xba8] sm:$0xff]
          %v6596 = vld [vmem:[%s9 + $0xbb0] sm:$0xff]
          %v6597 = vld [vmem:[%s9 + $0xbb8] sm:$0xff]
          %v6598 = vld [vmem:[%s9 + $0xbc0] sm:$0xff]
          %v6599 = vld [vmem:[%s9 + $0xbc8] sm:$0xff]
          %v6600 = vld [vmem:[%s9 + $0xbd0] sm:$0xff]
          %v6601 = vld [vmem:[%s9 + $0xbd8] sm:$0xff]
          %v6602 = vld [vmem:[%s9 + $0xbe0] sm:$0xff]
          %v6603 = vld [vmem:[%s9 + $0xbe8] sm:$0xff]
          %v6604 = vld [vmem:[%s9 + $0xbf0] sm:$0xff]
          %v6605 = vld [vmem:[%s9 + $0xbf8] sm:$0xff]
          %v6606 = vld [vmem:[%s9 + $0xc00] sm:$0xff]
          %v6607 = vld [vmem:[%s9 + $0xc08] sm:$0xff]
          %v6608 = vld [vmem:[%s9 + $0xc10] sm:$0xff]
          %v6609 = vld [vmem:[%s9 + $0xc18] sm:$0xff]
          %v6610 = vld [vmem:[%s9 + $0xc20] sm:$0xff]
          %v6611 = vld [vmem:[%s9 + $0xc28] sm:$0xff]
          %v6612 = vld [vmem:[%s9 + $0xc30] sm:$0xff]
          %v6613 = vld [vmem:[%s9 + $0xc38] sm:$0xff]
          %v6614 = vld [vmem:[%s9 + $0xc40] sm:$0xff]
          %v6615 = vld [vmem:[%s9 + $0xc48] sm:$0xff]
          %v6616 = vld [vmem:[%s9 + $0xc50] sm:$0xff]
          %v6617 = vld [vmem:[%s9 + $0xc58] sm:$0xff]
          %v6618 = vld [vmem:[%s9 + $0xc60] sm:$0xff]
          %v6619 = vld [vmem:[%s9 + $0xc68] sm:$0xff]
          %v6620 = vld [vmem:[%s9 + $0xc70] sm:$0xff]
          %v6621 = vld [vmem:[%s9 + $0xc78] sm:$0xff]
          %v6622 = vld [vmem:[%s9 + $0xc80] sm:$0xff]
          %v6623 = vld [vmem:[%s9 + $0xc88] sm:$0xff]
          %v6624 = vld [vmem:[%s9 + $0xc90] sm:$0xff]
          %v6625 = vld [vmem:[%s9 + $0xc98] sm:$0xff]
          %v6626 = vld [vmem:[%s9 + $0xca0] sm:$0xff]
          %v6627 = vld [vmem:[%s9 + $0xca8] sm:$0xff]
          %v6628 = vld [vmem:[%s9 + $0xcb0] sm:$0xff]
          %v6629 = vld [vmem:[%s9 + $0xcb8] sm:$0xff]
          %v6630 = vld [vmem:[%s9 + $0xcc0] sm:$0xff]
          %v6631 = vld [vmem:[%s9 + $0xcc8] sm:$0xff]
          %v6632 = vld [vmem:[%s9 + $0xcd0] sm:$0xff]
          %v6633 = vld [vmem:[%s9 + $0xcd8] sm:$0xff]
          %v6634 = vld [vmem:[%s9 + $0xce0] sm:$0xff]
          %v6635 = vld [vmem:[%s9 + $0xce8] sm:$0xff]
          %v6636 = vld [vmem:[%s9 + $0xcf0] sm:$0xff]
          %v6637 = vld [vmem:[%s9 + $0xcf8] sm:$0xff]
          %v6638 = vld [vmem:[%s9 + $0xd00] sm:$0xff]
          %v6639 = vld [vmem:[%s9 + $0xd08] sm:$0xff]
          %v6640 = vld [vmem:[%s9 + $0xd10] sm:$0xff]
          %v6641 = vld [vmem:[%s9 + $0xd18] sm:$0xff]
          %v6642 = vld [vmem:[%s9 + $0xd20] sm:$0xff]
          %v6643 = vld [vmem:[%s9 + $0xd28] sm:$0xff]
          %v6644 = vld [vmem:[%s9 + $0xd30] sm:$0xff]
          %v6645 = vld [vmem:[%s9 + $0xd38] sm:$0xff]
          %v6646 = vld [vmem:[%s9 + $0xd40] sm:$0xff]
          %v6647 = vld [vmem:[%s9 + $0xd48] sm:$0xff]
          %v6648 = vld [vmem:[%s9 + $0xd50] sm:$0xff]
          %v6649 = vld [vmem:[%s9 + $0xd58] sm:$0xff]
          %v6650 = vld [vmem:[%s9 + $0xd60] sm:$0xff]
          %v6651 = vld [vmem:[%s9 + $0xd68] sm:$0xff]
          %v6652 = vld [vmem:[%s9 + $0xd70] sm:$0xff]
          %v6653 = vld [vmem:[%s9 + $0xd78] sm:$0xff]
          %v6654 = vld [vmem:[%s9 + $0xd80] sm:$0xff]
          %v6655 = vld [vmem:[%s9 + $0xd88] sm:$0xff]
          %v6656 = vld [vmem:[%s9 + $0xd90] sm:$0xff]
          %v6657 = vld [vmem:[%s9 + $0xd98] sm:$0xff]
          %v6658 = vld [vmem:[%s9 + $0xda0] sm:$0xff]
          %v6659 = vld [vmem:[%s9 + $0xda8] sm:$0xff]
          %v6660 = vld [vmem:[%s9 + $0xdb0] sm:$0xff]
          %v6661 = vld [vmem:[%s9 + $0xdb8] sm:$0xff]
          %v6662 = vld [vmem:[%s9 + $0xdc0] sm:$0xff]
          %v6663 = vld [vmem:[%s9 + $0xdc8] sm:$0xff]
          %v6664 = vld [vmem:[%s9 + $0xdd0] sm:$0xff]
          %v6665 = vld [vmem:[%s9 + $0xdd8] sm:$0xff]
          %v6666 = vld [vmem:[%s9 + $0xde0] sm:$0xff]
          %v6667 = vld [vmem:[%s9 + $0xde8] sm:$0xff]
          %v6668 = vld [vmem:[%s9 + $0xdf0] sm:$0xff]
          %v6669 = vld [vmem:[%s9 + $0xdf8] sm:$0xff]
          %v6670 = vld [vmem:[%s9 + $0xe00] sm:$0xff]
          %v6671 = vld [vmem:[%s9 + $0xe08] sm:$0xff]
          %v6672 = vld [vmem:[%s9 + $0xe10] sm:$0xff]
          %v6673 = vld [vmem:[%s9 + $0xe18] sm:$0xff]
          %v6674 = vld [vmem:[%s9 + $0xe20] sm:$0xff]
          %v6675 = vld [vmem:[%s9 + $0xe28] sm:$0xff]
          %v6676 = vld [vmem:[%s9 + $0xe30] sm:$0xff]
          %v6677 = vld [vmem:[%s9 + $0xe38] sm:$0xff]
          %v6678 = vld [vmem:[%s9 + $0xe40] sm:$0xff]
          %v6679 = vld [vmem:[%s9 + $0xe48] sm:$0xff]
          %v6680 = vld [vmem:[%s9 + $0xe50] sm:$0xff]
          %v6681 = vld [vmem:[%s9 + $0xe58] sm:$0xff]
          %v6682 = vld [vmem:[%s9 + $0xe60] sm:$0xff]
          %v6683 = vld [vmem:[%s9 + $0xe68] sm:$0xff]
          %v6684 = vld [vmem:[%s9 + $0xe70] sm:$0xff]
          %v6685 = vld [vmem:[%s9 + $0xe78] sm:$0xff]
          %v6686 = vld [vmem:[%s9 + $0xe80] sm:$0xff]
          %v6687 = vld [vmem:[%s9 + $0xe88] sm:$0xff]
          %v6688 = vld [vmem:[%s9 + $0xe90] sm:$0xff]
          %v6689 = vld [vmem:[%s9 + $0xe98] sm:$0xff]
          %v6690 = vld [vmem:[%s9 + $0xea0] sm:$0xff]
          %v6691 = vld [vmem:[%s9 + $0xea8] sm:$0xff]
          %v6692 = vld [vmem:[%s9 + $0xeb0] sm:$0xff]
          %v6693 = vld [vmem:[%s9 + $0xeb8] sm:$0xff]
          %v6694 = vld [vmem:[%s9 + $0xec0] sm:$0xff]
          %v6695 = vld [vmem:[%s9 + $0xec8] sm:$0xff]
          %v6696 = vld [vmem:[%s9 + $0xed0] sm:$0xff]
          %v6697 = vld [vmem:[%s9 + $0xed8] sm:$0xff]
          %v6698 = vld [vmem:[%s9 + $0xee0] sm:$0xff]
          %v6699 = vld [vmem:[%s9 + $0xee8] sm:$0xff]
          %v6700 = vld [vmem:[%s9 + $0xef0] sm:$0xff]
          %v6701 = vld [vmem:[%s9 + $0xef8] sm:$0xff]
          %v6702 = vld [vmem:[%s9 + $0xf00] sm:$0xff]
          %v6703 = vld [vmem:[%s9 + $0xf08] sm:$0xff]
          %v6704 = vld [vmem:[%s9 + $0xf10] sm:$0xff]
          %v6705 = vld [vmem:[%s9 + $0xf18] sm:$0xff]
          %v6706 = vld [vmem:[%s9 + $0xf20] sm:$0xff]
          %v6707 = vld [vmem:[%s9 + $0xf28] sm:$0xff]
          %v6708 = vld [vmem:[%s9 + $0xf30] sm:$0xff]
          %v6709 = vld [vmem:[%s9 + $0xf38] sm:$0xff]
          %v6710 = vld [vmem:[%s9 + $0xf40] sm:$0xff]
          %v6711 = vld [vmem:[%s9 + $0xf48] sm:$0xff]
          %v6712 = vld [vmem:[%s9 + $0xf50] sm:$0xff]
          %v6713 = vld [vmem:[%s9 + $0xf58] sm:$0xff]
          %v6714 = vld [vmem:[%s9 + $0xf60] sm:$0xff]
          %v6715 = vld [vmem:[%s9 + $0xf68] sm:$0xff]
          %v6716 = vld [vmem:[%s9 + $0xf70] sm:$0xff]
          %v6717 = vld [vmem:[%s9 + $0xf78] sm:$0xff]
          %v6718 = vld [vmem:[%s9 + $0xf80] sm:$0xff]
          %v6719 = vld [vmem:[%s9 + $0xf88] sm:$0xff]
          %v6720 = vld [vmem:[%s9 + $0xf90] sm:$0xff]
          %v6721 = vld [vmem:[%s9 + $0xf98] sm:$0xff]
          %v6722 = vld [vmem:[%s9 + $0xfa0] sm:$0xff]
          %v6723 = vld [vmem:[%s9 + $0xfa8] sm:$0xff]
          %v6724 = vld [vmem:[%s9 + $0xfb0] sm:$0xff]
          %v6725 = vld [vmem:[%s9 + $0xfb8] sm:$0xff]
          %v6726 = vld [vmem:[%s9 + $0xfc0] sm:$0xff]
          %v6727 = vld [vmem:[%s9 + $0xfc8] sm:$0xff]
          %v6728 = vld [vmem:[%s9 + $0xfd0] sm:$0xff]
          %v6729 = vld [vmem:[%s9 + $0xfd8] sm:$0xff]
          %v6730 = vld [vmem:[%s9 + $0xfe0] sm:$0xff]
          %v6731 = vld [vmem:[%s9 + $0xfe8] sm:$0xff]
          %v6732 = vld [vmem:[%s9 + $0xff0] sm:$0xff]
          %v6733 = vld [vmem:[%s9 + $0xff8] sm:$0xff]
          %s6734 = scalar_lea.vmem %s14, 2
          %v6735 = vld [vmem:[%s6734] ss:$8 sm:$0xf]
          %v6737 = vperm.slane %v6735, 0
          %v6738 = vperm.slane %v6735, 1
          %v6739 = vperm.slane %v6735, 2
          %v6740 = vperm.slane %v6735, 3
          %v7257 = vunpack.c.l.b16 %v6222
          %v7258 = vunpack.c.h.b16 %v6222
          %v7259 = vunpack.c.l.b16 %v6223
          %v7260 = vunpack.c.h.b16 %v6223
          %v7261 = vunpack.c.l.b16 %v6224
          %v7262 = vunpack.c.h.b16 %v6224
          %v7263 = vunpack.c.l.b16 %v6225
          %v7264 = vunpack.c.h.b16 %v6225
          %v7265 = vunpack.c.l.b16 %v6226
          %v7266 = vunpack.c.h.b16 %v6226
          %v7267 = vunpack.c.l.b16 %v6227
          %v7268 = vunpack.c.h.b16 %v6227
          %v7269 = vunpack.c.l.b16 %v6228
          %v7270 = vunpack.c.h.b16 %v6228
          %v7271 = vunpack.c.l.b16 %v6229
          %v7272 = vunpack.c.h.b16 %v6229
          %v7273 = vunpack.c.l.b16 %v6230
          %v7274 = vunpack.c.h.b16 %v6230
          %v7275 = vunpack.c.l.b16 %v6231
          %v7276 = vunpack.c.h.b16 %v6231
          %v7277 = vunpack.c.l.b16 %v6232
          %v7278 = vunpack.c.h.b16 %v6232
          %v7279 = vunpack.c.l.b16 %v6233
          %v7280 = vunpack.c.h.b16 %v6233
          %v7281 = vunpack.c.l.b16 %v6234
          %v7282 = vunpack.c.h.b16 %v6234
          %v7283 = vunpack.c.l.b16 %v6235
          %v7284 = vunpack.c.h.b16 %v6235
          %v7285 = vunpack.c.l.b16 %v6236
          %v7286 = vunpack.c.h.b16 %v6236
          %v7287 = vunpack.c.l.b16 %v6237
          %v7288 = vunpack.c.h.b16 %v6237
          %v7289 = vunpack.c.l.b16 %v6238
          %v7290 = vunpack.c.h.b16 %v6238
          %v7291 = vunpack.c.l.b16 %v6239
          %v7292 = vunpack.c.h.b16 %v6239
          %v7293 = vunpack.c.l.b16 %v6240
          %v7294 = vunpack.c.h.b16 %v6240
          %v7295 = vunpack.c.l.b16 %v6241
          %v7296 = vunpack.c.h.b16 %v6241
          %v7297 = vunpack.c.l.b16 %v6242
          %v7298 = vunpack.c.h.b16 %v6242
          %v7299 = vunpack.c.l.b16 %v6243
          %v7300 = vunpack.c.h.b16 %v6243
          %v7301 = vunpack.c.l.b16 %v6244
          %v7302 = vunpack.c.h.b16 %v6244
          %v7303 = vunpack.c.l.b16 %v6245
          %v7304 = vunpack.c.h.b16 %v6245
          %v7305 = vunpack.c.l.b16 %v6246
          %v7306 = vunpack.c.h.b16 %v6246
          %v7307 = vunpack.c.l.b16 %v6247
          %v7308 = vunpack.c.h.b16 %v6247
          %v7309 = vunpack.c.l.b16 %v6248
          %v7310 = vunpack.c.h.b16 %v6248
          %v7311 = vunpack.c.l.b16 %v6249
          %v7312 = vunpack.c.h.b16 %v6249
          %v7313 = vunpack.c.l.b16 %v6250
          %v7314 = vunpack.c.h.b16 %v6250
          %v7315 = vunpack.c.l.b16 %v6251
          %v7316 = vunpack.c.h.b16 %v6251
          %v7317 = vunpack.c.l.b16 %v6252
          %v7318 = vunpack.c.h.b16 %v6252
          %v7319 = vunpack.c.l.b16 %v6253
          %v7320 = vunpack.c.h.b16 %v6253
          %v7321 = vunpack.c.l.b16 %v6254
          %v7322 = vunpack.c.h.b16 %v6254
          %v7323 = vunpack.c.l.b16 %v6255
          %v7324 = vunpack.c.h.b16 %v6255
          %v7325 = vunpack.c.l.b16 %v6256
          %v7326 = vunpack.c.h.b16 %v6256
          %v7327 = vunpack.c.l.b16 %v6257
          %v7328 = vunpack.c.h.b16 %v6257
          %v7329 = vunpack.c.l.b16 %v6258
          %v7330 = vunpack.c.h.b16 %v6258
          %v7331 = vunpack.c.l.b16 %v6259
          %v7332 = vunpack.c.h.b16 %v6259
          %v7333 = vunpack.c.l.b16 %v6260
          %v7334 = vunpack.c.h.b16 %v6260
          %v7335 = vunpack.c.l.b16 %v6261
          %v7336 = vunpack.c.h.b16 %v6261
          %v7337 = vunpack.c.l.b16 %v6262
          %v7338 = vunpack.c.h.b16 %v6262
          %v7339 = vunpack.c.l.b16 %v6263
          %v7340 = vunpack.c.h.b16 %v6263
          %v7341 = vunpack.c.l.b16 %v6264
          %v7342 = vunpack.c.h.b16 %v6264
          %v7343 = vunpack.c.l.b16 %v6265
          %v7344 = vunpack.c.h.b16 %v6265
          %v7345 = vunpack.c.l.b16 %v6266
          %v7346 = vunpack.c.h.b16 %v6266
          %v7347 = vunpack.c.l.b16 %v6267
          %v7348 = vunpack.c.h.b16 %v6267
          %v7349 = vunpack.c.l.b16 %v6268
          %v7350 = vunpack.c.h.b16 %v6268
          %v7351 = vunpack.c.l.b16 %v6269
          %v7352 = vunpack.c.h.b16 %v6269
          %v7353 = vunpack.c.l.b16 %v6270
          %v7354 = vunpack.c.h.b16 %v6270
          %v7355 = vunpack.c.l.b16 %v6271
          %v7356 = vunpack.c.h.b16 %v6271
          %v7357 = vunpack.c.l.b16 %v6272
          %v7358 = vunpack.c.h.b16 %v6272
          %v7359 = vunpack.c.l.b16 %v6273
          %v7360 = vunpack.c.h.b16 %v6273
          %v7361 = vunpack.c.l.b16 %v6274
          %v7362 = vunpack.c.h.b16 %v6274
          %v7363 = vunpack.c.l.b16 %v6275
          %v7364 = vunpack.c.h.b16 %v6275
          %v7365 = vunpack.c.l.b16 %v6276
          %v7366 = vunpack.c.h.b16 %v6276
          %v7367 = vunpack.c.l.b16 %v6277
          %v7368 = vunpack.c.h.b16 %v6277
          %v7369 = vunpack.c.l.b16 %v6278
          %v7370 = vunpack.c.h.b16 %v6278
          %v7371 = vunpack.c.l.b16 %v6279
          %v7372 = vunpack.c.h.b16 %v6279
          %v7373 = vunpack.c.l.b16 %v6280
          %v7374 = vunpack.c.h.b16 %v6280
          %v7375 = vunpack.c.l.b16 %v6281
          %v7376 = vunpack.c.h.b16 %v6281
          %v7377 = vunpack.c.l.b16 %v6282
          %v7378 = vunpack.c.h.b16 %v6282
          %v7379 = vunpack.c.l.b16 %v6283
          %v7380 = vunpack.c.h.b16 %v6283
          %v7381 = vunpack.c.l.b16 %v6284
          %v7382 = vunpack.c.h.b16 %v6284
          %v7383 = vunpack.c.l.b16 %v6285
          %v7384 = vunpack.c.h.b16 %v6285
          %v7385 = vunpack.c.l.b16 %v6286
          %v7386 = vunpack.c.h.b16 %v6286
          %v7387 = vunpack.c.l.b16 %v6287
          %v7388 = vunpack.c.h.b16 %v6287
          %v7389 = vunpack.c.l.b16 %v6288
          %v7390 = vunpack.c.h.b16 %v6288
          %v7391 = vunpack.c.l.b16 %v6289
          %v7392 = vunpack.c.h.b16 %v6289
          %v7393 = vunpack.c.l.b16 %v6290
          %v7394 = vunpack.c.h.b16 %v6290
          %v7395 = vunpack.c.l.b16 %v6291
          %v7396 = vunpack.c.h.b16 %v6291
          %v7397 = vunpack.c.l.b16 %v6292
          %v7398 = vunpack.c.h.b16 %v6292
          %v7399 = vunpack.c.l.b16 %v6293
          %v7400 = vunpack.c.h.b16 %v6293
          %v7401 = vunpack.c.l.b16 %v6294
          %v7402 = vunpack.c.h.b16 %v6294
          %v7403 = vunpack.c.l.b16 %v6295
          %v7404 = vunpack.c.h.b16 %v6295
          %v7405 = vunpack.c.l.b16 %v6296
          %v7406 = vunpack.c.h.b16 %v6296
          %v7407 = vunpack.c.l.b16 %v6297
          %v7408 = vunpack.c.h.b16 %v6297
          %v7409 = vunpack.c.l.b16 %v6298
          %v7410 = vunpack.c.h.b16 %v6298
          %v7411 = vunpack.c.l.b16 %v6299
          %v7412 = vunpack.c.h.b16 %v6299
          %v7413 = vunpack.c.l.b16 %v6300
          %v7414 = vunpack.c.h.b16 %v6300
          %v7415 = vunpack.c.l.b16 %v6301
          %v7416 = vunpack.c.h.b16 %v6301
          %v7417 = vunpack.c.l.b16 %v6302
          %v7418 = vunpack.c.h.b16 %v6302
          %v7419 = vunpack.c.l.b16 %v6303
          %v7420 = vunpack.c.h.b16 %v6303
          %v7421 = vunpack.c.l.b16 %v6304
          %v7422 = vunpack.c.h.b16 %v6304
          %v7423 = vunpack.c.l.b16 %v6305
          %v7424 = vunpack.c.h.b16 %v6305
          %v7425 = vunpack.c.l.b16 %v6306
          %v7426 = vunpack.c.h.b16 %v6306
          %v7427 = vunpack.c.l.b16 %v6307
          %v7428 = vunpack.c.h.b16 %v6307
          %v7429 = vunpack.c.l.b16 %v6308
          %v7430 = vunpack.c.h.b16 %v6308
          %v7431 = vunpack.c.l.b16 %v6309
          %v7432 = vunpack.c.h.b16 %v6309
          %v7433 = vunpack.c.l.b16 %v6310
          %v7434 = vunpack.c.h.b16 %v6310
          %v7435 = vunpack.c.l.b16 %v6311
          %v7436 = vunpack.c.h.b16 %v6311
          %v7437 = vunpack.c.l.b16 %v6312
          %v7438 = vunpack.c.h.b16 %v6312
          %v7439 = vunpack.c.l.b16 %v6313
          %v7440 = vunpack.c.h.b16 %v6313
          %v7441 = vunpack.c.l.b16 %v6314
          %v7442 = vunpack.c.h.b16 %v6314
          %v7443 = vunpack.c.l.b16 %v6315
          %v7444 = vunpack.c.h.b16 %v6315
          %v7445 = vunpack.c.l.b16 %v6316
          %v7446 = vunpack.c.h.b16 %v6316
          %v7447 = vunpack.c.l.b16 %v6317
          %v7448 = vunpack.c.h.b16 %v6317
          %v7449 = vunpack.c.l.b16 %v6318
          %v7450 = vunpack.c.h.b16 %v6318
          %v7451 = vunpack.c.l.b16 %v6319
          %v7452 = vunpack.c.h.b16 %v6319
          %v7453 = vunpack.c.l.b16 %v6320
          %v7454 = vunpack.c.h.b16 %v6320
          %v7455 = vunpack.c.l.b16 %v6321
          %v7456 = vunpack.c.h.b16 %v6321
          %v7457 = vunpack.c.l.b16 %v6322
          %v7458 = vunpack.c.h.b16 %v6322
          %v7459 = vunpack.c.l.b16 %v6323
          %v7460 = vunpack.c.h.b16 %v6323
          %v7461 = vunpack.c.l.b16 %v6324
          %v7462 = vunpack.c.h.b16 %v6324
          %v7463 = vunpack.c.l.b16 %v6325
          %v7464 = vunpack.c.h.b16 %v6325
          %v7465 = vunpack.c.l.b16 %v6326
          %v7466 = vunpack.c.h.b16 %v6326
          %v7467 = vunpack.c.l.b16 %v6327
          %v7468 = vunpack.c.h.b16 %v6327
          %v7469 = vunpack.c.l.b16 %v6328
          %v7470 = vunpack.c.h.b16 %v6328
          %v7471 = vunpack.c.l.b16 %v6329
          %v7472 = vunpack.c.h.b16 %v6329
          %v7473 = vunpack.c.l.b16 %v6330
          %v7474 = vunpack.c.h.b16 %v6330
          %v7475 = vunpack.c.l.b16 %v6331
          %v7476 = vunpack.c.h.b16 %v6331
          %v7477 = vunpack.c.l.b16 %v6332
          %v7478 = vunpack.c.h.b16 %v6332
          %v7479 = vunpack.c.l.b16 %v6333
          %v7480 = vunpack.c.h.b16 %v6333
          %v7481 = vunpack.c.l.b16 %v6334
          %v7482 = vunpack.c.h.b16 %v6334
          %v7483 = vunpack.c.l.b16 %v6335
          %v7484 = vunpack.c.h.b16 %v6335
          %v7485 = vunpack.c.l.b16 %v6336
          %v7486 = vunpack.c.h.b16 %v6336
          %v7487 = vunpack.c.l.b16 %v6337
          %v7488 = vunpack.c.h.b16 %v6337
          %v7489 = vunpack.c.l.b16 %v6338
          %v7490 = vunpack.c.h.b16 %v6338
          %v7491 = vunpack.c.l.b16 %v6339
          %v7492 = vunpack.c.h.b16 %v6339
          %v7493 = vunpack.c.l.b16 %v6340
          %v7494 = vunpack.c.h.b16 %v6340
          %v7495 = vunpack.c.l.b16 %v6341
          %v7496 = vunpack.c.h.b16 %v6341
          %v7497 = vunpack.c.l.b16 %v6342
          %v7498 = vunpack.c.h.b16 %v6342
          %v7499 = vunpack.c.l.b16 %v6343
          %v7500 = vunpack.c.h.b16 %v6343
          %v7501 = vunpack.c.l.b16 %v6344
          %v7502 = vunpack.c.h.b16 %v6344
          %v7503 = vunpack.c.l.b16 %v6345
          %v7504 = vunpack.c.h.b16 %v6345
          %v7505 = vunpack.c.l.b16 %v6346
          %v7506 = vunpack.c.h.b16 %v6346
          %v7507 = vunpack.c.l.b16 %v6347
          %v7508 = vunpack.c.h.b16 %v6347
          %v7509 = vunpack.c.l.b16 %v6348
          %v7510 = vunpack.c.h.b16 %v6348
          %v7511 = vunpack.c.l.b16 %v6349
          %v7512 = vunpack.c.h.b16 %v6349
          %v7513 = vunpack.c.l.b16 %v6350
          %v7514 = vunpack.c.h.b16 %v6350
          %v7515 = vunpack.c.l.b16 %v6351
          %v7516 = vunpack.c.h.b16 %v6351
          %v7517 = vunpack.c.l.b16 %v6352
          %v7518 = vunpack.c.h.b16 %v6352
          %v7519 = vunpack.c.l.b16 %v6353
          %v7520 = vunpack.c.h.b16 %v6353
          %v7521 = vunpack.c.l.b16 %v6354
          %v7522 = vunpack.c.h.b16 %v6354
          %v7523 = vunpack.c.l.b16 %v6355
          %v7524 = vunpack.c.h.b16 %v6355
          %v7525 = vunpack.c.l.b16 %v6356
          %v7526 = vunpack.c.h.b16 %v6356
          %v7527 = vunpack.c.l.b16 %v6357
          %v7528 = vunpack.c.h.b16 %v6357
          %v7529 = vunpack.c.l.b16 %v6358
          %v7530 = vunpack.c.h.b16 %v6358
          %v7531 = vunpack.c.l.b16 %v6359
          %v7532 = vunpack.c.h.b16 %v6359
          %v7533 = vunpack.c.l.b16 %v6360
          %v7534 = vunpack.c.h.b16 %v6360
          %v7535 = vunpack.c.l.b16 %v6361
          %v7536 = vunpack.c.h.b16 %v6361
          %v7537 = vunpack.c.l.b16 %v6362
          %v7538 = vunpack.c.h.b16 %v6362
          %v7539 = vunpack.c.l.b16 %v6363
          %v7540 = vunpack.c.h.b16 %v6363
          %v7541 = vunpack.c.l.b16 %v6364
          %v7542 = vunpack.c.h.b16 %v6364
          %v7543 = vunpack.c.l.b16 %v6365
          %v7544 = vunpack.c.h.b16 %v6365
          %v7545 = vunpack.c.l.b16 %v6366
          %v7546 = vunpack.c.h.b16 %v6366
          %v7547 = vunpack.c.l.b16 %v6367
          %v7548 = vunpack.c.h.b16 %v6367
          %v7549 = vunpack.c.l.b16 %v6368
          %v7550 = vunpack.c.h.b16 %v6368
          %v7551 = vunpack.c.l.b16 %v6369
          %v7552 = vunpack.c.h.b16 %v6369
          %v7553 = vunpack.c.l.b16 %v6370
          %v7554 = vunpack.c.h.b16 %v6370
          %v7555 = vunpack.c.l.b16 %v6371
          %v7556 = vunpack.c.h.b16 %v6371
          %v7557 = vunpack.c.l.b16 %v6372
          %v7558 = vunpack.c.h.b16 %v6372
          %v7559 = vunpack.c.l.b16 %v6373
          %v7560 = vunpack.c.h.b16 %v6373
          %v7561 = vunpack.c.l.b16 %v6374
          %v7562 = vunpack.c.h.b16 %v6374
          %v7563 = vunpack.c.l.b16 %v6375
          %v7564 = vunpack.c.h.b16 %v6375
          %v7565 = vunpack.c.l.b16 %v6376
          %v7566 = vunpack.c.h.b16 %v6376
          %v7567 = vunpack.c.l.b16 %v6377
          %v7568 = vunpack.c.h.b16 %v6377
          %v7569 = vunpack.c.l.b16 %v6378
          %v7570 = vunpack.c.h.b16 %v6378
          %v7571 = vunpack.c.l.b16 %v6379
          %v7572 = vunpack.c.h.b16 %v6379
          %v7573 = vunpack.c.l.b16 %v6380
          %v7574 = vunpack.c.h.b16 %v6380
          %v7575 = vunpack.c.l.b16 %v6381
          %v7576 = vunpack.c.h.b16 %v6381
          %v7577 = vunpack.c.l.b16 %v6382
          %v7578 = vunpack.c.h.b16 %v6382
          %v7579 = vunpack.c.l.b16 %v6383
          %v7580 = vunpack.c.h.b16 %v6383
          %v7581 = vunpack.c.l.b16 %v6384
          %v7582 = vunpack.c.h.b16 %v6384
          %v7583 = vunpack.c.l.b16 %v6385
          %v7584 = vunpack.c.h.b16 %v6385
          %v7585 = vunpack.c.l.b16 %v6386
          %v7586 = vunpack.c.h.b16 %v6386
          %v7587 = vunpack.c.l.b16 %v6387
          %v7588 = vunpack.c.h.b16 %v6387
          %v7589 = vunpack.c.l.b16 %v6388
          %v7590 = vunpack.c.h.b16 %v6388
          %v7591 = vunpack.c.l.b16 %v6389
          %v7592 = vunpack.c.h.b16 %v6389
          %v7593 = vunpack.c.l.b16 %v6390
          %v7594 = vunpack.c.h.b16 %v6390
          %v7595 = vunpack.c.l.b16 %v6391
          %v7596 = vunpack.c.h.b16 %v6391
          %v7597 = vunpack.c.l.b16 %v6392
          %v7598 = vunpack.c.h.b16 %v6392
          %v7599 = vunpack.c.l.b16 %v6393
          %v7600 = vunpack.c.h.b16 %v6393
          %v7601 = vunpack.c.l.b16 %v6394
          %v7602 = vunpack.c.h.b16 %v6394
          %v7603 = vunpack.c.l.b16 %v6395
          %v7604 = vunpack.c.h.b16 %v6395
          %v7605 = vunpack.c.l.b16 %v6396
          %v7606 = vunpack.c.h.b16 %v6396
          %v7607 = vunpack.c.l.b16 %v6397
          %v7608 = vunpack.c.h.b16 %v6397
          %v7609 = vunpack.c.l.b16 %v6398
          %v7610 = vunpack.c.h.b16 %v6398
          %v7611 = vunpack.c.l.b16 %v6399
          %v7612 = vunpack.c.h.b16 %v6399
          %v7613 = vunpack.c.l.b16 %v6400
          %v7614 = vunpack.c.h.b16 %v6400
          %v7615 = vunpack.c.l.b16 %v6401
          %v7616 = vunpack.c.h.b16 %v6401
          %v7617 = vunpack.c.l.b16 %v6402
          %v7618 = vunpack.c.h.b16 %v6402
          %v7619 = vunpack.c.l.b16 %v6403
          %v7620 = vunpack.c.h.b16 %v6403
          %v7621 = vunpack.c.l.b16 %v6404
          %v7622 = vunpack.c.h.b16 %v6404
          %v7623 = vunpack.c.l.b16 %v6405
          %v7624 = vunpack.c.h.b16 %v6405
          %v7625 = vunpack.c.l.b16 %v6406
          %v7626 = vunpack.c.h.b16 %v6406
          %v7627 = vunpack.c.l.b16 %v6407
          %v7628 = vunpack.c.h.b16 %v6407
          %v7629 = vunpack.c.l.b16 %v6408
          %v7630 = vunpack.c.h.b16 %v6408
          %v7631 = vunpack.c.l.b16 %v6409
          %v7632 = vunpack.c.h.b16 %v6409
          %v7633 = vunpack.c.l.b16 %v6410
          %v7634 = vunpack.c.h.b16 %v6410
          %v7635 = vunpack.c.l.b16 %v6411
          %v7636 = vunpack.c.h.b16 %v6411
          %v7637 = vunpack.c.l.b16 %v6412
          %v7638 = vunpack.c.h.b16 %v6412
          %v7639 = vunpack.c.l.b16 %v6413
          %v7640 = vunpack.c.h.b16 %v6413
          %v7641 = vunpack.c.l.b16 %v6414
          %v7642 = vunpack.c.h.b16 %v6414
          %v7643 = vunpack.c.l.b16 %v6415
          %v7644 = vunpack.c.h.b16 %v6415
          %v7645 = vunpack.c.l.b16 %v6416
          %v7646 = vunpack.c.h.b16 %v6416
          %v7647 = vunpack.c.l.b16 %v6417
          %v7648 = vunpack.c.h.b16 %v6417
          %v7649 = vunpack.c.l.b16 %v6418
          %v7650 = vunpack.c.h.b16 %v6418
          %v7651 = vunpack.c.l.b16 %v6419
          %v7652 = vunpack.c.h.b16 %v6419
          %v7653 = vunpack.c.l.b16 %v6420
          %v7654 = vunpack.c.h.b16 %v6420
          %v7655 = vunpack.c.l.b16 %v6421
          %v7656 = vunpack.c.h.b16 %v6421
          %v7657 = vunpack.c.l.b16 %v6422
          %v7658 = vunpack.c.h.b16 %v6422
          %v7659 = vunpack.c.l.b16 %v6423
          %v7660 = vunpack.c.h.b16 %v6423
          %v7661 = vunpack.c.l.b16 %v6424
          %v7662 = vunpack.c.h.b16 %v6424
          %v7663 = vunpack.c.l.b16 %v6425
          %v7664 = vunpack.c.h.b16 %v6425
          %v7665 = vunpack.c.l.b16 %v6426
          %v7666 = vunpack.c.h.b16 %v6426
          %v7667 = vunpack.c.l.b16 %v6427
          %v7668 = vunpack.c.h.b16 %v6427
          %v7669 = vunpack.c.l.b16 %v6428
          %v7670 = vunpack.c.h.b16 %v6428
          %v7671 = vunpack.c.l.b16 %v6429
          %v7672 = vunpack.c.h.b16 %v6429
          %v7673 = vunpack.c.l.b16 %v6430
          %v7674 = vunpack.c.h.b16 %v6430
          %v7675 = vunpack.c.l.b16 %v6431
          %v7676 = vunpack.c.h.b16 %v6431
          %v7677 = vunpack.c.l.b16 %v6432
          %v7678 = vunpack.c.h.b16 %v6432
          %v7679 = vunpack.c.l.b16 %v6433
          %v7680 = vunpack.c.h.b16 %v6433
          %v7681 = vunpack.c.l.b16 %v6434
          %v7682 = vunpack.c.h.b16 %v6434
          %v7683 = vunpack.c.l.b16 %v6435
          %v7684 = vunpack.c.h.b16 %v6435
          %v7685 = vunpack.c.l.b16 %v6436
          %v7686 = vunpack.c.h.b16 %v6436
          %v7687 = vunpack.c.l.b16 %v6437
          %v7688 = vunpack.c.h.b16 %v6437
          %v7689 = vunpack.c.l.b16 %v6438
          %v7690 = vunpack.c.h.b16 %v6438
          %v7691 = vunpack.c.l.b16 %v6439
          %v7692 = vunpack.c.h.b16 %v6439
          %v7693 = vunpack.c.l.b16 %v6440
          %v7694 = vunpack.c.h.b16 %v6440
          %v7695 = vunpack.c.l.b16 %v6441
          %v7696 = vunpack.c.h.b16 %v6441
          %v7697 = vunpack.c.l.b16 %v6442
          %v7698 = vunpack.c.h.b16 %v6442
          %v7699 = vunpack.c.l.b16 %v6443
          %v7700 = vunpack.c.h.b16 %v6443
          %v7701 = vunpack.c.l.b16 %v6444
          %v7702 = vunpack.c.h.b16 %v6444
          %v7703 = vunpack.c.l.b16 %v6445
          %v7704 = vunpack.c.h.b16 %v6445
          %v7705 = vunpack.c.l.b16 %v6446
          %v7706 = vunpack.c.h.b16 %v6446
          %v7707 = vunpack.c.l.b16 %v6447
          %v7708 = vunpack.c.h.b16 %v6447
          %v7709 = vunpack.c.l.b16 %v6448
          %v7710 = vunpack.c.h.b16 %v6448
          %v7711 = vunpack.c.l.b16 %v6449
          %v7712 = vunpack.c.h.b16 %v6449
          %v7713 = vunpack.c.l.b16 %v6450
          %v7714 = vunpack.c.h.b16 %v6450
          %v7715 = vunpack.c.l.b16 %v6451
          %v7716 = vunpack.c.h.b16 %v6451
          %v7717 = vunpack.c.l.b16 %v6452
          %v7718 = vunpack.c.h.b16 %v6452
          %v7719 = vunpack.c.l.b16 %v6453
          %v7720 = vunpack.c.h.b16 %v6453
          %v7721 = vunpack.c.l.b16 %v6454
          %v7722 = vunpack.c.h.b16 %v6454
          %v7723 = vunpack.c.l.b16 %v6455
          %v7724 = vunpack.c.h.b16 %v6455
          %v7725 = vunpack.c.l.b16 %v6456
          %v7726 = vunpack.c.h.b16 %v6456
          %v7727 = vunpack.c.l.b16 %v6457
          %v7728 = vunpack.c.h.b16 %v6457
          %v7729 = vunpack.c.l.b16 %v6458
          %v7730 = vunpack.c.h.b16 %v6458
          %v7731 = vunpack.c.l.b16 %v6459
          %v7732 = vunpack.c.h.b16 %v6459
          %v7733 = vunpack.c.l.b16 %v6460
          %v7734 = vunpack.c.h.b16 %v6460
          %v7735 = vunpack.c.l.b16 %v6461
          %v7736 = vunpack.c.h.b16 %v6461
          %v7737 = vunpack.c.l.b16 %v6462
          %v7738 = vunpack.c.h.b16 %v6462
          %v7739 = vunpack.c.l.b16 %v6463
          %v7740 = vunpack.c.h.b16 %v6463
          %v7741 = vunpack.c.l.b16 %v6464
          %v7742 = vunpack.c.h.b16 %v6464
          %v7743 = vunpack.c.l.b16 %v6465
          %v7744 = vunpack.c.h.b16 %v6465
          %v7745 = vunpack.c.l.b16 %v6466
          %v7746 = vunpack.c.h.b16 %v6466
          %v7747 = vunpack.c.l.b16 %v6467
          %v7748 = vunpack.c.h.b16 %v6467
          %v7749 = vunpack.c.l.b16 %v6468
          %v7750 = vunpack.c.h.b16 %v6468
          %v7751 = vunpack.c.l.b16 %v6469
          %v7752 = vunpack.c.h.b16 %v6469
          %v7753 = vunpack.c.l.b16 %v6470
          %v7754 = vunpack.c.h.b16 %v6470
          %v7755 = vunpack.c.l.b16 %v6471
          %v7756 = vunpack.c.h.b16 %v6471
          %v7757 = vunpack.c.l.b16 %v6472
          %v7758 = vunpack.c.h.b16 %v6472
          %v7759 = vunpack.c.l.b16 %v6473
          %v7760 = vunpack.c.h.b16 %v6473
          %v7761 = vunpack.c.l.b16 %v6474
          %v7762 = vunpack.c.h.b16 %v6474
          %v7763 = vunpack.c.l.b16 %v6475
          %v7764 = vunpack.c.h.b16 %v6475
          %v7765 = vunpack.c.l.b16 %v6476
          %v7766 = vunpack.c.h.b16 %v6476
          %v7767 = vunpack.c.l.b16 %v6477
          %v7768 = vunpack.c.h.b16 %v6477
          %v7769 = vunpack.c.l.b16 %v6478
          %v7770 = vunpack.c.h.b16 %v6478
          %v7771 = vunpack.c.l.b16 %v6479
          %v7772 = vunpack.c.h.b16 %v6479
          %v7773 = vunpack.c.l.b16 %v6480
          %v7774 = vunpack.c.h.b16 %v6480
          %v7775 = vunpack.c.l.b16 %v6481
          %v7776 = vunpack.c.h.b16 %v6481
          %v7777 = vunpack.c.l.b16 %v6482
          %v7778 = vunpack.c.h.b16 %v6482
          %v7779 = vunpack.c.l.b16 %v6483
          %v7780 = vunpack.c.h.b16 %v6483
          %v7781 = vunpack.c.l.b16 %v6484
          %v7782 = vunpack.c.h.b16 %v6484
          %v7783 = vunpack.c.l.b16 %v6485
          %v7784 = vunpack.c.h.b16 %v6485
          %v7785 = vunpack.c.l.b16 %v6486
          %v7786 = vunpack.c.h.b16 %v6486
          %v7787 = vunpack.c.l.b16 %v6487
          %v7788 = vunpack.c.h.b16 %v6487
          %v7789 = vunpack.c.l.b16 %v6488
          %v7790 = vunpack.c.h.b16 %v6488
          %v7791 = vunpack.c.l.b16 %v6489
          %v7792 = vunpack.c.h.b16 %v6489
          %v7793 = vunpack.c.l.b16 %v6490
          %v7794 = vunpack.c.h.b16 %v6490
          %v7795 = vunpack.c.l.b16 %v6491
          %v7796 = vunpack.c.h.b16 %v6491
          %v7797 = vunpack.c.l.b16 %v6492
          %v7798 = vunpack.c.h.b16 %v6492
          %v7799 = vunpack.c.l.b16 %v6493
          %v7800 = vunpack.c.h.b16 %v6493
          %v7801 = vunpack.c.l.b16 %v6494
          %v7802 = vunpack.c.h.b16 %v6494
          %v7803 = vunpack.c.l.b16 %v6495
          %v7804 = vunpack.c.h.b16 %v6495
          %v7805 = vunpack.c.l.b16 %v6496
          %v7806 = vunpack.c.h.b16 %v6496
          %v7807 = vunpack.c.l.b16 %v6497
          %v7808 = vunpack.c.h.b16 %v6497
          %v7809 = vunpack.c.l.b16 %v6498
          %v7810 = vunpack.c.h.b16 %v6498
          %v7811 = vunpack.c.l.b16 %v6499
          %v7812 = vunpack.c.h.b16 %v6499
          %v7813 = vunpack.c.l.b16 %v6500
          %v7814 = vunpack.c.h.b16 %v6500
          %v7815 = vunpack.c.l.b16 %v6501
          %v7816 = vunpack.c.h.b16 %v6501
          %v7817 = vunpack.c.l.b16 %v6502
          %v7818 = vunpack.c.h.b16 %v6502
          %v7819 = vunpack.c.l.b16 %v6503
          %v7820 = vunpack.c.h.b16 %v6503
          %v7821 = vunpack.c.l.b16 %v6504
          %v7822 = vunpack.c.h.b16 %v6504
          %v7823 = vunpack.c.l.b16 %v6505
          %v7824 = vunpack.c.h.b16 %v6505
          %v7825 = vunpack.c.l.b16 %v6506
          %v7826 = vunpack.c.h.b16 %v6506
          %v7827 = vunpack.c.l.b16 %v6507
          %v7828 = vunpack.c.h.b16 %v6507
          %v7829 = vunpack.c.l.b16 %v6508
          %v7830 = vunpack.c.h.b16 %v6508
          %v7831 = vunpack.c.l.b16 %v6509
          %v7832 = vunpack.c.h.b16 %v6509
          %v7833 = vunpack.c.l.b16 %v6510
          %v7834 = vunpack.c.h.b16 %v6510
          %v7835 = vunpack.c.l.b16 %v6511
          %v7836 = vunpack.c.h.b16 %v6511
          %v7837 = vunpack.c.l.b16 %v6512
          %v7838 = vunpack.c.h.b16 %v6512
          %v7839 = vunpack.c.l.b16 %v6513
          %v7840 = vunpack.c.h.b16 %v6513
          %v7841 = vunpack.c.l.b16 %v6514
          %v7842 = vunpack.c.h.b16 %v6514
          %v7843 = vunpack.c.l.b16 %v6515
          %v7844 = vunpack.c.h.b16 %v6515
          %v7845 = vunpack.c.l.b16 %v6516
          %v7846 = vunpack.c.h.b16 %v6516
          %v7847 = vunpack.c.l.b16 %v6517
          %v7848 = vunpack.c.h.b16 %v6517
          %v7849 = vunpack.c.l.b16 %v6518
          %v7850 = vunpack.c.h.b16 %v6518
          %v7851 = vunpack.c.l.b16 %v6519
          %v7852 = vunpack.c.h.b16 %v6519
          %v7853 = vunpack.c.l.b16 %v6520
          %v7854 = vunpack.c.h.b16 %v6520
          %v7855 = vunpack.c.l.b16 %v6521
          %v7856 = vunpack.c.h.b16 %v6521
          %v7857 = vunpack.c.l.b16 %v6522
          %v7858 = vunpack.c.h.b16 %v6522
          %v7859 = vunpack.c.l.b16 %v6523
          %v7860 = vunpack.c.h.b16 %v6523
          %v7861 = vunpack.c.l.b16 %v6524
          %v7862 = vunpack.c.h.b16 %v6524
          %v7863 = vunpack.c.l.b16 %v6525
          %v7864 = vunpack.c.h.b16 %v6525
          %v7865 = vunpack.c.l.b16 %v6526
          %v7866 = vunpack.c.h.b16 %v6526
          %v7867 = vunpack.c.l.b16 %v6527
          %v7868 = vunpack.c.h.b16 %v6527
          %v7869 = vunpack.c.l.b16 %v6528
          %v7870 = vunpack.c.h.b16 %v6528
          %v7871 = vunpack.c.l.b16 %v6529
          %v7872 = vunpack.c.h.b16 %v6529
          %v7873 = vunpack.c.l.b16 %v6530
          %v7874 = vunpack.c.h.b16 %v6530
          %v7875 = vunpack.c.l.b16 %v6531
          %v7876 = vunpack.c.h.b16 %v6531
          %v7877 = vunpack.c.l.b16 %v6532
          %v7878 = vunpack.c.h.b16 %v6532
          %v7879 = vunpack.c.l.b16 %v6533
          %v7880 = vunpack.c.h.b16 %v6533
          %v7881 = vunpack.c.l.b16 %v6534
          %v7882 = vunpack.c.h.b16 %v6534
          %v7883 = vunpack.c.l.b16 %v6535
          %v7884 = vunpack.c.h.b16 %v6535
          %v7885 = vunpack.c.l.b16 %v6536
          %v7886 = vunpack.c.h.b16 %v6536
          %v7887 = vunpack.c.l.b16 %v6537
          %v7888 = vunpack.c.h.b16 %v6537
          %v7889 = vunpack.c.l.b16 %v6538
          %v7890 = vunpack.c.h.b16 %v6538
          %v7891 = vunpack.c.l.b16 %v6539
          %v7892 = vunpack.c.h.b16 %v6539
          %v7893 = vunpack.c.l.b16 %v6540
          %v7894 = vunpack.c.h.b16 %v6540
          %v7895 = vunpack.c.l.b16 %v6541
          %v7896 = vunpack.c.h.b16 %v6541
          %v7897 = vunpack.c.l.b16 %v6542
          %v7898 = vunpack.c.h.b16 %v6542
          %v7899 = vunpack.c.l.b16 %v6543
          %v7900 = vunpack.c.h.b16 %v6543
          %v7901 = vunpack.c.l.b16 %v6544
          %v7902 = vunpack.c.h.b16 %v6544
          %v7903 = vunpack.c.l.b16 %v6545
          %v7904 = vunpack.c.h.b16 %v6545
          %v7905 = vunpack.c.l.b16 %v6546
          %v7906 = vunpack.c.h.b16 %v6546
          %v7907 = vunpack.c.l.b16 %v6547
          %v7908 = vunpack.c.h.b16 %v6547
          %v7909 = vunpack.c.l.b16 %v6548
          %v7910 = vunpack.c.h.b16 %v6548
          %v7911 = vunpack.c.l.b16 %v6549
          %v7912 = vunpack.c.h.b16 %v6549
          %v7913 = vunpack.c.l.b16 %v6550
          %v7914 = vunpack.c.h.b16 %v6550
          %v7915 = vunpack.c.l.b16 %v6551
          %v7916 = vunpack.c.h.b16 %v6551
          %v7917 = vunpack.c.l.b16 %v6552
          %v7918 = vunpack.c.h.b16 %v6552
          %v7919 = vunpack.c.l.b16 %v6553
          %v7920 = vunpack.c.h.b16 %v6553
          %v7921 = vunpack.c.l.b16 %v6554
          %v7922 = vunpack.c.h.b16 %v6554
          %v7923 = vunpack.c.l.b16 %v6555
          %v7924 = vunpack.c.h.b16 %v6555
          %v7925 = vunpack.c.l.b16 %v6556
          %v7926 = vunpack.c.h.b16 %v6556
          %v7927 = vunpack.c.l.b16 %v6557
          %v7928 = vunpack.c.h.b16 %v6557
          %v7929 = vunpack.c.l.b16 %v6558
          %v7930 = vunpack.c.h.b16 %v6558
          %v7931 = vunpack.c.l.b16 %v6559
          %v7932 = vunpack.c.h.b16 %v6559
          %v7933 = vunpack.c.l.b16 %v6560
          %v7934 = vunpack.c.h.b16 %v6560
          %v7935 = vunpack.c.l.b16 %v6561
          %v7936 = vunpack.c.h.b16 %v6561
          %v7937 = vunpack.c.l.b16 %v6562
          %v7938 = vunpack.c.h.b16 %v6562
          %v7939 = vunpack.c.l.b16 %v6563
          %v7940 = vunpack.c.h.b16 %v6563
          %v7941 = vunpack.c.l.b16 %v6564
          %v7942 = vunpack.c.h.b16 %v6564
          %v7943 = vunpack.c.l.b16 %v6565
          %v7944 = vunpack.c.h.b16 %v6565
          %v7945 = vunpack.c.l.b16 %v6566
          %v7946 = vunpack.c.h.b16 %v6566
          %v7947 = vunpack.c.l.b16 %v6567
          %v7948 = vunpack.c.h.b16 %v6567
          %v7949 = vunpack.c.l.b16 %v6568
          %v7950 = vunpack.c.h.b16 %v6568
          %v7951 = vunpack.c.l.b16 %v6569
          %v7952 = vunpack.c.h.b16 %v6569
          %v7953 = vunpack.c.l.b16 %v6570
          %v7954 = vunpack.c.h.b16 %v6570
          %v7955 = vunpack.c.l.b16 %v6571
          %v7956 = vunpack.c.h.b16 %v6571
          %v7957 = vunpack.c.l.b16 %v6572
          %v7958 = vunpack.c.h.b16 %v6572
          %v7959 = vunpack.c.l.b16 %v6573
          %v7960 = vunpack.c.h.b16 %v6573
          %v7961 = vunpack.c.l.b16 %v6574
          %v7962 = vunpack.c.h.b16 %v6574
          %v7963 = vunpack.c.l.b16 %v6575
          %v7964 = vunpack.c.h.b16 %v6575
          %v7965 = vunpack.c.l.b16 %v6576
          %v7966 = vunpack.c.h.b16 %v6576
          %v7967 = vunpack.c.l.b16 %v6577
          %v7968 = vunpack.c.h.b16 %v6577
          %v7969 = vunpack.c.l.b16 %v6578
          %v7970 = vunpack.c.h.b16 %v6578
          %v7971 = vunpack.c.l.b16 %v6579
          %v7972 = vunpack.c.h.b16 %v6579
          %v7973 = vunpack.c.l.b16 %v6580
          %v7974 = vunpack.c.h.b16 %v6580
          %v7975 = vunpack.c.l.b16 %v6581
          %v7976 = vunpack.c.h.b16 %v6581
          %v7977 = vunpack.c.l.b16 %v6582
          %v7978 = vunpack.c.h.b16 %v6582
          %v7979 = vunpack.c.l.b16 %v6583
          %v7980 = vunpack.c.h.b16 %v6583
          %v7981 = vunpack.c.l.b16 %v6584
          %v7982 = vunpack.c.h.b16 %v6584
          %v7983 = vunpack.c.l.b16 %v6585
          %v7984 = vunpack.c.h.b16 %v6585
          %v7985 = vunpack.c.l.b16 %v6586
          %v7986 = vunpack.c.h.b16 %v6586
          %v7987 = vunpack.c.l.b16 %v6587
          %v7988 = vunpack.c.h.b16 %v6587
          %v7989 = vunpack.c.l.b16 %v6588
          %v7990 = vunpack.c.h.b16 %v6588
          %v7991 = vunpack.c.l.b16 %v6589
          %v7992 = vunpack.c.h.b16 %v6589
          %v7993 = vunpack.c.l.b16 %v6590
          %v7994 = vunpack.c.h.b16 %v6590
          %v7995 = vunpack.c.l.b16 %v6591
          %v7996 = vunpack.c.h.b16 %v6591
          %v7997 = vunpack.c.l.b16 %v6592
          %v7998 = vunpack.c.h.b16 %v6592
          %v7999 = vunpack.c.l.b16 %v6593
          %v8000 = vunpack.c.h.b16 %v6593
          %v8001 = vunpack.c.l.b16 %v6594
          %v8002 = vunpack.c.h.b16 %v6594
          %v8003 = vunpack.c.l.b16 %v6595
          %v8004 = vunpack.c.h.b16 %v6595
          %v8005 = vunpack.c.l.b16 %v6596
          %v8006 = vunpack.c.h.b16 %v6596
          %v8007 = vunpack.c.l.b16 %v6597
          %v8008 = vunpack.c.h.b16 %v6597
          %v8009 = vunpack.c.l.b16 %v6598
          %v8010 = vunpack.c.h.b16 %v6598
          %v8011 = vunpack.c.l.b16 %v6599
          %v8012 = vunpack.c.h.b16 %v6599
          %v8013 = vunpack.c.l.b16 %v6600
          %v8014 = vunpack.c.h.b16 %v6600
          %v8015 = vunpack.c.l.b16 %v6601
          %v8016 = vunpack.c.h.b16 %v6601
          %v8017 = vunpack.c.l.b16 %v6602
          %v8018 = vunpack.c.h.b16 %v6602
          %v8019 = vunpack.c.l.b16 %v6603
          %v8020 = vunpack.c.h.b16 %v6603
          %v8021 = vunpack.c.l.b16 %v6604
          %v8022 = vunpack.c.h.b16 %v6604
          %v8023 = vunpack.c.l.b16 %v6605
          %v8024 = vunpack.c.h.b16 %v6605
          %v8025 = vunpack.c.l.b16 %v6606
          %v8026 = vunpack.c.h.b16 %v6606
          %v8027 = vunpack.c.l.b16 %v6607
          %v8028 = vunpack.c.h.b16 %v6607
          %v8029 = vunpack.c.l.b16 %v6608
          %v8030 = vunpack.c.h.b16 %v6608
          %v8031 = vunpack.c.l.b16 %v6609
          %v8032 = vunpack.c.h.b16 %v6609
          %v8033 = vunpack.c.l.b16 %v6610
          %v8034 = vunpack.c.h.b16 %v6610
          %v8035 = vunpack.c.l.b16 %v6611
          %v8036 = vunpack.c.h.b16 %v6611
          %v8037 = vunpack.c.l.b16 %v6612
          %v8038 = vunpack.c.h.b16 %v6612
          %v8039 = vunpack.c.l.b16 %v6613
          %v8040 = vunpack.c.h.b16 %v6613
          %v8041 = vunpack.c.l.b16 %v6614
          %v8042 = vunpack.c.h.b16 %v6614
          %v8043 = vunpack.c.l.b16 %v6615
          %v8044 = vunpack.c.h.b16 %v6615
          %v8045 = vunpack.c.l.b16 %v6616
          %v8046 = vunpack.c.h.b16 %v6616
          %v8047 = vunpack.c.l.b16 %v6617
          %v8048 = vunpack.c.h.b16 %v6617
          %v8049 = vunpack.c.l.b16 %v6618
          %v8050 = vunpack.c.h.b16 %v6618
          %v8051 = vunpack.c.l.b16 %v6619
          %v8052 = vunpack.c.h.b16 %v6619
          %v8053 = vunpack.c.l.b16 %v6620
          %v8054 = vunpack.c.h.b16 %v6620
          %v8055 = vunpack.c.l.b16 %v6621
          %v8056 = vunpack.c.h.b16 %v6621
          %v8057 = vunpack.c.l.b16 %v6622
          %v8058 = vunpack.c.h.b16 %v6622
          %v8059 = vunpack.c.l.b16 %v6623
          %v8060 = vunpack.c.h.b16 %v6623
          %v8061 = vunpack.c.l.b16 %v6624
          %v8062 = vunpack.c.h.b16 %v6624
          %v8063 = vunpack.c.l.b16 %v6625
          %v8064 = vunpack.c.h.b16 %v6625
          %v8065 = vunpack.c.l.b16 %v6626
          %v8066 = vunpack.c.h.b16 %v6626
          %v8067 = vunpack.c.l.b16 %v6627
          %v8068 = vunpack.c.h.b16 %v6627
          %v8069 = vunpack.c.l.b16 %v6628
          %v8070 = vunpack.c.h.b16 %v6628
          %v8071 = vunpack.c.l.b16 %v6629
          %v8072 = vunpack.c.h.b16 %v6629
          %v8073 = vunpack.c.l.b16 %v6630
          %v8074 = vunpack.c.h.b16 %v6630
          %v8075 = vunpack.c.l.b16 %v6631
          %v8076 = vunpack.c.h.b16 %v6631
          %v8077 = vunpack.c.l.b16 %v6632
          %v8078 = vunpack.c.h.b16 %v6632
          %v8079 = vunpack.c.l.b16 %v6633
          %v8080 = vunpack.c.h.b16 %v6633
          %v8081 = vunpack.c.l.b16 %v6634
          %v8082 = vunpack.c.h.b16 %v6634
          %v8083 = vunpack.c.l.b16 %v6635
          %v8084 = vunpack.c.h.b16 %v6635
          %v8085 = vunpack.c.l.b16 %v6636
          %v8086 = vunpack.c.h.b16 %v6636
          %v8087 = vunpack.c.l.b16 %v6637
          %v8088 = vunpack.c.h.b16 %v6637
          %v8089 = vunpack.c.l.b16 %v6638
          %v8090 = vunpack.c.h.b16 %v6638
          %v8091 = vunpack.c.l.b16 %v6639
          %v8092 = vunpack.c.h.b16 %v6639
          %v8093 = vunpack.c.l.b16 %v6640
          %v8094 = vunpack.c.h.b16 %v6640
          %v8095 = vunpack.c.l.b16 %v6641
          %v8096 = vunpack.c.h.b16 %v6641
          %v8097 = vunpack.c.l.b16 %v6642
          %v8098 = vunpack.c.h.b16 %v6642
          %v8099 = vunpack.c.l.b16 %v6643
          %v8100 = vunpack.c.h.b16 %v6643
          %v8101 = vunpack.c.l.b16 %v6644
          %v8102 = vunpack.c.h.b16 %v6644
          %v8103 = vunpack.c.l.b16 %v6645
          %v8104 = vunpack.c.h.b16 %v6645
          %v8105 = vunpack.c.l.b16 %v6646
          %v8106 = vunpack.c.h.b16 %v6646
          %v8107 = vunpack.c.l.b16 %v6647
          %v8108 = vunpack.c.h.b16 %v6647
          %v8109 = vunpack.c.l.b16 %v6648
          %v8110 = vunpack.c.h.b16 %v6648
          %v8111 = vunpack.c.l.b16 %v6649
          %v8112 = vunpack.c.h.b16 %v6649
          %v8113 = vunpack.c.l.b16 %v6650
          %v8114 = vunpack.c.h.b16 %v6650
          %v8115 = vunpack.c.l.b16 %v6651
          %v8116 = vunpack.c.h.b16 %v6651
          %v8117 = vunpack.c.l.b16 %v6652
          %v8118 = vunpack.c.h.b16 %v6652
          %v8119 = vunpack.c.l.b16 %v6653
          %v8120 = vunpack.c.h.b16 %v6653
          %v8121 = vunpack.c.l.b16 %v6654
          %v8122 = vunpack.c.h.b16 %v6654
          %v8123 = vunpack.c.l.b16 %v6655
          %v8124 = vunpack.c.h.b16 %v6655
          %v8125 = vunpack.c.l.b16 %v6656
          %v8126 = vunpack.c.h.b16 %v6656
          %v8127 = vunpack.c.l.b16 %v6657
          %v8128 = vunpack.c.h.b16 %v6657
          %v8129 = vunpack.c.l.b16 %v6658
          %v8130 = vunpack.c.h.b16 %v6658
          %v8131 = vunpack.c.l.b16 %v6659
          %v8132 = vunpack.c.h.b16 %v6659
          %v8133 = vunpack.c.l.b16 %v6660
          %v8134 = vunpack.c.h.b16 %v6660
          %v8135 = vunpack.c.l.b16 %v6661
          %v8136 = vunpack.c.h.b16 %v6661
          %v8137 = vunpack.c.l.b16 %v6662
          %v8138 = vunpack.c.h.b16 %v6662
          %v8139 = vunpack.c.l.b16 %v6663
          %v8140 = vunpack.c.h.b16 %v6663
          %v8141 = vunpack.c.l.b16 %v6664
          %v8142 = vunpack.c.h.b16 %v6664
          %v8143 = vunpack.c.l.b16 %v6665
          %v8144 = vunpack.c.h.b16 %v6665
          %v8145 = vunpack.c.l.b16 %v6666
          %v8146 = vunpack.c.h.b16 %v6666
          %v8147 = vunpack.c.l.b16 %v6667
          %v8148 = vunpack.c.h.b16 %v6667
          %v8149 = vunpack.c.l.b16 %v6668
          %v8150 = vunpack.c.h.b16 %v6668
          %v8151 = vunpack.c.l.b16 %v6669
          %v8152 = vunpack.c.h.b16 %v6669
          %v8153 = vunpack.c.l.b16 %v6670
          %v8154 = vunpack.c.h.b16 %v6670
          %v8155 = vunpack.c.l.b16 %v6671
          %v8156 = vunpack.c.h.b16 %v6671
          %v8157 = vunpack.c.l.b16 %v6672
          %v8158 = vunpack.c.h.b16 %v6672
          %v8159 = vunpack.c.l.b16 %v6673
          %v8160 = vunpack.c.h.b16 %v6673
          %v8161 = vunpack.c.l.b16 %v6674
          %v8162 = vunpack.c.h.b16 %v6674
          %v8163 = vunpack.c.l.b16 %v6675
          %v8164 = vunpack.c.h.b16 %v6675
          %v8165 = vunpack.c.l.b16 %v6676
          %v8166 = vunpack.c.h.b16 %v6676
          %v8167 = vunpack.c.l.b16 %v6677
          %v8168 = vunpack.c.h.b16 %v6677
          %v8169 = vunpack.c.l.b16 %v6678
          %v8170 = vunpack.c.h.b16 %v6678
          %v8171 = vunpack.c.l.b16 %v6679
          %v8172 = vunpack.c.h.b16 %v6679
          %v8173 = vunpack.c.l.b16 %v6680
          %v8174 = vunpack.c.h.b16 %v6680
          %v8175 = vunpack.c.l.b16 %v6681
          %v8176 = vunpack.c.h.b16 %v6681
          %v8177 = vunpack.c.l.b16 %v6682
          %v8178 = vunpack.c.h.b16 %v6682
          %v8179 = vunpack.c.l.b16 %v6683
          %v8180 = vunpack.c.h.b16 %v6683
          %v8181 = vunpack.c.l.b16 %v6684
          %v8182 = vunpack.c.h.b16 %v6684
          %v8183 = vunpack.c.l.b16 %v6685
          %v8184 = vunpack.c.h.b16 %v6685
          %v8185 = vunpack.c.l.b16 %v6686
          %v8186 = vunpack.c.h.b16 %v6686
          %v8187 = vunpack.c.l.b16 %v6687
          %v8188 = vunpack.c.h.b16 %v6687
          %v8189 = vunpack.c.l.b16 %v6688
          %v8190 = vunpack.c.h.b16 %v6688
          %v8191 = vunpack.c.l.b16 %v6689
          %v8192 = vunpack.c.h.b16 %v6689
          %v8193 = vunpack.c.l.b16 %v6690
          %v8194 = vunpack.c.h.b16 %v6690
          %v8195 = vunpack.c.l.b16 %v6691
          %v8196 = vunpack.c.h.b16 %v6691
          %v8197 = vunpack.c.l.b16 %v6692
          %v8198 = vunpack.c.h.b16 %v6692
          %v8199 = vunpack.c.l.b16 %v6693
          %v8200 = vunpack.c.h.b16 %v6693
          %v8201 = vunpack.c.l.b16 %v6694
          %v8202 = vunpack.c.h.b16 %v6694
          %v8203 = vunpack.c.l.b16 %v6695
          %v8204 = vunpack.c.h.b16 %v6695
          %v8205 = vunpack.c.l.b16 %v6696
          %v8206 = vunpack.c.h.b16 %v6696
          %v8207 = vunpack.c.l.b16 %v6697
          %v8208 = vunpack.c.h.b16 %v6697
          %v8209 = vunpack.c.l.b16 %v6698
          %v8210 = vunpack.c.h.b16 %v6698
          %v8211 = vunpack.c.l.b16 %v6699
          %v8212 = vunpack.c.h.b16 %v6699
          %v8213 = vunpack.c.l.b16 %v6700
          %v8214 = vunpack.c.h.b16 %v6700
          %v8215 = vunpack.c.l.b16 %v6701
          %v8216 = vunpack.c.h.b16 %v6701
          %v8217 = vunpack.c.l.b16 %v6702
          %v8218 = vunpack.c.h.b16 %v6702
          %v8219 = vunpack.c.l.b16 %v6703
          %v8220 = vunpack.c.h.b16 %v6703
          %v8221 = vunpack.c.l.b16 %v6704
          %v8222 = vunpack.c.h.b16 %v6704
          %v8223 = vunpack.c.l.b16 %v6705
          %v8224 = vunpack.c.h.b16 %v6705
          %v8225 = vunpack.c.l.b16 %v6706
          %v8226 = vunpack.c.h.b16 %v6706
          %v8227 = vunpack.c.l.b16 %v6707
          %v8228 = vunpack.c.h.b16 %v6707
          %v8229 = vunpack.c.l.b16 %v6708
          %v8230 = vunpack.c.h.b16 %v6708
          %v8231 = vunpack.c.l.b16 %v6709
          %v8232 = vunpack.c.h.b16 %v6709
          %v8233 = vunpack.c.l.b16 %v6710
          %v8234 = vunpack.c.h.b16 %v6710
          %v8235 = vunpack.c.l.b16 %v6711
          %v8236 = vunpack.c.h.b16 %v6711
          %v8237 = vunpack.c.l.b16 %v6712
          %v8238 = vunpack.c.h.b16 %v6712
          %v8239 = vunpack.c.l.b16 %v6713
          %v8240 = vunpack.c.h.b16 %v6713
          %v8241 = vunpack.c.l.b16 %v6714
          %v8242 = vunpack.c.h.b16 %v6714
          %v8243 = vunpack.c.l.b16 %v6715
          %v8244 = vunpack.c.h.b16 %v6715
          %v8245 = vunpack.c.l.b16 %v6716
          %v8246 = vunpack.c.h.b16 %v6716
          %v8247 = vunpack.c.l.b16 %v6717
          %v8248 = vunpack.c.h.b16 %v6717
          %v8249 = vunpack.c.l.b16 %v6718
          %v8250 = vunpack.c.h.b16 %v6718
          %v8251 = vunpack.c.l.b16 %v6719
          %v8252 = vunpack.c.h.b16 %v6719
          %v8253 = vunpack.c.l.b16 %v6720
          %v8254 = vunpack.c.h.b16 %v6720
          %v8255 = vunpack.c.l.b16 %v6721
          %v8256 = vunpack.c.h.b16 %v6721
          %v8257 = vunpack.c.l.b16 %v6722
          %v8258 = vunpack.c.h.b16 %v6722
          %v8259 = vunpack.c.l.b16 %v6723
          %v8260 = vunpack.c.h.b16 %v6723
          %v8261 = vunpack.c.l.b16 %v6724
          %v8262 = vunpack.c.h.b16 %v6724
          %v8263 = vunpack.c.l.b16 %v6725
          %v8264 = vunpack.c.h.b16 %v6725
          %v8265 = vunpack.c.l.b16 %v6726
          %v8266 = vunpack.c.h.b16 %v6726
          %v8267 = vunpack.c.l.b16 %v6727
          %v8268 = vunpack.c.h.b16 %v6727
          %v8269 = vunpack.c.l.b16 %v6728
          %v8270 = vunpack.c.h.b16 %v6728
          %v8271 = vunpack.c.l.b16 %v6729
          %v8272 = vunpack.c.h.b16 %v6729
          %v8273 = vunpack.c.l.b16 %v6730
          %v8274 = vunpack.c.h.b16 %v6730
          %v8275 = vunpack.c.l.b16 %v6731
          %v8276 = vunpack.c.h.b16 %v6731
          %v8277 = vunpack.c.l.b16 %v6732
          %v8278 = vunpack.c.h.b16 %v6732
          %v8279 = vunpack.c.l.b16 %v6733
          %v8280 = vunpack.c.h.b16 %v6733
          %v8281 = vpack.c.b16 %v7261, %v7257
          %v8282 = vpack.c.b16 %v7262, %v7258
          %v8283 = vpack.c.b16 %v7263, %v7259
          %v8284 = vpack.c.b16 %v7264, %v7260
          %v8285 = vpack.c.b16 %v7269, %v7265
          %v8286 = vpack.c.b16 %v7270, %v7266
          %v8287 = vpack.c.b16 %v7271, %v7267
          %v8288 = vpack.c.b16 %v7272, %v7268
          %v8289 = vpack.c.b16 %v7277, %v7273
          %v8290 = vpack.c.b16 %v7278, %v7274
          %v8291 = vpack.c.b16 %v7279, %v7275
          %v8292 = vpack.c.b16 %v7280, %v7276
          %v8293 = vpack.c.b16 %v7285, %v7281
          %v8294 = vpack.c.b16 %v7286, %v7282
          %v8295 = vpack.c.b16 %v7287, %v7283
          %v8296 = vpack.c.b16 %v7288, %v7284
          %v8297 = vpack.c.b16 %v7293, %v7289
          %v8298 = vpack.c.b16 %v7294, %v7290
          %v8299 = vpack.c.b16 %v7295, %v7291
          %v8300 = vpack.c.b16 %v7296, %v7292
          %v8301 = vpack.c.b16 %v7301, %v7297
          %v8302 = vpack.c.b16 %v7302, %v7298
          %v8303 = vpack.c.b16 %v7303, %v7299
          %v8304 = vpack.c.b16 %v7304, %v7300
          %v8305 = vpack.c.b16 %v7309, %v7305
          %v8306 = vpack.c.b16 %v7310, %v7306
          %v8307 = vpack.c.b16 %v7311, %v7307
          %v8308 = vpack.c.b16 %v7312, %v7308
          %v8309 = vpack.c.b16 %v7317, %v7313
          %v8310 = vpack.c.b16 %v7318, %v7314
          %v8311 = vpack.c.b16 %v7319, %v7315
          %v8312 = vpack.c.b16 %v7320, %v7316
          %v8313 = vpack.c.b16 %v7325, %v7321
          %v8314 = vpack.c.b16 %v7326, %v7322
          %v8315 = vpack.c.b16 %v7327, %v7323
          %v8316 = vpack.c.b16 %v7328, %v7324
          %v8317 = vpack.c.b16 %v7333, %v7329
          %v8318 = vpack.c.b16 %v7334, %v7330
          %v8319 = vpack.c.b16 %v7335, %v7331
          %v8320 = vpack.c.b16 %v7336, %v7332
          %v8321 = vpack.c.b16 %v7341, %v7337
          %v8322 = vpack.c.b16 %v7342, %v7338
          %v8323 = vpack.c.b16 %v7343, %v7339
          %v8324 = vpack.c.b16 %v7344, %v7340
          %v8325 = vpack.c.b16 %v7349, %v7345
          %v8326 = vpack.c.b16 %v7350, %v7346
          %v8327 = vpack.c.b16 %v7351, %v7347
          %v8328 = vpack.c.b16 %v7352, %v7348
          %v8329 = vpack.c.b16 %v7357, %v7353
          %v8330 = vpack.c.b16 %v7358, %v7354
          %v8331 = vpack.c.b16 %v7359, %v7355
          %v8332 = vpack.c.b16 %v7360, %v7356
          %v8333 = vpack.c.b16 %v7365, %v7361
          %v8334 = vpack.c.b16 %v7366, %v7362
          %v8335 = vpack.c.b16 %v7367, %v7363
          %v8336 = vpack.c.b16 %v7368, %v7364
          %v8337 = vpack.c.b16 %v7373, %v7369
          %v8338 = vpack.c.b16 %v7374, %v7370
          %v8339 = vpack.c.b16 %v7375, %v7371
          %v8340 = vpack.c.b16 %v7376, %v7372
          %v8341 = vpack.c.b16 %v7381, %v7377
          %v8342 = vpack.c.b16 %v7382, %v7378
          %v8343 = vpack.c.b16 %v7383, %v7379
          %v8344 = vpack.c.b16 %v7384, %v7380
          %v8345 = vpack.c.b16 %v7389, %v7385
          %v8346 = vpack.c.b16 %v7390, %v7386
          %v8347 = vpack.c.b16 %v7391, %v7387
          %v8348 = vpack.c.b16 %v7392, %v7388
          %v8349 = vpack.c.b16 %v7397, %v7393
          %v8350 = vpack.c.b16 %v7398, %v7394
          %v8351 = vpack.c.b16 %v7399, %v7395
          %v8352 = vpack.c.b16 %v7400, %v7396
          %v8353 = vpack.c.b16 %v7405, %v7401
          %v8354 = vpack.c.b16 %v7406, %v7402
          %v8355 = vpack.c.b16 %v7407, %v7403
          %v8356 = vpack.c.b16 %v7408, %v7404
          %v8357 = vpack.c.b16 %v7413, %v7409
          %v8358 = vpack.c.b16 %v7414, %v7410
          %v8359 = vpack.c.b16 %v7415, %v7411
          %v8360 = vpack.c.b16 %v7416, %v7412
          %v8361 = vpack.c.b16 %v7421, %v7417
          %v8362 = vpack.c.b16 %v7422, %v7418
          %v8363 = vpack.c.b16 %v7423, %v7419
          %v8364 = vpack.c.b16 %v7424, %v7420
          %v8365 = vpack.c.b16 %v7429, %v7425
          %v8366 = vpack.c.b16 %v7430, %v7426
          %v8367 = vpack.c.b16 %v7431, %v7427
          %v8368 = vpack.c.b16 %v7432, %v7428
          %v8369 = vpack.c.b16 %v7437, %v7433
          %v8370 = vpack.c.b16 %v7438, %v7434
          %v8371 = vpack.c.b16 %v7439, %v7435
          %v8372 = vpack.c.b16 %v7440, %v7436
          %v8373 = vpack.c.b16 %v7445, %v7441
          %v8374 = vpack.c.b16 %v7446, %v7442
          %v8375 = vpack.c.b16 %v7447, %v7443
          %v8376 = vpack.c.b16 %v7448, %v7444
          %v8377 = vpack.c.b16 %v7453, %v7449
          %v8378 = vpack.c.b16 %v7454, %v7450
          %v8379 = vpack.c.b16 %v7455, %v7451
          %v8380 = vpack.c.b16 %v7456, %v7452
          %v8381 = vpack.c.b16 %v7461, %v7457
          %v8382 = vpack.c.b16 %v7462, %v7458
          %v8383 = vpack.c.b16 %v7463, %v7459
          %v8384 = vpack.c.b16 %v7464, %v7460
          %v8385 = vpack.c.b16 %v7469, %v7465
          %v8386 = vpack.c.b16 %v7470, %v7466
          %v8387 = vpack.c.b16 %v7471, %v7467
          %v8388 = vpack.c.b16 %v7472, %v7468
          %v8389 = vpack.c.b16 %v7477, %v7473
          %v8390 = vpack.c.b16 %v7478, %v7474
          %v8391 = vpack.c.b16 %v7479, %v7475
          %v8392 = vpack.c.b16 %v7480, %v7476
          %v8393 = vpack.c.b16 %v7485, %v7481
          %v8394 = vpack.c.b16 %v7486, %v7482
          %v8395 = vpack.c.b16 %v7487, %v7483
          %v8396 = vpack.c.b16 %v7488, %v7484
          %v8397 = vpack.c.b16 %v7493, %v7489
          %v8398 = vpack.c.b16 %v7494, %v7490
          %v8399 = vpack.c.b16 %v7495, %v7491
          %v8400 = vpack.c.b16 %v7496, %v7492
          %v8401 = vpack.c.b16 %v7501, %v7497
          %v8402 = vpack.c.b16 %v7502, %v7498
          %v8403 = vpack.c.b16 %v7503, %v7499
          %v8404 = vpack.c.b16 %v7504, %v7500
          %v8405 = vpack.c.b16 %v7509, %v7505
          %v8406 = vpack.c.b16 %v7510, %v7506
          %v8407 = vpack.c.b16 %v7511, %v7507
          %v8408 = vpack.c.b16 %v7512, %v7508
          %v8409 = vpack.c.b16 %v7517, %v7513
          %v8410 = vpack.c.b16 %v7518, %v7514
          %v8411 = vpack.c.b16 %v7519, %v7515
          %v8412 = vpack.c.b16 %v7520, %v7516
          %v8413 = vpack.c.b16 %v7525, %v7521
          %v8414 = vpack.c.b16 %v7526, %v7522
          %v8415 = vpack.c.b16 %v7527, %v7523
          %v8416 = vpack.c.b16 %v7528, %v7524
          %v8417 = vpack.c.b16 %v7533, %v7529
          %v8418 = vpack.c.b16 %v7534, %v7530
          %v8419 = vpack.c.b16 %v7535, %v7531
          %v8420 = vpack.c.b16 %v7536, %v7532
          %v8421 = vpack.c.b16 %v7541, %v7537
          %v8422 = vpack.c.b16 %v7542, %v7538
          %v8423 = vpack.c.b16 %v7543, %v7539
          %v8424 = vpack.c.b16 %v7544, %v7540
          %v8425 = vpack.c.b16 %v7549, %v7545
          %v8426 = vpack.c.b16 %v7550, %v7546
          %v8427 = vpack.c.b16 %v7551, %v7547
          %v8428 = vpack.c.b16 %v7552, %v7548
          %v8429 = vpack.c.b16 %v7557, %v7553
          %v8430 = vpack.c.b16 %v7558, %v7554
          %v8431 = vpack.c.b16 %v7559, %v7555
          %v8432 = vpack.c.b16 %v7560, %v7556
          %v8433 = vpack.c.b16 %v7565, %v7561
          %v8434 = vpack.c.b16 %v7566, %v7562
          %v8435 = vpack.c.b16 %v7567, %v7563
          %v8436 = vpack.c.b16 %v7568, %v7564
          %v8437 = vpack.c.b16 %v7573, %v7569
          %v8438 = vpack.c.b16 %v7574, %v7570
          %v8439 = vpack.c.b16 %v7575, %v7571
          %v8440 = vpack.c.b16 %v7576, %v7572
          %v8441 = vpack.c.b16 %v7581, %v7577
          %v8442 = vpack.c.b16 %v7582, %v7578
          %v8443 = vpack.c.b16 %v7583, %v7579
          %v8444 = vpack.c.b16 %v7584, %v7580
          %v8445 = vpack.c.b16 %v7589, %v7585
          %v8446 = vpack.c.b16 %v7590, %v7586
          %v8447 = vpack.c.b16 %v7591, %v7587
          %v8448 = vpack.c.b16 %v7592, %v7588
          %v8449 = vpack.c.b16 %v7597, %v7593
          %v8450 = vpack.c.b16 %v7598, %v7594
          %v8451 = vpack.c.b16 %v7599, %v7595
          %v8452 = vpack.c.b16 %v7600, %v7596
          %v8453 = vpack.c.b16 %v7605, %v7601
          %v8454 = vpack.c.b16 %v7606, %v7602
          %v8455 = vpack.c.b16 %v7607, %v7603
          %v8456 = vpack.c.b16 %v7608, %v7604
          %v8457 = vpack.c.b16 %v7613, %v7609
          %v8458 = vpack.c.b16 %v7614, %v7610
          %v8459 = vpack.c.b16 %v7615, %v7611
          %v8460 = vpack.c.b16 %v7616, %v7612
          %v8461 = vpack.c.b16 %v7621, %v7617
          %v8462 = vpack.c.b16 %v7622, %v7618
          %v8463 = vpack.c.b16 %v7623, %v7619
          %v8464 = vpack.c.b16 %v7624, %v7620
          %v8465 = vpack.c.b16 %v7629, %v7625
          %v8466 = vpack.c.b16 %v7630, %v7626
          %v8467 = vpack.c.b16 %v7631, %v7627
          %v8468 = vpack.c.b16 %v7632, %v7628
          %v8469 = vpack.c.b16 %v7637, %v7633
          %v8470 = vpack.c.b16 %v7638, %v7634
          %v8471 = vpack.c.b16 %v7639, %v7635
          %v8472 = vpack.c.b16 %v7640, %v7636
          %v8473 = vpack.c.b16 %v7645, %v7641
          %v8474 = vpack.c.b16 %v7646, %v7642
          %v8475 = vpack.c.b16 %v7647, %v7643
          %v8476 = vpack.c.b16 %v7648, %v7644
          %v8477 = vpack.c.b16 %v7653, %v7649
          %v8478 = vpack.c.b16 %v7654, %v7650
          %v8479 = vpack.c.b16 %v7655, %v7651
          %v8480 = vpack.c.b16 %v7656, %v7652
          %v8481 = vpack.c.b16 %v7661, %v7657
          %v8482 = vpack.c.b16 %v7662, %v7658
          %v8483 = vpack.c.b16 %v7663, %v7659
          %v8484 = vpack.c.b16 %v7664, %v7660
          %v8485 = vpack.c.b16 %v7669, %v7665
          %v8486 = vpack.c.b16 %v7670, %v7666
          %v8487 = vpack.c.b16 %v7671, %v7667
          %v8488 = vpack.c.b16 %v7672, %v7668
          %v8489 = vpack.c.b16 %v7677, %v7673
          %v8490 = vpack.c.b16 %v7678, %v7674
          %v8491 = vpack.c.b16 %v7679, %v7675
          %v8492 = vpack.c.b16 %v7680, %v7676
          %v8493 = vpack.c.b16 %v7685, %v7681
          %v8494 = vpack.c.b16 %v7686, %v7682
          %v8495 = vpack.c.b16 %v7687, %v7683
          %v8496 = vpack.c.b16 %v7688, %v7684
          %v8497 = vpack.c.b16 %v7693, %v7689
          %v8498 = vpack.c.b16 %v7694, %v7690
          %v8499 = vpack.c.b16 %v7695, %v7691
          %v8500 = vpack.c.b16 %v7696, %v7692
          %v8501 = vpack.c.b16 %v7701, %v7697
          %v8502 = vpack.c.b16 %v7702, %v7698
          %v8503 = vpack.c.b16 %v7703, %v7699
          %v8504 = vpack.c.b16 %v7704, %v7700
          %v8505 = vpack.c.b16 %v7709, %v7705
          %v8506 = vpack.c.b16 %v7710, %v7706
          %v8507 = vpack.c.b16 %v7711, %v7707
          %v8508 = vpack.c.b16 %v7712, %v7708
          %v8509 = vpack.c.b16 %v7717, %v7713
          %v8510 = vpack.c.b16 %v7718, %v7714
          %v8511 = vpack.c.b16 %v7719, %v7715
          %v8512 = vpack.c.b16 %v7720, %v7716
          %v8513 = vpack.c.b16 %v7725, %v7721
          %v8514 = vpack.c.b16 %v7726, %v7722
          %v8515 = vpack.c.b16 %v7727, %v7723
          %v8516 = vpack.c.b16 %v7728, %v7724
          %v8517 = vpack.c.b16 %v7733, %v7729
          %v8518 = vpack.c.b16 %v7734, %v7730
          %v8519 = vpack.c.b16 %v7735, %v7731
          %v8520 = vpack.c.b16 %v7736, %v7732
          %v8521 = vpack.c.b16 %v7741, %v7737
          %v8522 = vpack.c.b16 %v7742, %v7738
          %v8523 = vpack.c.b16 %v7743, %v7739
          %v8524 = vpack.c.b16 %v7744, %v7740
          %v8525 = vpack.c.b16 %v7749, %v7745
          %v8526 = vpack.c.b16 %v7750, %v7746
          %v8527 = vpack.c.b16 %v7751, %v7747
          %v8528 = vpack.c.b16 %v7752, %v7748
          %v8529 = vpack.c.b16 %v7757, %v7753
          %v8530 = vpack.c.b16 %v7758, %v7754
          %v8531 = vpack.c.b16 %v7759, %v7755
          %v8532 = vpack.c.b16 %v7760, %v7756
          %v8533 = vpack.c.b16 %v7765, %v7761
          %v8534 = vpack.c.b16 %v7766, %v7762
          %v8535 = vpack.c.b16 %v7767, %v7763
          %v8536 = vpack.c.b16 %v7768, %v7764
          %v8537 = vpack.c.b16 %v7773, %v7769
          %v8538 = vpack.c.b16 %v7774, %v7770
          %v8539 = vpack.c.b16 %v7775, %v7771
          %v8540 = vpack.c.b16 %v7776, %v7772
          %v8541 = vpack.c.b16 %v7781, %v7777
          %v8542 = vpack.c.b16 %v7782, %v7778
          %v8543 = vpack.c.b16 %v7783, %v7779
          %v8544 = vpack.c.b16 %v7784, %v7780
          %v8545 = vpack.c.b16 %v7789, %v7785
          %v8546 = vpack.c.b16 %v7790, %v7786
          %v8547 = vpack.c.b16 %v7791, %v7787
          %v8548 = vpack.c.b16 %v7792, %v7788
          %v8549 = vpack.c.b16 %v7797, %v7793
          %v8550 = vpack.c.b16 %v7798, %v7794
          %v8551 = vpack.c.b16 %v7799, %v7795
          %v8552 = vpack.c.b16 %v7800, %v7796
          %v8553 = vpack.c.b16 %v7805, %v7801
          %v8554 = vpack.c.b16 %v7806, %v7802
          %v8555 = vpack.c.b16 %v7807, %v7803
          %v8556 = vpack.c.b16 %v7808, %v7804
          %v8557 = vpack.c.b16 %v7813, %v7809
          %v8558 = vpack.c.b16 %v7814, %v7810
          %v8559 = vpack.c.b16 %v7815, %v7811
          %v8560 = vpack.c.b16 %v7816, %v7812
          %v8561 = vpack.c.b16 %v7821, %v7817
          %v8562 = vpack.c.b16 %v7822, %v7818
          %v8563 = vpack.c.b16 %v7823, %v7819
          %v8564 = vpack.c.b16 %v7824, %v7820
          %v8565 = vpack.c.b16 %v7829, %v7825
          %v8566 = vpack.c.b16 %v7830, %v7826
          %v8567 = vpack.c.b16 %v7831, %v7827
          %v8568 = vpack.c.b16 %v7832, %v7828
          %v8569 = vpack.c.b16 %v7837, %v7833
          %v8570 = vpack.c.b16 %v7838, %v7834
          %v8571 = vpack.c.b16 %v7839, %v7835
          %v8572 = vpack.c.b16 %v7840, %v7836
          %v8573 = vpack.c.b16 %v7845, %v7841
          %v8574 = vpack.c.b16 %v7846, %v7842
          %v8575 = vpack.c.b16 %v7847, %v7843
          %v8576 = vpack.c.b16 %v7848, %v7844
          %v8577 = vpack.c.b16 %v7853, %v7849
          %v8578 = vpack.c.b16 %v7854, %v7850
          %v8579 = vpack.c.b16 %v7855, %v7851
          %v8580 = vpack.c.b16 %v7856, %v7852
          %v8581 = vpack.c.b16 %v7861, %v7857
          %v8582 = vpack.c.b16 %v7862, %v7858
          %v8583 = vpack.c.b16 %v7863, %v7859
          %v8584 = vpack.c.b16 %v7864, %v7860
          %v8585 = vpack.c.b16 %v7869, %v7865
          %v8586 = vpack.c.b16 %v7870, %v7866
          %v8587 = vpack.c.b16 %v7871, %v7867
          %v8588 = vpack.c.b16 %v7872, %v7868
          %v8589 = vpack.c.b16 %v7877, %v7873
          %v8590 = vpack.c.b16 %v7878, %v7874
          %v8591 = vpack.c.b16 %v7879, %v7875
          %v8592 = vpack.c.b16 %v7880, %v7876
          %v8593 = vpack.c.b16 %v7885, %v7881
          %v8594 = vpack.c.b16 %v7886, %v7882
          %v8595 = vpack.c.b16 %v7887, %v7883
          %v8596 = vpack.c.b16 %v7888, %v7884
          %v8597 = vpack.c.b16 %v7893, %v7889
          %v8598 = vpack.c.b16 %v7894, %v7890
          %v8599 = vpack.c.b16 %v7895, %v7891
          %v8600 = vpack.c.b16 %v7896, %v7892
          %v8601 = vpack.c.b16 %v7901, %v7897
          %v8602 = vpack.c.b16 %v7902, %v7898
          %v8603 = vpack.c.b16 %v7903, %v7899
          %v8604 = vpack.c.b16 %v7904, %v7900
          %v8605 = vpack.c.b16 %v7909, %v7905
          %v8606 = vpack.c.b16 %v7910, %v7906
          %v8607 = vpack.c.b16 %v7911, %v7907
          %v8608 = vpack.c.b16 %v7912, %v7908
          %v8609 = vpack.c.b16 %v7917, %v7913
          %v8610 = vpack.c.b16 %v7918, %v7914
          %v8611 = vpack.c.b16 %v7919, %v7915
          %v8612 = vpack.c.b16 %v7920, %v7916
          %v8613 = vpack.c.b16 %v7925, %v7921
          %v8614 = vpack.c.b16 %v7926, %v7922
          %v8615 = vpack.c.b16 %v7927, %v7923
          %v8616 = vpack.c.b16 %v7928, %v7924
          %v8617 = vpack.c.b16 %v7933, %v7929
          %v8618 = vpack.c.b16 %v7934, %v7930
          %v8619 = vpack.c.b16 %v7935, %v7931
          %v8620 = vpack.c.b16 %v7936, %v7932
          %v8621 = vpack.c.b16 %v7941, %v7937
          %v8622 = vpack.c.b16 %v7942, %v7938
          %v8623 = vpack.c.b16 %v7943, %v7939
          %v8624 = vpack.c.b16 %v7944, %v7940
          %v8625 = vpack.c.b16 %v7949, %v7945
          %v8626 = vpack.c.b16 %v7950, %v7946
          %v8627 = vpack.c.b16 %v7951, %v7947
          %v8628 = vpack.c.b16 %v7952, %v7948
          %v8629 = vpack.c.b16 %v7957, %v7953
          %v8630 = vpack.c.b16 %v7958, %v7954
          %v8631 = vpack.c.b16 %v7959, %v7955
          %v8632 = vpack.c.b16 %v7960, %v7956
          %v8633 = vpack.c.b16 %v7965, %v7961
          %v8634 = vpack.c.b16 %v7966, %v7962
          %v8635 = vpack.c.b16 %v7967, %v7963
          %v8636 = vpack.c.b16 %v7968, %v7964
          %v8637 = vpack.c.b16 %v7973, %v7969
          %v8638 = vpack.c.b16 %v7974, %v7970
          %v8639 = vpack.c.b16 %v7975, %v7971
          %v8640 = vpack.c.b16 %v7976, %v7972
          %v8641 = vpack.c.b16 %v7981, %v7977
          %v8642 = vpack.c.b16 %v7982, %v7978
          %v8643 = vpack.c.b16 %v7983, %v7979
          %v8644 = vpack.c.b16 %v7984, %v7980
          %v8645 = vpack.c.b16 %v7989, %v7985
          %v8646 = vpack.c.b16 %v7990, %v7986
          %v8647 = vpack.c.b16 %v7991, %v7987
          %v8648 = vpack.c.b16 %v7992, %v7988
          %v8649 = vpack.c.b16 %v7997, %v7993
          %v8650 = vpack.c.b16 %v7998, %v7994
          %v8651 = vpack.c.b16 %v7999, %v7995
          %v8652 = vpack.c.b16 %v8000, %v7996
          %v8653 = vpack.c.b16 %v8005, %v8001
          %v8654 = vpack.c.b16 %v8006, %v8002
          %v8655 = vpack.c.b16 %v8007, %v8003
          %v8656 = vpack.c.b16 %v8008, %v8004
          %v8657 = vpack.c.b16 %v8013, %v8009
          %v8658 = vpack.c.b16 %v8014, %v8010
          %v8659 = vpack.c.b16 %v8015, %v8011
          %v8660 = vpack.c.b16 %v8016, %v8012
          %v8661 = vpack.c.b16 %v8021, %v8017
          %v8662 = vpack.c.b16 %v8022, %v8018
          %v8663 = vpack.c.b16 %v8023, %v8019
          %v8664 = vpack.c.b16 %v8024, %v8020
          %v8665 = vpack.c.b16 %v8029, %v8025
          %v8666 = vpack.c.b16 %v8030, %v8026
          %v8667 = vpack.c.b16 %v8031, %v8027
          %v8668 = vpack.c.b16 %v8032, %v8028
          %v8669 = vpack.c.b16 %v8037, %v8033
          %v8670 = vpack.c.b16 %v8038, %v8034
          %v8671 = vpack.c.b16 %v8039, %v8035
          %v8672 = vpack.c.b16 %v8040, %v8036
          %v8673 = vpack.c.b16 %v8045, %v8041
          %v8674 = vpack.c.b16 %v8046, %v8042
          %v8675 = vpack.c.b16 %v8047, %v8043
          %v8676 = vpack.c.b16 %v8048, %v8044
          %v8677 = vpack.c.b16 %v8053, %v8049
          %v8678 = vpack.c.b16 %v8054, %v8050
          %v8679 = vpack.c.b16 %v8055, %v8051
          %v8680 = vpack.c.b16 %v8056, %v8052
          %v8681 = vpack.c.b16 %v8061, %v8057
          %v8682 = vpack.c.b16 %v8062, %v8058
          %v8683 = vpack.c.b16 %v8063, %v8059
          %v8684 = vpack.c.b16 %v8064, %v8060
          %v8685 = vpack.c.b16 %v8069, %v8065
          %v8686 = vpack.c.b16 %v8070, %v8066
          %v8687 = vpack.c.b16 %v8071, %v8067
          %v8688 = vpack.c.b16 %v8072, %v8068
          %v8689 = vpack.c.b16 %v8077, %v8073
          %v8690 = vpack.c.b16 %v8078, %v8074
          %v8691 = vpack.c.b16 %v8079, %v8075
          %v8692 = vpack.c.b16 %v8080, %v8076
          %v8693 = vpack.c.b16 %v8085, %v8081
          %v8694 = vpack.c.b16 %v8086, %v8082
          %v8695 = vpack.c.b16 %v8087, %v8083
          %v8696 = vpack.c.b16 %v8088, %v8084
          %v8697 = vpack.c.b16 %v8093, %v8089
          %v8698 = vpack.c.b16 %v8094, %v8090
          %v8699 = vpack.c.b16 %v8095, %v8091
          %v8700 = vpack.c.b16 %v8096, %v8092
          %v8701 = vpack.c.b16 %v8101, %v8097
          %v8702 = vpack.c.b16 %v8102, %v8098
          %v8703 = vpack.c.b16 %v8103, %v8099
          %v8704 = vpack.c.b16 %v8104, %v8100
          %v8705 = vpack.c.b16 %v8109, %v8105
          %v8706 = vpack.c.b16 %v8110, %v8106
          %v8707 = vpack.c.b16 %v8111, %v8107
          %v8708 = vpack.c.b16 %v8112, %v8108
          %v8709 = vpack.c.b16 %v8117, %v8113
          %v8710 = vpack.c.b16 %v8118, %v8114
          %v8711 = vpack.c.b16 %v8119, %v8115
          %v8712 = vpack.c.b16 %v8120, %v8116
          %v8713 = vpack.c.b16 %v8125, %v8121
          %v8714 = vpack.c.b16 %v8126, %v8122
          %v8715 = vpack.c.b16 %v8127, %v8123
          %v8716 = vpack.c.b16 %v8128, %v8124
          %v8717 = vpack.c.b16 %v8133, %v8129
          %v8718 = vpack.c.b16 %v8134, %v8130
          %v8719 = vpack.c.b16 %v8135, %v8131
          %v8720 = vpack.c.b16 %v8136, %v8132
          %v8721 = vpack.c.b16 %v8141, %v8137
          %v8722 = vpack.c.b16 %v8142, %v8138
          %v8723 = vpack.c.b16 %v8143, %v8139
          %v8724 = vpack.c.b16 %v8144, %v8140
          %v8725 = vpack.c.b16 %v8149, %v8145
          %v8726 = vpack.c.b16 %v8150, %v8146
          %v8727 = vpack.c.b16 %v8151, %v8147
          %v8728 = vpack.c.b16 %v8152, %v8148
          %v8729 = vpack.c.b16 %v8157, %v8153
          %v8730 = vpack.c.b16 %v8158, %v8154
          %v8731 = vpack.c.b16 %v8159, %v8155
          %v8732 = vpack.c.b16 %v8160, %v8156
          %v8733 = vpack.c.b16 %v8165, %v8161
          %v8734 = vpack.c.b16 %v8166, %v8162
          %v8735 = vpack.c.b16 %v8167, %v8163
          %v8736 = vpack.c.b16 %v8168, %v8164
          %v8737 = vpack.c.b16 %v8173, %v8169
          %v8738 = vpack.c.b16 %v8174, %v8170
          %v8739 = vpack.c.b16 %v8175, %v8171
          %v8740 = vpack.c.b16 %v8176, %v8172
          %v8741 = vpack.c.b16 %v8181, %v8177
          %v8742 = vpack.c.b16 %v8182, %v8178
          %v8743 = vpack.c.b16 %v8183, %v8179
          %v8744 = vpack.c.b16 %v8184, %v8180
          %v8745 = vpack.c.b16 %v8189, %v8185
          %v8746 = vpack.c.b16 %v8190, %v8186
          %v8747 = vpack.c.b16 %v8191, %v8187
          %v8748 = vpack.c.b16 %v8192, %v8188
          %v8749 = vpack.c.b16 %v8197, %v8193
          %v8750 = vpack.c.b16 %v8198, %v8194
          %v8751 = vpack.c.b16 %v8199, %v8195
          %v8752 = vpack.c.b16 %v8200, %v8196
          %v8753 = vpack.c.b16 %v8205, %v8201
          %v8754 = vpack.c.b16 %v8206, %v8202
          %v8755 = vpack.c.b16 %v8207, %v8203
          %v8756 = vpack.c.b16 %v8208, %v8204
          %v8757 = vpack.c.b16 %v8213, %v8209
          %v8758 = vpack.c.b16 %v8214, %v8210
          %v8759 = vpack.c.b16 %v8215, %v8211
          %v8760 = vpack.c.b16 %v8216, %v8212
          %v8761 = vpack.c.b16 %v8221, %v8217
          %v8762 = vpack.c.b16 %v8222, %v8218
          %v8763 = vpack.c.b16 %v8223, %v8219
          %v8764 = vpack.c.b16 %v8224, %v8220
          %v8765 = vpack.c.b16 %v8229, %v8225
          %v8766 = vpack.c.b16 %v8230, %v8226
          %v8767 = vpack.c.b16 %v8231, %v8227
          %v8768 = vpack.c.b16 %v8232, %v8228
          %v8769 = vpack.c.b16 %v8237, %v8233
          %v8770 = vpack.c.b16 %v8238, %v8234
          %v8771 = vpack.c.b16 %v8239, %v8235
          %v8772 = vpack.c.b16 %v8240, %v8236
          %v8773 = vpack.c.b16 %v8245, %v8241
          %v8774 = vpack.c.b16 %v8246, %v8242
          %v8775 = vpack.c.b16 %v8247, %v8243
          %v8776 = vpack.c.b16 %v8248, %v8244
          %v8777 = vpack.c.b16 %v8253, %v8249
          %v8778 = vpack.c.b16 %v8254, %v8250
          %v8779 = vpack.c.b16 %v8255, %v8251
          %v8780 = vpack.c.b16 %v8256, %v8252
          %v8781 = vpack.c.b16 %v8261, %v8257
          %v8782 = vpack.c.b16 %v8262, %v8258
          %v8783 = vpack.c.b16 %v8263, %v8259
          %v8784 = vpack.c.b16 %v8264, %v8260
          %v8785 = vpack.c.b16 %v8269, %v8265
          %v8786 = vpack.c.b16 %v8270, %v8266
          %v8787 = vpack.c.b16 %v8271, %v8267
          %v8788 = vpack.c.b16 %v8272, %v8268
          %v8789 = vpack.c.b16 %v8277, %v8273
          %v8790 = vpack.c.b16 %v8278, %v8274
          %v8791 = vpack.c.b16 %v8279, %v8275
          %v8792 = vpack.c.b16 %v8280, %v8276
          %9305 = vmatpush.bf16.msra.mxu0 %v8309
          %9306 = vmatpush.bf16.msra.mxu0 %v8305
          %9307 = vmatpush.bf16.msra.mxu0 %v8301
          %9308 = vmatpush.bf16.msra.mxu0 %v8297
          %9309 = vmatpush.bf16.msra.mxu0 %v8293
          %9310 = vmatpush.bf16.msra.mxu0 %v8289
          %9311 = vmatpush.bf16.msra.mxu0 %v8285
          %9312 = vmatpush.bf16.msra.mxu0 %v8281
          %9313 = vmatmul.bf16.gmra.mxu0 %v6206
          %v9314 = vpop.f32.mrf.mxu0
          %v9315 = vadd.f32 %v6737, %v9314
          %v9316 = vpop.f32.mrf.mxu0
          %9317 = vdwg.mxu0
          %9318 = vmatpush.bf16.msra.mxu0 %v8341
          %9319 = vmatpush.bf16.msra.mxu0 %v8337
          %9320 = vmatpush.bf16.msra.mxu0 %v8333
          %9321 = vmatpush.bf16.msra.mxu0 %v8329
          %9322 = vmatpush.bf16.msra.mxu0 %v8325
          %9323 = vmatpush.bf16.msra.mxu0 %v8321
          %9324 = vmatpush.bf16.msra.mxu0 %v8317
          %9325 = vmatpush.bf16.msra.mxu0 %v8313
          %9326 = vmatmul.bf16.gmra.mxu0 %v6207
          %v9327 = vpop.f32.mrf.mxu0
          %v9328 = vadd.f32 %v9315, %v9327
          %v9329 = vpop.f32.mrf.mxu0
          %9330 = vdwg.mxu0
          %9331 = vmatpush.bf16.msra.mxu0 %v8373
          %9332 = vmatpush.bf16.msra.mxu0 %v8369
          %9333 = vmatpush.bf16.msra.mxu0 %v8365
          %9334 = vmatpush.bf16.msra.mxu0 %v8361
          %9335 = vmatpush.bf16.msra.mxu0 %v8357
          %9336 = vmatpush.bf16.msra.mxu0 %v8353
          %9337 = vmatpush.bf16.msra.mxu0 %v8349
          %9338 = vmatpush.bf16.msra.mxu0 %v8345
          %9339 = vmatmul.bf16.gmra.mxu0 %v6208
          %v9340 = vpop.f32.mrf.mxu0
          %v9341 = vadd.f32 %v9328, %v9340
          %v9342 = vpop.f32.mrf.mxu0
          %9343 = vdwg.mxu0
          %9344 = vmatpush.bf16.msra.mxu0 %v8405
          %9345 = vmatpush.bf16.msra.mxu0 %v8401
          %9346 = vmatpush.bf16.msra.mxu0 %v8397
          %9347 = vmatpush.bf16.msra.mxu0 %v8393
          %9348 = vmatpush.bf16.msra.mxu0 %v8389
          %9349 = vmatpush.bf16.msra.mxu0 %v8385
          %9350 = vmatpush.bf16.msra.mxu0 %v8381
          %9351 = vmatpush.bf16.msra.mxu0 %v8377
          %9352 = vmatmul.bf16.gmra.mxu0 %v6209
          %v9353 = vpop.f32.mrf.mxu0
          %v9354 = vadd.f32 %v9341, %v9353
          %v9355 = vpop.f32.mrf.mxu0
          %9356 = vdwg.mxu0
          %9357 = vmatpush.bf16.msra.mxu0 %v8437
          %9358 = vmatpush.bf16.msra.mxu0 %v8433
          %9359 = vmatpush.bf16.msra.mxu0 %v8429
          %9360 = vmatpush.bf16.msra.mxu0 %v8425
          %9361 = vmatpush.bf16.msra.mxu0 %v8421
          %9362 = vmatpush.bf16.msra.mxu0 %v8417
          %9363 = vmatpush.bf16.msra.mxu0 %v8413
          %9364 = vmatpush.bf16.msra.mxu0 %v8409
          %9365 = vmatmul.bf16.gmra.mxu0 %v6210
          %v9366 = vpop.f32.mrf.mxu0
          %v9367 = vadd.f32 %v9354, %v9366
          %v9368 = vpop.f32.mrf.mxu0
          %9369 = vdwg.mxu0
          %9370 = vmatpush.bf16.msra.mxu0 %v8469
          %9371 = vmatpush.bf16.msra.mxu0 %v8465
          %9372 = vmatpush.bf16.msra.mxu0 %v8461
          %9373 = vmatpush.bf16.msra.mxu0 %v8457
          %9374 = vmatpush.bf16.msra.mxu0 %v8453
          %9375 = vmatpush.bf16.msra.mxu0 %v8449
          %9376 = vmatpush.bf16.msra.mxu0 %v8445
          %9377 = vmatpush.bf16.msra.mxu0 %v8441
          %9378 = vmatmul.bf16.gmra.mxu0 %v6211
          %v9379 = vpop.f32.mrf.mxu0
          %v9380 = vadd.f32 %v9367, %v9379
          %v9381 = vpop.f32.mrf.mxu0
          %9382 = vdwg.mxu0
          %9383 = vmatpush.bf16.msra.mxu0 %v8501
          %9384 = vmatpush.bf16.msra.mxu0 %v8497
          %9385 = vmatpush.bf16.msra.mxu0 %v8493
          %9386 = vmatpush.bf16.msra.mxu0 %v8489
          %9387 = vmatpush.bf16.msra.mxu0 %v8485
          %9388 = vmatpush.bf16.msra.mxu0 %v8481
          %9389 = vmatpush.bf16.msra.mxu0 %v8477
          %9390 = vmatpush.bf16.msra.mxu0 %v8473
          %9391 = vmatmul.bf16.gmra.mxu0 %v6212
          %v9392 = vpop.f32.mrf.mxu0
          %v9393 = vadd.f32 %v9380, %v9392
          %v9394 = vpop.f32.mrf.mxu0
          %9395 = vdwg.mxu0
          %9396 = vmatpush.bf16.msra.mxu0 %v8533
          %9397 = vmatpush.bf16.msra.mxu0 %v8529
          %9398 = vmatpush.bf16.msra.mxu0 %v8525
          %9399 = vmatpush.bf16.msra.mxu0 %v8521
          %9400 = vmatpush.bf16.msra.mxu0 %v8517
          %9401 = vmatpush.bf16.msra.mxu0 %v8513
          %9402 = vmatpush.bf16.msra.mxu0 %v8509
          %9403 = vmatpush.bf16.msra.mxu0 %v8505
          %9404 = vmatmul.bf16.gmra.mxu0 %v6213
          %v9405 = vpop.f32.mrf.mxu0
          %v9406 = vadd.f32 %v9393, %v9405
          %v9407 = vpop.f32.mrf.mxu0
          %9408 = vdwg.mxu0
          %9409 = vmatpush.bf16.msra.mxu0 %v8565
          %9410 = vmatpush.bf16.msra.mxu0 %v8561
          %9411 = vmatpush.bf16.msra.mxu0 %v8557
          %9412 = vmatpush.bf16.msra.mxu0 %v8553
          %9413 = vmatpush.bf16.msra.mxu0 %v8549
          %9414 = vmatpush.bf16.msra.mxu0 %v8545
          %9415 = vmatpush.bf16.msra.mxu0 %v8541
          %9416 = vmatpush.bf16.msra.mxu0 %v8537
          %9417 = vmatmul.bf16.gmra.mxu0 %v6214
          %v9418 = vpop.f32.mrf.mxu0
          %v9419 = vadd.f32 %v9406, %v9418
          %v9420 = vpop.f32.mrf.mxu0
          %9421 = vdwg.mxu0
          %9422 = vmatpush.bf16.msra.mxu0 %v8597
          %9423 = vmatpush.bf16.msra.mxu0 %v8593
          %9424 = vmatpush.bf16.msra.mxu0 %v8589
          %9425 = vmatpush.bf16.msra.mxu0 %v8585
          %9426 = vmatpush.bf16.msra.mxu0 %v8581
          %9427 = vmatpush.bf16.msra.mxu0 %v8577
          %9428 = vmatpush.bf16.msra.mxu0 %v8573
          %9429 = vmatpush.bf16.msra.mxu0 %v8569
          %9430 = vmatmul.bf16.gmra.mxu0 %v6215
          %v9431 = vpop.f32.mrf.mxu0
          %v9432 = vadd.f32 %v9419, %v9431
          %v9433 = vpop.f32.mrf.mxu0
          %9434 = vdwg.mxu0
          %9435 = vmatpush.bf16.msra.mxu0 %v8629
          %9436 = vmatpush.bf16.msra.mxu0 %v8625
          %9437 = vmatpush.bf16.msra.mxu0 %v8621
          %9438 = vmatpush.bf16.msra.mxu0 %v8617
          %9439 = vmatpush.bf16.msra.mxu0 %v8613
          %9440 = vmatpush.bf16.msra.mxu0 %v8609
          %9441 = vmatpush.bf16.msra.mxu0 %v8605
          %9442 = vmatpush.bf16.msra.mxu0 %v8601
          %9443 = vmatmul.bf16.gmra.mxu0 %v6216
          %v9444 = vpop.f32.mrf.mxu0
          %v9445 = vadd.f32 %v9432, %v9444
          %v9446 = vpop.f32.mrf.mxu0
          %9447 = vdwg.mxu0
          %9448 = vmatpush.bf16.msra.mxu0 %v8661
          %9449 = vmatpush.bf16.msra.mxu0 %v8657
          %9450 = vmatpush.bf16.msra.mxu0 %v8653
          %9451 = vmatpush.bf16.msra.mxu0 %v8649
          %9452 = vmatpush.bf16.msra.mxu0 %v8645
          %9453 = vmatpush.bf16.msra.mxu0 %v8641
          %9454 = vmatpush.bf16.msra.mxu0 %v8637
          %9455 = vmatpush.bf16.msra.mxu0 %v8633
          %9456 = vmatmul.bf16.gmra.mxu0 %v6217
          %v9457 = vpop.f32.mrf.mxu0
          %v9458 = vadd.f32 %v9445, %v9457
          %v9459 = vpop.f32.mrf.mxu0
          %9460 = vdwg.mxu0
          %9461 = vmatpush.bf16.msra.mxu0 %v8693
          %9462 = vmatpush.bf16.msra.mxu0 %v8689
          %9463 = vmatpush.bf16.msra.mxu0 %v8685
          %9464 = vmatpush.bf16.msra.mxu0 %v8681
          %9465 = vmatpush.bf16.msra.mxu0 %v8677
          %9466 = vmatpush.bf16.msra.mxu0 %v8673
          %9467 = vmatpush.bf16.msra.mxu0 %v8669
          %9468 = vmatpush.bf16.msra.mxu0 %v8665
          %9469 = vmatmul.bf16.gmra.mxu0 %v6218
          %v9470 = vpop.f32.mrf.mxu0
          %v9471 = vadd.f32 %v9458, %v9470
          %v9472 = vpop.f32.mrf.mxu0
          %9473 = vdwg.mxu0
          %9474 = vmatpush.bf16.msra.mxu0 %v8725
          %9475 = vmatpush.bf16.msra.mxu0 %v8721
          %9476 = vmatpush.bf16.msra.mxu0 %v8717
          %9477 = vmatpush.bf16.msra.mxu0 %v8713
          %9478 = vmatpush.bf16.msra.mxu0 %v8709
          %9479 = vmatpush.bf16.msra.mxu0 %v8705
          %9480 = vmatpush.bf16.msra.mxu0 %v8701
          %9481 = vmatpush.bf16.msra.mxu0 %v8697
          %9482 = vmatmul.bf16.gmra.mxu0 %v6219
          %v9483 = vpop.f32.mrf.mxu0
          %v9484 = vadd.f32 %v9471, %v9483
          %v9485 = vpop.f32.mrf.mxu0
          %9486 = vdwg.mxu0
          %9487 = vmatpush.bf16.msra.mxu0 %v8757
          %9488 = vmatpush.bf16.msra.mxu0 %v8753
          %9489 = vmatpush.bf16.msra.mxu0 %v8749
          %9490 = vmatpush.bf16.msra.mxu0 %v8745
          %9491 = vmatpush.bf16.msra.mxu0 %v8741
          %9492 = vmatpush.bf16.msra.mxu0 %v8737
          %9493 = vmatpush.bf16.msra.mxu0 %v8733
          %9494 = vmatpush.bf16.msra.mxu0 %v8729
          %9495 = vmatmul.bf16.gmra.mxu0 %v6220
          %v9496 = vpop.f32.mrf.mxu0
          %v9497 = vadd.f32 %v9484, %v9496
          %v9498 = vpop.f32.mrf.mxu0
          %9499 = vdwg.mxu0
          %9500 = vmatpush.bf16.msra.mxu0 %v8789
          %9501 = vmatpush.bf16.msra.mxu0 %v8785
          %9502 = vmatpush.bf16.msra.mxu0 %v8781
          %9503 = vmatpush.bf16.msra.mxu0 %v8777
          %9504 = vmatpush.bf16.msra.mxu0 %v8773
          %9505 = vmatpush.bf16.msra.mxu0 %v8769
          %9506 = vmatpush.bf16.msra.mxu0 %v8765
          %9507 = vmatpush.bf16.msra.mxu0 %v8761
          %9508 = vmatmul.bf16.gmra.mxu0 %v6221
          %v9509 = vpop.f32.mrf.mxu0
          %v9510 = vadd.f32 %v9497, %v9509
          %v9511 = vpop.f32.mrf.mxu0
          %9512 = vdwg.mxu0
          %9513 = vmatpush.bf16.msra.mxu0 %v8310
          %9514 = vmatpush.bf16.msra.mxu0 %v8306
          %9515 = vmatpush.bf16.msra.mxu0 %v8302
          %9516 = vmatpush.bf16.msra.mxu0 %v8298
          %9517 = vmatpush.bf16.msra.mxu0 %v8294
          %9518 = vmatpush.bf16.msra.mxu0 %v8290
          %9519 = vmatpush.bf16.msra.mxu0 %v8286
          %9520 = vmatpush.bf16.msra.mxu0 %v8282
          %9521 = vmatmul.bf16.gmra.mxu0 %v6206
          %v9522 = vpop.f32.mrf.mxu0
          %v9523 = vadd.f32 %v6738, %v9522
          %v9524 = vpop.f32.mrf.mxu0
          %9525 = vdwg.mxu0
          %9526 = vmatpush.bf16.msra.mxu0 %v8342
          %9527 = vmatpush.bf16.msra.mxu0 %v8338
          %9528 = vmatpush.bf16.msra.mxu0 %v8334
          %9529 = vmatpush.bf16.msra.mxu0 %v8330
          %9530 = vmatpush.bf16.msra.mxu0 %v8326
          %9531 = vmatpush.bf16.msra.mxu0 %v8322
          %9532 = vmatpush.bf16.msra.mxu0 %v8318
          %9533 = vmatpush.bf16.msra.mxu0 %v8314
          %9534 = vmatmul.bf16.gmra.mxu0 %v6207
          %v9535 = vpop.f32.mrf.mxu0
          %v9536 = vadd.f32 %v9523, %v9535
          %v9537 = vpop.f32.mrf.mxu0
          %9538 = vdwg.mxu0
          %9539 = vmatpush.bf16.msra.mxu0 %v8374
          %9540 = vmatpush.bf16.msra.mxu0 %v8370
          %9541 = vmatpush.bf16.msra.mxu0 %v8366
          %9542 = vmatpush.bf16.msra.mxu0 %v8362
          %9543 = vmatpush.bf16.msra.mxu0 %v8358
          %9544 = vmatpush.bf16.msra.mxu0 %v8354
          %9545 = vmatpush.bf16.msra.mxu0 %v8350
          %9546 = vmatpush.bf16.msra.mxu0 %v8346
          %9547 = vmatmul.bf16.gmra.mxu0 %v6208
          %v9548 = vpop.f32.mrf.mxu0
          %v9549 = vadd.f32 %v9536, %v9548
          %v9550 = vpop.f32.mrf.mxu0
          %9551 = vdwg.mxu0
          %9552 = vmatpush.bf16.msra.mxu0 %v8406
          %9553 = vmatpush.bf16.msra.mxu0 %v8402
          %9554 = vmatpush.bf16.msra.mxu0 %v8398
          %9555 = vmatpush.bf16.msra.mxu0 %v8394
          %9556 = vmatpush.bf16.msra.mxu0 %v8390
          %9557 = vmatpush.bf16.msra.mxu0 %v8386
          %9558 = vmatpush.bf16.msra.mxu0 %v8382
          %9559 = vmatpush.bf16.msra.mxu0 %v8378
          %9560 = vmatmul.bf16.gmra.mxu0 %v6209
          %v9561 = vpop.f32.mrf.mxu0
          %v9562 = vadd.f32 %v9549, %v9561
          %v9563 = vpop.f32.mrf.mxu0
          %9564 = vdwg.mxu0
          %9565 = vmatpush.bf16.msra.mxu0 %v8438
          %9566 = vmatpush.bf16.msra.mxu0 %v8434
          %9567 = vmatpush.bf16.msra.mxu0 %v8430
          %9568 = vmatpush.bf16.msra.mxu0 %v8426
          %9569 = vmatpush.bf16.msra.mxu0 %v8422
          %9570 = vmatpush.bf16.msra.mxu0 %v8418
          %9571 = vmatpush.bf16.msra.mxu0 %v8414
          %9572 = vmatpush.bf16.msra.mxu0 %v8410
          %9573 = vmatmul.bf16.gmra.mxu0 %v6210
          %v9574 = vpop.f32.mrf.mxu0
          %v9575 = vadd.f32 %v9562, %v9574
          %v9576 = vpop.f32.mrf.mxu0
          %9577 = vdwg.mxu0
          %9578 = vmatpush.bf16.msra.mxu0 %v8470
          %9579 = vmatpush.bf16.msra.mxu0 %v8466
          %9580 = vmatpush.bf16.msra.mxu0 %v8462
          %9581 = vmatpush.bf16.msra.mxu0 %v8458
          %9582 = vmatpush.bf16.msra.mxu0 %v8454
          %9583 = vmatpush.bf16.msra.mxu0 %v8450
          %9584 = vmatpush.bf16.msra.mxu0 %v8446
          %9585 = vmatpush.bf16.msra.mxu0 %v8442
          %9586 = vmatmul.bf16.gmra.mxu0 %v6211
          %v9587 = vpop.f32.mrf.mxu0
          %v9588 = vadd.f32 %v9575, %v9587
          %v9589 = vpop.f32.mrf.mxu0
          %9590 = vdwg.mxu0
          %9591 = vmatpush.bf16.msra.mxu0 %v8502
          %9592 = vmatpush.bf16.msra.mxu0 %v8498
          %9593 = vmatpush.bf16.msra.mxu0 %v8494
          %9594 = vmatpush.bf16.msra.mxu0 %v8490
          %9595 = vmatpush.bf16.msra.mxu0 %v8486
          %9596 = vmatpush.bf16.msra.mxu0 %v8482
          %9597 = vmatpush.bf16.msra.mxu0 %v8478
          %9598 = vmatpush.bf16.msra.mxu0 %v8474
          %9599 = vmatmul.bf16.gmra.mxu0 %v6212
          %v9600 = vpop.f32.mrf.mxu0
          %v9601 = vadd.f32 %v9588, %v9600
          %v9602 = vpop.f32.mrf.mxu0
          %9603 = vdwg.mxu0
          %9604 = vmatpush.bf16.msra.mxu0 %v8534
          %9605 = vmatpush.bf16.msra.mxu0 %v8530
          %9606 = vmatpush.bf16.msra.mxu0 %v8526
          %9607 = vmatpush.bf16.msra.mxu0 %v8522
          %9608 = vmatpush.bf16.msra.mxu0 %v8518
          %9609 = vmatpush.bf16.msra.mxu0 %v8514
          %9610 = vmatpush.bf16.msra.mxu0 %v8510
          %9611 = vmatpush.bf16.msra.mxu0 %v8506
          %9612 = vmatmul.bf16.gmra.mxu0 %v6213
          %v9613 = vpop.f32.mrf.mxu0
          %v9614 = vadd.f32 %v9601, %v9613
          %v9615 = vpop.f32.mrf.mxu0
          %9616 = vdwg.mxu0
          %9617 = vmatpush.bf16.msra.mxu0 %v8566
          %9618 = vmatpush.bf16.msra.mxu0 %v8562
          %9619 = vmatpush.bf16.msra.mxu0 %v8558
          %9620 = vmatpush.bf16.msra.mxu0 %v8554
          %9621 = vmatpush.bf16.msra.mxu0 %v8550
          %9622 = vmatpush.bf16.msra.mxu0 %v8546
          %9623 = vmatpush.bf16.msra.mxu0 %v8542
          %9624 = vmatpush.bf16.msra.mxu0 %v8538
          %9625 = vmatmul.bf16.gmra.mxu0 %v6214
          %v9626 = vpop.f32.mrf.mxu0
          %v9627 = vadd.f32 %v9614, %v9626
          %v9628 = vpop.f32.mrf.mxu0
          %9629 = vdwg.mxu0
          %9630 = vmatpush.bf16.msra.mxu0 %v8598
          %9631 = vmatpush.bf16.msra.mxu0 %v8594
          %9632 = vmatpush.bf16.msra.mxu0 %v8590
          %9633 = vmatpush.bf16.msra.mxu0 %v8586
          %9634 = vmatpush.bf16.msra.mxu0 %v8582
          %9635 = vmatpush.bf16.msra.mxu0 %v8578
          %9636 = vmatpush.bf16.msra.mxu0 %v8574
          %9637 = vmatpush.bf16.msra.mxu0 %v8570
          %9638 = vmatmul.bf16.gmra.mxu0 %v6215
          %v9639 = vpop.f32.mrf.mxu0
          %v9640 = vadd.f32 %v9627, %v9639
          %v9641 = vpop.f32.mrf.mxu0
          %9642 = vdwg.mxu0
          %9643 = vmatpush.bf16.msra.mxu0 %v8630
          %9644 = vmatpush.bf16.msra.mxu0 %v8626
          %9645 = vmatpush.bf16.msra.mxu0 %v8622
          %9646 = vmatpush.bf16.msra.mxu0 %v8618
          %9647 = vmatpush.bf16.msra.mxu0 %v8614
          %9648 = vmatpush.bf16.msra.mxu0 %v8610
          %9649 = vmatpush.bf16.msra.mxu0 %v8606
          %9650 = vmatpush.bf16.msra.mxu0 %v8602
          %9651 = vmatmul.bf16.gmra.mxu0 %v6216
          %v9652 = vpop.f32.mrf.mxu0
          %v9653 = vadd.f32 %v9640, %v9652
          %v9654 = vpop.f32.mrf.mxu0
          %9655 = vdwg.mxu0
          %9656 = vmatpush.bf16.msra.mxu0 %v8662
          %9657 = vmatpush.bf16.msra.mxu0 %v8658
          %9658 = vmatpush.bf16.msra.mxu0 %v8654
          %9659 = vmatpush.bf16.msra.mxu0 %v8650
          %9660 = vmatpush.bf16.msra.mxu0 %v8646
          %9661 = vmatpush.bf16.msra.mxu0 %v8642
          %9662 = vmatpush.bf16.msra.mxu0 %v8638
          %9663 = vmatpush.bf16.msra.mxu0 %v8634
          %9664 = vmatmul.bf16.gmra.mxu0 %v6217
          %v9665 = vpop.f32.mrf.mxu0
          %v9666 = vadd.f32 %v9653, %v9665
          %v9667 = vpop.f32.mrf.mxu0
          %9668 = vdwg.mxu0
          %9669 = vmatpush.bf16.msra.mxu0 %v8694
          %9670 = vmatpush.bf16.msra.mxu0 %v8690
          %9671 = vmatpush.bf16.msra.mxu0 %v8686
          %9672 = vmatpush.bf16.msra.mxu0 %v8682
          %9673 = vmatpush.bf16.msra.mxu0 %v8678
          %9674 = vmatpush.bf16.msra.mxu0 %v8674
          %9675 = vmatpush.bf16.msra.mxu0 %v8670
          %9676 = vmatpush.bf16.msra.mxu0 %v8666
          %9677 = vmatmul.bf16.gmra.mxu0 %v6218
          %v9678 = vpop.f32.mrf.mxu0
          %v9679 = vadd.f32 %v9666, %v9678
          %v9680 = vpop.f32.mrf.mxu0
          %9681 = vdwg.mxu0
          %9682 = vmatpush.bf16.msra.mxu0 %v8726
          %9683 = vmatpush.bf16.msra.mxu0 %v8722
          %9684 = vmatpush.bf16.msra.mxu0 %v8718
          %9685 = vmatpush.bf16.msra.mxu0 %v8714
          %9686 = vmatpush.bf16.msra.mxu0 %v8710
          %9687 = vmatpush.bf16.msra.mxu0 %v8706
          %9688 = vmatpush.bf16.msra.mxu0 %v8702
          %9689 = vmatpush.bf16.msra.mxu0 %v8698
          %9690 = vmatmul.bf16.gmra.mxu0 %v6219
          %v9691 = vpop.f32.mrf.mxu0
          %v9692 = vadd.f32 %v9679, %v9691
          %v9693 = vpop.f32.mrf.mxu0
          %9694 = vdwg.mxu0
          %9695 = vmatpush.bf16.msra.mxu0 %v8758
          %9696 = vmatpush.bf16.msra.mxu0 %v8754
          %9697 = vmatpush.bf16.msra.mxu0 %v8750
          %9698 = vmatpush.bf16.msra.mxu0 %v8746
          %9699 = vmatpush.bf16.msra.mxu0 %v8742
          %9700 = vmatpush.bf16.msra.mxu0 %v8738
          %9701 = vmatpush.bf16.msra.mxu0 %v8734
          %9702 = vmatpush.bf16.msra.mxu0 %v8730
          %9703 = vmatmul.bf16.gmra.mxu0 %v6220
          %v9704 = vpop.f32.mrf.mxu0
          %v9705 = vadd.f32 %v9692, %v9704
          %v9706 = vpop.f32.mrf.mxu0
          %9707 = vdwg.mxu0
          %9708 = vmatpush.bf16.msra.mxu0 %v8790
          %9709 = vmatpush.bf16.msra.mxu0 %v8786
          %9710 = vmatpush.bf16.msra.mxu0 %v8782
          %9711 = vmatpush.bf16.msra.mxu0 %v8778
          %9712 = vmatpush.bf16.msra.mxu0 %v8774
          %9713 = vmatpush.bf16.msra.mxu0 %v8770
          %9714 = vmatpush.bf16.msra.mxu0 %v8766
          %9715 = vmatpush.bf16.msra.mxu0 %v8762
          %9716 = vmatmul.bf16.gmra.mxu0 %v6221
          %v9717 = vpop.f32.mrf.mxu0
          %v9718 = vadd.f32 %v9705, %v9717
          %v9719 = vpop.f32.mrf.mxu0
          %9720 = vdwg.mxu0
          %9721 = vmatpush.bf16.msra.mxu0 %v8311
          %9722 = vmatpush.bf16.msra.mxu0 %v8307
          %9723 = vmatpush.bf16.msra.mxu0 %v8303
          %9724 = vmatpush.bf16.msra.mxu0 %v8299
          %9725 = vmatpush.bf16.msra.mxu0 %v8295
          %9726 = vmatpush.bf16.msra.mxu0 %v8291
          %9727 = vmatpush.bf16.msra.mxu0 %v8287
          %9728 = vmatpush.bf16.msra.mxu0 %v8283
          %9729 = vmatmul.bf16.gmra.mxu0 %v6206
          %v9730 = vpop.f32.mrf.mxu0
          %v9731 = vadd.f32 %v6739, %v9730
          %v9732 = vpop.f32.mrf.mxu0
          %9733 = vdwg.mxu0
          %9734 = vmatpush.bf16.msra.mxu0 %v8343
          %9735 = vmatpush.bf16.msra.mxu0 %v8339
          %9736 = vmatpush.bf16.msra.mxu0 %v8335
          %9737 = vmatpush.bf16.msra.mxu0 %v8331
          %9738 = vmatpush.bf16.msra.mxu0 %v8327
          %9739 = vmatpush.bf16.msra.mxu0 %v8323
          %9740 = vmatpush.bf16.msra.mxu0 %v8319
          %9741 = vmatpush.bf16.msra.mxu0 %v8315
          %9742 = vmatmul.bf16.gmra.mxu0 %v6207
          %v9743 = vpop.f32.mrf.mxu0
          %v9744 = vadd.f32 %v9731, %v9743
          %v9745 = vpop.f32.mrf.mxu0
          %9746 = vdwg.mxu0
          %9747 = vmatpush.bf16.msra.mxu0 %v8375
          %9748 = vmatpush.bf16.msra.mxu0 %v8371
          %9749 = vmatpush.bf16.msra.mxu0 %v8367
          %9750 = vmatpush.bf16.msra.mxu0 %v8363
          %9751 = vmatpush.bf16.msra.mxu0 %v8359
          %9752 = vmatpush.bf16.msra.mxu0 %v8355
          %9753 = vmatpush.bf16.msra.mxu0 %v8351
          %9754 = vmatpush.bf16.msra.mxu0 %v8347
          %9755 = vmatmul.bf16.gmra.mxu0 %v6208
          %v9756 = vpop.f32.mrf.mxu0
          %v9757 = vadd.f32 %v9744, %v9756
          %v9758 = vpop.f32.mrf.mxu0
          %9759 = vdwg.mxu0
          %9760 = vmatpush.bf16.msra.mxu0 %v8407
          %9761 = vmatpush.bf16.msra.mxu0 %v8403
          %9762 = vmatpush.bf16.msra.mxu0 %v8399
          %9763 = vmatpush.bf16.msra.mxu0 %v8395
          %9764 = vmatpush.bf16.msra.mxu0 %v8391
          %9765 = vmatpush.bf16.msra.mxu0 %v8387
          %9766 = vmatpush.bf16.msra.mxu0 %v8383
          %9767 = vmatpush.bf16.msra.mxu0 %v8379
          %9768 = vmatmul.bf16.gmra.mxu0 %v6209
          %v9769 = vpop.f32.mrf.mxu0
          %v9770 = vadd.f32 %v9757, %v9769
          %v9771 = vpop.f32.mrf.mxu0
          %9772 = vdwg.mxu0
          %9773 = vmatpush.bf16.msra.mxu0 %v8439
          %9774 = vmatpush.bf16.msra.mxu0 %v8435
          %9775 = vmatpush.bf16.msra.mxu0 %v8431
          %9776 = vmatpush.bf16.msra.mxu0 %v8427
          %9777 = vmatpush.bf16.msra.mxu0 %v8423
          %9778 = vmatpush.bf16.msra.mxu0 %v8419
          %9779 = vmatpush.bf16.msra.mxu0 %v8415
          %9780 = vmatpush.bf16.msra.mxu0 %v8411
          %9781 = vmatmul.bf16.gmra.mxu0 %v6210
          %v9782 = vpop.f32.mrf.mxu0
          %v9783 = vadd.f32 %v9770, %v9782
          %v9784 = vpop.f32.mrf.mxu0
          %9785 = vdwg.mxu0
          %9786 = vmatpush.bf16.msra.mxu0 %v8471
          %9787 = vmatpush.bf16.msra.mxu0 %v8467
          %9788 = vmatpush.bf16.msra.mxu0 %v8463
          %9789 = vmatpush.bf16.msra.mxu0 %v8459
          %9790 = vmatpush.bf16.msra.mxu0 %v8455
          %9791 = vmatpush.bf16.msra.mxu0 %v8451
          %9792 = vmatpush.bf16.msra.mxu0 %v8447
          %9793 = vmatpush.bf16.msra.mxu0 %v8443
          %9794 = vmatmul.bf16.gmra.mxu0 %v6211
          %v9795 = vpop.f32.mrf.mxu0
          %v9796 = vadd.f32 %v9783, %v9795
          %v9797 = vpop.f32.mrf.mxu0
          %9798 = vdwg.mxu0
          %9799 = vmatpush.bf16.msra.mxu0 %v8503
          %9800 = vmatpush.bf16.msra.mxu0 %v8499
          %9801 = vmatpush.bf16.msra.mxu0 %v8495
          %9802 = vmatpush.bf16.msra.mxu0 %v8491
          %9803 = vmatpush.bf16.msra.mxu0 %v8487
          %9804 = vmatpush.bf16.msra.mxu0 %v8483
          %9805 = vmatpush.bf16.msra.mxu0 %v8479
          %9806 = vmatpush.bf16.msra.mxu0 %v8475
          %9807 = vmatmul.bf16.gmra.mxu0 %v6212
          %v9808 = vpop.f32.mrf.mxu0
          %v9809 = vadd.f32 %v9796, %v9808
          %v9810 = vpop.f32.mrf.mxu0
          %9811 = vdwg.mxu0
          %9812 = vmatpush.bf16.msra.mxu0 %v8535
          %9813 = vmatpush.bf16.msra.mxu0 %v8531
          %9814 = vmatpush.bf16.msra.mxu0 %v8527
          %9815 = vmatpush.bf16.msra.mxu0 %v8523
          %9816 = vmatpush.bf16.msra.mxu0 %v8519
          %9817 = vmatpush.bf16.msra.mxu0 %v8515
          %9818 = vmatpush.bf16.msra.mxu0 %v8511
          %9819 = vmatpush.bf16.msra.mxu0 %v8507
          %9820 = vmatmul.bf16.gmra.mxu0 %v6213
          %v9821 = vpop.f32.mrf.mxu0
          %v9822 = vadd.f32 %v9809, %v9821
          %v9823 = vpop.f32.mrf.mxu0
          %9824 = vdwg.mxu0
          %9825 = vmatpush.bf16.msra.mxu0 %v8567
          %9826 = vmatpush.bf16.msra.mxu0 %v8563
          %9827 = vmatpush.bf16.msra.mxu0 %v8559
          %9828 = vmatpush.bf16.msra.mxu0 %v8555
          %9829 = vmatpush.bf16.msra.mxu0 %v8551
          %9830 = vmatpush.bf16.msra.mxu0 %v8547
          %9831 = vmatpush.bf16.msra.mxu0 %v8543
          %9832 = vmatpush.bf16.msra.mxu0 %v8539
          %9833 = vmatmul.bf16.gmra.mxu0 %v6214
          %v9834 = vpop.f32.mrf.mxu0
          %v9835 = vadd.f32 %v9822, %v9834
          %v9836 = vpop.f32.mrf.mxu0
          %9837 = vdwg.mxu0
          %9838 = vmatpush.bf16.msra.mxu0 %v8599
          %9839 = vmatpush.bf16.msra.mxu0 %v8595
          %9840 = vmatpush.bf16.msra.mxu0 %v8591
          %9841 = vmatpush.bf16.msra.mxu0 %v8587
          %9842 = vmatpush.bf16.msra.mxu0 %v8583
          %9843 = vmatpush.bf16.msra.mxu0 %v8579
          %9844 = vmatpush.bf16.msra.mxu0 %v8575
          %9845 = vmatpush.bf16.msra.mxu0 %v8571
          %9846 = vmatmul.bf16.gmra.mxu0 %v6215
          %v9847 = vpop.f32.mrf.mxu0
          %v9848 = vadd.f32 %v9835, %v9847
          %v9849 = vpop.f32.mrf.mxu0
          %9850 = vdwg.mxu0
          %9851 = vmatpush.bf16.msra.mxu0 %v8631
          %9852 = vmatpush.bf16.msra.mxu0 %v8627
          %9853 = vmatpush.bf16.msra.mxu0 %v8623
          %9854 = vmatpush.bf16.msra.mxu0 %v8619
          %9855 = vmatpush.bf16.msra.mxu0 %v8615
          %9856 = vmatpush.bf16.msra.mxu0 %v8611
          %9857 = vmatpush.bf16.msra.mxu0 %v8607
          %9858 = vmatpush.bf16.msra.mxu0 %v8603
          %9859 = vmatmul.bf16.gmra.mxu0 %v6216
          %v9860 = vpop.f32.mrf.mxu0
          %v9861 = vadd.f32 %v9848, %v9860
          %v9862 = vpop.f32.mrf.mxu0
          %9863 = vdwg.mxu0
          %9864 = vmatpush.bf16.msra.mxu0 %v8663
          %9865 = vmatpush.bf16.msra.mxu0 %v8659
          %9866 = vmatpush.bf16.msra.mxu0 %v8655
          %9867 = vmatpush.bf16.msra.mxu0 %v8651
          %9868 = vmatpush.bf16.msra.mxu0 %v8647
          %9869 = vmatpush.bf16.msra.mxu0 %v8643
          %9870 = vmatpush.bf16.msra.mxu0 %v8639
          %9871 = vmatpush.bf16.msra.mxu0 %v8635
          %9872 = vmatmul.bf16.gmra.mxu0 %v6217
          %v9873 = vpop.f32.mrf.mxu0
          %v9874 = vadd.f32 %v9861, %v9873
          %v9875 = vpop.f32.mrf.mxu0
          %9876 = vdwg.mxu0
          %9877 = vmatpush.bf16.msra.mxu0 %v8695
          %9878 = vmatpush.bf16.msra.mxu0 %v8691
          %9879 = vmatpush.bf16.msra.mxu0 %v8687
          %9880 = vmatpush.bf16.msra.mxu0 %v8683
          %9881 = vmatpush.bf16.msra.mxu0 %v8679
          %9882 = vmatpush.bf16.msra.mxu0 %v8675
          %9883 = vmatpush.bf16.msra.mxu0 %v8671
          %9884 = vmatpush.bf16.msra.mxu0 %v8667
          %9885 = vmatmul.bf16.gmra.mxu0 %v6218
          %v9886 = vpop.f32.mrf.mxu0
          %v9887 = vadd.f32 %v9874, %v9886
          %v9888 = vpop.f32.mrf.mxu0
          %9889 = vdwg.mxu0
          %9890 = vmatpush.bf16.msra.mxu0 %v8727
          %9891 = vmatpush.bf16.msra.mxu0 %v8723
          %9892 = vmatpush.bf16.msra.mxu0 %v8719
          %9893 = vmatpush.bf16.msra.mxu0 %v8715
          %9894 = vmatpush.bf16.msra.mxu0 %v8711
          %9895 = vmatpush.bf16.msra.mxu0 %v8707
          %9896 = vmatpush.bf16.msra.mxu0 %v8703
          %9897 = vmatpush.bf16.msra.mxu0 %v8699
          %9898 = vmatmul.bf16.gmra.mxu0 %v6219
          %v9899 = vpop.f32.mrf.mxu0
          %v9900 = vadd.f32 %v9887, %v9899
          %v9901 = vpop.f32.mrf.mxu0
          %9902 = vdwg.mxu0
          %9903 = vmatpush.bf16.msra.mxu0 %v8759
          %9904 = vmatpush.bf16.msra.mxu0 %v8755
          %9905 = vmatpush.bf16.msra.mxu0 %v8751
          %9906 = vmatpush.bf16.msra.mxu0 %v8747
          %9907 = vmatpush.bf16.msra.mxu0 %v8743
          %9908 = vmatpush.bf16.msra.mxu0 %v8739
          %9909 = vmatpush.bf16.msra.mxu0 %v8735
          %9910 = vmatpush.bf16.msra.mxu0 %v8731
          %9911 = vmatmul.bf16.gmra.mxu0 %v6220
          %v9912 = vpop.f32.mrf.mxu0
          %v9913 = vadd.f32 %v9900, %v9912
          %v9914 = vpop.f32.mrf.mxu0
          %9915 = vdwg.mxu0
          %9916 = vmatpush.bf16.msra.mxu0 %v8791
          %9917 = vmatpush.bf16.msra.mxu0 %v8787
          %9918 = vmatpush.bf16.msra.mxu0 %v8783
          %9919 = vmatpush.bf16.msra.mxu0 %v8779
          %9920 = vmatpush.bf16.msra.mxu0 %v8775
          %9921 = vmatpush.bf16.msra.mxu0 %v8771
          %9922 = vmatpush.bf16.msra.mxu0 %v8767
          %9923 = vmatpush.bf16.msra.mxu0 %v8763
          %9924 = vmatmul.bf16.gmra.mxu0 %v6221
          %v9925 = vpop.f32.mrf.mxu0
          %v9926 = vadd.f32 %v9913, %v9925
          %v9927 = vpop.f32.mrf.mxu0
          %9928 = vdwg.mxu0
          %9929 = vmatpush.bf16.msra.mxu0 %v8312
          %9930 = vmatpush.bf16.msra.mxu0 %v8308
          %9931 = vmatpush.bf16.msra.mxu0 %v8304
          %9932 = vmatpush.bf16.msra.mxu0 %v8300
          %9933 = vmatpush.bf16.msra.mxu0 %v8296
          %9934 = vmatpush.bf16.msra.mxu0 %v8292
          %9935 = vmatpush.bf16.msra.mxu0 %v8288
          %9936 = vmatpush.bf16.msra.mxu0 %v8284
          %9937 = vmatmul.bf16.gmra.mxu0 %v6206
          %v9938 = vpop.f32.mrf.mxu0
          %v9939 = vadd.f32 %v6740, %v9938
          %v9940 = vpop.f32.mrf.mxu0
          %9941 = vdwg.mxu0
          %9942 = vmatpush.bf16.msra.mxu0 %v8344
          %9943 = vmatpush.bf16.msra.mxu0 %v8340
          %9944 = vmatpush.bf16.msra.mxu0 %v8336
          %9945 = vmatpush.bf16.msra.mxu0 %v8332
          %9946 = vmatpush.bf16.msra.mxu0 %v8328
          %9947 = vmatpush.bf16.msra.mxu0 %v8324
          %9948 = vmatpush.bf16.msra.mxu0 %v8320
          %9949 = vmatpush.bf16.msra.mxu0 %v8316
          %9950 = vmatmul.bf16.gmra.mxu0 %v6207
          %v9951 = vpop.f32.mrf.mxu0
          %v9952 = vadd.f32 %v9939, %v9951
          %v9953 = vpop.f32.mrf.mxu0
          %9954 = vdwg.mxu0
          %9955 = vmatpush.bf16.msra.mxu0 %v8376
          %9956 = vmatpush.bf16.msra.mxu0 %v8372
          %9957 = vmatpush.bf16.msra.mxu0 %v8368
          %9958 = vmatpush.bf16.msra.mxu0 %v8364
          %9959 = vmatpush.bf16.msra.mxu0 %v8360
          %9960 = vmatpush.bf16.msra.mxu0 %v8356
          %9961 = vmatpush.bf16.msra.mxu0 %v8352
          %9962 = vmatpush.bf16.msra.mxu0 %v8348
          %9963 = vmatmul.bf16.gmra.mxu0 %v6208
          %v9964 = vpop.f32.mrf.mxu0
          %v9965 = vadd.f32 %v9952, %v9964
          %v9966 = vpop.f32.mrf.mxu0
          %9967 = vdwg.mxu0
          %9968 = vmatpush.bf16.msra.mxu0 %v8408
          %9969 = vmatpush.bf16.msra.mxu0 %v8404
          %9970 = vmatpush.bf16.msra.mxu0 %v8400
          %9971 = vmatpush.bf16.msra.mxu0 %v8396
          %9972 = vmatpush.bf16.msra.mxu0 %v8392
          %9973 = vmatpush.bf16.msra.mxu0 %v8388
          %9974 = vmatpush.bf16.msra.mxu0 %v8384
          %9975 = vmatpush.bf16.msra.mxu0 %v8380
          %9976 = vmatmul.bf16.gmra.mxu0 %v6209
          %v9977 = vpop.f32.mrf.mxu0
          %v9978 = vadd.f32 %v9965, %v9977
          %v9979 = vpop.f32.mrf.mxu0
          %9980 = vdwg.mxu0
          %9981 = vmatpush.bf16.msra.mxu0 %v8440
          %9982 = vmatpush.bf16.msra.mxu0 %v8436
          %9983 = vmatpush.bf16.msra.mxu0 %v8432
          %9984 = vmatpush.bf16.msra.mxu0 %v8428
          %9985 = vmatpush.bf16.msra.mxu0 %v8424
          %9986 = vmatpush.bf16.msra.mxu0 %v8420
          %9987 = vmatpush.bf16.msra.mxu0 %v8416
          %9988 = vmatpush.bf16.msra.mxu0 %v8412
          %9989 = vmatmul.bf16.gmra.mxu0 %v6210
          %v9990 = vpop.f32.mrf.mxu0
          %v9991 = vadd.f32 %v9978, %v9990
          %v9992 = vpop.f32.mrf.mxu0
          %9993 = vdwg.mxu0
          %9994 = vmatpush.bf16.msra.mxu0 %v8472
          %9995 = vmatpush.bf16.msra.mxu0 %v8468
          %9996 = vmatpush.bf16.msra.mxu0 %v8464
          %9997 = vmatpush.bf16.msra.mxu0 %v8460
          %9998 = vmatpush.bf16.msra.mxu0 %v8456
          %9999 = vmatpush.bf16.msra.mxu0 %v8452
          %10000 = vmatpush.bf16.msra.mxu0 %v8448
          %10001 = vmatpush.bf16.msra.mxu0 %v8444
          %10002 = vmatmul.bf16.gmra.mxu0 %v6211
          %v10003 = vpop.f32.mrf.mxu0
          %v10004 = vadd.f32 %v9991, %v10003
          %v10005 = vpop.f32.mrf.mxu0
          %10006 = vdwg.mxu0
          %10007 = vmatpush.bf16.msra.mxu0 %v8504
          %10008 = vmatpush.bf16.msra.mxu0 %v8500
          %10009 = vmatpush.bf16.msra.mxu0 %v8496
          %10010 = vmatpush.bf16.msra.mxu0 %v8492
          %10011 = vmatpush.bf16.msra.mxu0 %v8488
          %10012 = vmatpush.bf16.msra.mxu0 %v8484
          %10013 = vmatpush.bf16.msra.mxu0 %v8480
          %10014 = vmatpush.bf16.msra.mxu0 %v8476
          %10015 = vmatmul.bf16.gmra.mxu0 %v6212
          %v10016 = vpop.f32.mrf.mxu0
          %v10017 = vadd.f32 %v10004, %v10016
          %v10018 = vpop.f32.mrf.mxu0
          %10019 = vdwg.mxu0
          %10020 = vmatpush.bf16.msra.mxu0 %v8536
          %10021 = vmatpush.bf16.msra.mxu0 %v8532
          %10022 = vmatpush.bf16.msra.mxu0 %v8528
          %10023 = vmatpush.bf16.msra.mxu0 %v8524
          %10024 = vmatpush.bf16.msra.mxu0 %v8520
          %10025 = vmatpush.bf16.msra.mxu0 %v8516
          %10026 = vmatpush.bf16.msra.mxu0 %v8512
          %10027 = vmatpush.bf16.msra.mxu0 %v8508
          %10028 = vmatmul.bf16.gmra.mxu0 %v6213
          %v10029 = vpop.f32.mrf.mxu0
          %v10030 = vadd.f32 %v10017, %v10029
          %v10031 = vpop.f32.mrf.mxu0
          %10032 = vdwg.mxu0
          %10033 = vmatpush.bf16.msra.mxu0 %v8568
          %10034 = vmatpush.bf16.msra.mxu0 %v8564
          %10035 = vmatpush.bf16.msra.mxu0 %v8560
          %10036 = vmatpush.bf16.msra.mxu0 %v8556
          %10037 = vmatpush.bf16.msra.mxu0 %v8552
          %10038 = vmatpush.bf16.msra.mxu0 %v8548
          %10039 = vmatpush.bf16.msra.mxu0 %v8544
          %10040 = vmatpush.bf16.msra.mxu0 %v8540
          %10041 = vmatmul.bf16.gmra.mxu0 %v6214
          %v10042 = vpop.f32.mrf.mxu0
          %v10043 = vadd.f32 %v10030, %v10042
          %v10044 = vpop.f32.mrf.mxu0
          %10045 = vdwg.mxu0
          %10046 = vmatpush.bf16.msra.mxu0 %v8600
          %10047 = vmatpush.bf16.msra.mxu0 %v8596
          %10048 = vmatpush.bf16.msra.mxu0 %v8592
          %10049 = vmatpush.bf16.msra.mxu0 %v8588
          %10050 = vmatpush.bf16.msra.mxu0 %v8584
          %10051 = vmatpush.bf16.msra.mxu0 %v8580
          %10052 = vmatpush.bf16.msra.mxu0 %v8576
          %10053 = vmatpush.bf16.msra.mxu0 %v8572
          %10054 = vmatmul.bf16.gmra.mxu0 %v6215
          %v10055 = vpop.f32.mrf.mxu0
          %v10056 = vadd.f32 %v10043, %v10055
          %v10057 = vpop.f32.mrf.mxu0
          %10058 = vdwg.mxu0
          %10059 = vmatpush.bf16.msra.mxu0 %v8632
          %10060 = vmatpush.bf16.msra.mxu0 %v8628
          %10061 = vmatpush.bf16.msra.mxu0 %v8624
          %10062 = vmatpush.bf16.msra.mxu0 %v8620
          %10063 = vmatpush.bf16.msra.mxu0 %v8616
          %10064 = vmatpush.bf16.msra.mxu0 %v8612
          %10065 = vmatpush.bf16.msra.mxu0 %v8608
          %10066 = vmatpush.bf16.msra.mxu0 %v8604
          %10067 = vmatmul.bf16.gmra.mxu0 %v6216
          %v10068 = vpop.f32.mrf.mxu0
          %v10069 = vadd.f32 %v10056, %v10068
          %v10070 = vpop.f32.mrf.mxu0
          %10071 = vdwg.mxu0
          %10072 = vmatpush.bf16.msra.mxu0 %v8664
          %10073 = vmatpush.bf16.msra.mxu0 %v8660
          %10074 = vmatpush.bf16.msra.mxu0 %v8656
          %10075 = vmatpush.bf16.msra.mxu0 %v8652
          %10076 = vmatpush.bf16.msra.mxu0 %v8648
          %10077 = vmatpush.bf16.msra.mxu0 %v8644
          %10078 = vmatpush.bf16.msra.mxu0 %v8640
          %10079 = vmatpush.bf16.msra.mxu0 %v8636
          %10080 = vmatmul.bf16.gmra.mxu0 %v6217
          %v10081 = vpop.f32.mrf.mxu0
          %v10082 = vadd.f32 %v10069, %v10081
          %v10083 = vpop.f32.mrf.mxu0
          %10084 = vdwg.mxu0
          %10085 = vmatpush.bf16.msra.mxu0 %v8696
          %10086 = vmatpush.bf16.msra.mxu0 %v8692
          %10087 = vmatpush.bf16.msra.mxu0 %v8688
          %10088 = vmatpush.bf16.msra.mxu0 %v8684
          %10089 = vmatpush.bf16.msra.mxu0 %v8680
          %10090 = vmatpush.bf16.msra.mxu0 %v8676
          %10091 = vmatpush.bf16.msra.mxu0 %v8672
          %10092 = vmatpush.bf16.msra.mxu0 %v8668
          %10093 = vmatmul.bf16.gmra.mxu0 %v6218
          %v10094 = vpop.f32.mrf.mxu0
          %v10095 = vadd.f32 %v10082, %v10094
          %v10096 = vpop.f32.mrf.mxu0
          %10097 = vdwg.mxu0
          %10098 = vmatpush.bf16.msra.mxu0 %v8728
          %10099 = vmatpush.bf16.msra.mxu0 %v8724
          %10100 = vmatpush.bf16.msra.mxu0 %v8720
          %10101 = vmatpush.bf16.msra.mxu0 %v8716
          %10102 = vmatpush.bf16.msra.mxu0 %v8712
          %10103 = vmatpush.bf16.msra.mxu0 %v8708
          %10104 = vmatpush.bf16.msra.mxu0 %v8704
          %10105 = vmatpush.bf16.msra.mxu0 %v8700
          %10106 = vmatmul.bf16.gmra.mxu0 %v6219
          %v10107 = vpop.f32.mrf.mxu0
          %v10108 = vadd.f32 %v10095, %v10107
          %v10109 = vpop.f32.mrf.mxu0
          %10110 = vdwg.mxu0
          %10111 = vmatpush.bf16.msra.mxu0 %v8760
          %10112 = vmatpush.bf16.msra.mxu0 %v8756
          %10113 = vmatpush.bf16.msra.mxu0 %v8752
          %10114 = vmatpush.bf16.msra.mxu0 %v8748
          %10115 = vmatpush.bf16.msra.mxu0 %v8744
          %10116 = vmatpush.bf16.msra.mxu0 %v8740
          %10117 = vmatpush.bf16.msra.mxu0 %v8736
          %10118 = vmatpush.bf16.msra.mxu0 %v8732
          %10119 = vmatmul.bf16.gmra.mxu0 %v6220
          %v10120 = vpop.f32.mrf.mxu0
          %v10121 = vadd.f32 %v10108, %v10120
          %v10122 = vpop.f32.mrf.mxu0
          %10123 = vdwg.mxu0
          %10124 = vmatpush.bf16.msra.mxu0 %v8792
          %10125 = vmatpush.bf16.msra.mxu0 %v8788
          %10126 = vmatpush.bf16.msra.mxu0 %v8784
          %10127 = vmatpush.bf16.msra.mxu0 %v8780
          %10128 = vmatpush.bf16.msra.mxu0 %v8776
          %10129 = vmatpush.bf16.msra.mxu0 %v8772
          %10130 = vmatpush.bf16.msra.mxu0 %v8768
          %10131 = vmatpush.bf16.msra.mxu0 %v8764
          %10132 = vmatmul.bf16.gmra.mxu0 %v6221
          %v10133 = vpop.f32.mrf.mxu0
          %v10134 = vadd.f32 %v10121, %v10133
          %v10135 = vpop.f32.mrf.mxu0
          %10136 = vdwg.mxu0
          %v10137 = vmax.f32 %v9510, 0.0
          %v10138 = vmax.f32 %v9718, 0.0
          %v10139 = vmax.f32 %v9926, 0.0
          %v10140 = vmax.f32 %v10134, 0.0
          %v10141 = vpack.c.bf16 %v10137, %v10137
          %v10142 = vpack.c.bf16 %v10138, %v10138
          %v10143 = vpack.c.bf16 %v10139, %v10139
          %v10144 = vpack.c.bf16 %v10140, %v10140
          %v10145 = vld [vmem:[%s10] sm:$0xff]
          %v10146 = vld [vmem:[%s10 + $0x8] sm:$0xff]
          %v10147 = vld [vmem:[%s10 + $0x10] sm:$0xff]
          %v10148 = vld [vmem:[%s10 + $0x18] sm:$0xff]
          %v10149 = vld [vmem:[%s10 + $0x20] sm:$0xff]
          %v10150 = vld [vmem:[%s10 + $0x28] sm:$0xff]
          %v10151 = vld [vmem:[%s10 + $0x30] sm:$0xff]
          %v10152 = vld [vmem:[%s10 + $0x38] sm:$0xff]
          %v10153 = vld [vmem:[%s10 + $0x40] sm:$0xff]
          %v10154 = vld [vmem:[%s10 + $0x48] sm:$0xff]
          %v10155 = vld [vmem:[%s10 + $0x50] sm:$0xff]
          %v10156 = vld [vmem:[%s10 + $0x58] sm:$0xff]
          %v10157 = vld [vmem:[%s10 + $0x60] sm:$0xff]
          %v10158 = vld [vmem:[%s10 + $0x68] sm:$0xff]
          %v10159 = vld [vmem:[%s10 + $0x70] sm:$0xff]
          %v10160 = vld [vmem:[%s10 + $0x78] sm:$0xff]
          %v10161 = vld [vmem:[%s10 + $0x80] sm:$0xff]
          %v10162 = vld [vmem:[%s10 + $0x88] sm:$0xff]
          %v10163 = vld [vmem:[%s10 + $0x90] sm:$0xff]
          %v10164 = vld [vmem:[%s10 + $0x98] sm:$0xff]
          %v10165 = vld [vmem:[%s10 + $0xa0] sm:$0xff]
          %v10166 = vld [vmem:[%s10 + $0xa8] sm:$0xff]
          %v10167 = vld [vmem:[%s10 + $0xb0] sm:$0xff]
          %v10168 = vld [vmem:[%s10 + $0xb8] sm:$0xff]
          %v10169 = vld [vmem:[%s10 + $0xc0] sm:$0xff]
          %v10170 = vld [vmem:[%s10 + $0xc8] sm:$0xff]
          %v10171 = vld [vmem:[%s10 + $0xd0] sm:$0xff]
          %v10172 = vld [vmem:[%s10 + $0xd8] sm:$0xff]
          %v10173 = vld [vmem:[%s10 + $0xe0] sm:$0xff]
          %v10174 = vld [vmem:[%s10 + $0xe8] sm:$0xff]
          %v10175 = vld [vmem:[%s10 + $0xf0] sm:$0xff]
          %v10176 = vld [vmem:[%s10 + $0xf8] sm:$0xff]
          %v10177 = vld [vmem:[%s10 + $0x100] sm:$0xff]
          %v10178 = vld [vmem:[%s10 + $0x108] sm:$0xff]
          %v10179 = vld [vmem:[%s10 + $0x110] sm:$0xff]
          %v10180 = vld [vmem:[%s10 + $0x118] sm:$0xff]
          %v10181 = vld [vmem:[%s10 + $0x120] sm:$0xff]
          %v10182 = vld [vmem:[%s10 + $0x128] sm:$0xff]
          %v10183 = vld [vmem:[%s10 + $0x130] sm:$0xff]
          %v10184 = vld [vmem:[%s10 + $0x138] sm:$0xff]
          %v10185 = vld [vmem:[%s10 + $0x140] sm:$0xff]
          %v10186 = vld [vmem:[%s10 + $0x148] sm:$0xff]
          %v10187 = vld [vmem:[%s10 + $0x150] sm:$0xff]
          %v10188 = vld [vmem:[%s10 + $0x158] sm:$0xff]
          %v10189 = vld [vmem:[%s10 + $0x160] sm:$0xff]
          %v10190 = vld [vmem:[%s10 + $0x168] sm:$0xff]
          %v10191 = vld [vmem:[%s10 + $0x170] sm:$0xff]
          %v10192 = vld [vmem:[%s10 + $0x178] sm:$0xff]
          %v10193 = vld [vmem:[%s10 + $0x180] sm:$0xff]
          %v10194 = vld [vmem:[%s10 + $0x188] sm:$0xff]
          %v10195 = vld [vmem:[%s10 + $0x190] sm:$0xff]
          %v10196 = vld [vmem:[%s10 + $0x198] sm:$0xff]
          %v10197 = vld [vmem:[%s10 + $0x1a0] sm:$0xff]
          %v10198 = vld [vmem:[%s10 + $0x1a8] sm:$0xff]
          %v10199 = vld [vmem:[%s10 + $0x1b0] sm:$0xff]
          %v10200 = vld [vmem:[%s10 + $0x1b8] sm:$0xff]
          %v10201 = vld [vmem:[%s10 + $0x1c0] sm:$0xff]
          %v10202 = vld [vmem:[%s10 + $0x1c8] sm:$0xff]
          %v10203 = vld [vmem:[%s10 + $0x1d0] sm:$0xff]
          %v10204 = vld [vmem:[%s10 + $0x1d8] sm:$0xff]
          %v10205 = vld [vmem:[%s10 + $0x1e0] sm:$0xff]
          %v10206 = vld [vmem:[%s10 + $0x1e8] sm:$0xff]
          %v10207 = vld [vmem:[%s10 + $0x1f0] sm:$0xff]
          %v10208 = vld [vmem:[%s10 + $0x1f8] sm:$0xff]
          %v10209 = vld [vmem:[%s10 + $0x200] sm:$0xff]
          %v10210 = vld [vmem:[%s10 + $0x208] sm:$0xff]
          %v10211 = vld [vmem:[%s10 + $0x210] sm:$0xff]
          %v10212 = vld [vmem:[%s10 + $0x218] sm:$0xff]
          %v10213 = vld [vmem:[%s10 + $0x220] sm:$0xff]
          %v10214 = vld [vmem:[%s10 + $0x228] sm:$0xff]
          %v10215 = vld [vmem:[%s10 + $0x230] sm:$0xff]
          %v10216 = vld [vmem:[%s10 + $0x238] sm:$0xff]
          %v10217 = vld [vmem:[%s10 + $0x240] sm:$0xff]
          %v10218 = vld [vmem:[%s10 + $0x248] sm:$0xff]
          %v10219 = vld [vmem:[%s10 + $0x250] sm:$0xff]
          %v10220 = vld [vmem:[%s10 + $0x258] sm:$0xff]
          %v10221 = vld [vmem:[%s10 + $0x260] sm:$0xff]
          %v10222 = vld [vmem:[%s10 + $0x268] sm:$0xff]
          %v10223 = vld [vmem:[%s10 + $0x270] sm:$0xff]
          %v10224 = vld [vmem:[%s10 + $0x278] sm:$0xff]
          %v10225 = vld [vmem:[%s10 + $0x280] sm:$0xff]
          %v10226 = vld [vmem:[%s10 + $0x288] sm:$0xff]
          %v10227 = vld [vmem:[%s10 + $0x290] sm:$0xff]
          %v10228 = vld [vmem:[%s10 + $0x298] sm:$0xff]
          %v10229 = vld [vmem:[%s10 + $0x2a0] sm:$0xff]
          %v10230 = vld [vmem:[%s10 + $0x2a8] sm:$0xff]
          %v10231 = vld [vmem:[%s10 + $0x2b0] sm:$0xff]
          %v10232 = vld [vmem:[%s10 + $0x2b8] sm:$0xff]
          %v10233 = vld [vmem:[%s10 + $0x2c0] sm:$0xff]
          %v10234 = vld [vmem:[%s10 + $0x2c8] sm:$0xff]
          %v10235 = vld [vmem:[%s10 + $0x2d0] sm:$0xff]
          %v10236 = vld [vmem:[%s10 + $0x2d8] sm:$0xff]
          %v10237 = vld [vmem:[%s10 + $0x2e0] sm:$0xff]
          %v10238 = vld [vmem:[%s10 + $0x2e8] sm:$0xff]
          %v10239 = vld [vmem:[%s10 + $0x2f0] sm:$0xff]
          %v10240 = vld [vmem:[%s10 + $0x2f8] sm:$0xff]
          %v10241 = vld [vmem:[%s10 + $0x300] sm:$0xff]
          %v10242 = vld [vmem:[%s10 + $0x308] sm:$0xff]
          %v10243 = vld [vmem:[%s10 + $0x310] sm:$0xff]
          %v10244 = vld [vmem:[%s10 + $0x318] sm:$0xff]
          %v10245 = vld [vmem:[%s10 + $0x320] sm:$0xff]
          %v10246 = vld [vmem:[%s10 + $0x328] sm:$0xff]
          %v10247 = vld [vmem:[%s10 + $0x330] sm:$0xff]
          %v10248 = vld [vmem:[%s10 + $0x338] sm:$0xff]
          %v10249 = vld [vmem:[%s10 + $0x340] sm:$0xff]
          %v10250 = vld [vmem:[%s10 + $0x348] sm:$0xff]
          %v10251 = vld [vmem:[%s10 + $0x350] sm:$0xff]
          %v10252 = vld [vmem:[%s10 + $0x358] sm:$0xff]
          %v10253 = vld [vmem:[%s10 + $0x360] sm:$0xff]
          %v10254 = vld [vmem:[%s10 + $0x368] sm:$0xff]
          %v10255 = vld [vmem:[%s10 + $0x370] sm:$0xff]
          %v10256 = vld [vmem:[%s10 + $0x378] sm:$0xff]
          %v10257 = vld [vmem:[%s10 + $0x380] sm:$0xff]
          %v10258 = vld [vmem:[%s10 + $0x388] sm:$0xff]
          %v10259 = vld [vmem:[%s10 + $0x390] sm:$0xff]
          %v10260 = vld [vmem:[%s10 + $0x398] sm:$0xff]
          %v10261 = vld [vmem:[%s10 + $0x3a0] sm:$0xff]
          %v10262 = vld [vmem:[%s10 + $0x3a8] sm:$0xff]
          %v10263 = vld [vmem:[%s10 + $0x3b0] sm:$0xff]
          %v10264 = vld [vmem:[%s10 + $0x3b8] sm:$0xff]
          %v10265 = vld [vmem:[%s10 + $0x3c0] sm:$0xff]
          %v10266 = vld [vmem:[%s10 + $0x3c8] sm:$0xff]
          %v10267 = vld [vmem:[%s10 + $0x3d0] sm:$0xff]
          %v10268 = vld [vmem:[%s10 + $0x3d8] sm:$0xff]
          %v10269 = vld [vmem:[%s10 + $0x3e0] sm:$0xff]
          %v10270 = vld [vmem:[%s10 + $0x3e8] sm:$0xff]
          %v10271 = vld [vmem:[%s10 + $0x3f0] sm:$0xff]
          %v10272 = vld [vmem:[%s10 + $0x3f8] sm:$0xff]
          %s10273 = scalar_lea.vmem %s14, 3
          %v10274 = vld [vmem:[%s10273] ss:$8 sm:$0xf]
          %v10276 = vperm.slane %v10274, 0
          %v10277 = vperm.slane %v10274, 1
          %v10278 = vperm.slane %v10274, 2
          %v10279 = vperm.slane %v10274, 3
          %v10412 = vunpack.c.l.b16 %v10145
          %v10413 = vunpack.c.h.b16 %v10145
          %v10414 = vunpack.c.l.b16 %v10146
          %v10415 = vunpack.c.h.b16 %v10146
          %v10416 = vunpack.c.l.b16 %v10147
          %v10417 = vunpack.c.h.b16 %v10147
          %v10418 = vunpack.c.l.b16 %v10148
          %v10419 = vunpack.c.h.b16 %v10148
          %v10420 = vunpack.c.l.b16 %v10149
          %v10421 = vunpack.c.h.b16 %v10149
          %v10422 = vunpack.c.l.b16 %v10150
          %v10423 = vunpack.c.h.b16 %v10150
          %v10424 = vunpack.c.l.b16 %v10151
          %v10425 = vunpack.c.h.b16 %v10151
          %v10426 = vunpack.c.l.b16 %v10152
          %v10427 = vunpack.c.h.b16 %v10152
          %v10428 = vunpack.c.l.b16 %v10153
          %v10429 = vunpack.c.h.b16 %v10153
          %v10430 = vunpack.c.l.b16 %v10154
          %v10431 = vunpack.c.h.b16 %v10154
          %v10432 = vunpack.c.l.b16 %v10155
          %v10433 = vunpack.c.h.b16 %v10155
          %v10434 = vunpack.c.l.b16 %v10156
          %v10435 = vunpack.c.h.b16 %v10156
          %v10436 = vunpack.c.l.b16 %v10157
          %v10437 = vunpack.c.h.b16 %v10157
          %v10438 = vunpack.c.l.b16 %v10158
          %v10439 = vunpack.c.h.b16 %v10158
          %v10440 = vunpack.c.l.b16 %v10159
          %v10441 = vunpack.c.h.b16 %v10159
          %v10442 = vunpack.c.l.b16 %v10160
          %v10443 = vunpack.c.h.b16 %v10160
          %v10444 = vunpack.c.l.b16 %v10161
          %v10445 = vunpack.c.h.b16 %v10161
          %v10446 = vunpack.c.l.b16 %v10162
          %v10447 = vunpack.c.h.b16 %v10162
          %v10448 = vunpack.c.l.b16 %v10163
          %v10449 = vunpack.c.h.b16 %v10163
          %v10450 = vunpack.c.l.b16 %v10164
          %v10451 = vunpack.c.h.b16 %v10164
          %v10452 = vunpack.c.l.b16 %v10165
          %v10453 = vunpack.c.h.b16 %v10165
          %v10454 = vunpack.c.l.b16 %v10166
          %v10455 = vunpack.c.h.b16 %v10166
          %v10456 = vunpack.c.l.b16 %v10167
          %v10457 = vunpack.c.h.b16 %v10167
          %v10458 = vunpack.c.l.b16 %v10168
          %v10459 = vunpack.c.h.b16 %v10168
          %v10460 = vunpack.c.l.b16 %v10169
          %v10461 = vunpack.c.h.b16 %v10169
          %v10462 = vunpack.c.l.b16 %v10170
          %v10463 = vunpack.c.h.b16 %v10170
          %v10464 = vunpack.c.l.b16 %v10171
          %v10465 = vunpack.c.h.b16 %v10171
          %v10466 = vunpack.c.l.b16 %v10172
          %v10467 = vunpack.c.h.b16 %v10172
          %v10468 = vunpack.c.l.b16 %v10173
          %v10469 = vunpack.c.h.b16 %v10173
          %v10470 = vunpack.c.l.b16 %v10174
          %v10471 = vunpack.c.h.b16 %v10174
          %v10472 = vunpack.c.l.b16 %v10175
          %v10473 = vunpack.c.h.b16 %v10175
          %v10474 = vunpack.c.l.b16 %v10176
          %v10475 = vunpack.c.h.b16 %v10176
          %v10476 = vunpack.c.l.b16 %v10177
          %v10477 = vunpack.c.h.b16 %v10177
          %v10478 = vunpack.c.l.b16 %v10178
          %v10479 = vunpack.c.h.b16 %v10178
          %v10480 = vunpack.c.l.b16 %v10179
          %v10481 = vunpack.c.h.b16 %v10179
          %v10482 = vunpack.c.l.b16 %v10180
          %v10483 = vunpack.c.h.b16 %v10180
          %v10484 = vunpack.c.l.b16 %v10181
          %v10485 = vunpack.c.h.b16 %v10181
          %v10486 = vunpack.c.l.b16 %v10182
          %v10487 = vunpack.c.h.b16 %v10182
          %v10488 = vunpack.c.l.b16 %v10183
          %v10489 = vunpack.c.h.b16 %v10183
          %v10490 = vunpack.c.l.b16 %v10184
          %v10491 = vunpack.c.h.b16 %v10184
          %v10492 = vunpack.c.l.b16 %v10185
          %v10493 = vunpack.c.h.b16 %v10185
          %v10494 = vunpack.c.l.b16 %v10186
          %v10495 = vunpack.c.h.b16 %v10186
          %v10496 = vunpack.c.l.b16 %v10187
          %v10497 = vunpack.c.h.b16 %v10187
          %v10498 = vunpack.c.l.b16 %v10188
          %v10499 = vunpack.c.h.b16 %v10188
          %v10500 = vunpack.c.l.b16 %v10189
          %v10501 = vunpack.c.h.b16 %v10189
          %v10502 = vunpack.c.l.b16 %v10190
          %v10503 = vunpack.c.h.b16 %v10190
          %v10504 = vunpack.c.l.b16 %v10191
          %v10505 = vunpack.c.h.b16 %v10191
          %v10506 = vunpack.c.l.b16 %v10192
          %v10507 = vunpack.c.h.b16 %v10192
          %v10508 = vunpack.c.l.b16 %v10193
          %v10509 = vunpack.c.h.b16 %v10193
          %v10510 = vunpack.c.l.b16 %v10194
          %v10511 = vunpack.c.h.b16 %v10194
          %v10512 = vunpack.c.l.b16 %v10195
          %v10513 = vunpack.c.h.b16 %v10195
          %v10514 = vunpack.c.l.b16 %v10196
          %v10515 = vunpack.c.h.b16 %v10196
          %v10516 = vunpack.c.l.b16 %v10197
          %v10517 = vunpack.c.h.b16 %v10197
          %v10518 = vunpack.c.l.b16 %v10198
          %v10519 = vunpack.c.h.b16 %v10198
          %v10520 = vunpack.c.l.b16 %v10199
          %v10521 = vunpack.c.h.b16 %v10199
          %v10522 = vunpack.c.l.b16 %v10200
          %v10523 = vunpack.c.h.b16 %v10200
          %v10524 = vunpack.c.l.b16 %v10201
          %v10525 = vunpack.c.h.b16 %v10201
          %v10526 = vunpack.c.l.b16 %v10202
          %v10527 = vunpack.c.h.b16 %v10202
          %v10528 = vunpack.c.l.b16 %v10203
          %v10529 = vunpack.c.h.b16 %v10203
          %v10530 = vunpack.c.l.b16 %v10204
          %v10531 = vunpack.c.h.b16 %v10204
          %v10532 = vunpack.c.l.b16 %v10205
          %v10533 = vunpack.c.h.b16 %v10205
          %v10534 = vunpack.c.l.b16 %v10206
          %v10535 = vunpack.c.h.b16 %v10206
          %v10536 = vunpack.c.l.b16 %v10207
          %v10537 = vunpack.c.h.b16 %v10207
          %v10538 = vunpack.c.l.b16 %v10208
          %v10539 = vunpack.c.h.b16 %v10208
          %v10540 = vunpack.c.l.b16 %v10209
          %v10541 = vunpack.c.h.b16 %v10209
          %v10542 = vunpack.c.l.b16 %v10210
          %v10543 = vunpack.c.h.b16 %v10210
          %v10544 = vunpack.c.l.b16 %v10211
          %v10545 = vunpack.c.h.b16 %v10211
          %v10546 = vunpack.c.l.b16 %v10212
          %v10547 = vunpack.c.h.b16 %v10212
          %v10548 = vunpack.c.l.b16 %v10213
          %v10549 = vunpack.c.h.b16 %v10213
          %v10550 = vunpack.c.l.b16 %v10214
          %v10551 = vunpack.c.h.b16 %v10214
          %v10552 = vunpack.c.l.b16 %v10215
          %v10553 = vunpack.c.h.b16 %v10215
          %v10554 = vunpack.c.l.b16 %v10216
          %v10555 = vunpack.c.h.b16 %v10216
          %v10556 = vunpack.c.l.b16 %v10217
          %v10557 = vunpack.c.h.b16 %v10217
          %v10558 = vunpack.c.l.b16 %v10218
          %v10559 = vunpack.c.h.b16 %v10218
          %v10560 = vunpack.c.l.b16 %v10219
          %v10561 = vunpack.c.h.b16 %v10219
          %v10562 = vunpack.c.l.b16 %v10220
          %v10563 = vunpack.c.h.b16 %v10220
          %v10564 = vunpack.c.l.b16 %v10221
          %v10565 = vunpack.c.h.b16 %v10221
          %v10566 = vunpack.c.l.b16 %v10222
          %v10567 = vunpack.c.h.b16 %v10222
          %v10568 = vunpack.c.l.b16 %v10223
          %v10569 = vunpack.c.h.b16 %v10223
          %v10570 = vunpack.c.l.b16 %v10224
          %v10571 = vunpack.c.h.b16 %v10224
          %v10572 = vunpack.c.l.b16 %v10225
          %v10573 = vunpack.c.h.b16 %v10225
          %v10574 = vunpack.c.l.b16 %v10226
          %v10575 = vunpack.c.h.b16 %v10226
          %v10576 = vunpack.c.l.b16 %v10227
          %v10577 = vunpack.c.h.b16 %v10227
          %v10578 = vunpack.c.l.b16 %v10228
          %v10579 = vunpack.c.h.b16 %v10228
          %v10580 = vunpack.c.l.b16 %v10229
          %v10581 = vunpack.c.h.b16 %v10229
          %v10582 = vunpack.c.l.b16 %v10230
          %v10583 = vunpack.c.h.b16 %v10230
          %v10584 = vunpack.c.l.b16 %v10231
          %v10585 = vunpack.c.h.b16 %v10231
          %v10586 = vunpack.c.l.b16 %v10232
          %v10587 = vunpack.c.h.b16 %v10232
          %v10588 = vunpack.c.l.b16 %v10233
          %v10589 = vunpack.c.h.b16 %v10233
          %v10590 = vunpack.c.l.b16 %v10234
          %v10591 = vunpack.c.h.b16 %v10234
          %v10592 = vunpack.c.l.b16 %v10235
          %v10593 = vunpack.c.h.b16 %v10235
          %v10594 = vunpack.c.l.b16 %v10236
          %v10595 = vunpack.c.h.b16 %v10236
          %v10596 = vunpack.c.l.b16 %v10237
          %v10597 = vunpack.c.h.b16 %v10237
          %v10598 = vunpack.c.l.b16 %v10238
          %v10599 = vunpack.c.h.b16 %v10238
          %v10600 = vunpack.c.l.b16 %v10239
          %v10601 = vunpack.c.h.b16 %v10239
          %v10602 = vunpack.c.l.b16 %v10240
          %v10603 = vunpack.c.h.b16 %v10240
          %v10604 = vunpack.c.l.b16 %v10241
          %v10605 = vunpack.c.h.b16 %v10241
          %v10606 = vunpack.c.l.b16 %v10242
          %v10607 = vunpack.c.h.b16 %v10242
          %v10608 = vunpack.c.l.b16 %v10243
          %v10609 = vunpack.c.h.b16 %v10243
          %v10610 = vunpack.c.l.b16 %v10244
          %v10611 = vunpack.c.h.b16 %v10244
          %v10612 = vunpack.c.l.b16 %v10245
          %v10613 = vunpack.c.h.b16 %v10245
          %v10614 = vunpack.c.l.b16 %v10246
          %v10615 = vunpack.c.h.b16 %v10246
          %v10616 = vunpack.c.l.b16 %v10247
          %v10617 = vunpack.c.h.b16 %v10247
          %v10618 = vunpack.c.l.b16 %v10248
          %v10619 = vunpack.c.h.b16 %v10248
          %v10620 = vunpack.c.l.b16 %v10249
          %v10621 = vunpack.c.h.b16 %v10249
          %v10622 = vunpack.c.l.b16 %v10250
          %v10623 = vunpack.c.h.b16 %v10250
          %v10624 = vunpack.c.l.b16 %v10251
          %v10625 = vunpack.c.h.b16 %v10251
          %v10626 = vunpack.c.l.b16 %v10252
          %v10627 = vunpack.c.h.b16 %v10252
          %v10628 = vunpack.c.l.b16 %v10253
          %v10629 = vunpack.c.h.b16 %v10253
          %v10630 = vunpack.c.l.b16 %v10254
          %v10631 = vunpack.c.h.b16 %v10254
          %v10632 = vunpack.c.l.b16 %v10255
          %v10633 = vunpack.c.h.b16 %v10255
          %v10634 = vunpack.c.l.b16 %v10256
          %v10635 = vunpack.c.h.b16 %v10256
          %v10636 = vunpack.c.l.b16 %v10257
          %v10637 = vunpack.c.h.b16 %v10257
          %v10638 = vunpack.c.l.b16 %v10258
          %v10639 = vunpack.c.h.b16 %v10258
          %v10640 = vunpack.c.l.b16 %v10259
          %v10641 = vunpack.c.h.b16 %v10259
          %v10642 = vunpack.c.l.b16 %v10260
          %v10643 = vunpack.c.h.b16 %v10260
          %v10644 = vunpack.c.l.b16 %v10261
          %v10645 = vunpack.c.h.b16 %v10261
          %v10646 = vunpack.c.l.b16 %v10262
          %v10647 = vunpack.c.h.b16 %v10262
          %v10648 = vunpack.c.l.b16 %v10263
          %v10649 = vunpack.c.h.b16 %v10263
          %v10650 = vunpack.c.l.b16 %v10264
          %v10651 = vunpack.c.h.b16 %v10264
          %v10652 = vunpack.c.l.b16 %v10265
          %v10653 = vunpack.c.h.b16 %v10265
          %v10654 = vunpack.c.l.b16 %v10266
          %v10655 = vunpack.c.h.b16 %v10266
          %v10656 = vunpack.c.l.b16 %v10267
          %v10657 = vunpack.c.h.b16 %v10267
          %v10658 = vunpack.c.l.b16 %v10268
          %v10659 = vunpack.c.h.b16 %v10268
          %v10660 = vunpack.c.l.b16 %v10269
          %v10661 = vunpack.c.h.b16 %v10269
          %v10662 = vunpack.c.l.b16 %v10270
          %v10663 = vunpack.c.h.b16 %v10270
          %v10664 = vunpack.c.l.b16 %v10271
          %v10665 = vunpack.c.h.b16 %v10271
          %v10666 = vunpack.c.l.b16 %v10272
          %v10667 = vunpack.c.h.b16 %v10272
          %v10668 = vpack.c.b16 %v10416, %v10412
          %v10669 = vpack.c.b16 %v10417, %v10413
          %v10670 = vpack.c.b16 %v10418, %v10414
          %v10671 = vpack.c.b16 %v10419, %v10415
          %v10672 = vpack.c.b16 %v10424, %v10420
          %v10673 = vpack.c.b16 %v10425, %v10421
          %v10674 = vpack.c.b16 %v10426, %v10422
          %v10675 = vpack.c.b16 %v10427, %v10423
          %v10676 = vpack.c.b16 %v10432, %v10428
          %v10677 = vpack.c.b16 %v10433, %v10429
          %v10678 = vpack.c.b16 %v10434, %v10430
          %v10679 = vpack.c.b16 %v10435, %v10431
          %v10680 = vpack.c.b16 %v10440, %v10436
          %v10681 = vpack.c.b16 %v10441, %v10437
          %v10682 = vpack.c.b16 %v10442, %v10438
          %v10683 = vpack.c.b16 %v10443, %v10439
          %v10684 = vpack.c.b16 %v10448, %v10444
          %v10685 = vpack.c.b16 %v10449, %v10445
          %v10686 = vpack.c.b16 %v10450, %v10446
          %v10687 = vpack.c.b16 %v10451, %v10447
          %v10688 = vpack.c.b16 %v10456, %v10452
          %v10689 = vpack.c.b16 %v10457, %v10453
          %v10690 = vpack.c.b16 %v10458, %v10454
          %v10691 = vpack.c.b16 %v10459, %v10455
          %v10692 = vpack.c.b16 %v10464, %v10460
          %v10693 = vpack.c.b16 %v10465, %v10461
          %v10694 = vpack.c.b16 %v10466, %v10462
          %v10695 = vpack.c.b16 %v10467, %v10463
          %v10696 = vpack.c.b16 %v10472, %v10468
          %v10697 = vpack.c.b16 %v10473, %v10469
          %v10698 = vpack.c.b16 %v10474, %v10470
          %v10699 = vpack.c.b16 %v10475, %v10471
          %v10700 = vpack.c.b16 %v10480, %v10476
          %v10701 = vpack.c.b16 %v10481, %v10477
          %v10702 = vpack.c.b16 %v10482, %v10478
          %v10703 = vpack.c.b16 %v10483, %v10479
          %v10704 = vpack.c.b16 %v10488, %v10484
          %v10705 = vpack.c.b16 %v10489, %v10485
          %v10706 = vpack.c.b16 %v10490, %v10486
          %v10707 = vpack.c.b16 %v10491, %v10487
          %v10708 = vpack.c.b16 %v10496, %v10492
          %v10709 = vpack.c.b16 %v10497, %v10493
          %v10710 = vpack.c.b16 %v10498, %v10494
          %v10711 = vpack.c.b16 %v10499, %v10495
          %v10712 = vpack.c.b16 %v10504, %v10500
          %v10713 = vpack.c.b16 %v10505, %v10501
          %v10714 = vpack.c.b16 %v10506, %v10502
          %v10715 = vpack.c.b16 %v10507, %v10503
          %v10716 = vpack.c.b16 %v10512, %v10508
          %v10717 = vpack.c.b16 %v10513, %v10509
          %v10718 = vpack.c.b16 %v10514, %v10510
          %v10719 = vpack.c.b16 %v10515, %v10511
          %v10720 = vpack.c.b16 %v10520, %v10516
          %v10721 = vpack.c.b16 %v10521, %v10517
          %v10722 = vpack.c.b16 %v10522, %v10518
          %v10723 = vpack.c.b16 %v10523, %v10519
          %v10724 = vpack.c.b16 %v10528, %v10524
          %v10725 = vpack.c.b16 %v10529, %v10525
          %v10726 = vpack.c.b16 %v10530, %v10526
          %v10727 = vpack.c.b16 %v10531, %v10527
          %v10728 = vpack.c.b16 %v10536, %v10532
          %v10729 = vpack.c.b16 %v10537, %v10533
          %v10730 = vpack.c.b16 %v10538, %v10534
          %v10731 = vpack.c.b16 %v10539, %v10535
          %v10732 = vpack.c.b16 %v10544, %v10540
          %v10733 = vpack.c.b16 %v10545, %v10541
          %v10734 = vpack.c.b16 %v10546, %v10542
          %v10735 = vpack.c.b16 %v10547, %v10543
          %v10736 = vpack.c.b16 %v10552, %v10548
          %v10737 = vpack.c.b16 %v10553, %v10549
          %v10738 = vpack.c.b16 %v10554, %v10550
          %v10739 = vpack.c.b16 %v10555, %v10551
          %v10740 = vpack.c.b16 %v10560, %v10556
          %v10741 = vpack.c.b16 %v10561, %v10557
          %v10742 = vpack.c.b16 %v10562, %v10558
          %v10743 = vpack.c.b16 %v10563, %v10559
          %v10744 = vpack.c.b16 %v10568, %v10564
          %v10745 = vpack.c.b16 %v10569, %v10565
          %v10746 = vpack.c.b16 %v10570, %v10566
          %v10747 = vpack.c.b16 %v10571, %v10567
          %v10748 = vpack.c.b16 %v10576, %v10572
          %v10749 = vpack.c.b16 %v10577, %v10573
          %v10750 = vpack.c.b16 %v10578, %v10574
          %v10751 = vpack.c.b16 %v10579, %v10575
          %v10752 = vpack.c.b16 %v10584, %v10580
          %v10753 = vpack.c.b16 %v10585, %v10581
          %v10754 = vpack.c.b16 %v10586, %v10582
          %v10755 = vpack.c.b16 %v10587, %v10583
          %v10756 = vpack.c.b16 %v10592, %v10588
          %v10757 = vpack.c.b16 %v10593, %v10589
          %v10758 = vpack.c.b16 %v10594, %v10590
          %v10759 = vpack.c.b16 %v10595, %v10591
          %v10760 = vpack.c.b16 %v10600, %v10596
          %v10761 = vpack.c.b16 %v10601, %v10597
          %v10762 = vpack.c.b16 %v10602, %v10598
          %v10763 = vpack.c.b16 %v10603, %v10599
          %v10764 = vpack.c.b16 %v10608, %v10604
          %v10765 = vpack.c.b16 %v10609, %v10605
          %v10766 = vpack.c.b16 %v10610, %v10606
          %v10767 = vpack.c.b16 %v10611, %v10607
          %v10768 = vpack.c.b16 %v10616, %v10612
          %v10769 = vpack.c.b16 %v10617, %v10613
          %v10770 = vpack.c.b16 %v10618, %v10614
          %v10771 = vpack.c.b16 %v10619, %v10615
          %v10772 = vpack.c.b16 %v10624, %v10620
          %v10773 = vpack.c.b16 %v10625, %v10621
          %v10774 = vpack.c.b16 %v10626, %v10622
          %v10775 = vpack.c.b16 %v10627, %v10623
          %v10776 = vpack.c.b16 %v10632, %v10628
          %v10777 = vpack.c.b16 %v10633, %v10629
          %v10778 = vpack.c.b16 %v10634, %v10630
          %v10779 = vpack.c.b16 %v10635, %v10631
          %v10780 = vpack.c.b16 %v10640, %v10636
          %v10781 = vpack.c.b16 %v10641, %v10637
          %v10782 = vpack.c.b16 %v10642, %v10638
          %v10783 = vpack.c.b16 %v10643, %v10639
          %v10784 = vpack.c.b16 %v10648, %v10644
          %v10785 = vpack.c.b16 %v10649, %v10645
          %v10786 = vpack.c.b16 %v10650, %v10646
          %v10787 = vpack.c.b16 %v10651, %v10647
          %v10788 = vpack.c.b16 %v10656, %v10652
          %v10789 = vpack.c.b16 %v10657, %v10653
          %v10790 = vpack.c.b16 %v10658, %v10654
          %v10791 = vpack.c.b16 %v10659, %v10655
          %v10792 = vpack.c.b16 %v10664, %v10660
          %v10793 = vpack.c.b16 %v10665, %v10661
          %v10794 = vpack.c.b16 %v10666, %v10662
          %v10795 = vpack.c.b16 %v10667, %v10663
          %10924 = vmatpush.bf16.msra.mxu0 %v10696
          %10925 = vmatpush.bf16.msra.mxu0 %v10692
          %10926 = vmatpush.bf16.msra.mxu0 %v10688
          %10927 = vmatpush.bf16.msra.mxu0 %v10684
          %10928 = vmatpush.bf16.msra.mxu0 %v10680
          %10929 = vmatpush.bf16.msra.mxu0 %v10676
          %10930 = vmatpush.bf16.msra.mxu0 %v10672
          %10931 = vmatpush.bf16.msra.mxu0 %v10668
          %10932 = vmatmul.bf16.gmra.mxu0 %v10141
          %v10933 = vpop.f32.mrf.mxu0
          %v10934 = vadd.f32 %v10276, %v10933
          %v10935 = vpop.f32.mrf.mxu0
          %10936 = vdwg.mxu0
          %10937 = vmatpush.bf16.msra.mxu0 %v10728
          %10938 = vmatpush.bf16.msra.mxu0 %v10724
          %10939 = vmatpush.bf16.msra.mxu0 %v10720
          %10940 = vmatpush.bf16.msra.mxu0 %v10716
          %10941 = vmatpush.bf16.msra.mxu0 %v10712
          %10942 = vmatpush.bf16.msra.mxu0 %v10708
          %10943 = vmatpush.bf16.msra.mxu0 %v10704
          %10944 = vmatpush.bf16.msra.mxu0 %v10700
          %10945 = vmatmul.bf16.gmra.mxu0 %v10142
          %v10946 = vpop.f32.mrf.mxu0
          %v10947 = vadd.f32 %v10934, %v10946
          %v10948 = vpop.f32.mrf.mxu0
          %10949 = vdwg.mxu0
          %10950 = vmatpush.bf16.msra.mxu0 %v10760
          %10951 = vmatpush.bf16.msra.mxu0 %v10756
          %10952 = vmatpush.bf16.msra.mxu0 %v10752
          %10953 = vmatpush.bf16.msra.mxu0 %v10748
          %10954 = vmatpush.bf16.msra.mxu0 %v10744
          %10955 = vmatpush.bf16.msra.mxu0 %v10740
          %10956 = vmatpush.bf16.msra.mxu0 %v10736
          %10957 = vmatpush.bf16.msra.mxu0 %v10732
          %10958 = vmatmul.bf16.gmra.mxu0 %v10143
          %v10959 = vpop.f32.mrf.mxu0
          %v10960 = vadd.f32 %v10947, %v10959
          %v10961 = vpop.f32.mrf.mxu0
          %10962 = vdwg.mxu0
          %10963 = vmatpush.bf16.msra.mxu0 %v10792
          %10964 = vmatpush.bf16.msra.mxu0 %v10788
          %10965 = vmatpush.bf16.msra.mxu0 %v10784
          %10966 = vmatpush.bf16.msra.mxu0 %v10780
          %10967 = vmatpush.bf16.msra.mxu0 %v10776
          %10968 = vmatpush.bf16.msra.mxu0 %v10772
          %10969 = vmatpush.bf16.msra.mxu0 %v10768
          %10970 = vmatpush.bf16.msra.mxu0 %v10764
          %10971 = vmatmul.bf16.gmra.mxu0 %v10144
          %v10972 = vpop.f32.mrf.mxu0
          %v10973 = vadd.f32 %v10960, %v10972
          %v10974 = vpop.f32.mrf.mxu0
          %10975 = vdwg.mxu0
          %10976 = vmatpush.bf16.msra.mxu0 %v10697
          %10977 = vmatpush.bf16.msra.mxu0 %v10693
          %10978 = vmatpush.bf16.msra.mxu0 %v10689
          %10979 = vmatpush.bf16.msra.mxu0 %v10685
          %10980 = vmatpush.bf16.msra.mxu0 %v10681
          %10981 = vmatpush.bf16.msra.mxu0 %v10677
          %10982 = vmatpush.bf16.msra.mxu0 %v10673
          %10983 = vmatpush.bf16.msra.mxu0 %v10669
          %10984 = vmatmul.bf16.gmra.mxu0 %v10141
          %v10985 = vpop.f32.mrf.mxu0
          %v10986 = vadd.f32 %v10277, %v10985
          %v10987 = vpop.f32.mrf.mxu0
          %10988 = vdwg.mxu0
          %10989 = vmatpush.bf16.msra.mxu0 %v10729
          %10990 = vmatpush.bf16.msra.mxu0 %v10725
          %10991 = vmatpush.bf16.msra.mxu0 %v10721
          %10992 = vmatpush.bf16.msra.mxu0 %v10717
          %10993 = vmatpush.bf16.msra.mxu0 %v10713
          %10994 = vmatpush.bf16.msra.mxu0 %v10709
          %10995 = vmatpush.bf16.msra.mxu0 %v10705
          %10996 = vmatpush.bf16.msra.mxu0 %v10701
          %10997 = vmatmul.bf16.gmra.mxu0 %v10142
          %v10998 = vpop.f32.mrf.mxu0
          %v10999 = vadd.f32 %v10986, %v10998
          %v11000 = vpop.f32.mrf.mxu0
          %11001 = vdwg.mxu0
          %11002 = vmatpush.bf16.msra.mxu0 %v10761
          %11003 = vmatpush.bf16.msra.mxu0 %v10757
          %11004 = vmatpush.bf16.msra.mxu0 %v10753
          %11005 = vmatpush.bf16.msra.mxu0 %v10749
          %11006 = vmatpush.bf16.msra.mxu0 %v10745
          %11007 = vmatpush.bf16.msra.mxu0 %v10741
          %11008 = vmatpush.bf16.msra.mxu0 %v10737
          %11009 = vmatpush.bf16.msra.mxu0 %v10733
          %11010 = vmatmul.bf16.gmra.mxu0 %v10143
          %v11011 = vpop.f32.mrf.mxu0
          %v11012 = vadd.f32 %v10999, %v11011
          %v11013 = vpop.f32.mrf.mxu0
          %11014 = vdwg.mxu0
          %11015 = vmatpush.bf16.msra.mxu0 %v10793
          %11016 = vmatpush.bf16.msra.mxu0 %v10789
          %11017 = vmatpush.bf16.msra.mxu0 %v10785
          %11018 = vmatpush.bf16.msra.mxu0 %v10781
          %11019 = vmatpush.bf16.msra.mxu0 %v10777
          %11020 = vmatpush.bf16.msra.mxu0 %v10773
          %11021 = vmatpush.bf16.msra.mxu0 %v10769
          %11022 = vmatpush.bf16.msra.mxu0 %v10765
          %11023 = vmatmul.bf16.gmra.mxu0 %v10144
          %v11024 = vpop.f32.mrf.mxu0
          %v11025 = vadd.f32 %v11012, %v11024
          %v11026 = vpop.f32.mrf.mxu0
          %11027 = vdwg.mxu0
          %11028 = vmatpush.bf16.msra.mxu0 %v10698
          %11029 = vmatpush.bf16.msra.mxu0 %v10694
          %11030 = vmatpush.bf16.msra.mxu0 %v10690
          %11031 = vmatpush.bf16.msra.mxu0 %v10686
          %11032 = vmatpush.bf16.msra.mxu0 %v10682
          %11033 = vmatpush.bf16.msra.mxu0 %v10678
          %11034 = vmatpush.bf16.msra.mxu0 %v10674
          %11035 = vmatpush.bf16.msra.mxu0 %v10670
          %11036 = vmatmul.bf16.gmra.mxu0 %v10141
          %v11037 = vpop.f32.mrf.mxu0
          %v11038 = vadd.f32 %v10278, %v11037
          %v11039 = vpop.f32.mrf.mxu0
          %11040 = vdwg.mxu0
          %11041 = vmatpush.bf16.msra.mxu0 %v10730
          %11042 = vmatpush.bf16.msra.mxu0 %v10726
          %11043 = vmatpush.bf16.msra.mxu0 %v10722
          %11044 = vmatpush.bf16.msra.mxu0 %v10718
          %11045 = vmatpush.bf16.msra.mxu0 %v10714
          %11046 = vmatpush.bf16.msra.mxu0 %v10710
          %11047 = vmatpush.bf16.msra.mxu0 %v10706
          %11048 = vmatpush.bf16.msra.mxu0 %v10702
          %11049 = vmatmul.bf16.gmra.mxu0 %v10142
          %v11050 = vpop.f32.mrf.mxu0
          %v11051 = vadd.f32 %v11038, %v11050
          %v11052 = vpop.f32.mrf.mxu0
          %11053 = vdwg.mxu0
          %11054 = vmatpush.bf16.msra.mxu0 %v10762
          %11055 = vmatpush.bf16.msra.mxu0 %v10758
          %11056 = vmatpush.bf16.msra.mxu0 %v10754
          %11057 = vmatpush.bf16.msra.mxu0 %v10750
          %11058 = vmatpush.bf16.msra.mxu0 %v10746
          %11059 = vmatpush.bf16.msra.mxu0 %v10742
          %11060 = vmatpush.bf16.msra.mxu0 %v10738
          %11061 = vmatpush.bf16.msra.mxu0 %v10734
          %11062 = vmatmul.bf16.gmra.mxu0 %v10143
          %v11063 = vpop.f32.mrf.mxu0
          %v11064 = vadd.f32 %v11051, %v11063
          %v11065 = vpop.f32.mrf.mxu0
          %11066 = vdwg.mxu0
          %11067 = vmatpush.bf16.msra.mxu0 %v10794
          %11068 = vmatpush.bf16.msra.mxu0 %v10790
          %11069 = vmatpush.bf16.msra.mxu0 %v10786
          %11070 = vmatpush.bf16.msra.mxu0 %v10782
          %11071 = vmatpush.bf16.msra.mxu0 %v10778
          %11072 = vmatpush.bf16.msra.mxu0 %v10774
          %11073 = vmatpush.bf16.msra.mxu0 %v10770
          %11074 = vmatpush.bf16.msra.mxu0 %v10766
          %11075 = vmatmul.bf16.gmra.mxu0 %v10144
          %v11076 = vpop.f32.mrf.mxu0
          %v11077 = vadd.f32 %v11064, %v11076
          %v11078 = vpop.f32.mrf.mxu0
          %11079 = vdwg.mxu0
          %11080 = vmatpush.bf16.msra.mxu0 %v10699
          %11081 = vmatpush.bf16.msra.mxu0 %v10695
          %11082 = vmatpush.bf16.msra.mxu0 %v10691
          %11083 = vmatpush.bf16.msra.mxu0 %v10687
          %11084 = vmatpush.bf16.msra.mxu0 %v10683
          %11085 = vmatpush.bf16.msra.mxu0 %v10679
          %11086 = vmatpush.bf16.msra.mxu0 %v10675
          %11087 = vmatpush.bf16.msra.mxu0 %v10671
          %11088 = vmatmul.bf16.gmra.mxu0 %v10141
          %v11089 = vpop.f32.mrf.mxu0
          %v11090 = vadd.f32 %v10279, %v11089
          %v11091 = vpop.f32.mrf.mxu0
          %11092 = vdwg.mxu0
          %11093 = vmatpush.bf16.msra.mxu0 %v10731
          %11094 = vmatpush.bf16.msra.mxu0 %v10727
          %11095 = vmatpush.bf16.msra.mxu0 %v10723
          %11096 = vmatpush.bf16.msra.mxu0 %v10719
          %11097 = vmatpush.bf16.msra.mxu0 %v10715
          %11098 = vmatpush.bf16.msra.mxu0 %v10711
          %11099 = vmatpush.bf16.msra.mxu0 %v10707
          %11100 = vmatpush.bf16.msra.mxu0 %v10703
          %11101 = vmatmul.bf16.gmra.mxu0 %v10142
          %v11102 = vpop.f32.mrf.mxu0
          %v11103 = vadd.f32 %v11090, %v11102
          %v11104 = vpop.f32.mrf.mxu0
          %11105 = vdwg.mxu0
          %11106 = vmatpush.bf16.msra.mxu0 %v10763
          %11107 = vmatpush.bf16.msra.mxu0 %v10759
          %11108 = vmatpush.bf16.msra.mxu0 %v10755
          %11109 = vmatpush.bf16.msra.mxu0 %v10751
          %11110 = vmatpush.bf16.msra.mxu0 %v10747
          %11111 = vmatpush.bf16.msra.mxu0 %v10743
          %11112 = vmatpush.bf16.msra.mxu0 %v10739
          %11113 = vmatpush.bf16.msra.mxu0 %v10735
          %11114 = vmatmul.bf16.gmra.mxu0 %v10143
          %v11115 = vpop.f32.mrf.mxu0
          %v11116 = vadd.f32 %v11103, %v11115
          %v11117 = vpop.f32.mrf.mxu0
          %11118 = vdwg.mxu0
          %11119 = vmatpush.bf16.msra.mxu0 %v10795
          %11120 = vmatpush.bf16.msra.mxu0 %v10791
          %11121 = vmatpush.bf16.msra.mxu0 %v10787
          %11122 = vmatpush.bf16.msra.mxu0 %v10783
          %11123 = vmatpush.bf16.msra.mxu0 %v10779
          %11124 = vmatpush.bf16.msra.mxu0 %v10775
          %11125 = vmatpush.bf16.msra.mxu0 %v10771
          %11126 = vmatpush.bf16.msra.mxu0 %v10767
          %11127 = vmatmul.bf16.gmra.mxu0 %v10144
          %v11128 = vpop.f32.mrf.mxu0
          %v11129 = vadd.f32 %v11116, %v11128
          %v11130 = vpop.f32.mrf.mxu0
          %11131 = vdwg.mxu0
          %v11132 = vmax.f32 %v10973, 0.0
          %v11133 = vmax.f32 %v11025, 0.0
          %v11134 = vmax.f32 %v11077, 0.0
          %v11135 = vmax.f32 %v11129, 0.0
          %v11136 = vpack.c.bf16 %v11132, %v11132
          %v11137 = vpack.c.bf16 %v11133, %v11133
          %v11138 = vpack.c.bf16 %v11134, %v11134
          %v11139 = vpack.c.bf16 %v11135, %v11135
          %v11140 = vld [vmem:[%s11] sm:$0xf]
          %v11141 = vld [vmem:[%s11 + $0x4] sm:$0xf]
          %v11142 = vld [vmem:[%s11 + $0x8] sm:$0xf]
          %v11143 = vld [vmem:[%s11 + $0xc] sm:$0xf]
          %v11144 = vld [vmem:[%s11 + $0x10] sm:$0xf]
          %v11145 = vld [vmem:[%s11 + $0x14] sm:$0xf]
          %v11146 = vld [vmem:[%s11 + $0x18] sm:$0xf]
          %v11147 = vld [vmem:[%s11 + $0x1c] sm:$0xf]
          %v11148 = vld [vmem:[%s11 + $0x20] sm:$0xf]
          %v11149 = vld [vmem:[%s11 + $0x24] sm:$0xf]
          %v11150 = vld [vmem:[%s11 + $0x28] sm:$0xf]
          %v11151 = vld [vmem:[%s11 + $0x2c] sm:$0xf]
          %v11152 = vld [vmem:[%s11 + $0x30] sm:$0xf]
          %v11153 = vld [vmem:[%s11 + $0x34] sm:$0xf]
          %v11154 = vld [vmem:[%s11 + $0x38] sm:$0xf]
          %v11155 = vld [vmem:[%s11 + $0x3c] sm:$0xf]
          %v11156 = vld [vmem:[%s11 + $0x40] sm:$0xf]
          %v11157 = vld [vmem:[%s11 + $0x44] sm:$0xf]
          %v11158 = vld [vmem:[%s11 + $0x48] sm:$0xf]
          %v11159 = vld [vmem:[%s11 + $0x4c] sm:$0xf]
          %v11160 = vld [vmem:[%s11 + $0x50] sm:$0xf]
          %v11161 = vld [vmem:[%s11 + $0x54] sm:$0xf]
          %v11162 = vld [vmem:[%s11 + $0x58] sm:$0xf]
          %v11163 = vld [vmem:[%s11 + $0x5c] sm:$0xf]
          %v11164 = vld [vmem:[%s11 + $0x60] sm:$0xf]
          %v11165 = vld [vmem:[%s11 + $0x64] sm:$0xf]
          %v11166 = vld [vmem:[%s11 + $0x68] sm:$0xf]
          %v11167 = vld [vmem:[%s11 + $0x6c] sm:$0xf]
          %v11168 = vld [vmem:[%s11 + $0x70] sm:$0xf]
          %v11169 = vld [vmem:[%s11 + $0x74] sm:$0xf]
          %v11170 = vld [vmem:[%s11 + $0x78] sm:$0xf]
          %v11171 = vld [vmem:[%s11 + $0x7c] sm:$0xf]
          %v11172 = vld [vmem:[%s11 + $0x80] sm:$0xf]
          %v11173 = vld [vmem:[%s11 + $0x84] sm:$0xf]
          %v11174 = vld [vmem:[%s11 + $0x88] sm:$0xf]
          %v11175 = vld [vmem:[%s11 + $0x8c] sm:$0xf]
          %v11176 = vld [vmem:[%s11 + $0x90] sm:$0xf]
          %v11177 = vld [vmem:[%s11 + $0x94] sm:$0xf]
          %v11178 = vld [vmem:[%s11 + $0x98] sm:$0xf]
          %v11179 = vld [vmem:[%s11 + $0x9c] sm:$0xf]
          %v11180 = vld [vmem:[%s11 + $0xa0] sm:$0xf]
          %v11181 = vld [vmem:[%s11 + $0xa4] sm:$0xf]
          %v11182 = vld [vmem:[%s11 + $0xa8] sm:$0xf]
          %v11183 = vld [vmem:[%s11 + $0xac] sm:$0xf]
          %v11184 = vld [vmem:[%s11 + $0xb0] sm:$0xf]
          %v11185 = vld [vmem:[%s11 + $0xb4] sm:$0xf]
          %v11186 = vld [vmem:[%s11 + $0xb8] sm:$0xf]
          %v11187 = vld [vmem:[%s11 + $0xbc] sm:$0xf]
          %v11188 = vld [vmem:[%s11 + $0xc0] sm:$0xf]
          %v11189 = vld [vmem:[%s11 + $0xc4] sm:$0xf]
          %v11190 = vld [vmem:[%s11 + $0xc8] sm:$0xf]
          %v11191 = vld [vmem:[%s11 + $0xcc] sm:$0xf]
          %v11192 = vld [vmem:[%s11 + $0xd0] sm:$0xf]
          %v11193 = vld [vmem:[%s11 + $0xd4] sm:$0xf]
          %v11194 = vld [vmem:[%s11 + $0xd8] sm:$0xf]
          %v11195 = vld [vmem:[%s11 + $0xdc] sm:$0xf]
          %v11196 = vld [vmem:[%s11 + $0xe0] sm:$0xf]
          %v11197 = vld [vmem:[%s11 + $0xe4] sm:$0xf]
          %v11198 = vld [vmem:[%s11 + $0xe8] sm:$0xf]
          %v11199 = vld [vmem:[%s11 + $0xec] sm:$0xf]
          %v11200 = vld [vmem:[%s11 + $0xf0] sm:$0xf]
          %v11201 = vld [vmem:[%s11 + $0xf4] sm:$0xf]
          %v11202 = vld [vmem:[%s11 + $0xf8] sm:$0xf]
          %v11203 = vld [vmem:[%s11 + $0xfc] sm:$0xf]
          %v11204 = vld [vmem:[%s14 + $0x4] ss:$0 sm:$0xff]
          %v11269 = vunpack.c.l.b16 %v11140
          %v11270 = vunpack.c.l.b16 %v11141
          %v11271 = vunpack.c.l.b16 %v11142
          %v11272 = vunpack.c.l.b16 %v11143
          %v11273 = vunpack.c.l.b16 %v11144
          %v11274 = vunpack.c.l.b16 %v11145
          %v11275 = vunpack.c.l.b16 %v11146
          %v11276 = vunpack.c.l.b16 %v11147
          %v11277 = vunpack.c.l.b16 %v11148
          %v11278 = vunpack.c.l.b16 %v11149
          %v11279 = vunpack.c.l.b16 %v11150
          %v11280 = vunpack.c.l.b16 %v11151
          %v11281 = vunpack.c.l.b16 %v11152
          %v11282 = vunpack.c.l.b16 %v11153
          %v11283 = vunpack.c.l.b16 %v11154
          %v11284 = vunpack.c.l.b16 %v11155
          %v11285 = vunpack.c.l.b16 %v11156
          %v11286 = vunpack.c.l.b16 %v11157
          %v11287 = vunpack.c.l.b16 %v11158
          %v11288 = vunpack.c.l.b16 %v11159
          %v11289 = vunpack.c.l.b16 %v11160
          %v11290 = vunpack.c.l.b16 %v11161
          %v11291 = vunpack.c.l.b16 %v11162
          %v11292 = vunpack.c.l.b16 %v11163
          %v11293 = vunpack.c.l.b16 %v11164
          %v11294 = vunpack.c.l.b16 %v11165
          %v11295 = vunpack.c.l.b16 %v11166
          %v11296 = vunpack.c.l.b16 %v11167
          %v11297 = vunpack.c.l.b16 %v11168
          %v11298 = vunpack.c.l.b16 %v11169
          %v11299 = vunpack.c.l.b16 %v11170
          %v11300 = vunpack.c.l.b16 %v11171
          %v11301 = vunpack.c.l.b16 %v11172
          %v11302 = vunpack.c.l.b16 %v11173
          %v11303 = vunpack.c.l.b16 %v11174
          %v11304 = vunpack.c.l.b16 %v11175
          %v11305 = vunpack.c.l.b16 %v11176
          %v11306 = vunpack.c.l.b16 %v11177
          %v11307 = vunpack.c.l.b16 %v11178
          %v11308 = vunpack.c.l.b16 %v11179
          %v11309 = vunpack.c.l.b16 %v11180
          %v11310 = vunpack.c.l.b16 %v11181
          %v11311 = vunpack.c.l.b16 %v11182
          %v11312 = vunpack.c.l.b16 %v11183
          %v11313 = vunpack.c.l.b16 %v11184
          %v11314 = vunpack.c.l.b16 %v11185
          %v11315 = vunpack.c.l.b16 %v11186
          %v11316 = vunpack.c.l.b16 %v11187
          %v11317 = vunpack.c.l.b16 %v11188
          %v11318 = vunpack.c.l.b16 %v11189
          %v11319 = vunpack.c.l.b16 %v11190
          %v11320 = vunpack.c.l.b16 %v11191
          %v11321 = vunpack.c.l.b16 %v11192
          %v11322 = vunpack.c.l.b16 %v11193
          %v11323 = vunpack.c.l.b16 %v11194
          %v11324 = vunpack.c.l.b16 %v11195
          %v11325 = vunpack.c.l.b16 %v11196
          %v11326 = vunpack.c.l.b16 %v11197
          %v11327 = vunpack.c.l.b16 %v11198
          %v11328 = vunpack.c.l.b16 %v11199
          %v11329 = vunpack.c.l.b16 %v11200
          %v11330 = vunpack.c.l.b16 %v11201
          %v11331 = vunpack.c.l.b16 %v11202
          %v11332 = vunpack.c.l.b16 %v11203
          %v11333 = vpack.c.b16 %v11270, %v11269
          %v11334 = vpack.c.b16 %v11272, %v11271
          %v11335 = vpack.c.b16 %v11274, %v11273
          %v11336 = vpack.c.b16 %v11276, %v11275
          %v11337 = vpack.c.b16 %v11278, %v11277
          %v11338 = vpack.c.b16 %v11280, %v11279
          %v11339 = vpack.c.b16 %v11282, %v11281
          %v11340 = vpack.c.b16 %v11284, %v11283
          %v11341 = vpack.c.b16 %v11286, %v11285
          %v11342 = vpack.c.b16 %v11288, %v11287
          %v11343 = vpack.c.b16 %v11290, %v11289
          %v11344 = vpack.c.b16 %v11292, %v11291
          %v11345 = vpack.c.b16 %v11294, %v11293
          %v11346 = vpack.c.b16 %v11296, %v11295
          %v11347 = vpack.c.b16 %v11298, %v11297
          %v11348 = vpack.c.b16 %v11300, %v11299
          %v11349 = vpack.c.b16 %v11302, %v11301
          %v11350 = vpack.c.b16 %v11304, %v11303
          %v11351 = vpack.c.b16 %v11306, %v11305
          %v11352 = vpack.c.b16 %v11308, %v11307
          %v11353 = vpack.c.b16 %v11310, %v11309
          %v11354 = vpack.c.b16 %v11312, %v11311
          %v11355 = vpack.c.b16 %v11314, %v11313
          %v11356 = vpack.c.b16 %v11316, %v11315
          %v11357 = vpack.c.b16 %v11318, %v11317
          %v11358 = vpack.c.b16 %v11320, %v11319
          %v11359 = vpack.c.b16 %v11322, %v11321
          %v11360 = vpack.c.b16 %v11324, %v11323
          %v11361 = vpack.c.b16 %v11326, %v11325
          %v11362 = vpack.c.b16 %v11328, %v11327
          %v11363 = vpack.c.b16 %v11330, %v11329
          %v11364 = vpack.c.b16 %v11332, %v11331
          %11397 = vmatpush.bf16.msra.mxu0 %v11340
          %11398 = vmatpush.bf16.msra.mxu0 %v11339
          %11399 = vmatpush.bf16.msra.mxu0 %v11338
          %11400 = vmatpush.bf16.msra.mxu0 %v11337
          %11401 = vmatpush.bf16.msra.mxu0 %v11336
          %11402 = vmatpush.bf16.msra.mxu0 %v11335
          %11403 = vmatpush.bf16.msra.mxu0 %v11334
          %11404 = vmatpush.bf16.msra.mxu0 %v11333
          %11405 = vmatmul.bf16.gmra.mxu0 %v11136
          %v11406 = vpop.f32.mrf.mxu0
          %v11407 = vadd.f32 %v11204, %v11406
          %v11408 = vpop.f32.mrf.mxu0
          %11409 = vdwg.mxu0
          %11410 = vmatpush.bf16.msra.mxu0 %v11348
          %11411 = vmatpush.bf16.msra.mxu0 %v11347
          %11412 = vmatpush.bf16.msra.mxu0 %v11346
          %11413 = vmatpush.bf16.msra.mxu0 %v11345
          %11414 = vmatpush.bf16.msra.mxu0 %v11344
          %11415 = vmatpush.bf16.msra.mxu0 %v11343
          %11416 = vmatpush.bf16.msra.mxu0 %v11342
          %11417 = vmatpush.bf16.msra.mxu0 %v11341
          %11418 = vmatmul.bf16.gmra.mxu0 %v11137
          %v11419 = vpop.f32.mrf.mxu0
          %v11420 = vadd.f32 %v11407, %v11419
          %v11421 = vpop.f32.mrf.mxu0
          %11422 = vdwg.mxu0
          %11423 = vmatpush.bf16.msra.mxu0 %v11356
          %11424 = vmatpush.bf16.msra.mxu0 %v11355
          %11425 = vmatpush.bf16.msra.mxu0 %v11354
          %11426 = vmatpush.bf16.msra.mxu0 %v11353
          %11427 = vmatpush.bf16.msra.mxu0 %v11352
          %11428 = vmatpush.bf16.msra.mxu0 %v11351
          %11429 = vmatpush.bf16.msra.mxu0 %v11350
          %11430 = vmatpush.bf16.msra.mxu0 %v11349
          %11431 = vmatmul.bf16.gmra.mxu0 %v11138
          %v11432 = vpop.f32.mrf.mxu0
          %v11433 = vadd.f32 %v11420, %v11432
          %v11434 = vpop.f32.mrf.mxu0
          %11435 = vdwg.mxu0
          %11436 = vmatpush.bf16.msra.mxu0 %v11364
          %11437 = vmatpush.bf16.msra.mxu0 %v11363
          %11438 = vmatpush.bf16.msra.mxu0 %v11362
          %11439 = vmatpush.bf16.msra.mxu0 %v11361
          %11440 = vmatpush.bf16.msra.mxu0 %v11360
          %11441 = vmatpush.bf16.msra.mxu0 %v11359
          %11442 = vmatpush.bf16.msra.mxu0 %v11358
          %11443 = vmatpush.bf16.msra.mxu0 %v11357
          %11444 = vmatmul.bf16.gmra.mxu0 %v11139
          %v11445 = vpop.f32.mrf.mxu0
          %v11446 = vadd.f32 %v11433, %v11445
          %v11447 = vpop.f32.mrf.mxu0
          %11448 = vdwg.mxu0
          %v11449 = vmax.f32 %v11446, 0.0
          %v11450 = vpack.c.bf16 %v11449, %v11449
          %v11451 = vld [vmem:[%s12] sm:$0xf]
          %v11452 = vld [vmem:[%s12 + $0x4] sm:$0xf]
          %v11453 = vld [vmem:[%s12 + $0x8] sm:$0xf]
          %v11454 = vld [vmem:[%s12 + $0xc] sm:$0xf]
          %v11455 = vld [vmem:[%s12 + $0x10] sm:$0xf]
          %v11456 = vld [vmem:[%s12 + $0x14] sm:$0xf]
          %v11457 = vld [vmem:[%s12 + $0x18] sm:$0xf]
          %v11458 = vld [vmem:[%s12 + $0x1c] sm:$0xf]
          %v11459 = vld [vmem:[%s12 + $0x20] sm:$0xf]
          %v11460 = vld [vmem:[%s12 + $0x24] sm:$0xf]
          %v11461 = vld [vmem:[%s12 + $0x28] sm:$0xf]
          %v11462 = vld [vmem:[%s12 + $0x2c] sm:$0xf]
          %v11463 = vld [vmem:[%s12 + $0x30] sm:$0xf]
          %v11464 = vld [vmem:[%s12 + $0x34] sm:$0xf]
          %v11465 = vld [vmem:[%s12 + $0x38] sm:$0xf]
          %v11466 = vld [vmem:[%s12 + $0x3c] sm:$0xf]
          %v11467 = vld [vmem:[%s14 + $0x5] ss:$0 sm:$0xff]
          %v11484 = vunpack.c.l.b16 %v11451
          %v11485 = vunpack.c.l.b16 %v11452
          %v11486 = vunpack.c.l.b16 %v11453
          %v11487 = vunpack.c.l.b16 %v11454
          %v11488 = vunpack.c.l.b16 %v11455
          %v11489 = vunpack.c.l.b16 %v11456
          %v11490 = vunpack.c.l.b16 %v11457
          %v11491 = vunpack.c.l.b16 %v11458
          %v11492 = vunpack.c.l.b16 %v11459
          %v11493 = vunpack.c.l.b16 %v11460
          %v11494 = vunpack.c.l.b16 %v11461
          %v11495 = vunpack.c.l.b16 %v11462
          %v11496 = vunpack.c.l.b16 %v11463
          %v11497 = vunpack.c.l.b16 %v11464
          %v11498 = vunpack.c.l.b16 %v11465
          %v11499 = vunpack.c.l.b16 %v11466
          %v11500 = vpack.c.b16 %v11485, %v11484
          %v11501 = vpack.c.b16 %v11487, %v11486
          %v11502 = vpack.c.b16 %v11489, %v11488
          %v11503 = vpack.c.b16 %v11491, %v11490
          %v11504 = vpack.c.b16 %v11493, %v11492
          %v11505 = vpack.c.b16 %v11495, %v11494
          %v11506 = vpack.c.b16 %v11497, %v11496
          %v11507 = vpack.c.b16 %v11499, %v11498
          %11516 = vmatpush.bf16.msra.mxu0 %v11507
          %11517 = vmatpush.bf16.msra.mxu0 %v11506
          %11518 = vmatpush.bf16.msra.mxu0 %v11505
          %11519 = vmatpush.bf16.msra.mxu0 %v11504
          %11520 = vmatpush.bf16.msra.mxu0 %v11503
          %11521 = vmatpush.bf16.msra.mxu0 %v11502
          %11522 = vmatpush.bf16.msra.mxu0 %v11501
          %11523 = vmatpush.bf16.msra.mxu0 %v11500
          %11524 = vmatmul.bf16.gmra.mxu0 %v11450
          %v11525 = vpop.f32.mrf.mxu0
          %v11526 = vadd.f32 %v11467, %v11525
          %v11527 = vpop.f32.mrf.mxu0
          %11528 = vdwg.mxu0
          %v11529 = vmax.f32 %v11526, 0.0
          %v11530 = vpack.c.bf16 %v11529, %v11529
          %v11531 = vld [vmem:[%s13] sm:$0xf]
          %v11532 = vld [vmem:[%s13 + $0x4] sm:$0xf]
          %v11533 = vld [vmem:[%s13 + $0x8] sm:$0xf]
          %v11534 = vld [vmem:[%s13 + $0xc] sm:$0xf]
          %v11535 = vld [vmem:[%s13 + $0x10] sm:$0xf]
          %v11536 = vld [vmem:[%s13 + $0x14] sm:$0xf]
          %v11537 = vld [vmem:[%s13 + $0x18] sm:$0xf]
          %v11538 = vld [vmem:[%s13 + $0x1c] sm:$0xf]
          %v11539 = vld [vmem:[%s14 + $0x6] ss:$0 sm:$0xff]
          %v11548 = vunpack.c.l.b16 %v11531
          %v11549 = vunpack.c.l.b16 %v11532
          %v11550 = vunpack.c.l.b16 %v11533
          %v11551 = vunpack.c.l.b16 %v11534
          %v11552 = vunpack.c.l.b16 %v11535
          %v11553 = vunpack.c.l.b16 %v11536
          %v11554 = vunpack.c.l.b16 %v11537
          %v11555 = vunpack.c.l.b16 %v11538
          %v11556 = vpack.c.b16 %v11549, %v11548
          %v11557 = vpack.c.b16 %v11551, %v11550
          %v11558 = vpack.c.b16 %v11553, %v11552
          %v11559 = vpack.c.b16 %v11555, %v11554
          %v11565 = vsel %vm996, %v11530, 0
          %11567 = vmatpush.bf16.msra.mxu0 0
          %11568 = vmatpush.bf16.msra.mxu0 0
          %11569 = vmatpush.bf16.msra.mxu0 0
          %11570 = vmatpush.bf16.msra.mxu0 0
          %11571 = vmatpush.bf16.msra.mxu0 %v11559
          %11572 = vmatpush.bf16.msra.mxu0 %v11558
          %11573 = vmatpush.bf16.msra.mxu0 %v11557
          %11574 = vmatpush.bf16.msra.mxu0 %v11556
          %11575 = vmatmul.bf16.gmra.mxu0 %v11565
          %v11576 = vpop.f32.mrf.mxu0
          %v11577 = vadd.f32 %v11539, %v11576
          %v11578 = vpop.f32.mrf.mxu0
          %11579 = vdwg.mxu0
          %vm11580 = vcmask 1024
          %11581 = vst.msk [vmem:[%s607] sm:$0x3] %vm11580, %v11577
        $region130: #{discriminator_forward.1} parent=113 // pred_fallthru
          _
        %p11582 = scmp.lt.s32.totalorder %s30, 0
        %s11583 = scalar_select %p11582, %s30, 0
        %s11584 = smul.addr %s11583, 2
        %s11585 = scalar_lea.vmem %s15, %s11584
        // Predicated region
        $region131: #{discriminator_forward.1} parent=113 // pred_check
          %p11586 = pneg %p378
        $region132: #{discriminator_forward.1} parent=113 // pred_check_branch
          %11588 = sbr.rel (%p11586) target = $region134
        $region133: #{discriminator_forward.1} parent=113 // pred_region
          _
        $region134: #{discriminator_forward.1} parent=113 // pred_fallthru
          _
        // Predicated region
        $region135: #{discriminator_forward.1} parent=113 // pred_check
          %p11589 = pneg %p378
        $region136: #{discriminator_forward.1} parent=113 // pred_check_branch
          %11591 = sbr.rel (%p11589) target = $region138
        $region137: #{discriminator_forward.1} parent=113 // pred_region
          %p11592 = scmp.lt.s32.totalorder %s30, 0
          %s11593 = scalar_select %p11592, %s30, 0
          %s11594 = smul.addr %s11593, 2
          %s11595 = scalar_lea.vmem %s15, %s11594
        $region138: #{discriminator_forward.1} parent=113 // pred_fallthru
          _
      $region114: #{discriminator_forward.1} parent=5 // pred_fallthru
        _
      %p11596 = scmp.le.s32.totalorder 2, %s21
      // Predicated region
      $region139: #{discriminator_forward.1} parent=5 // pred_check
        %p11597 = pneg %p11596
      $region140: #{discriminator_forward.1} parent=5 // pred_check_branch
        %11599 = sbr.rel (%p11597) target = $region142
      $region141: #{discriminator_forward.1} parent=5 // pred_region
        %s11600 = ssub.s32 %s21, 2
      $region142: #{discriminator_forward.1} parent=5 // pred_fallthru
        _
    $region6: #{discriminator_forward.1} parent=1 // loop_footer
      %s25 = sadd.s32 1, %s21
    $region7: #{discriminator_forward.1} parent=1 // loop_footer_branch
      %20 = sbr.rel target = $region3
    $region8: #{discriminator_forward.1} parent=1 // loop_exit
      _

</llo_original>
